<compile_context>
chip_gen: v7x
topology: tpu7x:2x2x1
jax: 0.10.0
libtpu: 0.0.40
codegen_flags: <defaults>
</compile_context>

<pallas_src>
import functools

import jax
import jax.numpy as jnp
from jax import lax
from jax.experimental import pallas as pl
from jax.experimental.pallas import tpu as pltpu


# ------------------------------- helpers ------------------------------------ #

def _round_up(v, m):
    return (v + m - 1) // m * m


def _pick_images_per_step(N, M, Cin, Cout, max_block_bytes=4 << 20):
    """Largest divisor of N whose bf16 in+out block stays under a VMEM budget."""
    per_image = M * (Cin + Cout) * 2
    best = 1
    for b in range(1, N + 1):
        if N % b == 0 and b * per_image <= max_block_bytes:
            best = b
    return best


def _vmem_limit_bytes():
    cap = 64 * 1024 * 1024
    try:
        info = pltpu.get_tpu_info()
        cap = int(getattr(info, "vmem_capacity_bytes", cap))
    except Exception:
        pass
    return min(cap * 3 // 4, 96 * 1024 * 1024)


# ------------------------------- Pallas kernel ------------------------------ #

def _bottleneck_kernel(H, W, Wp_a, G, x_ref, w1_ref, s1_ref, b1_ref,
                       w2_ref, s2_ref, b2_ref, w3_ref, s3_ref, b3_ref,
                       o_ref, pad_ref):
    """Fused Bottleneck forward for a block of images.

    x_ref   : (B, M, Cin)  bf16  compact (unpadded) NHWC-flattened activations.
    w*_ref  : bf16 weights; s*/b*_ref : (1, C) f32 folded-BN scale/bias.
    o_ref   : (B, M, Cout) bf16  compact output.
    pad_ref : (2G + H*Wp_a, Cmid) f32 VMEM scratch: zero-guarded conv1 output,
              with an aligned per-row pitch of Wp_a (>= W+1) so right-pad
              columns double as left/right zero padding of adjacent rows.
    """
    B = x_ref.shape[0]
    M = H * W
    R = H * Wp_a                       # contiguous conv2 compute range
    Cmid = w2_ref.shape[2]

    # Zero the staging buffer once per grid step: guard / right-pad rows stay
    # zero across the image loop, image rows are fully overwritten below.
    pad_ref[...] = jnp.zeros(pad_ref.shape, pad_ref.dtype)

    for b in range(B):
        x = x_ref[b]                                             # (M, Cin) bf16

        # ---- conv1 (1x1) + bn1 + relu --------------------------------------
        a1 = jnp.dot(x, w1_ref[...], preferred_element_type=jnp.float32)
        o1 = jnp.maximum(a1 * s1_ref[...] + b1_ref[...], 0.0)    # (M, Cmid) f32

        # Scatter image rows into the zero-guarded padded layout (row starts
        # are multiples of 8 -> aligned stores).
        for h in range(H):
            pad_ref[pl.ds(G + h * Wp_a, W), :] = o1[h * W:(h + 1) * W, :]

        # ---- conv2 (3x3, pad=1): 9 shifted in-VMEM matmuls ------------------
        # Garbage rows at right-pad positions are dropped at the gather below.
        acc = jnp.zeros((R, Cmid), jnp.float32)
        for dy in range(3):
            for dx in range(3):
                off = G + (dy - 1) * Wp_a + (dx - 1)
                patch = pad_ref[pl.ds(off, R), :].astype(jnp.bfloat16)
                acc = acc + jnp.dot(patch, w2_ref[dy * 3 + dx],
                                    preferred_element_type=jnp.float32)

        # Gather the compact interior rows, then bn2 + relu on M rows only.
        acc_c = jnp.concatenate(
            [acc[h * Wp_a:h * Wp_a + W, :] for h in range(H)], axis=0)
        o2 = jnp.maximum(acc_c * s2_ref[...] + b2_ref[...], 0.0
                         ).astype(jnp.bfloat16)                  # (M, Cmid)

        # ---- conv3 (1x1) + bn3 + residual (f32) + relu ----------------------
        a3 = jnp.dot(o2, w3_ref[...], preferred_element_type=jnp.float32)
        y = a3 * s3_ref[...] + b3_ref[...] + x.astype(jnp.float32)
        o_ref[b] = jnp.maximum(y, 0.0).astype(o_ref.dtype)


# ------------------------------ Host-side wrappers --------------------------- #

def bottleneck_forward_flat(x_flat, params, H, W, images_per_step=None):
    """Block-to-block entry point: (N, H*W, Cin) -> (N, H*W, Cout) bf16."""
    N, M, Cin = x_flat.shape
    assert M == H * W
    Cmid = params["w1"].shape[1]
    Cout = params["w3"].shape[1]
    assert Cout == Cin, "downsample=None requires inplanes == planes * expansion"

    # Aligned padded-row pitch and zero guard for the in-kernel 3x3 staging.
    Wp_a = _round_up(W + 1, 8)
    G = _round_up(Wp_a + 1, 8)
    R = H * Wp_a
    n_pad_rows = 2 * G + R

    if images_per_step is None:
        images_per_step = _pick_images_per_step(N, M, Cin, Cout)
    B = images_per_step
    assert N % B == 0

    x_flat = x_flat.astype(jnp.bfloat16)
    w1 = params["w1"].astype(jnp.bfloat16)
    w2 = params["w2_hwio"].reshape(9, Cmid, Cmid).astype(jnp.bfloat16)
    w3 = params["w3"].astype(jnp.bfloat16)
    s1 = params["s1"].reshape(1, Cmid).astype(jnp.float32)
    b1 = params["b1"].reshape(1, Cmid).astype(jnp.float32)
    s2 = params["s2"].reshape(1, Cmid).astype(jnp.float32)
    b2 = params["b2"].reshape(1, Cmid).astype(jnp.float32)
    s3 = params["s3"].reshape(1, Cout).astype(jnp.float32)
    b3 = params["b3"].reshape(1, Cout).astype(jnp.float32)

    flops = 2 * N * (M * Cin * Cmid + R * 9 * Cmid * Cmid + M * Cmid * Cout)
    bytes_accessed = (N * M * (Cin + Cout) * 2
                      + (w1.size + w2.size + w3.size) * 2
                      + (s1.size + b1.size + s2.size + b2.size
                         + s3.size + b3.size) * 4)

    return pl.pallas_call(
        functools.partial(_bottleneck_kernel, H, W, Wp_a, G),
        out_shape=jax.ShapeDtypeStruct((N, M, Cout), jnp.bfloat16),
        grid_spec=pltpu.PrefetchScalarGridSpec(
            num_scalar_prefetch=0,
            grid=(N // B,),
            in_specs=[
                pl.BlockSpec((B, M, Cin), lambda n: (n, 0, 0)),       # x
                pl.BlockSpec((Cin, Cmid), lambda n: (0, 0)),          # w1
                pl.BlockSpec((1, Cmid), lambda n: (0, 0)),            # s1
                pl.BlockSpec((1, Cmid), lambda n: (0, 0)),            # b1
                pl.BlockSpec((9, Cmid, Cmid), lambda n: (0, 0, 0)),   # w2
                pl.BlockSpec((1, Cmid), lambda n: (0, 0)),            # s2
                pl.BlockSpec((1, Cmid), lambda n: (0, 0)),            # b2
                pl.BlockSpec((Cmid, Cout), lambda n: (0, 0)),         # w3
                pl.BlockSpec((1, Cout), lambda n: (0, 0)),            # s3
                pl.BlockSpec((1, Cout), lambda n: (0, 0)),            # b3
            ],
            out_specs=pl.BlockSpec((B, M, Cout), lambda n: (n, 0, 0)),
            scratch_shapes=[pltpu.VMEM((n_pad_rows, Cmid), jnp.float32)],
        ),
        compiler_params=pltpu.CompilerParams(
            dimension_semantics=("parallel",),
            vmem_limit_bytes=_vmem_limit_bytes()),
        cost_estimate=pl.CostEstimate(
            flops=flops, transcendentals=0, bytes_accessed=bytes_accessed),
    )(x_flat, w1, s1, b1, w2, s2, b2, w3, s3, b3)


def bottleneck_forward(x_nchw, params):
    """NCHW adapter (demo / PyTorch-layout boundary only).

    In a real network, keep activations in the flat NHWC bf16 layout and chain
    bottleneck_forward_flat calls directly (no transposes between blocks).
    """
    N, Cin, H, W = x_nchw.shape
    x_flat = jnp.transpose(x_nchw, (0, 2, 3, 1)).reshape(N, H * W, Cin)
    out_flat = bottleneck_forward_flat(x_flat, params, H, W)
    out = out_flat.reshape(N, H, W, -1).astype(x_nchw.dtype)
    return jnp.transpose(out, (0, 3, 1, 2))


# ------------------------------ Reference (JAX) ------------------------------ #

def bottleneck_reference(x_nchw, params):
    def conv1x1(x, w_mat):                           # w_mat: (Cin, Cout)
        w = jnp.transpose(w_mat)[:, :, None, None]   # OIHW
        return lax.conv_general_dilated(
            x, w, (1, 1), "VALID",
            dimension_numbers=("NCHW", "OIHW", "NCHW"))

    def conv3x3(x, w_hwio):                          # w_hwio: (3, 3, Cin, Cout)
        w = jnp.transpose(w_hwio, (3, 2, 0, 1))      # OIHW
        return lax.conv_general_dilated(
            x, w, (1, 1), ((1, 1), (1, 1)),
            dimension_numbers=("NCHW", "OIHW", "NCHW"))

    def bn(x, s, b):
        return x * s[None, :, None, None] + b[None, :, None, None]

    o = jax.nn.relu(bn(conv1x1(x_nchw, params["w1"]), params["s1"], params["b1"]))
    o = jax.nn.relu(bn(conv3x3(o, params["w2_hwio"]), params["s2"], params["b2"]))
    o = bn(conv1x1(o, params["w3"]), params["s3"], params["b3"])
    return jax.nn.relu(o + x_nchw)


# ------------------------------ Parameter init ------------------------------- #

def make_params(key, inplanes, planes, expansion=4, eps=1e-5):
    cout = planes * expansion
    keys = jax.random.split(key, 16)

    def bn_fold(kg, kb, km, kv, c):
        gamma = jax.random.uniform(kg, (c,), jnp.float32, 0.5, 1.5)
        beta = 0.1 * jax.random.normal(kb, (c,), jnp.float32)
        rmean = 0.1 * jax.random.normal(km, (c,), jnp.float32)
        rvar = jax.random.uniform(kv, (c,), jnp.float32, 0.5, 1.5)
        scale = gamma / jnp.sqrt(rvar + eps)
        bias = beta - rmean * scale
        return scale, bias

    w1 = 0.1 * jax.random.normal(keys[0], (inplanes, planes), jnp.float32)
    w2_hwio = 0.1 * jax.random.normal(keys[1], (3, 3, planes, planes), jnp.float32)
    w3 = 0.1 * jax.random.normal(keys[2], (planes, cout), jnp.float32)
    s1, b1 = bn_fold(keys[3], keys[4], keys[5], keys[6], planes)
    s2, b2 = bn_fold(keys[7], keys[8], keys[9], keys[10], planes)
    s3, b3 = bn_fold(keys[11], keys[12], keys[13], keys[14], cout)

    return dict(w1=w1, w2_hwio=w2_hwio, w3=w3,
                s1=s1, b1=b1, s2=s2, b2=b2, s3=s3, b3=b3)


# ----------------------------------- Main ------------------------------------ #

if __name__ == "__main__":
    N, H, W = 2, 16, 16
    planes = 32
    inplanes = planes * 4          # downsample=None requires inplanes == planes*4

    key = jax.random.PRNGKey(0)
    kx, kp = jax.random.split(key)
    x = jax.random.normal(kx, (N, inplanes, H, W), jnp.float32)
    params = make_params(kp, inplanes, planes)

    out = jax.block_until_ready(bottleneck_forward(x, params))
    ref = jax.block_until_ready(bottleneck_reference(x, params))

    assert out.shape == (N, inplanes, H, W)
    max_err = float(jnp.max(jnp.abs(out - ref)))
    # bf16 MXU operands, bf16 HBM activations (f32 accumulation / epilogue /
    # residual) -> tolerance looser than an all-f32 path.
    assert jnp.allclose(out, ref, atol=1e-1, rtol=1e-1), max_err

    print("KERNEL_OK")
</pallas_src>

<mosaic_0001>
module attributes {stable_mosaic.version = 11 : i64} {
  func.func @_bottleneck_kernel(%arg0: i32, %arg1: memref<2x256x128xbf16, #tpu.memory_space<vmem>>, %arg2: memref<128x32xbf16, #tpu.memory_space<vmem>>, %arg3: memref<1x32xf32, #tpu.memory_space<vmem>>, %arg4: memref<1x32xf32, #tpu.memory_space<vmem>>, %arg5: memref<9x32x32xbf16, #tpu.memory_space<vmem>>, %arg6: memref<1x32xf32, #tpu.memory_space<vmem>>, %arg7: memref<1x32xf32, #tpu.memory_space<vmem>>, %arg8: memref<32x128xbf16, #tpu.memory_space<vmem>>, %arg9: memref<1x128xf32, #tpu.memory_space<vmem>>, %arg10: memref<1x128xf32, #tpu.memory_space<vmem>>, %arg11: memref<2x256x128xbf16, #tpu.memory_space<vmem>>, %arg12: memref<448x32xf32, #tpu.memory_space<vmem>>) attributes {dimension_semantics = [#tpu.dimension_semantics<parallel>], iteration_bounds = array<i64: 1>, scalar_prefetch = 0 : i64, scratch_operands = 1 : i64, tpu.core_type = #tpu.core_type<tc>, window_params = [{transform_indices = @transform_0, window_bounds = array<i64: 2, 256, 128>}, {pipeline_mode = #tpu.pipeline_mode<synchronous>, transform_indices = @transform_1, window_bounds = array<i64: 128, 32>}, {pipeline_mode = #tpu.pipeline_mode<synchronous>, transform_indices = @transform_2, window_bounds = array<i64: 1, 32>}, {pipeline_mode = #tpu.pipeline_mode<synchronous>, transform_indices = @transform_3, window_bounds = array<i64: 1, 32>}, {pipeline_mode = #tpu.pipeline_mode<synchronous>, transform_indices = @transform_4, window_bounds = array<i64: 9, 32, 32>}, {pipeline_mode = #tpu.pipeline_mode<synchronous>, transform_indices = @transform_5, window_bounds = array<i64: 1, 32>}, {pipeline_mode = #tpu.pipeline_mode<synchronous>, transform_indices = @transform_6, window_bounds = array<i64: 1, 32>}, {pipeline_mode = #tpu.pipeline_mode<synchronous>, transform_indices = @transform_7, window_bounds = array<i64: 32, 128>}, {pipeline_mode = #tpu.pipeline_mode<synchronous>, transform_indices = @transform_8, window_bounds = array<i64: 1, 128>}, {pipeline_mode = #tpu.pipeline_mode<synchronous>, transform_indices = @transform_9, window_bounds = array<i64: 1, 128>}, {transform_indices = @transform_10, window_bounds = array<i64: 2, 256, 128>}]} {
    %cst = arith.constant 0.000000e+00 : f32
    %0 = vector.broadcast %cst : f32 to vector<448x32xf32>
    %c0 = arith.constant 0 : index
    %c0_0 = arith.constant 0 : index
    %1 = vector.load %arg12[%c0, %c0_0] : memref<448x32xf32, #tpu.memory_space<vmem>>, vector<448x32xf32>
    tpu.vector_store %arg12[%c0, %c0_0], %0 {strides = array<i32>} : memref<448x32xf32, #tpu.memory_space<vmem>>, vector<448x32xf32>,
    %c0_1 = arith.constant 0 : index
    %c0_2 = arith.constant 0 : index
    %c0_3 = arith.constant 0 : index
    %2 = vector.load %arg1[%c0_1, %c0_2, %c0_3] : memref<2x256x128xbf16, #tpu.memory_space<vmem>>, vector<1x256x128xbf16>
    %3 = vector.shape_cast %2 : vector<1x256x128xbf16> to vector<256x128xbf16>
    %c0_4 = arith.constant 0 : index
    %c0_5 = arith.constant 0 : index
    %4 = vector.load %arg2[%c0_4, %c0_5] : memref<128x32xbf16, #tpu.memory_space<vmem>>, vector<128x32xbf16>
    %cst_6 = arith.constant dense<0.000000e+00> : vector<256x32xf32>
    %5 = tpu.matmul %3, %4, %cst_6 {dimension_numbers = #tpu.dot_dimension_numbers<[1], [0], [0], [1], [0, 0, 1, 1], [], []>} : vector<256x128xbf16>, vector<128x32xbf16>, vector<256x32xf32> -> vector<256x32xf32>
    %c0_7 = arith.constant 0 : index
    %c0_8 = arith.constant 0 : index
    %6 = vector.load %arg3[%c0_7, %c0_8] : memref<1x32xf32, #tpu.memory_space<vmem>>, vector<1x32xf32>
    %7 = vector.broadcast %6 : vector<1x32xf32> to vector<256x32xf32>
    %8 = arith.mulf %5, %7 : vector<256x32xf32>
    %c0_9 = arith.constant 0 : index
    %c0_10 = arith.constant 0 : index
    %9 = vector.load %arg4[%c0_9, %c0_10] : memref<1x32xf32, #tpu.memory_space<vmem>>, vector<1x32xf32>
    %10 = vector.broadcast %9 : vector<1x32xf32> to vector<256x32xf32>
    %11 = arith.addf %8, %10 : vector<256x32xf32>
    %cst_11 = arith.constant 0.000000e+00 : f32
    %12 = vector.broadcast %cst_11 : f32 to vector<256x32xf32>
    %13 = arith.maximumf %11, %12 : vector<256x32xf32>
    %14 = vector.extract_strided_slice %13 {offsets = [0, 0], sizes = [16, 32], strides = [1, 1]} : vector<256x32xf32> to vector<16x32xf32>
    %c32 = arith.constant 32 : index
    %c0_12 = arith.constant 0 : index
    %15 = vector.load %arg12[%c32, %c0_12] : memref<448x32xf32, #tpu.memory_space<vmem>>, vector<16x32xf32>
    tpu.vector_store %arg12[%c32, %c0_12], %14 {strides = array<i32>} : memref<448x32xf32, #tpu.memory_space<vmem>>, vector<16x32xf32>,
    %16 = vector.extract_strided_slice %13 {offsets = [16, 0], sizes = [16, 32], strides = [1, 1]} : vector<256x32xf32> to vector<16x32xf32>
    %c56 = arith.constant 56 : index
    %c0_13 = arith.constant 0 : index
    %17 = vector.load %arg12[%c56, %c0_13] : memref<448x32xf32, #tpu.memory_space<vmem>>, vector<16x32xf32>
    tpu.vector_store %arg12[%c56, %c0_13], %16 {strides = array<i32>} : memref<448x32xf32, #tpu.memory_space<vmem>>, vector<16x32xf32>,
    %18 = vector.extract_strided_slice %13 {offsets = [32, 0], sizes = [16, 32], strides = [1, 1]} : vector<256x32xf32> to vector<16x32xf32>
    %c80 = arith.constant 80 : index
    %c0_14 = arith.constant 0 : index
    %19 = vector.load %arg12[%c80, %c0_14] : memref<448x32xf32, #tpu.memory_space<vmem>>, vector<16x32xf32>
    tpu.vector_store %arg12[%c80, %c0_14], %18 {strides = array<i32>} : memref<448x32xf32, #tpu.memory_space<vmem>>, vector<16x32xf32>,
    %20 = vector.extract_strided_slice %13 {offsets = [48, 0], sizes = [16, 32], strides = [1, 1]} : vector<256x32xf32> to vector<16x32xf32>
    %c104 = arith.constant 104 : index
    %c0_15 = arith.constant 0 : index
    %21 = vector.load %arg12[%c104, %c0_15] : memref<448x32xf32, #tpu.memory_space<vmem>>, vector<16x32xf32>
    tpu.vector_store %arg12[%c104, %c0_15], %20 {strides = array<i32>} : memref<448x32xf32, #tpu.memory_space<vmem>>, vector<16x32xf32>,
    %22 = vector.extract_strided_slice %13 {offsets = [64, 0], sizes = [16, 32], strides = [1, 1]} : vector<256x32xf32> to vector<16x32xf32>
    %c128 = arith.constant 128 : index
    %c0_16 = arith.constant 0 : index
    %23 = vector.load %arg12[%c128, %c0_16] : memref<448x32xf32, #tpu.memory_space<vmem>>, vector<16x32xf32>
    tpu.vector_store %arg12[%c128, %c0_16], %22 {strides = array<i32>} : memref<448x32xf32, #tpu.memory_space<vmem>>, vector<16x32xf32>,
    %24 = vector.extract_strided_slice %13 {offsets = [80, 0], sizes = [16, 32], strides = [1, 1]} : vector<256x32xf32> to vector<16x32xf32>
    %c152 = arith.constant 152 : index
    %c0_17 = arith.constant 0 : index
    %25 = vector.load %arg12[%c152, %c0_17] : memref<448x32xf32, #tpu.memory_space<vmem>>, vector<16x32xf32>
    tpu.vector_store %arg12[%c152, %c0_17], %24 {strides = array<i32>} : memref<448x32xf32, #tpu.memory_space<vmem>>, vector<16x32xf32>,
    %26 = vector.extract_strided_slice %13 {offsets = [96, 0], sizes = [16, 32], strides = [1, 1]} : vector<256x32xf32> to vector<16x32xf32>
    %c176 = arith.constant 176 : index
    %c0_18 = arith.constant 0 : index
    %27 = vector.load %arg12[%c176, %c0_18] : memref<448x32xf32, #tpu.memory_space<vmem>>, vector<16x32xf32>
    tpu.vector_store %arg12[%c176, %c0_18], %26 {strides = array<i32>} : memref<448x32xf32, #tpu.memory_space<vmem>>, vector<16x32xf32>,
    %28 = vector.extract_strided_slice %13 {offsets = [112, 0], sizes = [16, 32], strides = [1, 1]} : vector<256x32xf32> to vector<16x32xf32>
    %c200 = arith.constant 200 : index
    %c0_19 = arith.constant 0 : index
    %29 = vector.load %arg12[%c200, %c0_19] : memref<448x32xf32, #tpu.memory_space<vmem>>, vector<16x32xf32>
    tpu.vector_store %arg12[%c200, %c0_19], %28 {strides = array<i32>} : memref<448x32xf32, #tpu.memory_space<vmem>>, vector<16x32xf32>,
    %30 = vector.extract_strided_slice %13 {offsets = [128, 0], sizes = [16, 32], strides = [1, 1]} : vector<256x32xf32> to vector<16x32xf32>
    %c224 = arith.constant 224 : index
    %c0_20 = arith.constant 0 : index
    %31 = vector.load %arg12[%c224, %c0_20] : memref<448x32xf32, #tpu.memory_space<vmem>>, vector<16x32xf32>
    tpu.vector_store %arg12[%c224, %c0_20], %30 {strides = array<i32>} : memref<448x32xf32, #tpu.memory_space<vmem>>, vector<16x32xf32>,
    %32 = vector.extract_strided_slice %13 {offsets = [144, 0], sizes = [16, 32], strides = [1, 1]} : vector<256x32xf32> to vector<16x32xf32>
    %c248 = arith.constant 248 : index
    %c0_21 = arith.constant 0 : index
    %33 = vector.load %arg12[%c248, %c0_21] : memref<448x32xf32, #tpu.memory_space<vmem>>, vector<16x32xf32>
    tpu.vector_store %arg12[%c248, %c0_21], %32 {strides = array<i32>} : memref<448x32xf32, #tpu.memory_space<vmem>>, vector<16x32xf32>,
    %34 = vector.extract_strided_slice %13 {offsets = [160, 0], sizes = [16, 32], strides = [1, 1]} : vector<256x32xf32> to vector<16x32xf32>
    %c272 = arith.constant 272 : index
    %c0_22 = arith.constant 0 : index
    %35 = vector.load %arg12[%c272, %c0_22] : memref<448x32xf32, #tpu.memory_space<vmem>>, vector<16x32xf32>
    tpu.vector_store %arg12[%c272, %c0_22], %34 {strides = array<i32>} : memref<448x32xf32, #tpu.memory_space<vmem>>, vector<16x32xf32>,
    %36 = vector.extract_strided_slice %13 {offsets = [176, 0], sizes = [16, 32], strides = [1, 1]} : vector<256x32xf32> to vector<16x32xf32>
    %c296 = arith.constant 296 : index
    %c0_23 = arith.constant 0 : index
    %37 = vector.load %arg12[%c296, %c0_23] : memref<448x32xf32, #tpu.memory_space<vmem>>, vector<16x32xf32>
    tpu.vector_store %arg12[%c296, %c0_23], %36 {strides = array<i32>} : memref<448x32xf32, #tpu.memory_space<vmem>>, vector<16x32xf32>,
    %38 = vector.extract_strided_slice %13 {offsets = [192, 0], sizes = [16, 32], strides = [1, 1]} : vector<256x32xf32> to vector<16x32xf32>
    %c320 = arith.constant 320 : index
    %c0_24 = arith.constant 0 : index
    %39 = vector.load %arg12[%c320, %c0_24] : memref<448x32xf32, #tpu.memory_space<vmem>>, vector<16x32xf32>
    tpu.vector_store %arg12[%c320, %c0_24], %38 {strides = array<i32>} : memref<448x32xf32, #tpu.memory_space<vmem>>, vector<16x32xf32>,
    %40 = vector.extract_strided_slice %13 {offsets = [208, 0], sizes = [16, 32], strides = [1, 1]} : vector<256x32xf32> to vector<16x32xf32>
    %c344 = arith.constant 344 : index
    %c0_25 = arith.constant 0 : index
    %41 = vector.load %arg12[%c344, %c0_25] : memref<448x32xf32, #tpu.memory_space<vmem>>, vector<16x32xf32>
    tpu.vector_store %arg12[%c344, %c0_25], %40 {strides = array<i32>} : memref<448x32xf32, #tpu.memory_space<vmem>>, vector<16x32xf32>,
    %42 = vector.extract_strided_slice %13 {offsets = [224, 0], sizes = [16, 32], strides = [1, 1]} : vector<256x32xf32> to vector<16x32xf32>
    %c368 = arith.constant 368 : index
    %c0_26 = arith.constant 0 : index
    %43 = vector.load %arg12[%c368, %c0_26] : memref<448x32xf32, #tpu.memory_space<vmem>>, vector<16x32xf32>
    tpu.vector_store %arg12[%c368, %c0_26], %42 {strides = array<i32>} : memref<448x32xf32, #tpu.memory_space<vmem>>, vector<16x32xf32>,
    %44 = vector.extract_strided_slice %13 {offsets = [240, 0], sizes = [16, 32], strides = [1, 1]} : vector<256x32xf32> to vector<16x32xf32>
    %c392 = arith.constant 392 : index
    %c0_27 = arith.constant 0 : index
    %45 = vector.load %arg12[%c392, %c0_27] : memref<448x32xf32, #tpu.memory_space<vmem>>, vector<16x32xf32>
    tpu.vector_store %arg12[%c392, %c0_27], %44 {strides = array<i32>} : memref<448x32xf32, #tpu.memory_space<vmem>>, vector<16x32xf32>,
    %cst_28 = arith.constant 0.000000e+00 : f32
    %46 = vector.broadcast %cst_28 : f32 to vector<384x32xf32>
    %c7 = arith.constant 7 : index
    %c0_29 = arith.constant 0 : index
    %47 = vector.load %arg12[%c7, %c0_29] : memref<448x32xf32, #tpu.memory_space<vmem>>, vector<384x32xf32>
    %48 = arith.truncf %47 : vector<384x32xf32> to vector<384x32xbf16>
    %c0_30 = arith.constant 0 : index
    %c0_31 = arith.constant 0 : index
    %c0_32 = arith.constant 0 : index
    %49 = vector.load %arg5[%c0_30, %c0_31, %c0_32] : memref<9x32x32xbf16, #tpu.memory_space<vmem>>, vector<1x32x32xbf16>
    %50 = vector.shape_cast %49 : vector<1x32x32xbf16> to vector<32x32xbf16>
    %cst_33 = arith.constant dense<0.000000e+00> : vector<384x32xf32>
    %51 = tpu.matmul %48, %50, %cst_33 {dimension_numbers = #tpu.dot_dimension_numbers<[1], [0], [0], [1], [0, 0, 1, 1], [], []>} : vector<384x32xbf16>, vector<32x32xbf16>, vector<384x32xf32> -> vector<384x32xf32>
    %52 = arith.addf %46, %51 : vector<384x32xf32>
    %c8 = arith.constant 8 : index
    %c0_34 = arith.constant 0 : index
    %53 = vector.load %arg12[%c8, %c0_34] : memref<448x32xf32, #tpu.memory_space<vmem>>, vector<384x32xf32>
    %54 = arith.truncf %53 : vector<384x32xf32> to vector<384x32xbf16>
    %c1 = arith.constant 1 : index
    %c0_35 = arith.constant 0 : index
    %c0_36 = arith.constant 0 : index
    %55 = vector.load %arg5[%c1, %c0_35, %c0_36] : memref<9x32x32xbf16, #tpu.memory_space<vmem>>, vector<1x32x32xbf16>
    %56 = vector.shape_cast %55 : vector<1x32x32xbf16> to vector<32x32xbf16>
    %cst_37 = arith.constant dense<0.000000e+00> : vector<384x32xf32>
    %57 = tpu.matmul %54, %56, %cst_37 {dimension_numbers = #tpu.dot_dimension_numbers<[1], [0], [0], [1], [0, 0, 1, 1], [], []>} : vector<384x32xbf16>, vector<32x32xbf16>, vector<384x32xf32> -> vector<384x32xf32>
    %58 = arith.addf %52, %57 : vector<384x32xf32>
    %c9 = arith.constant 9 : index
    %c0_38 = arith.constant 0 : index
    %59 = vector.load %arg12[%c9, %c0_38] : memref<448x32xf32, #tpu.memory_space<vmem>>, vector<384x32xf32>
    %60 = arith.truncf %59 : vector<384x32xf32> to vector<384x32xbf16>
    %c2 = arith.constant 2 : index
    %c0_39 = arith.constant 0 : index
    %c0_40 = arith.constant 0 : index
    %61 = vector.load %arg5[%c2, %c0_39, %c0_40] : memref<9x32x32xbf16, #tpu.memory_space<vmem>>, vector<1x32x32xbf16>
    %62 = vector.shape_cast %61 : vector<1x32x32xbf16> to vector<32x32xbf16>
    %cst_41 = arith.constant dense<0.000000e+00> : vector<384x32xf32>
    %63 = tpu.matmul %60, %62, %cst_41 {dimension_numbers = #tpu.dot_dimension_numbers<[1], [0], [0], [1], [0, 0, 1, 1], [], []>} : vector<384x32xbf16>, vector<32x32xbf16>, vector<384x32xf32> -> vector<384x32xf32>
    %64 = arith.addf %58, %63 : vector<384x32xf32>
    %c31 = arith.constant 31 : index
    %c0_42 = arith.constant 0 : index
    %65 = vector.load %arg12[%c31, %c0_42] : memref<448x32xf32, #tpu.memory_space<vmem>>, vector<384x32xf32>
    %66 = arith.truncf %65 : vector<384x32xf32> to vector<384x32xbf16>
    %c3 = arith.constant 3 : index
    %c0_43 = arith.constant 0 : index
    %c0_44 = arith.constant 0 : index
    %67 = vector.load %arg5[%c3, %c0_43, %c0_44] : memref<9x32x32xbf16, #tpu.memory_space<vmem>>, vector<1x32x32xbf16>
    %68 = vector.shape_cast %67 : vector<1x32x32xbf16> to vector<32x32xbf16>
    %cst_45 = arith.constant dense<0.000000e+00> : vector<384x32xf32>
    %69 = tpu.matmul %66, %68, %cst_45 {dimension_numbers = #tpu.dot_dimension_numbers<[1], [0], [0], [1], [0, 0, 1, 1], [], []>} : vector<384x32xbf16>, vector<32x32xbf16>, vector<384x32xf32> -> vector<384x32xf32>
    %70 = arith.addf %64, %69 : vector<384x32xf32>
    %c32_46 = arith.constant 32 : index
    %c0_47 = arith.constant 0 : index
    %71 = vector.load %arg12[%c32_46, %c0_47] : memref<448x32xf32, #tpu.memory_space<vmem>>, vector<384x32xf32>
    %72 = arith.truncf %71 : vector<384x32xf32> to vector<384x32xbf16>
    %c4 = arith.constant 4 : index
    %c0_48 = arith.constant 0 : index
    %c0_49 = arith.constant 0 : index
    %73 = vector.load %arg5[%c4, %c0_48, %c0_49] : memref<9x32x32xbf16, #tpu.memory_space<vmem>>, vector<1x32x32xbf16>
    %74 = vector.shape_cast %73 : vector<1x32x32xbf16> to vector<32x32xbf16>
    %cst_50 = arith.constant dense<0.000000e+00> : vector<384x32xf32>
    %75 = tpu.matmul %72, %74, %cst_50 {dimension_numbers = #tpu.dot_dimension_numbers<[1], [0], [0], [1], [0, 0, 1, 1], [], []>} : vector<384x32xbf16>, vector<32x32xbf16>, vector<384x32xf32> -> vector<384x32xf32>
    %76 = arith.addf %70, %75 : vector<384x32xf32>
    %c33 = arith.constant 33 : index
    %c0_51 = arith.constant 0 : index
    %77 = vector.load %arg12[%c33, %c0_51] : memref<448x32xf32, #tpu.memory_space<vmem>>, vector<384x32xf32>
    %78 = arith.truncf %77 : vector<384x32xf32> to vector<384x32xbf16>
    %c5 = arith.constant 5 : index
    %c0_52 = arith.constant 0 : index
    %c0_53 = arith.constant 0 : index
    %79 = vector.load %arg5[%c5, %c0_52, %c0_53] : memref<9x32x32xbf16, #tpu.memory_space<vmem>>, vector<1x32x32xbf16>
    %80 = vector.shape_cast %79 : vector<1x32x32xbf16> to vector<32x32xbf16>
    %cst_54 = arith.constant dense<0.000000e+00> : vector<384x32xf32>
    %81 = tpu.matmul %78, %80, %cst_54 {dimension_numbers = #tpu.dot_dimension_numbers<[1], [0], [0], [1], [0, 0, 1, 1], [], []>} : vector<384x32xbf16>, vector<32x32xbf16>, vector<384x32xf32> -> vector<384x32xf32>
    %82 = arith.addf %76, %81 : vector<384x32xf32>
    %c55 = arith.constant 55 : index
    %c0_55 = arith.constant 0 : index
    %83 = vector.load %arg12[%c55, %c0_55] : memref<448x32xf32, #tpu.memory_space<vmem>>, vector<384x32xf32>
    %84 = arith.truncf %83 : vector<384x32xf32> to vector<384x32xbf16>
    %c6 = arith.constant 6 : index
    %c0_56 = arith.constant 0 : index
    %c0_57 = arith.constant 0 : index
    %85 = vector.load %arg5[%c6, %c0_56, %c0_57] : memref<9x32x32xbf16, #tpu.memory_space<vmem>>, vector<1x32x32xbf16>
    %86 = vector.shape_cast %85 : vector<1x32x32xbf16> to vector<32x32xbf16>
    %cst_58 = arith.constant dense<0.000000e+00> : vector<384x32xf32>
    %87 = tpu.matmul %84, %86, %cst_58 {dimension_numbers = #tpu.dot_dimension_numbers<[1], [0], [0], [1], [0, 0, 1, 1], [], []>} : vector<384x32xbf16>, vector<32x32xbf16>, vector<384x32xf32> -> vector<384x32xf32>
    %88 = arith.addf %82, %87 : vector<384x32xf32>
    %c56_59 = arith.constant 56 : index
    %c0_60 = arith.constant 0 : index
    %89 = vector.load %arg12[%c56_59, %c0_60] : memref<448x32xf32, #tpu.memory_space<vmem>>, vector<384x32xf32>
    %90 = arith.truncf %89 : vector<384x32xf32> to vector<384x32xbf16>
    %c7_61 = arith.constant 7 : index
    %c0_62 = arith.constant 0 : index
    %c0_63 = arith.constant 0 : index
    %91 = vector.load %arg5[%c7_61, %c0_62, %c0_63] : memref<9x32x32xbf16, #tpu.memory_space<vmem>>, vector<1x32x32xbf16>
    %92 = vector.shape_cast %91 : vector<1x32x32xbf16> to vector<32x32xbf16>
    %cst_64 = arith.constant dense<0.000000e+00> : vector<384x32xf32>
    %93 = tpu.matmul %90, %92, %cst_64 {dimension_numbers = #tpu.dot_dimension_numbers<[1], [0], [0], [1], [0, 0, 1, 1], [], []>} : vector<384x32xbf16>, vector<32x32xbf16>, vector<384x32xf32> -> vector<384x32xf32>
    %94 = arith.addf %88, %93 : vector<384x32xf32>
    %c57 = arith.constant 57 : index
    %c0_65 = arith.constant 0 : index
    %95 = vector.load %arg12[%c57, %c0_65] : memref<448x32xf32, #tpu.memory_space<vmem>>, vector<384x32xf32>
    %96 = arith.truncf %95 : vector<384x32xf32> to vector<384x32xbf16>
    %c8_66 = arith.constant 8 : index
    %c0_67 = arith.constant 0 : index
    %c0_68 = arith.constant 0 : index
    %97 = vector.load %arg5[%c8_66, %c0_67, %c0_68] : memref<9x32x32xbf16, #tpu.memory_space<vmem>>, vector<1x32x32xbf16>
    %98 = vector.shape_cast %97 : vector<1x32x32xbf16> to vector<32x32xbf16>
    %cst_69 = arith.constant dense<0.000000e+00> : vector<384x32xf32>
    %99 = tpu.matmul %96, %98, %cst_69 {dimension_numbers = #tpu.dot_dimension_numbers<[1], [0], [0], [1], [0, 0, 1, 1], [], []>} : vector<384x32xbf16>, vector<32x32xbf16>, vector<384x32xf32> -> vector<384x32xf32>
    %100 = arith.addf %94, %99 : vector<384x32xf32>
    %101 = vector.extract_strided_slice %100 {offsets = [0, 0], sizes = [16, 32], strides = [1, 1]} : vector<384x32xf32> to vector<16x32xf32>
    %102 = vector.extract_strided_slice %100 {offsets = [24, 0], sizes = [16, 32], strides = [1, 1]} : vector<384x32xf32> to vector<16x32xf32>
    %103 = vector.extract_strided_slice %100 {offsets = [48, 0], sizes = [16, 32], strides = [1, 1]} : vector<384x32xf32> to vector<16x32xf32>
    %104 = vector.extract_strided_slice %100 {offsets = [72, 0], sizes = [16, 32], strides = [1, 1]} : vector<384x32xf32> to vector<16x32xf32>
    %105 = vector.extract_strided_slice %100 {offsets = [96, 0], sizes = [16, 32], strides = [1, 1]} : vector<384x32xf32> to vector<16x32xf32>
    %106 = vector.extract_strided_slice %100 {offsets = [120, 0], sizes = [16, 32], strides = [1, 1]} : vector<384x32xf32> to vector<16x32xf32>
    %107 = vector.extract_strided_slice %100 {offsets = [144, 0], sizes = [16, 32], strides = [1, 1]} : vector<384x32xf32> to vector<16x32xf32>
    %108 = vector.extract_strided_slice %100 {offsets = [168, 0], sizes = [16, 32], strides = [1, 1]} : vector<384x32xf32> to vector<16x32xf32>
    %109 = vector.extract_strided_slice %100 {offsets = [192, 0], sizes = [16, 32], strides = [1, 1]} : vector<384x32xf32> to vector<16x32xf32>
    %110 = vector.extract_strided_slice %100 {offsets = [216, 0], sizes = [16, 32], strides = [1, 1]} : vector<384x32xf32> to vector<16x32xf32>
    %111 = vector.extract_strided_slice %100 {offsets = [240, 0], sizes = [16, 32], strides = [1, 1]} : vector<384x32xf32> to vector<16x32xf32>
    %112 = vector.extract_strided_slice %100 {offsets = [264, 0], sizes = [16, 32], strides = [1, 1]} : vector<384x32xf32> to vector<16x32xf32>
    %113 = vector.extract_strided_slice %100 {offsets = [288, 0], sizes = [16, 32], strides = [1, 1]} : vector<384x32xf32> to vector<16x32xf32>
    %114 = vector.extract_strided_slice %100 {offsets = [312, 0], sizes = [16, 32], strides = [1, 1]} : vector<384x32xf32> to vector<16x32xf32>
    %115 = vector.extract_strided_slice %100 {offsets = [336, 0], sizes = [16, 32], strides = [1, 1]} : vector<384x32xf32> to vector<16x32xf32>
    %116 = vector.extract_strided_slice %100 {offsets = [360, 0], sizes = [16, 32], strides = [1, 1]} : vector<384x32xf32> to vector<16x32xf32>
    %117 = tpu.concatenate %101, %102, %103, %104, %105, %106, %107, %108, %109, %110, %111, %112, %113, %114, %115, %116 in 0 : vector<16x32xf32>, vector<16x32xf32>, vector<16x32xf32>, vector<16x32xf32>, vector<16x32xf32>, vector<16x32xf32>, vector<16x32xf32>, vector<16x32xf32>, vector<16x32xf32>, vector<16x32xf32>, vector<16x32xf32>, vector<16x32xf32>, vector<16x32xf32>, vector<16x32xf32>, vector<16x32xf32>, vector<16x32xf32> -> vector<256x32xf32>
    %c0_70 = arith.constant 0 : index
    %c0_71 = arith.constant 0 : index
    %118 = vector.load %arg6[%c0_70, %c0_71] : memref<1x32xf32, #tpu.memory_space<vmem>>, vector<1x32xf32>
    %119 = vector.broadcast %118 : vector<1x32xf32> to vector<256x32xf32>
    %120 = arith.mulf %117, %119 : vector<256x32xf32>
    %c0_72 = arith.constant 0 : index
    %c0_73 = arith.constant 0 : index
    %121 = vector.load %arg7[%c0_72, %c0_73] : memref<1x32xf32, #tpu.memory_space<vmem>>, vector<1x32xf32>
    %122 = vector.broadcast %121 : vector<1x32xf32> to vector<256x32xf32>
    %123 = arith.addf %120, %122 : vector<256x32xf32>
    %cst_74 = arith.constant 0.000000e+00 : f32
    %124 = vector.broadcast %cst_74 : f32 to vector<256x32xf32>
    %125 = arith.maximumf %123, %124 : vector<256x32xf32>
    %126 = arith.truncf %125 : vector<256x32xf32> to vector<256x32xbf16>
    %c0_75 = arith.constant 0 : index
    %c0_76 = arith.constant 0 : index
    %127 = vector.load %arg8[%c0_75, %c0_76] : memref<32x128xbf16, #tpu.memory_space<vmem>>, vector<32x128xbf16>
    %cst_77 = arith.constant dense<0.000000e+00> : vector<256x128xf32>
    %128 = tpu.matmul %126, %127, %cst_77 {dimension_numbers = #tpu.dot_dimension_numbers<[1], [0], [0], [1], [0, 0, 1, 1], [], []>} : vector<256x32xbf16>, vector<32x128xbf16>, vector<256x128xf32> -> vector<256x128xf32>
    %c0_78 = arith.constant 0 : index
    %c0_79 = arith.constant 0 : index
    %129 = vector.load %arg9[%c0_78, %c0_79] : memref<1x128xf32, #tpu.memory_space<vmem>>, vector<1x128xf32>
    %130 = vector.broadcast %129 : vector<1x128xf32> to vector<256x128xf32>
    %131 = arith.mulf %128, %130 : vector<256x128xf32>
    %c0_80 = arith.constant 0 : index
    %c0_81 = arith.constant 0 : index
    %132 = vector.load %arg10[%c0_80, %c0_81] : memref<1x128xf32, #tpu.memory_space<vmem>>, vector<1x128xf32>
    %133 = vector.broadcast %132 : vector<1x128xf32> to vector<256x128xf32>
    %134 = arith.addf %131, %133 : vector<256x128xf32>
    %135 = arith.extf %3 : vector<256x128xbf16> to vector<256x128xf32>
    %136 = arith.addf %134, %135 : vector<256x128xf32>
    %cst_82 = arith.constant 0.000000e+00 : f32
    %137 = vector.broadcast %cst_82 : f32 to vector<256x128xf32>
    %138 = arith.maximumf %136, %137 : vector<256x128xf32>
    %139 = arith.truncf %138 : vector<256x128xf32> to vector<256x128xbf16>
    %c0_83 = arith.constant 0 : index
    %c0_84 = arith.constant 0 : index
    %c0_85 = arith.constant 0 : index
    %140 = vector.load %arg11[%c0_83, %c0_84, %c0_85] : memref<2x256x128xbf16, #tpu.memory_space<vmem>>, vector<1x256x128xbf16>
    %141 = vector.shape_cast %140 : vector<1x256x128xbf16> to vector<256x128xbf16>
    %142 = vector.shape_cast %139 : vector<256x128xbf16> to vector<1x256x128xbf16>
    tpu.vector_store %arg11[%c0_83, %c0_84, %c0_85], %142 {strides = array<i32>} : memref<2x256x128xbf16, #tpu.memory_space<vmem>>, vector<1x256x128xbf16>,
    %c1_86 = arith.constant 1 : index
    %c0_87 = arith.constant 0 : index
    %c0_88 = arith.constant 0 : index
    %143 = vector.load %arg1[%c1_86, %c0_87, %c0_88] : memref<2x256x128xbf16, #tpu.memory_space<vmem>>, vector<1x256x128xbf16>
    %144 = vector.shape_cast %143 : vector<1x256x128xbf16> to vector<256x128xbf16>
    %c0_89 = arith.constant 0 : index
    %c0_90 = arith.constant 0 : index
    %145 = vector.load %arg2[%c0_89, %c0_90] : memref<128x32xbf16, #tpu.memory_space<vmem>>, vector<128x32xbf16>
    %cst_91 = arith.constant dense<0.000000e+00> : vector<256x32xf32>
    %146 = tpu.matmul %144, %145, %cst_91 {dimension_numbers = #tpu.dot_dimension_numbers<[1], [0], [0], [1], [0, 0, 1, 1], [], []>} : vector<256x128xbf16>, vector<128x32xbf16>, vector<256x32xf32> -> vector<256x32xf32>
    %c0_92 = arith.constant 0 : index
    %c0_93 = arith.constant 0 : index
    %147 = vector.load %arg3[%c0_92, %c0_93] : memref<1x32xf32, #tpu.memory_space<vmem>>, vector<1x32xf32>
    %148 = vector.broadcast %147 : vector<1x32xf32> to vector<256x32xf32>
    %149 = arith.mulf %146, %148 : vector<256x32xf32>
    %c0_94 = arith.constant 0 : index
    %c0_95 = arith.constant 0 : index
    %150 = vector.load %arg4[%c0_94, %c0_95] : memref<1x32xf32, #tpu.memory_space<vmem>>, vector<1x32xf32>
    %151 = vector.broadcast %150 : vector<1x32xf32> to vector<256x32xf32>
    %152 = arith.addf %149, %151 : vector<256x32xf32>
    %cst_96 = arith.constant 0.000000e+00 : f32
    %153 = vector.broadcast %cst_96 : f32 to vector<256x32xf32>
    %154 = arith.maximumf %152, %153 : vector<256x32xf32>
    %155 = vector.extract_strided_slice %154 {offsets = [0, 0], sizes = [16, 32], strides = [1, 1]} : vector<256x32xf32> to vector<16x32xf32>
    %c32_97 = arith.constant 32 : index
    %c0_98 = arith.constant 0 : index
    %156 = vector.load %arg12[%c32_97, %c0_98] : memref<448x32xf32, #tpu.memory_space<vmem>>, vector<16x32xf32>
    tpu.vector_store %arg12[%c32_97, %c0_98], %155 {strides = array<i32>} : memref<448x32xf32, #tpu.memory_space<vmem>>, vector<16x32xf32>,
    %157 = vector.extract_strided_slice %154 {offsets = [16, 0], sizes = [16, 32], strides = [1, 1]} : vector<256x32xf32> to vector<16x32xf32>
    %c56_99 = arith.constant 56 : index
    %c0_100 = arith.constant 0 : index
    %158 = vector.load %arg12[%c56_99, %c0_100] : memref<448x32xf32, #tpu.memory_space<vmem>>, vector<16x32xf32>
    tpu.vector_store %arg12[%c56_99, %c0_100], %157 {strides = array<i32>} : memref<448x32xf32, #tpu.memory_space<vmem>>, vector<16x32xf32>,
    %159 = vector.extract_strided_slice %154 {offsets = [32, 0], sizes = [16, 32], strides = [1, 1]} : vector<256x32xf32> to vector<16x32xf32>
    %c80_101 = arith.constant 80 : index
    %c0_102 = arith.constant 0 : index
    %160 = vector.load %arg12[%c80_101, %c0_102] : memref<448x32xf32, #tpu.memory_space<vmem>>, vector<16x32xf32>
    tpu.vector_store %arg12[%c80_101, %c0_102], %159 {strides = array<i32>} : memref<448x32xf32, #tpu.memory_space<vmem>>, vector<16x32xf32>,
    %161 = vector.extract_strided_slice %154 {offsets = [48, 0], sizes = [16, 32], strides = [1, 1]} : vector<256x32xf32> to vector<16x32xf32>
    %c104_103 = arith.constant 104 : index
    %c0_104 = arith.constant 0 : index
    %162 = vector.load %arg12[%c104_103, %c0_104] : memref<448x32xf32, #tpu.memory_space<vmem>>, vector<16x32xf32>
    tpu.vector_store %arg12[%c104_103, %c0_104], %161 {strides = array<i32>} : memref<448x32xf32, #tpu.memory_space<vmem>>, vector<16x32xf32>,
    %163 = vector.extract_strided_slice %154 {offsets = [64, 0], sizes = [16, 32], strides = [1, 1]} : vector<256x32xf32> to vector<16x32xf32>
    %c128_105 = arith.constant 128 : index
    %c0_106 = arith.constant 0 : index
    %164 = vector.load %arg12[%c128_105, %c0_106] : memref<448x32xf32, #tpu.memory_space<vmem>>, vector<16x32xf32>
    tpu.vector_store %arg12[%c128_105, %c0_106], %163 {strides = array<i32>} : memref<448x32xf32, #tpu.memory_space<vmem>>, vector<16x32xf32>,
    %165 = vector.extract_strided_slice %154 {offsets = [80, 0], sizes = [16, 32], strides = [1, 1]} : vector<256x32xf32> to vector<16x32xf32>
    %c152_107 = arith.constant 152 : index
    %c0_108 = arith.constant 0 : index
    %166 = vector.load %arg12[%c152_107, %c0_108] : memref<448x32xf32, #tpu.memory_space<vmem>>, vector<16x32xf32>
    tpu.vector_store %arg12[%c152_107, %c0_108], %165 {strides = array<i32>} : memref<448x32xf32, #tpu.memory_space<vmem>>, vector<16x32xf32>,
    %167 = vector.extract_strided_slice %154 {offsets = [96, 0], sizes = [16, 32], strides = [1, 1]} : vector<256x32xf32> to vector<16x32xf32>
    %c176_109 = arith.constant 176 : index
    %c0_110 = arith.constant 0 : index
    %168 = vector.load %arg12[%c176_109, %c0_110] : memref<448x32xf32, #tpu.memory_space<vmem>>, vector<16x32xf32>
    tpu.vector_store %arg12[%c176_109, %c0_110], %167 {strides = array<i32>} : memref<448x32xf32, #tpu.memory_space<vmem>>, vector<16x32xf32>,
    %169 = vector.extract_strided_slice %154 {offsets = [112, 0], sizes = [16, 32], strides = [1, 1]} : vector<256x32xf32> to vector<16x32xf32>
    %c200_111 = arith.constant 200 : index
    %c0_112 = arith.constant 0 : index
    %170 = vector.load %arg12[%c200_111, %c0_112] : memref<448x32xf32, #tpu.memory_space<vmem>>, vector<16x32xf32>
    tpu.vector_store %arg12[%c200_111, %c0_112], %169 {strides = array<i32>} : memref<448x32xf32, #tpu.memory_space<vmem>>, vector<16x32xf32>,
    %171 = vector.extract_strided_slice %154 {offsets = [128, 0], sizes = [16, 32], strides = [1, 1]} : vector<256x32xf32> to vector<16x32xf32>
    %c224_113 = arith.constant 224 : index
    %c0_114 = arith.constant 0 : index
    %172 = vector.load %arg12[%c224_113, %c0_114] : memref<448x32xf32, #tpu.memory_space<vmem>>, vector<16x32xf32>
    tpu.vector_store %arg12[%c224_113, %c0_114], %171 {strides = array<i32>} : memref<448x32xf32, #tpu.memory_space<vmem>>, vector<16x32xf32>,
    %173 = vector.extract_strided_slice %154 {offsets = [144, 0], sizes = [16, 32], strides = [1, 1]} : vector<256x32xf32> to vector<16x32xf32>
    %c248_115 = arith.constant 248 : index
    %c0_116 = arith.constant 0 : index
    %174 = vector.load %arg12[%c248_115, %c0_116] : memref<448x32xf32, #tpu.memory_space<vmem>>, vector<16x32xf32>
    tpu.vector_store %arg12[%c248_115, %c0_116], %173 {strides = array<i32>} : memref<448x32xf32, #tpu.memory_space<vmem>>, vector<16x32xf32>,
    %175 = vector.extract_strided_slice %154 {offsets = [160, 0], sizes = [16, 32], strides = [1, 1]} : vector<256x32xf32> to vector<16x32xf32>
    %c272_117 = arith.constant 272 : index
    %c0_118 = arith.constant 0 : index
    %176 = vector.load %arg12[%c272_117, %c0_118] : memref<448x32xf32, #tpu.memory_space<vmem>>, vector<16x32xf32>
    tpu.vector_store %arg12[%c272_117, %c0_118], %175 {strides = array<i32>} : memref<448x32xf32, #tpu.memory_space<vmem>>, vector<16x32xf32>,
    %177 = vector.extract_strided_slice %154 {offsets = [176, 0], sizes = [16, 32], strides = [1, 1]} : vector<256x32xf32> to vector<16x32xf32>
    %c296_119 = arith.constant 296 : index
    %c0_120 = arith.constant 0 : index
    %178 = vector.load %arg12[%c296_119, %c0_120] : memref<448x32xf32, #tpu.memory_space<vmem>>, vector<16x32xf32>
    tpu.vector_store %arg12[%c296_119, %c0_120], %177 {strides = array<i32>} : memref<448x32xf32, #tpu.memory_space<vmem>>, vector<16x32xf32>,
    %179 = vector.extract_strided_slice %154 {offsets = [192, 0], sizes = [16, 32], strides = [1, 1]} : vector<256x32xf32> to vector<16x32xf32>
    %c320_121 = arith.constant 320 : index
    %c0_122 = arith.constant 0 : index
    %180 = vector.load %arg12[%c320_121, %c0_122] : memref<448x32xf32, #tpu.memory_space<vmem>>, vector<16x32xf32>
    tpu.vector_store %arg12[%c320_121, %c0_122], %179 {strides = array<i32>} : memref<448x32xf32, #tpu.memory_space<vmem>>, vector<16x32xf32>,
    %181 = vector.extract_strided_slice %154 {offsets = [208, 0], sizes = [16, 32], strides = [1, 1]} : vector<256x32xf32> to vector<16x32xf32>
    %c344_123 = arith.constant 344 : index
    %c0_124 = arith.constant 0 : index
    %182 = vector.load %arg12[%c344_123, %c0_124] : memref<448x32xf32, #tpu.memory_space<vmem>>, vector<16x32xf32>
    tpu.vector_store %arg12[%c344_123, %c0_124], %181 {strides = array<i32>} : memref<448x32xf32, #tpu.memory_space<vmem>>, vector<16x32xf32>,
    %183 = vector.extract_strided_slice %154 {offsets = [224, 0], sizes = [16, 32], strides = [1, 1]} : vector<256x32xf32> to vector<16x32xf32>
    %c368_125 = arith.constant 368 : index
    %c0_126 = arith.constant 0 : index
    %184 = vector.load %arg12[%c368_125, %c0_126] : memref<448x32xf32, #tpu.memory_space<vmem>>, vector<16x32xf32>
    tpu.vector_store %arg12[%c368_125, %c0_126], %183 {strides = array<i32>} : memref<448x32xf32, #tpu.memory_space<vmem>>, vector<16x32xf32>,
    %185 = vector.extract_strided_slice %154 {offsets = [240, 0], sizes = [16, 32], strides = [1, 1]} : vector<256x32xf32> to vector<16x32xf32>
    %c392_127 = arith.constant 392 : index
    %c0_128 = arith.constant 0 : index
    %186 = vector.load %arg12[%c392_127, %c0_128] : memref<448x32xf32, #tpu.memory_space<vmem>>, vector<16x32xf32>
    tpu.vector_store %arg12[%c392_127, %c0_128], %185 {strides = array<i32>} : memref<448x32xf32, #tpu.memory_space<vmem>>, vector<16x32xf32>,
    %cst_129 = arith.constant 0.000000e+00 : f32
    %187 = vector.broadcast %cst_129 : f32 to vector<384x32xf32>
    %c7_130 = arith.constant 7 : index
    %c0_131 = arith.constant 0 : index
    %188 = vector.load %arg12[%c7_130, %c0_131] : memref<448x32xf32, #tpu.memory_space<vmem>>, vector<384x32xf32>
    %189 = arith.truncf %188 : vector<384x32xf32> to vector<384x32xbf16>
    %c0_132 = arith.constant 0 : index
    %c0_133 = arith.constant 0 : index
    %c0_134 = arith.constant 0 : index
    %190 = vector.load %arg5[%c0_132, %c0_133, %c0_134] : memref<9x32x32xbf16, #tpu.memory_space<vmem>>, vector<1x32x32xbf16>
    %191 = vector.shape_cast %190 : vector<1x32x32xbf16> to vector<32x32xbf16>
    %cst_135 = arith.constant dense<0.000000e+00> : vector<384x32xf32>
    %192 = tpu.matmul %189, %191, %cst_135 {dimension_numbers = #tpu.dot_dimension_numbers<[1], [0], [0], [1], [0, 0, 1, 1], [], []>} : vector<384x32xbf16>, vector<32x32xbf16>, vector<384x32xf32> -> vector<384x32xf32>
    %193 = arith.addf %187, %192 : vector<384x32xf32>
    %c8_136 = arith.constant 8 : index
    %c0_137 = arith.constant 0 : index
    %194 = vector.load %arg12[%c8_136, %c0_137] : memref<448x32xf32, #tpu.memory_space<vmem>>, vector<384x32xf32>
    %195 = arith.truncf %194 : vector<384x32xf32> to vector<384x32xbf16>
    %c1_138 = arith.constant 1 : index
    %c0_139 = arith.constant 0 : index
    %c0_140 = arith.constant 0 : index
    %196 = vector.load %arg5[%c1_138, %c0_139, %c0_140] : memref<9x32x32xbf16, #tpu.memory_space<vmem>>, vector<1x32x32xbf16>
    %197 = vector.shape_cast %196 : vector<1x32x32xbf16> to vector<32x32xbf16>
    %cst_141 = arith.constant dense<0.000000e+00> : vector<384x32xf32>
    %198 = tpu.matmul %195, %197, %cst_141 {dimension_numbers = #tpu.dot_dimension_numbers<[1], [0], [0], [1], [0, 0, 1, 1], [], []>} : vector<384x32xbf16>, vector<32x32xbf16>, vector<384x32xf32> -> vector<384x32xf32>
    %199 = arith.addf %193, %198 : vector<384x32xf32>
    %c9_142 = arith.constant 9 : index
    %c0_143 = arith.constant 0 : index
    %200 = vector.load %arg12[%c9_142, %c0_143] : memref<448x32xf32, #tpu.memory_space<vmem>>, vector<384x32xf32>
    %201 = arith.truncf %200 : vector<384x32xf32> to vector<384x32xbf16>
    %c2_144 = arith.constant 2 : index
    %c0_145 = arith.constant 0 : index
    %c0_146 = arith.constant 0 : index
    %202 = vector.load %arg5[%c2_144, %c0_145, %c0_146] : memref<9x32x32xbf16, #tpu.memory_space<vmem>>, vector<1x32x32xbf16>
    %203 = vector.shape_cast %202 : vector<1x32x32xbf16> to vector<32x32xbf16>
    %cst_147 = arith.constant dense<0.000000e+00> : vector<384x32xf32>
    %204 = tpu.matmul %201, %203, %cst_147 {dimension_numbers = #tpu.dot_dimension_numbers<[1], [0], [0], [1], [0, 0, 1, 1], [], []>} : vector<384x32xbf16>, vector<32x32xbf16>, vector<384x32xf32> -> vector<384x32xf32>
    %205 = arith.addf %199, %204 : vector<384x32xf32>
    %c31_148 = arith.constant 31 : index
    %c0_149 = arith.constant 0 : index
    %206 = vector.load %arg12[%c31_148, %c0_149] : memref<448x32xf32, #tpu.memory_space<vmem>>, vector<384x32xf32>
    %207 = arith.truncf %206 : vector<384x32xf32> to vector<384x32xbf16>
    %c3_150 = arith.constant 3 : index
    %c0_151 = arith.constant 0 : index
    %c0_152 = arith.constant 0 : index
    %208 = vector.load %arg5[%c3_150, %c0_151, %c0_152] : memref<9x32x32xbf16, #tpu.memory_space<vmem>>, vector<1x32x32xbf16>
    %209 = vector.shape_cast %208 : vector<1x32x32xbf16> to vector<32x32xbf16>
    %cst_153 = arith.constant dense<0.000000e+00> : vector<384x32xf32>
    %210 = tpu.matmul %207, %209, %cst_153 {dimension_numbers = #tpu.dot_dimension_numbers<[1], [0], [0], [1], [0, 0, 1, 1], [], []>} : vector<384x32xbf16>, vector<32x32xbf16>, vector<384x32xf32> -> vector<384x32xf32>
    %211 = arith.addf %205, %210 : vector<384x32xf32>
    %c32_154 = arith.constant 32 : index
    %c0_155 = arith.constant 0 : index
    %212 = vector.load %arg12[%c32_154, %c0_155] : memref<448x32xf32, #tpu.memory_space<vmem>>, vector<384x32xf32>
    %213 = arith.truncf %212 : vector<384x32xf32> to vector<384x32xbf16>
    %c4_156 = arith.constant 4 : index
    %c0_157 = arith.constant 0 : index
    %c0_158 = arith.constant 0 : index
    %214 = vector.load %arg5[%c4_156, %c0_157, %c0_158] : memref<9x32x32xbf16, #tpu.memory_space<vmem>>, vector<1x32x32xbf16>
    %215 = vector.shape_cast %214 : vector<1x32x32xbf16> to vector<32x32xbf16>
    %cst_159 = arith.constant dense<0.000000e+00> : vector<384x32xf32>
    %216 = tpu.matmul %213, %215, %cst_159 {dimension_numbers = #tpu.dot_dimension_numbers<[1], [0], [0], [1], [0, 0, 1, 1], [], []>} : vector<384x32xbf16>, vector<32x32xbf16>, vector<384x32xf32> -> vector<384x32xf32>
    %217 = arith.addf %211, %216 : vector<384x32xf32>
    %c33_160 = arith.constant 33 : index
    %c0_161 = arith.constant 0 : index
    %218 = vector.load %arg12[%c33_160, %c0_161] : memref<448x32xf32, #tpu.memory_space<vmem>>, vector<384x32xf32>
    %219 = arith.truncf %218 : vector<384x32xf32> to vector<384x32xbf16>
    %c5_162 = arith.constant 5 : index
    %c0_163 = arith.constant 0 : index
    %c0_164 = arith.constant 0 : index
    %220 = vector.load %arg5[%c5_162, %c0_163, %c0_164] : memref<9x32x32xbf16, #tpu.memory_space<vmem>>, vector<1x32x32xbf16>
    %221 = vector.shape_cast %220 : vector<1x32x32xbf16> to vector<32x32xbf16>
    %cst_165 = arith.constant dense<0.000000e+00> : vector<384x32xf32>
    %222 = tpu.matmul %219, %221, %cst_165 {dimension_numbers = #tpu.dot_dimension_numbers<[1], [0], [0], [1], [0, 0, 1, 1], [], []>} : vector<384x32xbf16>, vector<32x32xbf16>, vector<384x32xf32> -> vector<384x32xf32>
    %223 = arith.addf %217, %222 : vector<384x32xf32>
    %c55_166 = arith.constant 55 : index
    %c0_167 = arith.constant 0 : index
    %224 = vector.load %arg12[%c55_166, %c0_167] : memref<448x32xf32, #tpu.memory_space<vmem>>, vector<384x32xf32>
    %225 = arith.truncf %224 : vector<384x32xf32> to vector<384x32xbf16>
    %c6_168 = arith.constant 6 : index
    %c0_169 = arith.constant 0 : index
    %c0_170 = arith.constant 0 : index
    %226 = vector.load %arg5[%c6_168, %c0_169, %c0_170] : memref<9x32x32xbf16, #tpu.memory_space<vmem>>, vector<1x32x32xbf16>
    %227 = vector.shape_cast %226 : vector<1x32x32xbf16> to vector<32x32xbf16>
    %cst_171 = arith.constant dense<0.000000e+00> : vector<384x32xf32>
    %228 = tpu.matmul %225, %227, %cst_171 {dimension_numbers = #tpu.dot_dimension_numbers<[1], [0], [0], [1], [0, 0, 1, 1], [], []>} : vector<384x32xbf16>, vector<32x32xbf16>, vector<384x32xf32> -> vector<384x32xf32>
    %229 = arith.addf %223, %228 : vector<384x32xf32>
    %c56_172 = arith.constant 56 : index
    %c0_173 = arith.constant 0 : index
    %230 = vector.load %arg12[%c56_172, %c0_173] : memref<448x32xf32, #tpu.memory_space<vmem>>, vector<384x32xf32>
    %231 = arith.truncf %230 : vector<384x32xf32> to vector<384x32xbf16>
    %c7_174 = arith.constant 7 : index
    %c0_175 = arith.constant 0 : index
    %c0_176 = arith.constant 0 : index
    %232 = vector.load %arg5[%c7_174, %c0_175, %c0_176] : memref<9x32x32xbf16, #tpu.memory_space<vmem>>, vector<1x32x32xbf16>
    %233 = vector.shape_cast %232 : vector<1x32x32xbf16> to vector<32x32xbf16>
    %cst_177 = arith.constant dense<0.000000e+00> : vector<384x32xf32>
    %234 = tpu.matmul %231, %233, %cst_177 {dimension_numbers = #tpu.dot_dimension_numbers<[1], [0], [0], [1], [0, 0, 1, 1], [], []>} : vector<384x32xbf16>, vector<32x32xbf16>, vector<384x32xf32> -> vector<384x32xf32>
    %235 = arith.addf %229, %234 : vector<384x32xf32>
    %c57_178 = arith.constant 57 : index
    %c0_179 = arith.constant 0 : index
    %236 = vector.load %arg12[%c57_178, %c0_179] : memref<448x32xf32, #tpu.memory_space<vmem>>, vector<384x32xf32>
    %237 = arith.truncf %236 : vector<384x32xf32> to vector<384x32xbf16>
    %c8_180 = arith.constant 8 : index
    %c0_181 = arith.constant 0 : index
    %c0_182 = arith.constant 0 : index
    %238 = vector.load %arg5[%c8_180, %c0_181, %c0_182] : memref<9x32x32xbf16, #tpu.memory_space<vmem>>, vector<1x32x32xbf16>
    %239 = vector.shape_cast %238 : vector<1x32x32xbf16> to vector<32x32xbf16>
    %cst_183 = arith.constant dense<0.000000e+00> : vector<384x32xf32>
    %240 = tpu.matmul %237, %239, %cst_183 {dimension_numbers = #tpu.dot_dimension_numbers<[1], [0], [0], [1], [0, 0, 1, 1], [], []>} : vector<384x32xbf16>, vector<32x32xbf16>, vector<384x32xf32> -> vector<384x32xf32>
    %241 = arith.addf %235, %240 : vector<384x32xf32>
    %242 = vector.extract_strided_slice %241 {offsets = [0, 0], sizes = [16, 32], strides = [1, 1]} : vector<384x32xf32> to vector<16x32xf32>
    %243 = vector.extract_strided_slice %241 {offsets = [24, 0], sizes = [16, 32], strides = [1, 1]} : vector<384x32xf32> to vector<16x32xf32>
    %244 = vector.extract_strided_slice %241 {offsets = [48, 0], sizes = [16, 32], strides = [1, 1]} : vector<384x32xf32> to vector<16x32xf32>
    %245 = vector.extract_strided_slice %241 {offsets = [72, 0], sizes = [16, 32], strides = [1, 1]} : vector<384x32xf32> to vector<16x32xf32>
    %246 = vector.extract_strided_slice %241 {offsets = [96, 0], sizes = [16, 32], strides = [1, 1]} : vector<384x32xf32> to vector<16x32xf32>
    %247 = vector.extract_strided_slice %241 {offsets = [120, 0], sizes = [16, 32], strides = [1, 1]} : vector<384x32xf32> to vector<16x32xf32>
    %248 = vector.extract_strided_slice %241 {offsets = [144, 0], sizes = [16, 32], strides = [1, 1]} : vector<384x32xf32> to vector<16x32xf32>
    %249 = vector.extract_strided_slice %241 {offsets = [168, 0], sizes = [16, 32], strides = [1, 1]} : vector<384x32xf32> to vector<16x32xf32>
    %250 = vector.extract_strided_slice %241 {offsets = [192, 0], sizes = [16, 32], strides = [1, 1]} : vector<384x32xf32> to vector<16x32xf32>
    %251 = vector.extract_strided_slice %241 {offsets = [216, 0], sizes = [16, 32], strides = [1, 1]} : vector<384x32xf32> to vector<16x32xf32>
    %252 = vector.extract_strided_slice %241 {offsets = [240, 0], sizes = [16, 32], strides = [1, 1]} : vector<384x32xf32> to vector<16x32xf32>
    %253 = vector.extract_strided_slice %241 {offsets = [264, 0], sizes = [16, 32], strides = [1, 1]} : vector<384x32xf32> to vector<16x32xf32>
    %254 = vector.extract_strided_slice %241 {offsets = [288, 0], sizes = [16, 32], strides = [1, 1]} : vector<384x32xf32> to vector<16x32xf32>
    %255 = vector.extract_strided_slice %241 {offsets = [312, 0], sizes = [16, 32], strides = [1, 1]} : vector<384x32xf32> to vector<16x32xf32>
    %256 = vector.extract_strided_slice %241 {offsets = [336, 0], sizes = [16, 32], strides = [1, 1]} : vector<384x32xf32> to vector<16x32xf32>
    %257 = vector.extract_strided_slice %241 {offsets = [360, 0], sizes = [16, 32], strides = [1, 1]} : vector<384x32xf32> to vector<16x32xf32>
    %258 = tpu.concatenate %242, %243, %244, %245, %246, %247, %248, %249, %250, %251, %252, %253, %254, %255, %256, %257 in 0 : vector<16x32xf32>, vector<16x32xf32>, vector<16x32xf32>, vector<16x32xf32>, vector<16x32xf32>, vector<16x32xf32>, vector<16x32xf32>, vector<16x32xf32>, vector<16x32xf32>, vector<16x32xf32>, vector<16x32xf32>, vector<16x32xf32>, vector<16x32xf32>, vector<16x32xf32>, vector<16x32xf32>, vector<16x32xf32> -> vector<256x32xf32>
    %c0_184 = arith.constant 0 : index
    %c0_185 = arith.constant 0 : index
    %259 = vector.load %arg6[%c0_184, %c0_185] : memref<1x32xf32, #tpu.memory_space<vmem>>, vector<1x32xf32>
    %260 = vector.broadcast %259 : vector<1x32xf32> to vector<256x32xf32>
    %261 = arith.mulf %258, %260 : vector<256x32xf32>
    %c0_186 = arith.constant 0 : index
    %c0_187 = arith.constant 0 : index
    %262 = vector.load %arg7[%c0_186, %c0_187] : memref<1x32xf32, #tpu.memory_space<vmem>>, vector<1x32xf32>
    %263 = vector.broadcast %262 : vector<1x32xf32> to vector<256x32xf32>
    %264 = arith.addf %261, %263 : vector<256x32xf32>
    %cst_188 = arith.constant 0.000000e+00 : f32
    %265 = vector.broadcast %cst_188 : f32 to vector<256x32xf32>
    %266 = arith.maximumf %264, %265 : vector<256x32xf32>
    %267 = arith.truncf %266 : vector<256x32xf32> to vector<256x32xbf16>
    %c0_189 = arith.constant 0 : index
    %c0_190 = arith.constant 0 : index
    %268 = vector.load %arg8[%c0_189, %c0_190] : memref<32x128xbf16, #tpu.memory_space<vmem>>, vector<32x128xbf16>
    %cst_191 = arith.constant dense<0.000000e+00> : vector<256x128xf32>
    %269 = tpu.matmul %267, %268, %cst_191 {dimension_numbers = #tpu.dot_dimension_numbers<[1], [0], [0], [1], [0, 0, 1, 1], [], []>} : vector<256x32xbf16>, vector<32x128xbf16>, vector<256x128xf32> -> vector<256x128xf32>
    %c0_192 = arith.constant 0 : index
    %c0_193 = arith.constant 0 : index
    %270 = vector.load %arg9[%c0_192, %c0_193] : memref<1x128xf32, #tpu.memory_space<vmem>>, vector<1x128xf32>
    %271 = vector.broadcast %270 : vector<1x128xf32> to vector<256x128xf32>
    %272 = arith.mulf %269, %271 : vector<256x128xf32>
    %c0_194 = arith.constant 0 : index
    %c0_195 = arith.constant 0 : index
    %273 = vector.load %arg10[%c0_194, %c0_195] : memref<1x128xf32, #tpu.memory_space<vmem>>, vector<1x128xf32>
    %274 = vector.broadcast %273 : vector<1x128xf32> to vector<256x128xf32>
    %275 = arith.addf %272, %274 : vector<256x128xf32>
    %276 = arith.extf %144 : vector<256x128xbf16> to vector<256x128xf32>
    %277 = arith.addf %275, %276 : vector<256x128xf32>
    %cst_196 = arith.constant 0.000000e+00 : f32
    %278 = vector.broadcast %cst_196 : f32 to vector<256x128xf32>
    %279 = arith.maximumf %277, %278 : vector<256x128xf32>
    %280 = arith.truncf %279 : vector<256x128xf32> to vector<256x128xbf16>
    %c1_197 = arith.constant 1 : index
    %c0_198 = arith.constant 0 : index
    %c0_199 = arith.constant 0 : index
    %281 = vector.load %arg11[%c1_197, %c0_198, %c0_199] : memref<2x256x128xbf16, #tpu.memory_space<vmem>>, vector<1x256x128xbf16>
    %282 = vector.shape_cast %281 : vector<1x256x128xbf16> to vector<256x128xbf16>
    %283 = vector.shape_cast %280 : vector<256x128xbf16> to vector<1x256x128xbf16>
    tpu.vector_store %arg11[%c1_197, %c0_198, %c0_199], %283 {strides = array<i32>} : memref<2x256x128xbf16, #tpu.memory_space<vmem>>, vector<1x256x128xbf16>,
    return
  }
  func.func @transform_0(%arg0: i32) -> (i32, i32, i32) {
    %c0_i32 = arith.constant 0 : i32
    %c0_i32_0 = arith.constant 0 : i32
    %c0_i32_1 = arith.constant 0 : i32
    return %arg0, %c0_i32, %c0_i32_0 : i32, i32, i32
  }
  func.func @transform_1(%arg0: i32) -> (i32, i32) {
    %c0_i32 = arith.constant 0 : i32
    %c0_i32_0 = arith.constant 0 : i32
    %c0_i32_1 = arith.constant 0 : i32
    return %c0_i32, %c0_i32_0 : i32, i32
  }
  func.func @transform_2(%arg0: i32) -> (i32, i32) {
    %c0_i32 = arith.constant 0 : i32
    %c0_i32_0 = arith.constant 0 : i32
    %c0_i32_1 = arith.constant 0 : i32
    return %c0_i32, %c0_i32_0 : i32, i32
  }
  func.func @transform_3(%arg0: i32) -> (i32, i32) {
    %c0_i32 = arith.constant 0 : i32
    %c0_i32_0 = arith.constant 0 : i32
    %c0_i32_1 = arith.constant 0 : i32
    return %c0_i32, %c0_i32_0 : i32, i32
  }
  func.func @transform_4(%arg0: i32) -> (i32, i32, i32) {
    %c0_i32 = arith.constant 0 : i32
    %c0_i32_0 = arith.constant 0 : i32
    %c0_i32_1 = arith.constant 0 : i32
    %c0_i32_2 = arith.constant 0 : i32
    return %c0_i32, %c0_i32_0, %c0_i32_1 : i32, i32, i32
  }
  func.func @transform_5(%arg0: i32) -> (i32, i32) {
    %c0_i32 = arith.constant 0 : i32
    %c0_i32_0 = arith.constant 0 : i32
    %c0_i32_1 = arith.constant 0 : i32
    return %c0_i32, %c0_i32_0 : i32, i32
  }
  func.func @transform_6(%arg0: i32) -> (i32, i32) {
    %c0_i32 = arith.constant 0 : i32
    %c0_i32_0 = arith.constant 0 : i32
    %c0_i32_1 = arith.constant 0 : i32
    return %c0_i32, %c0_i32_0 : i32, i32
  }
  func.func @transform_7(%arg0: i32) -> (i32, i32) {
    %c0_i32 = arith.constant 0 : i32
    %c0_i32_0 = arith.constant 0 : i32
    %c0_i32_1 = arith.constant 0 : i32
    return %c0_i32, %c0_i32_0 : i32, i32
  }
  func.func @transform_8(%arg0: i32) -> (i32, i32) {
    %c0_i32 = arith.constant 0 : i32
    %c0_i32_0 = arith.constant 0 : i32
    %c0_i32_1 = arith.constant 0 : i32
    return %c0_i32, %c0_i32_0 : i32, i32
  }
  func.func @transform_9(%arg0: i32) -> (i32, i32) {
    %c0_i32 = arith.constant 0 : i32
    %c0_i32_0 = arith.constant 0 : i32
    %c0_i32_1 = arith.constant 0 : i32
    return %c0_i32, %c0_i32_0 : i32, i32
  }
  func.func @transform_10(%arg0: i32) -> (i32, i32, i32) {
    %c0_i32 = arith.constant 0 : i32
    %c0_i32_0 = arith.constant 0 : i32
    %c0_i32_1 = arith.constant 0 : i32
    return %arg0, %c0_i32, %c0_i32_0 : i32, i32, i32
  }
}

</mosaic_0001>

<llo_original>
// kernel: tpu_custom_call.1
$region0: #{tpu_custom_call.1}
  #allocation0 [shape = 'u32[]', space=smem, size = 0x4, offset = 0x4, fixed_abs, tag = 'smem constant byte address 0x4 - core index']
  #allocation1 [shape = 'u32[144,128]{1,0:T(1,128)}', space=vmem, size = 0x12000, scoped, tag = 'internal scratch']
  #allocation2 [shape = 'f32[448,32]{1,0:T(8,128)}', space=vmem, size = 0x38000, scoped, tag = 'scratch operand']
  %s0 = inlined_call_operand.hbm [shape: bf16[2,256,128], index: 0, kind: input, shape index: {}]
  %s1 = inlined_call_operand.vmem [shape: bf16[128,32], index: 1, kind: input, shape index: {}]
  %s2 = inlined_call_operand.vmem [shape: f32[1,32], index: 2, kind: input, shape index: {}]
  %s3 = inlined_call_operand.vmem [shape: f32[1,32], index: 3, kind: input, shape index: {}]
  %s4 = inlined_call_operand.hbm [shape: bf16[9,32,32], index: 4, kind: input, shape index: {}]
  %s5 = inlined_call_operand.vmem [shape: f32[1,32], index: 5, kind: input, shape index: {}]
  %s6 = inlined_call_operand.vmem [shape: f32[1,32], index: 6, kind: input, shape index: {}]
  %s7 = inlined_call_operand.vmem [shape: bf16[32,128], index: 7, kind: input, shape index: {}]
  %s8 = inlined_call_operand.vmem [shape: f32[1,128], index: 8, kind: input, shape index: {}]
  %s9 = inlined_call_operand.vmem [shape: f32[1,128], index: 9, kind: input, shape index: {}]
  %s10 = inlined_call_operand.hbm [shape: bf16[2,256,128], index: 10, kind: output, shape index: {}]
  %s11 = sld [smem:[#allocation0]]
  $region58: #{tpu_custom_call.1} parent=0
    _
  %s13 = ssub.s32 1, %s11
  %s14 = scalar_select 0, %s13, %s11
  $region1: #{tpu_custom_call.1} parent=0
    #allocation3 [shape = 'u8[131072]{0}', space=vmem, size = 0x20000, scoped, tag = 'input window, operand 0, single buffered']
    #allocation4 [shape = 's32[1]{0}', space=sflag, size = 0x4, scoped, tag = 'scoped memory for tpu_custom_call.1']
    #allocation5 [shape = 's32[1]{0}', space=sflag, size = 0x4, scoped, tag = 'scoped memory for tpu_custom_call.1']
    #allocation6 [shape = 'u8[73728]{0}', space=vmem, size = 0x12000, scoped, tag = 'input window, operand 4, single buffered']
    #allocation7 [shape = 's32[1]{0}', space=sflag, size = 0x4, scoped, tag = 'scoped memory for tpu_custom_call.1']
    #allocation8 [shape = 'u8[131072]{0}', space=vmem, size = 0x20000, scoped, tag = 'output window, operand 0, single buffered']
    %15 = vsyncpa [#allocation4], 0
    %16 = vsyncpa [#allocation7], 0
    %17 = vsyncpa [#allocation5], 0
    // Predicated region
    $region2: #{tpu_custom_call.1} parent=1 // pred_check
      _
    $region3: #{tpu_custom_call.1} parent=1 // pred_check_branch
      %19 = sbr.rel (0) target = $region5
    $region4: #{tpu_custom_call.1} parent=1 // pred_region
      %s21 = ssub.s32 4096, 4096
      %22 = vsyncadd [#allocation4], %s21
      %s23 = sshll.u32 [#allocation3], 4
      %s24 = int_to_ptr.vmem [resolvable:$true] %s23
      %29 = dma.hbm_to_vmem [thread:$0]  %s0, 4096, %s24, [#allocation4], 64, 64, 4
    $region5: #{tpu_custom_call.1} parent=1 // pred_fallthru
      _
    // Predicated region
    $region6: #{tpu_custom_call.1} parent=1 // pred_check
      _
    $region7: #{tpu_custom_call.1} parent=1 // pred_check_branch
      %31 = sbr.rel (0) target = $region9
    $region8: #{tpu_custom_call.1} parent=1 // pred_region
      _
    $region9: #{tpu_custom_call.1} parent=1 // pred_fallthru
      _
    // Predicated region
    $region10: #{tpu_custom_call.1} parent=1 // pred_check
      _
    $region11: #{tpu_custom_call.1} parent=1 // pred_check_branch
      %33 = sbr.rel (0) target = $region13
    $region12: #{tpu_custom_call.1} parent=1 // pred_region
      _
    $region13: #{tpu_custom_call.1} parent=1 // pred_fallthru
      _
    // Predicated region
    $region14: #{tpu_custom_call.1} parent=1 // pred_check
      _
    $region15: #{tpu_custom_call.1} parent=1 // pred_check_branch
      %35 = sbr.rel (0) target = $region17
    $region16: #{tpu_custom_call.1} parent=1 // pred_region
      _
    $region17: #{tpu_custom_call.1} parent=1 // pred_fallthru
      _
    // Predicated region
    $region18: #{tpu_custom_call.1} parent=1 // pred_check
      _
    $region19: #{tpu_custom_call.1} parent=1 // pred_check_branch
      %37 = sbr.rel (0) target = $region21
    $region20: #{tpu_custom_call.1} parent=1 // pred_region
      %s39 = ssub.s32 2304, 2304
      %40 = vsyncadd [#allocation7], %s39
      %s41 = sshll.u32 [#allocation6], 4
      %s42 = int_to_ptr.vmem [resolvable:$true] %s41
      %47 = dma.hbm_to_vmem [thread:$0]  %s4, 2304, %s42, [#allocation7], 64, 64, 4
    $region21: #{tpu_custom_call.1} parent=1 // pred_fallthru
      _
    // Predicated region
    $region22: #{tpu_custom_call.1} parent=1 // pred_check
      _
    $region23: #{tpu_custom_call.1} parent=1 // pred_check_branch
      %49 = sbr.rel (0) target = $region25
    $region24: #{tpu_custom_call.1} parent=1 // pred_region
      _
    $region25: #{tpu_custom_call.1} parent=1 // pred_fallthru
      _
    // Predicated region
    $region26: #{tpu_custom_call.1} parent=1 // pred_check
      _
    $region27: #{tpu_custom_call.1} parent=1 // pred_check_branch
      %51 = sbr.rel (0) target = $region29
    $region28: #{tpu_custom_call.1} parent=1 // pred_region
      _
    $region29: #{tpu_custom_call.1} parent=1 // pred_fallthru
      _
    // Predicated region
    $region30: #{tpu_custom_call.1} parent=1 // pred_check
      _
    $region31: #{tpu_custom_call.1} parent=1 // pred_check_branch
      %53 = sbr.rel (0) target = $region33
    $region32: #{tpu_custom_call.1} parent=1 // pred_region
      _
    $region33: #{tpu_custom_call.1} parent=1 // pred_fallthru
      _
    // Predicated region
    $region34: #{tpu_custom_call.1} parent=1 // pred_check
      _
    $region35: #{tpu_custom_call.1} parent=1 // pred_check_branch
      %55 = sbr.rel (0) target = $region37
    $region36: #{tpu_custom_call.1} parent=1 // pred_region
      _
    $region37: #{tpu_custom_call.1} parent=1 // pred_fallthru
      _
    // Predicated region
    $region38: #{tpu_custom_call.1} parent=1 // pred_check
      _
    $region39: #{tpu_custom_call.1} parent=1 // pred_check_branch
      %57 = sbr.rel (0) target = $region41
    $region40: #{tpu_custom_call.1} parent=1 // pred_region
      _
    $region41: #{tpu_custom_call.1} parent=1 // pred_fallthru
      _
    // Predicated region
    $region42: #{tpu_custom_call.1} parent=1 // pred_check
      _
    $region43: #{tpu_custom_call.1} parent=1 // pred_check_branch
      %59 = sbr.rel (0) target = $region45
    $region44: #{tpu_custom_call.1} parent=1 // pred_region
      %60 = dma.done [#allocation4], 4096
    $region45: #{tpu_custom_call.1} parent=1 // pred_fallthru
      _
    // Predicated region
    $region46: #{tpu_custom_call.1} parent=1 // pred_check
      _
    $region47: #{tpu_custom_call.1} parent=1 // pred_check_branch
      %62 = sbr.rel (0) target = $region49
    $region48: #{tpu_custom_call.1} parent=1 // pred_region
      %63 = dma.done [#allocation7], 2304
    $region49: #{tpu_custom_call.1} parent=1 // pred_fallthru
      _
    %vm65 = vcmask 261120
    %66 = vst.msk [vmem:[#allocation2] sm:$0xff] %vm65, 0.0
    %67 = vst.msk [vmem:[#allocation2 + $0x8] sm:$0xff] %vm65, 0.0
    %68 = vst.msk [vmem:[#allocation2 + $0x10] sm:$0xff] %vm65, 0.0
    %69 = vst.msk [vmem:[#allocation2 + $0x18] sm:$0xff] %vm65, 0.0
    %70 = vst.msk [vmem:[#allocation2 + $0x20] sm:$0xff] %vm65, 0.0
    %71 = vst.msk [vmem:[#allocation2 + $0x28] sm:$0xff] %vm65, 0.0
    %72 = vst.msk [vmem:[#allocation2 + $0x30] sm:$0xff] %vm65, 0.0
    %73 = vst.msk [vmem:[#allocation2 + $0x38] sm:$0xff] %vm65, 0.0
    %74 = vst.msk [vmem:[#allocation2 + $0x40] sm:$0xff] %vm65, 0.0
    %75 = vst.msk [vmem:[#allocation2 + $0x48] sm:$0xff] %vm65, 0.0
    %76 = vst.msk [vmem:[#allocation2 + $0x50] sm:$0xff] %vm65, 0.0
    %77 = vst.msk [vmem:[#allocation2 + $0x58] sm:$0xff] %vm65, 0.0
    %78 = vst.msk [vmem:[#allocation2 + $0x60] sm:$0xff] %vm65, 0.0
    %79 = vst.msk [vmem:[#allocation2 + $0x68] sm:$0xff] %vm65, 0.0
    %80 = vst.msk [vmem:[#allocation2 + $0x70] sm:$0xff] %vm65, 0.0
    %81 = vst.msk [vmem:[#allocation2 + $0x78] sm:$0xff] %vm65, 0.0
    %82 = vst.msk [vmem:[#allocation2 + $0x80] sm:$0xff] %vm65, 0.0
    %83 = vst.msk [vmem:[#allocation2 + $0x88] sm:$0xff] %vm65, 0.0
    %84 = vst.msk [vmem:[#allocation2 + $0x90] sm:$0xff] %vm65, 0.0
    %85 = vst.msk [vmem:[#allocation2 + $0x98] sm:$0xff] %vm65, 0.0
    %86 = vst.msk [vmem:[#allocation2 + $0xa0] sm:$0xff] %vm65, 0.0
    %87 = vst.msk [vmem:[#allocation2 + $0xa8] sm:$0xff] %vm65, 0.0
    %88 = vst.msk [vmem:[#allocation2 + $0xb0] sm:$0xff] %vm65, 0.0
    %89 = vst.msk [vmem:[#allocation2 + $0xb8] sm:$0xff] %vm65, 0.0
    %90 = vst.msk [vmem:[#allocation2 + $0xc0] sm:$0xff] %vm65, 0.0
    %91 = vst.msk [vmem:[#allocation2 + $0xc8] sm:$0xff] %vm65, 0.0
    %92 = vst.msk [vmem:[#allocation2 + $0xd0] sm:$0xff] %vm65, 0.0
    %93 = vst.msk [vmem:[#allocation2 + $0xd8] sm:$0xff] %vm65, 0.0
    %94 = vst.msk [vmem:[#allocation2 + $0xe0] sm:$0xff] %vm65, 0.0
    %95 = vst.msk [vmem:[#allocation2 + $0xe8] sm:$0xff] %vm65, 0.0
    %96 = vst.msk [vmem:[#allocation2 + $0xf0] sm:$0xff] %vm65, 0.0
    %97 = vst.msk [vmem:[#allocation2 + $0xf8] sm:$0xff] %vm65, 0.0
    %98 = vst.msk [vmem:[#allocation2 + $0x100] sm:$0xff] %vm65, 0.0
    %99 = vst.msk [vmem:[#allocation2 + $0x108] sm:$0xff] %vm65, 0.0
    %100 = vst.msk [vmem:[#allocation2 + $0x110] sm:$0xff] %vm65, 0.0
    %101 = vst.msk [vmem:[#allocation2 + $0x118] sm:$0xff] %vm65, 0.0
    %102 = vst.msk [vmem:[#allocation2 + $0x120] sm:$0xff] %vm65, 0.0
    %103 = vst.msk [vmem:[#allocation2 + $0x128] sm:$0xff] %vm65, 0.0
    %104 = vst.msk [vmem:[#allocation2 + $0x130] sm:$0xff] %vm65, 0.0
    %105 = vst.msk [vmem:[#allocation2 + $0x138] sm:$0xff] %vm65, 0.0
    %106 = vst.msk [vmem:[#allocation2 + $0x140] sm:$0xff] %vm65, 0.0
    %107 = vst.msk [vmem:[#allocation2 + $0x148] sm:$0xff] %vm65, 0.0
    %108 = vst.msk [vmem:[#allocation2 + $0x150] sm:$0xff] %vm65, 0.0
    %109 = vst.msk [vmem:[#allocation2 + $0x158] sm:$0xff] %vm65, 0.0
    %110 = vst.msk [vmem:[#allocation2 + $0x160] sm:$0xff] %vm65, 0.0
    %111 = vst.msk [vmem:[#allocation2 + $0x168] sm:$0xff] %vm65, 0.0
    %112 = vst.msk [vmem:[#allocation2 + $0x170] sm:$0xff] %vm65, 0.0
    %113 = vst.msk [vmem:[#allocation2 + $0x178] sm:$0xff] %vm65, 0.0
    %114 = vst.msk [vmem:[#allocation2 + $0x180] sm:$0xff] %vm65, 0.0
    %115 = vst.msk [vmem:[#allocation2 + $0x188] sm:$0xff] %vm65, 0.0
    %116 = vst.msk [vmem:[#allocation2 + $0x190] sm:$0xff] %vm65, 0.0
    %117 = vst.msk [vmem:[#allocation2 + $0x198] sm:$0xff] %vm65, 0.0
    %118 = vst.msk [vmem:[#allocation2 + $0x1a0] sm:$0xff] %vm65, 0.0
    %119 = vst.msk [vmem:[#allocation2 + $0x1a8] sm:$0xff] %vm65, 0.0
    %120 = vst.msk [vmem:[#allocation2 + $0x1b0] sm:$0xff] %vm65, 0.0
    %121 = vst.msk [vmem:[#allocation2 + $0x1b8] sm:$0xff] %vm65, 0.0
    %v122 = vld [vmem:[#allocation3] sm:$0xf]
    %v123 = vld [vmem:[#allocation3 + $0x4] sm:$0xf]
    %v124 = vld [vmem:[#allocation3 + $0x8] sm:$0xf]
    %v125 = vld [vmem:[#allocation3 + $0xc] sm:$0xf]
    %v126 = vld [vmem:[#allocation3 + $0x10] sm:$0xf]
    %v127 = vld [vmem:[#allocation3 + $0x14] sm:$0xf]
    %v128 = vld [vmem:[#allocation3 + $0x18] sm:$0xf]
    %v129 = vld [vmem:[#allocation3 + $0x1c] sm:$0xf]
    %v130 = vld [vmem:[#allocation3 + $0x20] sm:$0xf]
    %v131 = vld [vmem:[#allocation3 + $0x24] sm:$0xf]
    %v132 = vld [vmem:[#allocation3 + $0x28] sm:$0xf]
    %v133 = vld [vmem:[#allocation3 + $0x2c] sm:$0xf]
    %v134 = vld [vmem:[#allocation3 + $0x30] sm:$0xf]
    %v135 = vld [vmem:[#allocation3 + $0x34] sm:$0xf]
    %v136 = vld [vmem:[#allocation3 + $0x38] sm:$0xf]
    %v137 = vld [vmem:[#allocation3 + $0x3c] sm:$0xf]
    %v138 = vld [vmem:[#allocation3 + $0x40] sm:$0xf]
    %v139 = vld [vmem:[#allocation3 + $0x44] sm:$0xf]
    %v140 = vld [vmem:[#allocation3 + $0x48] sm:$0xf]
    %v141 = vld [vmem:[#allocation3 + $0x4c] sm:$0xf]
    %v142 = vld [vmem:[#allocation3 + $0x50] sm:$0xf]
    %v143 = vld [vmem:[#allocation3 + $0x54] sm:$0xf]
    %v144 = vld [vmem:[#allocation3 + $0x58] sm:$0xf]
    %v145 = vld [vmem:[#allocation3 + $0x5c] sm:$0xf]
    %v146 = vld [vmem:[#allocation3 + $0x60] sm:$0xf]
    %v147 = vld [vmem:[#allocation3 + $0x64] sm:$0xf]
    %v148 = vld [vmem:[#allocation3 + $0x68] sm:$0xf]
    %v149 = vld [vmem:[#allocation3 + $0x6c] sm:$0xf]
    %v150 = vld [vmem:[#allocation3 + $0x70] sm:$0xf]
    %v151 = vld [vmem:[#allocation3 + $0x74] sm:$0xf]
    %v152 = vld [vmem:[#allocation3 + $0x78] sm:$0xf]
    %v153 = vld [vmem:[#allocation3 + $0x7c] sm:$0xf]
    %v154 = vld [vmem:[%s1] sm:$0xf]
    %v155 = vld [vmem:[%s1 + $0x4] sm:$0xf]
    %v156 = vld [vmem:[%s1 + $0x8] sm:$0xf]
    %v157 = vld [vmem:[%s1 + $0xc] sm:$0xf]
    %v158 = vld [vmem:[%s1 + $0x10] sm:$0xf]
    %v159 = vld [vmem:[%s1 + $0x14] sm:$0xf]
    %v160 = vld [vmem:[%s1 + $0x18] sm:$0xf]
    %v161 = vld [vmem:[%s1 + $0x1c] sm:$0xf]
    %v162 = vld [vmem:[%s1 + $0x20] sm:$0xf]
    %v163 = vld [vmem:[%s1 + $0x24] sm:$0xf]
    %v164 = vld [vmem:[%s1 + $0x28] sm:$0xf]
    %v165 = vld [vmem:[%s1 + $0x2c] sm:$0xf]
    %v166 = vld [vmem:[%s1 + $0x30] sm:$0xf]
    %v167 = vld [vmem:[%s1 + $0x34] sm:$0xf]
    %v168 = vld [vmem:[%s1 + $0x38] sm:$0xf]
    %v169 = vld [vmem:[%s1 + $0x3c] sm:$0xf]
    %v202 = vunpack.c.l.b16 %v122
    %v203 = vunpack.c.l.b16 %v123
    %v204 = vunpack.c.l.b16 %v124
    %v205 = vunpack.c.l.b16 %v125
    %v206 = vunpack.c.l.b16 %v126
    %v207 = vunpack.c.l.b16 %v127
    %v208 = vunpack.c.l.b16 %v128
    %v209 = vunpack.c.l.b16 %v129
    %v210 = vunpack.c.l.b16 %v130
    %v211 = vunpack.c.l.b16 %v131
    %v212 = vunpack.c.l.b16 %v132
    %v213 = vunpack.c.l.b16 %v133
    %v214 = vunpack.c.l.b16 %v134
    %v215 = vunpack.c.l.b16 %v135
    %v216 = vunpack.c.l.b16 %v136
    %v217 = vunpack.c.l.b16 %v137
    %v218 = vunpack.c.l.b16 %v138
    %v219 = vunpack.c.l.b16 %v139
    %v220 = vunpack.c.l.b16 %v140
    %v221 = vunpack.c.l.b16 %v141
    %v222 = vunpack.c.l.b16 %v142
    %v223 = vunpack.c.l.b16 %v143
    %v224 = vunpack.c.l.b16 %v144
    %v225 = vunpack.c.l.b16 %v145
    %v226 = vunpack.c.l.b16 %v146
    %v227 = vunpack.c.l.b16 %v147
    %v228 = vunpack.c.l.b16 %v148
    %v229 = vunpack.c.l.b16 %v149
    %v230 = vunpack.c.l.b16 %v150
    %v231 = vunpack.c.l.b16 %v151
    %v232 = vunpack.c.l.b16 %v152
    %v233 = vunpack.c.l.b16 %v153
    %v234 = vpack.c.b16 %v203, %v202
    %v235 = vpack.c.b16 %v205, %v204
    %v236 = vpack.c.b16 %v207, %v206
    %v237 = vpack.c.b16 %v209, %v208
    %v238 = vpack.c.b16 %v211, %v210
    %v239 = vpack.c.b16 %v213, %v212
    %v240 = vpack.c.b16 %v215, %v214
    %v241 = vpack.c.b16 %v217, %v216
    %v242 = vpack.c.b16 %v219, %v218
    %v243 = vpack.c.b16 %v221, %v220
    %v244 = vpack.c.b16 %v223, %v222
    %v245 = vpack.c.b16 %v225, %v224
    %v246 = vpack.c.b16 %v227, %v226
    %v247 = vpack.c.b16 %v229, %v228
    %v248 = vpack.c.b16 %v231, %v230
    %v249 = vpack.c.b16 %v233, %v232
    %v282 = vunpack.c.l.b16 %v154
    %v283 = vunpack.c.l.b16 %v155
    %v284 = vunpack.c.l.b16 %v156
    %v285 = vunpack.c.l.b16 %v157
    %v286 = vunpack.c.l.b16 %v158
    %v287 = vunpack.c.l.b16 %v159
    %v288 = vunpack.c.l.b16 %v160
    %v289 = vunpack.c.l.b16 %v161
    %v290 = vunpack.c.l.b16 %v162
    %v291 = vunpack.c.l.b16 %v163
    %v292 = vunpack.c.l.b16 %v164
    %v293 = vunpack.c.l.b16 %v165
    %v294 = vunpack.c.l.b16 %v166
    %v295 = vunpack.c.l.b16 %v167
    %v296 = vunpack.c.l.b16 %v168
    %v297 = vunpack.c.l.b16 %v169
    %v298 = vpack.c.b16 %v283, %v282
    %v299 = vpack.c.b16 %v285, %v284
    %v300 = vpack.c.b16 %v287, %v286
    %v301 = vpack.c.b16 %v289, %v288
    %v302 = vpack.c.b16 %v291, %v290
    %v303 = vpack.c.b16 %v293, %v292
    %v304 = vpack.c.b16 %v295, %v294
    %v305 = vpack.c.b16 %v297, %v296
    %314 = vmatprep.subr.bf16.mxu0 0
    %315 = vmatpush1.bf16.msra.mxu0 %v298
    %316 = vmatprep.subr.bf16.mxu0 0
    %317 = vmatpush1.bf16.msra.mxu0 %v299
    %318 = vmatprep.subr.bf16.mxu0 0
    %319 = vmatpush1.bf16.msra.mxu0 %v300
    %320 = vmatprep.subr.bf16.mxu0 0
    %321 = vmatpush1.bf16.msra.mxu0 %v301
    %322 = vmatprep.subr.bf16.mxu0 0
    %323 = vmatpush1.bf16.msra.mxu0 %v302
    %324 = vmatprep.subr.bf16.mxu0 0
    %325 = vmatpush1.bf16.msra.mxu0 %v303
    %326 = vmatprep.subr.bf16.mxu0 0
    %327 = vmatpush1.bf16.msra.mxu0 %v304
    %328 = vmatprep.subr.bf16.mxu0 0
    %329 = vmatpush1.bf16.msra.mxu0 %v305
    %330 = vmatprep.subr.bf16.mxu0 0
    %331 = vmatpush1.bf16.msra.mxu0 0
    %332 = vmatprep.subr.bf16.mxu0 0
    %333 = vmatpush1.bf16.msra.mxu0 0
    %334 = vmatprep.subr.bf16.mxu0 0
    %335 = vmatpush1.bf16.msra.mxu0 0
    %336 = vmatprep.subr.bf16.mxu0 0
    %337 = vmatpush1.bf16.msra.mxu0 0
    %338 = vmatprep.subr.bf16.mxu0 0
    %339 = vmatpush1.bf16.msra.mxu0 0
    %340 = vmatprep.subr.bf16.mxu0 0
    %341 = vmatpush1.bf16.msra.mxu0 0
    %342 = vmatprep.subr.bf16.mxu0 0
    %343 = vmatpush1.bf16.msra.mxu0 0
    %344 = vmatprep.subr.bf16.mxu0 0
    %345 = vmatpush1.bf16.msra.mxu0 0
    %346 = vmatprep.mubr.bf16.mxu0 0
    %347 = vmatmul.mubr.bf16.gmra.mrb[0].mxu0 %v234
    %v348 = vpop.f32.mrb[0].mxu0
    %v349 = vadd.f32 0.0, %v348
    %v350 = vpop.f32.mrb[0].mxu0
    %v351 = vpop.f32.mrb[0].mxu0
    %v352 = vadd.f32 0.0, %v351
    %v353 = vpop.f32.mrb[0].mxu0
    %354 = vmatprep.mubr.bf16.mxu0 0
    %355 = vmatmul.mubr.bf16.gmra.mrb[0].mxu0 %v235
    %v356 = vpop.f32.mrb[0].mxu0
    %v357 = vadd.f32 0.0, %v356
    %v358 = vpop.f32.mrb[0].mxu0
    %v359 = vpop.f32.mrb[0].mxu0
    %v360 = vadd.f32 0.0, %v359
    %v361 = vpop.f32.mrb[0].mxu0
    %362 = vmatprep.mubr.bf16.mxu0 0
    %363 = vmatmul.mubr.bf16.gmra.mrb[0].mxu0 %v236
    %v364 = vpop.f32.mrb[0].mxu0
    %v365 = vadd.f32 0.0, %v364
    %v366 = vpop.f32.mrb[0].mxu0
    %v367 = vpop.f32.mrb[0].mxu0
    %v368 = vadd.f32 0.0, %v367
    %v369 = vpop.f32.mrb[0].mxu0
    %370 = vmatprep.mubr.bf16.mxu0 0
    %371 = vmatmul.mubr.bf16.gmra.mrb[0].mxu0 %v237
    %v372 = vpop.f32.mrb[0].mxu0
    %v373 = vadd.f32 0.0, %v372
    %v374 = vpop.f32.mrb[0].mxu0
    %v375 = vpop.f32.mrb[0].mxu0
    %v376 = vadd.f32 0.0, %v375
    %v377 = vpop.f32.mrb[0].mxu0
    %378 = vmatprep.mubr.bf16.mxu0 0
    %379 = vmatmul.mubr.bf16.gmra.mrb[0].mxu0 %v238
    %v380 = vpop.f32.mrb[0].mxu0
    %v381 = vadd.f32 0.0, %v380
    %v382 = vpop.f32.mrb[0].mxu0
    %v383 = vpop.f32.mrb[0].mxu0
    %v384 = vadd.f32 0.0, %v383
    %v385 = vpop.f32.mrb[0].mxu0
    %386 = vmatprep.mubr.bf16.mxu0 0
    %387 = vmatmul.mubr.bf16.gmra.mrb[0].mxu0 %v239
    %v388 = vpop.f32.mrb[0].mxu0
    %v389 = vadd.f32 0.0, %v388
    %v390 = vpop.f32.mrb[0].mxu0
    %v391 = vpop.f32.mrb[0].mxu0
    %v392 = vadd.f32 0.0, %v391
    %v393 = vpop.f32.mrb[0].mxu0
    %394 = vmatprep.mubr.bf16.mxu0 0
    %395 = vmatmul.mubr.bf16.gmra.mrb[0].mxu0 %v240
    %v396 = vpop.f32.mrb[0].mxu0
    %v397 = vadd.f32 0.0, %v396
    %v398 = vpop.f32.mrb[0].mxu0
    %v399 = vpop.f32.mrb[0].mxu0
    %v400 = vadd.f32 0.0, %v399
    %v401 = vpop.f32.mrb[0].mxu0
    %402 = vmatprep.mubr.bf16.mxu0 0
    %403 = vmatmul.mubr.bf16.gmra.mrb[0].mxu0 %v241
    %v404 = vpop.f32.mrb[0].mxu0
    %v405 = vadd.f32 0.0, %v404
    %v406 = vpop.f32.mrb[0].mxu0
    %v407 = vpop.f32.mrb[0].mxu0
    %v408 = vadd.f32 0.0, %v407
    %v409 = vpop.f32.mrb[0].mxu0
    %410 = vmatprep.mubr.bf16.mxu0 0
    %411 = vmatmul.mubr.bf16.gmra.mrb[0].mxu0 %v242
    %v412 = vpop.f32.mrb[0].mxu0
    %v413 = vadd.f32 0.0, %v412
    %v414 = vpop.f32.mrb[0].mxu0
    %v415 = vpop.f32.mrb[0].mxu0
    %v416 = vadd.f32 0.0, %v415
    %v417 = vpop.f32.mrb[0].mxu0
    %418 = vmatprep.mubr.bf16.mxu0 0
    %419 = vmatmul.mubr.bf16.gmra.mrb[0].mxu0 %v243
    %v420 = vpop.f32.mrb[0].mxu0
    %v421 = vadd.f32 0.0, %v420
    %v422 = vpop.f32.mrb[0].mxu0
    %v423 = vpop.f32.mrb[0].mxu0
    %v424 = vadd.f32 0.0, %v423
    %v425 = vpop.f32.mrb[0].mxu0
    %426 = vmatprep.mubr.bf16.mxu0 0
    %427 = vmatmul.mubr.bf16.gmra.mrb[0].mxu0 %v244
    %v428 = vpop.f32.mrb[0].mxu0
    %v429 = vadd.f32 0.0, %v428
    %v430 = vpop.f32.mrb[0].mxu0
    %v431 = vpop.f32.mrb[0].mxu0
    %v432 = vadd.f32 0.0, %v431
    %v433 = vpop.f32.mrb[0].mxu0
    %434 = vmatprep.mubr.bf16.mxu0 0
    %435 = vmatmul.mubr.bf16.gmra.mrb[0].mxu0 %v245
    %v436 = vpop.f32.mrb[0].mxu0
    %v437 = vadd.f32 0.0, %v436
    %v438 = vpop.f32.mrb[0].mxu0
    %v439 = vpop.f32.mrb[0].mxu0
    %v440 = vadd.f32 0.0, %v439
    %v441 = vpop.f32.mrb[0].mxu0
    %442 = vmatprep.mubr.bf16.mxu0 0
    %443 = vmatmul.mubr.bf16.gmra.mrb[0].mxu0 %v246
    %v444 = vpop.f32.mrb[0].mxu0
    %v445 = vadd.f32 0.0, %v444
    %v446 = vpop.f32.mrb[0].mxu0
    %v447 = vpop.f32.mrb[0].mxu0
    %v448 = vadd.f32 0.0, %v447
    %v449 = vpop.f32.mrb[0].mxu0
    %450 = vmatprep.mubr.bf16.mxu0 0
    %451 = vmatmul.mubr.bf16.gmra.mrb[0].mxu0 %v247
    %v452 = vpop.f32.mrb[0].mxu0
    %v453 = vadd.f32 0.0, %v452
    %v454 = vpop.f32.mrb[0].mxu0
    %v455 = vpop.f32.mrb[0].mxu0
    %v456 = vadd.f32 0.0, %v455
    %v457 = vpop.f32.mrb[0].mxu0
    %458 = vmatprep.mubr.bf16.mxu0 0
    %459 = vmatmul.mubr.bf16.gmra.mrb[0].mxu0 %v248
    %v460 = vpop.f32.mrb[0].mxu0
    %v461 = vadd.f32 0.0, %v460
    %v462 = vpop.f32.mrb[0].mxu0
    %v463 = vpop.f32.mrb[0].mxu0
    %v464 = vadd.f32 0.0, %v463
    %v465 = vpop.f32.mrb[0].mxu0
    %466 = vmatprep.mubr.bf16.mxu0 0
    %467 = vmatmul.mubr.bf16.gmra.mrb[0].mxu0 %v249
    %v468 = vpop.f32.mrb[0].mxu0
    %v469 = vadd.f32 0.0, %v468
    %v470 = vpop.f32.mrb[0].mxu0
    %v471 = vpop.f32.mrb[0].mxu0
    %v472 = vadd.f32 0.0, %v471
    %v473 = vpop.f32.mrb[0].mxu0
    %474 = vdwg.mxu0
    %v475 = vld [vmem:[%s2] sm:$0x1]
    %v477 = vlaneseq
    %v478 = vshrl.u32 %v477, 7
    %v479 = vsub.s32 0, %v478
    %v480 = vrot.slane %v475, %v479
    %v482 = vmul.f32 %v349, %v480
    %v483 = vmul.f32 %v352, %v480
    %v484 = vmul.f32 %v357, %v480
    %v485 = vmul.f32 %v360, %v480
    %v486 = vmul.f32 %v365, %v480
    %v487 = vmul.f32 %v368, %v480
    %v488 = vmul.f32 %v373, %v480
    %v489 = vmul.f32 %v376, %v480
    %v490 = vmul.f32 %v381, %v480
    %v491 = vmul.f32 %v384, %v480
    %v492 = vmul.f32 %v389, %v480
    %v493 = vmul.f32 %v392, %v480
    %v494 = vmul.f32 %v397, %v480
    %v495 = vmul.f32 %v400, %v480
    %v496 = vmul.f32 %v405, %v480
    %v497 = vmul.f32 %v408, %v480
    %v498 = vmul.f32 %v413, %v480
    %v499 = vmul.f32 %v416, %v480
    %v500 = vmul.f32 %v421, %v480
    %v501 = vmul.f32 %v424, %v480
    %v502 = vmul.f32 %v429, %v480
    %v503 = vmul.f32 %v432, %v480
    %v504 = vmul.f32 %v437, %v480
    %v505 = vmul.f32 %v440, %v480
    %v506 = vmul.f32 %v445, %v480
    %v507 = vmul.f32 %v448, %v480
    %v508 = vmul.f32 %v453, %v480
    %v509 = vmul.f32 %v456, %v480
    %v510 = vmul.f32 %v461, %v480
    %v511 = vmul.f32 %v464, %v480
    %v512 = vmul.f32 %v469, %v480
    %v513 = vmul.f32 %v472, %v480
    %v514 = vld [vmem:[%s3] sm:$0x1]
    %v516 = vlaneseq
    %v517 = vshrl.u32 %v516, 7
    %v518 = vsub.s32 0, %v517
    %v519 = vrot.slane %v514, %v518
    %v521 = vadd.f32 %v482, %v519
    %v522 = vadd.f32 %v483, %v519
    %v523 = vadd.f32 %v484, %v519
    %v524 = vadd.f32 %v485, %v519
    %v525 = vadd.f32 %v486, %v519
    %v526 = vadd.f32 %v487, %v519
    %v527 = vadd.f32 %v488, %v519
    %v528 = vadd.f32 %v489, %v519
    %v529 = vadd.f32 %v490, %v519
    %v530 = vadd.f32 %v491, %v519
    %v531 = vadd.f32 %v492, %v519
    %v532 = vadd.f32 %v493, %v519
    %v533 = vadd.f32 %v494, %v519
    %v534 = vadd.f32 %v495, %v519
    %v535 = vadd.f32 %v496, %v519
    %v536 = vadd.f32 %v497, %v519
    %v537 = vadd.f32 %v498, %v519
    %v538 = vadd.f32 %v499, %v519
    %v539 = vadd.f32 %v500, %v519
    %v540 = vadd.f32 %v501, %v519
    %v541 = vadd.f32 %v502, %v519
    %v542 = vadd.f32 %v503, %v519
    %v543 = vadd.f32 %v504, %v519
    %v544 = vadd.f32 %v505, %v519
    %v545 = vadd.f32 %v506, %v519
    %v546 = vadd.f32 %v507, %v519
    %v547 = vadd.f32 %v508, %v519
    %v548 = vadd.f32 %v509, %v519
    %v549 = vadd.f32 %v510, %v519
    %v550 = vadd.f32 %v511, %v519
    %v551 = vadd.f32 %v512, %v519
    %v552 = vadd.f32 %v513, %v519
    %v553 = vmax.f32 %v521, 0.0
    %v554 = vmax.f32 %v522, 0.0
    %v555 = vmax.f32 %v523, 0.0
    %v556 = vmax.f32 %v524, 0.0
    %v557 = vmax.f32 %v525, 0.0
    %v558 = vmax.f32 %v526, 0.0
    %v559 = vmax.f32 %v527, 0.0
    %v560 = vmax.f32 %v528, 0.0
    %v561 = vmax.f32 %v529, 0.0
    %v562 = vmax.f32 %v530, 0.0
    %v563 = vmax.f32 %v531, 0.0
    %v564 = vmax.f32 %v532, 0.0
    %v565 = vmax.f32 %v533, 0.0
    %v566 = vmax.f32 %v534, 0.0
    %v567 = vmax.f32 %v535, 0.0
    %v568 = vmax.f32 %v536, 0.0
    %v569 = vmax.f32 %v537, 0.0
    %v570 = vmax.f32 %v538, 0.0
    %v571 = vmax.f32 %v539, 0.0
    %v572 = vmax.f32 %v540, 0.0
    %v573 = vmax.f32 %v541, 0.0
    %v574 = vmax.f32 %v542, 0.0
    %v575 = vmax.f32 %v543, 0.0
    %v576 = vmax.f32 %v544, 0.0
    %v577 = vmax.f32 %v545, 0.0
    %v578 = vmax.f32 %v546, 0.0
    %v579 = vmax.f32 %v547, 0.0
    %v580 = vmax.f32 %v548, 0.0
    %v581 = vmax.f32 %v549, 0.0
    %v582 = vmax.f32 %v550, 0.0
    %v583 = vmax.f32 %v551, 0.0
    %v584 = vmax.f32 %v552, 0.0
    %585 = vst.msk [vmem:[#allocation2 + $0x20] sm:$0xff] %vm65, %v553
    %586 = vst.msk [vmem:[#allocation2 + $0x28] sm:$0xff] %vm65, %v554
    %587 = vst.msk [vmem:[#allocation2 + $0x38] sm:$0xff] %vm65, %v555
    %588 = vst.msk [vmem:[#allocation2 + $0x40] sm:$0xff] %vm65, %v556
    %589 = vst.msk [vmem:[#allocation2 + $0x50] sm:$0xff] %vm65, %v557
    %590 = vst.msk [vmem:[#allocation2 + $0x58] sm:$0xff] %vm65, %v558
    %591 = vst.msk [vmem:[#allocation2 + $0x68] sm:$0xff] %vm65, %v559
    %592 = vst.msk [vmem:[#allocation2 + $0x70] sm:$0xff] %vm65, %v560
    %593 = vst.msk [vmem:[#allocation2 + $0x80] sm:$0xff] %vm65, %v561
    %594 = vst.msk [vmem:[#allocation2 + $0x88] sm:$0xff] %vm65, %v562
    %595 = vst.msk [vmem:[#allocation2 + $0x98] sm:$0xff] %vm65, %v563
    %596 = vst.msk [vmem:[#allocation2 + $0xa0] sm:$0xff] %vm65, %v564
    %597 = vst.msk [vmem:[#allocation2 + $0xb0] sm:$0xff] %vm65, %v565
    %598 = vst.msk [vmem:[#allocation2 + $0xb8] sm:$0xff] %vm65, %v566
    %599 = vst.msk [vmem:[#allocation2 + $0xc8] sm:$0xff] %vm65, %v567
    %600 = vst.msk [vmem:[#allocation2 + $0xd0] sm:$0xff] %vm65, %v568
    %601 = vst.msk [vmem:[#allocation2 + $0xe0] sm:$0xff] %vm65, %v569
    %602 = vst.msk [vmem:[#allocation2 + $0xe8] sm:$0xff] %vm65, %v570
    %603 = vst.msk [vmem:[#allocation2 + $0xf8] sm:$0xff] %vm65, %v571
    %604 = vst.msk [vmem:[#allocation2 + $0x100] sm:$0xff] %vm65, %v572
    %605 = vst.msk [vmem:[#allocation2 + $0x110] sm:$0xff] %vm65, %v573
    %606 = vst.msk [vmem:[#allocation2 + $0x118] sm:$0xff] %vm65, %v574
    %607 = vst.msk [vmem:[#allocation2 + $0x128] sm:$0xff] %vm65, %v575
    %608 = vst.msk [vmem:[#allocation2 + $0x130] sm:$0xff] %vm65, %v576
    %609 = vst.msk [vmem:[#allocation2 + $0x140] sm:$0xff] %vm65, %v577
    %610 = vst.msk [vmem:[#allocation2 + $0x148] sm:$0xff] %vm65, %v578
    %611 = vst.msk [vmem:[#allocation2 + $0x158] sm:$0xff] %vm65, %v579
    %612 = vst.msk [vmem:[#allocation2 + $0x160] sm:$0xff] %vm65, %v580
    %613 = vst.msk [vmem:[#allocation2 + $0x170] sm:$0xff] %vm65, %v581
    %614 = vst.msk [vmem:[#allocation2 + $0x178] sm:$0xff] %vm65, %v582
    %615 = vst.msk [vmem:[#allocation2 + $0x188] sm:$0xff] %vm65, %v583
    %616 = vst.msk [vmem:[#allocation2 + $0x190] sm:$0xff] %vm65, %v584
    %v617 = vld [vmem:[#allocation2 + $0x7] sm:$0xff]
    %v618 = vld [vmem:[#allocation2 + $0xf] sm:$0xff]
    %v619 = vld [vmem:[#allocation2 + $0x17] sm:$0xff]
    %v620 = vld [vmem:[#allocation2 + $0x1f] sm:$0xff]
    %v621 = vld [vmem:[#allocation2 + $0x27] sm:$0xff]
    %v622 = vld [vmem:[#allocation2 + $0x2f] sm:$0xff]
    %v623 = vld [vmem:[#allocation2 + $0x37] sm:$0xff]
    %v624 = vld [vmem:[#allocation2 + $0x3f] sm:$0xff]
    %v625 = vld [vmem:[#allocation2 + $0x47] sm:$0xff]
    %v626 = vld [vmem:[#allocation2 + $0x4f] sm:$0xff]
    %v627 = vld [vmem:[#allocation2 + $0x57] sm:$0xff]
    %v628 = vld [vmem:[#allocation2 + $0x5f] sm:$0xff]
    %v629 = vld [vmem:[#allocation2 + $0x67] sm:$0xff]
    %v630 = vld [vmem:[#allocation2 + $0x6f] sm:$0xff]
    %v631 = vld [vmem:[#allocation2 + $0x77] sm:$0xff]
    %v632 = vld [vmem:[#allocation2 + $0x7f] sm:$0xff]
    %v633 = vld [vmem:[#allocation2 + $0x87] sm:$0xff]
    %v634 = vld [vmem:[#allocation2 + $0x8f] sm:$0xff]
    %v635 = vld [vmem:[#allocation2 + $0x97] sm:$0xff]
    %v636 = vld [vmem:[#allocation2 + $0x9f] sm:$0xff]
    %v637 = vld [vmem:[#allocation2 + $0xa7] sm:$0xff]
    %v638 = vld [vmem:[#allocation2 + $0xaf] sm:$0xff]
    %v639 = vld [vmem:[#allocation2 + $0xb7] sm:$0xff]
    %v640 = vld [vmem:[#allocation2 + $0xbf] sm:$0xff]
    %v641 = vld [vmem:[#allocation2 + $0xc7] sm:$0xff]
    %v642 = vld [vmem:[#allocation2 + $0xcf] sm:$0xff]
    %v643 = vld [vmem:[#allocation2 + $0xd7] sm:$0xff]
    %v644 = vld [vmem:[#allocation2 + $0xdf] sm:$0xff]
    %v645 = vld [vmem:[#allocation2 + $0xe7] sm:$0xff]
    %v646 = vld [vmem:[#allocation2 + $0xef] sm:$0xff]
    %v647 = vld [vmem:[#allocation2 + $0xf7] sm:$0xff]
    %v648 = vld [vmem:[#allocation2 + $0xff] sm:$0xff]
    %v649 = vld [vmem:[#allocation2 + $0x107] sm:$0xff]
    %v650 = vld [vmem:[#allocation2 + $0x10f] sm:$0xff]
    %v651 = vld [vmem:[#allocation2 + $0x117] sm:$0xff]
    %v652 = vld [vmem:[#allocation2 + $0x11f] sm:$0xff]
    %v653 = vld [vmem:[#allocation2 + $0x127] sm:$0xff]
    %v654 = vld [vmem:[#allocation2 + $0x12f] sm:$0xff]
    %v655 = vld [vmem:[#allocation2 + $0x137] sm:$0xff]
    %v656 = vld [vmem:[#allocation2 + $0x13f] sm:$0xff]
    %v657 = vld [vmem:[#allocation2 + $0x147] sm:$0xff]
    %v658 = vld [vmem:[#allocation2 + $0x14f] sm:$0xff]
    %v659 = vld [vmem:[#allocation2 + $0x157] sm:$0xff]
    %v660 = vld [vmem:[#allocation2 + $0x15f] sm:$0xff]
    %v661 = vld [vmem:[#allocation2 + $0x167] sm:$0xff]
    %v662 = vld [vmem:[#allocation2 + $0x16f] sm:$0xff]
    %v663 = vld [vmem:[#allocation2 + $0x177] sm:$0xff]
    %v664 = vld [vmem:[#allocation2 + $0x17f] sm:$0xff]
    %v665 = vpack.c.bf16 %v618, %v617
    %v666 = vpack.c.bf16 %v620, %v619
    %v667 = vpack.c.bf16 %v622, %v621
    %v668 = vpack.c.bf16 %v624, %v623
    %v669 = vpack.c.bf16 %v626, %v625
    %v670 = vpack.c.bf16 %v628, %v627
    %v671 = vpack.c.bf16 %v630, %v629
    %v672 = vpack.c.bf16 %v632, %v631
    %v673 = vpack.c.bf16 %v634, %v633
    %v674 = vpack.c.bf16 %v636, %v635
    %v675 = vpack.c.bf16 %v638, %v637
    %v676 = vpack.c.bf16 %v640, %v639
    %v677 = vpack.c.bf16 %v642, %v641
    %v678 = vpack.c.bf16 %v644, %v643
    %v679 = vpack.c.bf16 %v646, %v645
    %v680 = vpack.c.bf16 %v648, %v647
    %v681 = vpack.c.bf16 %v650, %v649
    %v682 = vpack.c.bf16 %v652, %v651
    %v683 = vpack.c.bf16 %v654, %v653
    %v684 = vpack.c.bf16 %v656, %v655
    %v685 = vpack.c.bf16 %v658, %v657
    %v686 = vpack.c.bf16 %v660, %v659
    %v687 = vpack.c.bf16 %v662, %v661
    %v688 = vpack.c.bf16 %v664, %v663
    %v689 = vld [vmem:[#allocation6] sm:$0xf]
    %v690 = vld [vmem:[#allocation6 + $0x4] sm:$0xf]
    %v691 = vld [vmem:[#allocation6 + $0x8] sm:$0xf]
    %v692 = vld [vmem:[#allocation6 + $0xc] sm:$0xf]
    %v693 = vld [vmem:[#allocation2 + $0x8] sm:$0xff]
    %v694 = vld [vmem:[#allocation2 + $0x10] sm:$0xff]
    %v695 = vld [vmem:[#allocation2 + $0x18] sm:$0xff]
    %v696 = vld [vmem:[#allocation2 + $0x20] sm:$0xff]
    %v697 = vld [vmem:[#allocation2 + $0x28] sm:$0xff]
    %v698 = vld [vmem:[#allocation2 + $0x30] sm:$0xff]
    %v699 = vld [vmem:[#allocation2 + $0x38] sm:$0xff]
    %v700 = vld [vmem:[#allocation2 + $0x40] sm:$0xff]
    %v701 = vld [vmem:[#allocation2 + $0x48] sm:$0xff]
    %v702 = vld [vmem:[#allocation2 + $0x50] sm:$0xff]
    %v703 = vld [vmem:[#allocation2 + $0x58] sm:$0xff]
    %v704 = vld [vmem:[#allocation2 + $0x60] sm:$0xff]
    %v705 = vld [vmem:[#allocation2 + $0x68] sm:$0xff]
    %v706 = vld [vmem:[#allocation2 + $0x70] sm:$0xff]
    %v707 = vld [vmem:[#allocation2 + $0x78] sm:$0xff]
    %v708 = vld [vmem:[#allocation2 + $0x80] sm:$0xff]
    %v709 = vld [vmem:[#allocation2 + $0x88] sm:$0xff]
    %v710 = vld [vmem:[#allocation2 + $0x90] sm:$0xff]
    %v711 = vld [vmem:[#allocation2 + $0x98] sm:$0xff]
    %v712 = vld [vmem:[#allocation2 + $0xa0] sm:$0xff]
    %v713 = vld [vmem:[#allocation2 + $0xa8] sm:$0xff]
    %v714 = vld [vmem:[#allocation2 + $0xb0] sm:$0xff]
    %v715 = vld [vmem:[#allocation2 + $0xb8] sm:$0xff]
    %v716 = vld [vmem:[#allocation2 + $0xc0] sm:$0xff]
    %v717 = vld [vmem:[#allocation2 + $0xc8] sm:$0xff]
    %v718 = vld [vmem:[#allocation2 + $0xd0] sm:$0xff]
    %v719 = vld [vmem:[#allocation2 + $0xd8] sm:$0xff]
    %v720 = vld [vmem:[#allocation2 + $0xe0] sm:$0xff]
    %v721 = vld [vmem:[#allocation2 + $0xe8] sm:$0xff]
    %v722 = vld [vmem:[#allocation2 + $0xf0] sm:$0xff]
    %v723 = vld [vmem:[#allocation2 + $0xf8] sm:$0xff]
    %v724 = vld [vmem:[#allocation2 + $0x100] sm:$0xff]
    %v725 = vld [vmem:[#allocation2 + $0x108] sm:$0xff]
    %v726 = vld [vmem:[#allocation2 + $0x110] sm:$0xff]
    %v727 = vld [vmem:[#allocation2 + $0x118] sm:$0xff]
    %v728 = vld [vmem:[#allocation2 + $0x120] sm:$0xff]
    %v729 = vld [vmem:[#allocation2 + $0x128] sm:$0xff]
    %v730 = vld [vmem:[#allocation2 + $0x130] sm:$0xff]
    %v731 = vld [vmem:[#allocation2 + $0x138] sm:$0xff]
    %v732 = vld [vmem:[#allocation2 + $0x140] sm:$0xff]
    %v733 = vld [vmem:[#allocation2 + $0x148] sm:$0xff]
    %v734 = vld [vmem:[#allocation2 + $0x150] sm:$0xff]
    %v735 = vld [vmem:[#allocation2 + $0x158] sm:$0xff]
    %v736 = vld [vmem:[#allocation2 + $0x160] sm:$0xff]
    %v737 = vld [vmem:[#allocation2 + $0x168] sm:$0xff]
    %v738 = vld [vmem:[#allocation2 + $0x170] sm:$0xff]
    %v739 = vld [vmem:[#allocation2 + $0x178] sm:$0xff]
    %v740 = vld [vmem:[#allocation2 + $0x180] sm:$0xff]
    %v741 = vpack.c.bf16 %v694, %v693
    %v742 = vpack.c.bf16 %v696, %v695
    %v743 = vpack.c.bf16 %v698, %v697
    %v744 = vpack.c.bf16 %v700, %v699
    %v745 = vpack.c.bf16 %v702, %v701
    %v746 = vpack.c.bf16 %v704, %v703
    %v747 = vpack.c.bf16 %v706, %v705
    %v748 = vpack.c.bf16 %v708, %v707
    %v749 = vpack.c.bf16 %v710, %v709
    %v750 = vpack.c.bf16 %v712, %v711
    %v751 = vpack.c.bf16 %v714, %v713
    %v752 = vpack.c.bf16 %v716, %v715
    %v753 = vpack.c.bf16 %v718, %v717
    %v754 = vpack.c.bf16 %v720, %v719
    %v755 = vpack.c.bf16 %v722, %v721
    %v756 = vpack.c.bf16 %v724, %v723
    %v757 = vpack.c.bf16 %v726, %v725
    %v758 = vpack.c.bf16 %v728, %v727
    %v759 = vpack.c.bf16 %v730, %v729
    %v760 = vpack.c.bf16 %v732, %v731
    %v761 = vpack.c.bf16 %v734, %v733
    %v762 = vpack.c.bf16 %v736, %v735
    %v763 = vpack.c.bf16 %v738, %v737
    %v764 = vpack.c.bf16 %v740, %v739
    %s765 = scalar_lea.vmem [#allocation6], 16
    %v766 = vld [vmem:[%s765] sm:$0xf]
    %v767 = vld [vmem:[%s765 + $0x4] sm:$0xf]
    %v768 = vld [vmem:[%s765 + $0x8] sm:$0xf]
    %v769 = vld [vmem:[%s765 + $0xc] sm:$0xf]
    %v774 = vunpack.c.l.b16 %v766
    %v775 = vunpack.c.l.b16 %v767
    %v776 = vunpack.c.l.b16 %v768
    %v777 = vunpack.c.l.b16 %v769
    %v778 = vpack.c.b16 %v775, %v774
    %v779 = vpack.c.b16 %v777, %v776
    %v783 = vsel %vm65, %v741, 0
    %v786 = vsel %vm65, %v742, 0
    %v789 = vsel %vm65, %v743, 0
    %v792 = vsel %vm65, %v744, 0
    %v795 = vsel %vm65, %v745, 0
    %v798 = vsel %vm65, %v746, 0
    %v801 = vsel %vm65, %v747, 0
    %v804 = vsel %vm65, %v748, 0
    %v807 = vsel %vm65, %v749, 0
    %v810 = vsel %vm65, %v750, 0
    %v813 = vsel %vm65, %v751, 0
    %v816 = vsel %vm65, %v752, 0
    %v819 = vsel %vm65, %v753, 0
    %v822 = vsel %vm65, %v754, 0
    %v825 = vsel %vm65, %v755, 0
    %v828 = vsel %vm65, %v756, 0
    %v831 = vsel %vm65, %v757, 0
    %v834 = vsel %vm65, %v758, 0
    %v837 = vsel %vm65, %v759, 0
    %v840 = vsel %vm65, %v760, 0
    %v843 = vsel %vm65, %v761, 0
    %v846 = vsel %vm65, %v762, 0
    %v849 = vsel %vm65, %v763, 0
    %v852 = vsel %vm65, %v764, 0
    %854 = vmatprep.subr.bf16.mxu0 0
    %855 = vmatpush1.bf16.msra.mxu0 %v778
    %856 = vmatprep.subr.bf16.mxu0 0
    %857 = vmatpush1.bf16.msra.mxu0 %v779
    %858 = vmatprep.subr.bf16.mxu0 0
    %859 = vmatpush1.bf16.msra.mxu0 0
    %860 = vmatprep.subr.bf16.mxu0 0
    %861 = vmatpush1.bf16.msra.mxu0 0
    %862 = vmatprep.subr.bf16.mxu0 0
    %863 = vmatpush1.bf16.msra.mxu0 0
    %864 = vmatprep.subr.bf16.mxu0 0
    %865 = vmatpush1.bf16.msra.mxu0 0
    %866 = vmatprep.subr.bf16.mxu0 0
    %867 = vmatpush1.bf16.msra.mxu0 0
    %868 = vmatprep.subr.bf16.mxu0 0
    %869 = vmatpush1.bf16.msra.mxu0 0
    %870 = vmatprep.subr.bf16.mxu0 0
    %871 = vmatpush1.bf16.msra.mxu0 0
    %872 = vmatprep.subr.bf16.mxu0 0
    %873 = vmatpush1.bf16.msra.mxu0 0
    %874 = vmatprep.subr.bf16.mxu0 0
    %875 = vmatpush1.bf16.msra.mxu0 0
    %876 = vmatprep.subr.bf16.mxu0 0
    %877 = vmatpush1.bf16.msra.mxu0 0
    %878 = vmatprep.subr.bf16.mxu0 0
    %879 = vmatpush1.bf16.msra.mxu0 0
    %880 = vmatprep.subr.bf16.mxu0 0
    %881 = vmatpush1.bf16.msra.mxu0 0
    %882 = vmatprep.subr.bf16.mxu0 0
    %883 = vmatpush1.bf16.msra.mxu0 0
    %884 = vmatprep.subr.bf16.mxu0 0
    %885 = vmatpush1.bf16.msra.mxu0 0
    %886 = vmatprep.mubr.bf16.mxu0 0
    %887 = vmatmul.mubr.bf16.gmra.mrb[0].mxu0 %v783
    %v888 = vpop.f32.mrb[0].mxu0
    %v889 = vadd.f32 0.0, %v888
    %v890 = vpop.f32.mrb[0].mxu0
    %v891 = vpop.f32.mrb[0].mxu0
    %v892 = vadd.f32 0.0, %v891
    %v893 = vpop.f32.mrb[0].mxu0
    %894 = vmatprep.mubr.bf16.mxu0 0
    %895 = vmatmul.mubr.bf16.gmra.mrb[0].mxu0 %v786
    %v896 = vpop.f32.mrb[0].mxu0
    %v897 = vpop.f32.mrb[0].mxu0
    %v898 = vpop.f32.mrb[0].mxu0
    %v899 = vadd.f32 0.0, %v898
    %v900 = vpop.f32.mrb[0].mxu0
    %901 = vmatprep.mubr.bf16.mxu0 0
    %902 = vmatmul.mubr.bf16.gmra.mrb[0].mxu0 %v789
    %v903 = vpop.f32.mrb[0].mxu0
    %v904 = vadd.f32 0.0, %v903
    %v905 = vpop.f32.mrb[0].mxu0
    %v906 = vpop.f32.mrb[0].mxu0
    %v907 = vpop.f32.mrb[0].mxu0
    %908 = vmatprep.mubr.bf16.mxu0 0
    %909 = vmatmul.mubr.bf16.gmra.mrb[0].mxu0 %v792
    %v910 = vpop.f32.mrb[0].mxu0
    %v911 = vadd.f32 0.0, %v910
    %v912 = vpop.f32.mrb[0].mxu0
    %v913 = vpop.f32.mrb[0].mxu0
    %v914 = vadd.f32 0.0, %v913
    %v915 = vpop.f32.mrb[0].mxu0
    %916 = vmatprep.mubr.bf16.mxu0 0
    %917 = vmatmul.mubr.bf16.gmra.mrb[0].mxu0 %v795
    %v918 = vpop.f32.mrb[0].mxu0
    %v919 = vpop.f32.mrb[0].mxu0
    %v920 = vpop.f32.mrb[0].mxu0
    %v921 = vadd.f32 0.0, %v920
    %v922 = vpop.f32.mrb[0].mxu0
    %923 = vmatprep.mubr.bf16.mxu0 0
    %924 = vmatmul.mubr.bf16.gmra.mrb[0].mxu0 %v798
    %v925 = vpop.f32.mrb[0].mxu0
    %v926 = vadd.f32 0.0, %v925
    %v927 = vpop.f32.mrb[0].mxu0
    %v928 = vpop.f32.mrb[0].mxu0
    %v929 = vpop.f32.mrb[0].mxu0
    %930 = vmatprep.mubr.bf16.mxu0 0
    %931 = vmatmul.mubr.bf16.gmra.mrb[0].mxu0 %v801
    %v932 = vpop.f32.mrb[0].mxu0
    %v933 = vadd.f32 0.0, %v932
    %v934 = vpop.f32.mrb[0].mxu0
    %v935 = vpop.f32.mrb[0].mxu0
    %v936 = vadd.f32 0.0, %v935
    %v937 = vpop.f32.mrb[0].mxu0
    %938 = vmatprep.mubr.bf16.mxu0 0
    %939 = vmatmul.mubr.bf16.gmra.mrb[0].mxu0 %v804
    %v940 = vpop.f32.mrb[0].mxu0
    %v941 = vpop.f32.mrb[0].mxu0
    %v942 = vpop.f32.mrb[0].mxu0
    %v943 = vadd.f32 0.0, %v942
    %v944 = vpop.f32.mrb[0].mxu0
    %945 = vmatprep.mubr.bf16.mxu0 0
    %946 = vmatmul.mubr.bf16.gmra.mrb[0].mxu0 %v807
    %v947 = vpop.f32.mrb[0].mxu0
    %v948 = vadd.f32 0.0, %v947
    %v949 = vpop.f32.mrb[0].mxu0
    %v950 = vpop.f32.mrb[0].mxu0
    %v951 = vpop.f32.mrb[0].mxu0
    %952 = vmatprep.mubr.bf16.mxu0 0
    %953 = vmatmul.mubr.bf16.gmra.mrb[0].mxu0 %v810
    %v954 = vpop.f32.mrb[0].mxu0
    %v955 = vadd.f32 0.0, %v954
    %v956 = vpop.f32.mrb[0].mxu0
    %v957 = vpop.f32.mrb[0].mxu0
    %v958 = vadd.f32 0.0, %v957
    %v959 = vpop.f32.mrb[0].mxu0
    %960 = vmatprep.mubr.bf16.mxu0 0
    %961 = vmatmul.mubr.bf16.gmra.mrb[0].mxu0 %v813
    %v962 = vpop.f32.mrb[0].mxu0
    %v963 = vpop.f32.mrb[0].mxu0
    %v964 = vpop.f32.mrb[0].mxu0
    %v965 = vadd.f32 0.0, %v964
    %v966 = vpop.f32.mrb[0].mxu0
    %967 = vmatprep.mubr.bf16.mxu0 0
    %968 = vmatmul.mubr.bf16.gmra.mrb[0].mxu0 %v816
    %v969 = vpop.f32.mrb[0].mxu0
    %v970 = vadd.f32 0.0, %v969
    %v971 = vpop.f32.mrb[0].mxu0
    %v972 = vpop.f32.mrb[0].mxu0
    %v973 = vpop.f32.mrb[0].mxu0
    %974 = vmatprep.mubr.bf16.mxu0 0
    %975 = vmatmul.mubr.bf16.gmra.mrb[0].mxu0 %v819
    %v976 = vpop.f32.mrb[0].mxu0
    %v977 = vadd.f32 0.0, %v976
    %v978 = vpop.f32.mrb[0].mxu0
    %v979 = vpop.f32.mrb[0].mxu0
    %v980 = vadd.f32 0.0, %v979
    %v981 = vpop.f32.mrb[0].mxu0
    %982 = vmatprep.mubr.bf16.mxu0 0
    %983 = vmatmul.mubr.bf16.gmra.mrb[0].mxu0 %v822
    %v984 = vpop.f32.mrb[0].mxu0
    %v985 = vpop.f32.mrb[0].mxu0
    %v986 = vpop.f32.mrb[0].mxu0
    %v987 = vadd.f32 0.0, %v986
    %v988 = vpop.f32.mrb[0].mxu0
    %989 = vmatprep.mubr.bf16.mxu0 0
    %990 = vmatmul.mubr.bf16.gmra.mrb[0].mxu0 %v825
    %v991 = vpop.f32.mrb[0].mxu0
    %v992 = vadd.f32 0.0, %v991
    %v993 = vpop.f32.mrb[0].mxu0
    %v994 = vpop.f32.mrb[0].mxu0
    %v995 = vpop.f32.mrb[0].mxu0
    %996 = vmatprep.mubr.bf16.mxu0 0
    %997 = vmatmul.mubr.bf16.gmra.mrb[0].mxu0 %v828
    %v998 = vpop.f32.mrb[0].mxu0
    %v999 = vadd.f32 0.0, %v998
    %v1000 = vpop.f32.mrb[0].mxu0
    %v1001 = vpop.f32.mrb[0].mxu0
    %v1002 = vadd.f32 0.0, %v1001
    %v1003 = vpop.f32.mrb[0].mxu0
    %1004 = vmatprep.mubr.bf16.mxu0 0
    %1005 = vmatmul.mubr.bf16.gmra.mrb[0].mxu0 %v831
    %v1006 = vpop.f32.mrb[0].mxu0
    %v1007 = vpop.f32.mrb[0].mxu0
    %v1008 = vpop.f32.mrb[0].mxu0
    %v1009 = vadd.f32 0.0, %v1008
    %v1010 = vpop.f32.mrb[0].mxu0
    %1011 = vmatprep.mubr.bf16.mxu0 0
    %1012 = vmatmul.mubr.bf16.gmra.mrb[0].mxu0 %v834
    %v1013 = vpop.f32.mrb[0].mxu0
    %v1014 = vadd.f32 0.0, %v1013
    %v1015 = vpop.f32.mrb[0].mxu0
    %v1016 = vpop.f32.mrb[0].mxu0
    %v1017 = vpop.f32.mrb[0].mxu0
    %1018 = vmatprep.mubr.bf16.mxu0 0
    %1019 = vmatmul.mubr.bf16.gmra.mrb[0].mxu0 %v837
    %v1020 = vpop.f32.mrb[0].mxu0
    %v1021 = vadd.f32 0.0, %v1020
    %v1022 = vpop.f32.mrb[0].mxu0
    %v1023 = vpop.f32.mrb[0].mxu0
    %v1024 = vadd.f32 0.0, %v1023
    %v1025 = vpop.f32.mrb[0].mxu0
    %1026 = vmatprep.mubr.bf16.mxu0 0
    %1027 = vmatmul.mubr.bf16.gmra.mrb[0].mxu0 %v840
    %v1028 = vpop.f32.mrb[0].mxu0
    %v1029 = vpop.f32.mrb[0].mxu0
    %v1030 = vpop.f32.mrb[0].mxu0
    %v1031 = vadd.f32 0.0, %v1030
    %v1032 = vpop.f32.mrb[0].mxu0
    %1033 = vmatprep.mubr.bf16.mxu0 0
    %1034 = vmatmul.mubr.bf16.gmra.mrb[0].mxu0 %v843
    %v1035 = vpop.f32.mrb[0].mxu0
    %v1036 = vadd.f32 0.0, %v1035
    %v1037 = vpop.f32.mrb[0].mxu0
    %v1038 = vpop.f32.mrb[0].mxu0
    %v1039 = vpop.f32.mrb[0].mxu0
    %1040 = vmatprep.mubr.bf16.mxu0 0
    %1041 = vmatmul.mubr.bf16.gmra.mrb[0].mxu0 %v846
    %v1042 = vpop.f32.mrb[0].mxu0
    %v1043 = vadd.f32 0.0, %v1042
    %v1044 = vpop.f32.mrb[0].mxu0
    %v1045 = vpop.f32.mrb[0].mxu0
    %v1046 = vadd.f32 0.0, %v1045
    %v1047 = vpop.f32.mrb[0].mxu0
    %1048 = vmatprep.mubr.bf16.mxu0 0
    %1049 = vmatmul.mubr.bf16.gmra.mrb[0].mxu0 %v849
    %v1050 = vpop.f32.mrb[0].mxu0
    %v1051 = vpop.f32.mrb[0].mxu0
    %v1052 = vpop.f32.mrb[0].mxu0
    %v1053 = vadd.f32 0.0, %v1052
    %v1054 = vpop.f32.mrb[0].mxu0
    %1055 = vmatprep.mubr.bf16.mxu0 0
    %1056 = vmatmul.mubr.bf16.gmra.mrb[0].mxu0 %v852
    %v1057 = vpop.f32.mrb[0].mxu0
    %v1058 = vadd.f32 0.0, %v1057
    %v1059 = vpop.f32.mrb[0].mxu0
    %v1060 = vpop.f32.mrb[0].mxu0
    %v1061 = vpop.f32.mrb[0].mxu0
    %1062 = vdwg.mxu0
    %v1067 = vunpack.c.l.b16 %v689
    %v1068 = vunpack.c.l.b16 %v690
    %v1069 = vunpack.c.l.b16 %v691
    %v1070 = vunpack.c.l.b16 %v692
    %v1071 = vpack.c.b16 %v1068, %v1067
    %v1072 = vpack.c.b16 %v1070, %v1069
    %v1076 = vsel %vm65, %v665, 0
    %v1079 = vsel %vm65, %v666, 0
    %v1082 = vsel %vm65, %v667, 0
    %v1085 = vsel %vm65, %v668, 0
    %v1088 = vsel %vm65, %v669, 0
    %v1091 = vsel %vm65, %v670, 0
    %v1094 = vsel %vm65, %v671, 0
    %v1097 = vsel %vm65, %v672, 0
    %v1100 = vsel %vm65, %v673, 0
    %v1103 = vsel %vm65, %v674, 0
    %v1106 = vsel %vm65, %v675, 0
    %v1109 = vsel %vm65, %v676, 0
    %v1112 = vsel %vm65, %v677, 0
    %v1115 = vsel %vm65, %v678, 0
    %v1118 = vsel %vm65, %v679, 0
    %v1121 = vsel %vm65, %v680, 0
    %v1124 = vsel %vm65, %v681, 0
    %v1127 = vsel %vm65, %v682, 0
    %v1130 = vsel %vm65, %v683, 0
    %v1133 = vsel %vm65, %v684, 0
    %v1136 = vsel %vm65, %v685, 0
    %v1139 = vsel %vm65, %v686, 0
    %v1142 = vsel %vm65, %v687, 0
    %v1145 = vsel %vm65, %v688, 0
    %1147 = vmatprep.subr.bf16.mxu0 0
    %1148 = vmatpush1.bf16.msra.mxu0 %v1071
    %1149 = vmatprep.subr.bf16.mxu0 0
    %1150 = vmatpush1.bf16.msra.mxu0 %v1072
    %1151 = vmatprep.subr.bf16.mxu0 0
    %1152 = vmatpush1.bf16.msra.mxu0 0
    %1153 = vmatprep.subr.bf16.mxu0 0
    %1154 = vmatpush1.bf16.msra.mxu0 0
    %1155 = vmatprep.subr.bf16.mxu0 0
    %1156 = vmatpush1.bf16.msra.mxu0 0
    %1157 = vmatprep.subr.bf16.mxu0 0
    %1158 = vmatpush1.bf16.msra.mxu0 0
    %1159 = vmatprep.subr.bf16.mxu0 0
    %1160 = vmatpush1.bf16.msra.mxu0 0
    %1161 = vmatprep.subr.bf16.mxu0 0
    %1162 = vmatpush1.bf16.msra.mxu0 0
    %1163 = vmatprep.subr.bf16.mxu0 0
    %1164 = vmatpush1.bf16.msra.mxu0 0
    %1165 = vmatprep.subr.bf16.mxu0 0
    %1166 = vmatpush1.bf16.msra.mxu0 0
    %1167 = vmatprep.subr.bf16.mxu0 0
    %1168 = vmatpush1.bf16.msra.mxu0 0
    %1169 = vmatprep.subr.bf16.mxu0 0
    %1170 = vmatpush1.bf16.msra.mxu0 0
    %1171 = vmatprep.subr.bf16.mxu0 0
    %1172 = vmatpush1.bf16.msra.mxu0 0
    %1173 = vmatprep.subr.bf16.mxu0 0
    %1174 = vmatpush1.bf16.msra.mxu0 0
    %1175 = vmatprep.subr.bf16.mxu0 0
    %1176 = vmatpush1.bf16.msra.mxu0 0
    %1177 = vmatprep.subr.bf16.mxu0 0
    %1178 = vmatpush1.bf16.msra.mxu0 0
    %1179 = vmatprep.mubr.bf16.mxu0 0
    %1180 = vmatmul.mubr.bf16.gmra.mrb[0].mxu0 %v1076
    %v1181 = vpop.f32.mrb[0].mxu0
    %v1182 = vadd.f32 %v889, %v1181
    %v1183 = vpop.f32.mrb[0].mxu0
    %v1184 = vpop.f32.mrb[0].mxu0
    %v1185 = vadd.f32 %v892, %v1184
    %v1186 = vpop.f32.mrb[0].mxu0
    %1187 = vmatprep.mubr.bf16.mxu0 0
    %1188 = vmatmul.mubr.bf16.gmra.mrb[0].mxu0 %v1079
    %v1189 = vpop.f32.mrb[0].mxu0
    %v1190 = vpop.f32.mrb[0].mxu0
    %v1191 = vpop.f32.mrb[0].mxu0
    %v1192 = vadd.f32 %v899, %v1191
    %v1193 = vpop.f32.mrb[0].mxu0
    %1194 = vmatprep.mubr.bf16.mxu0 0
    %1195 = vmatmul.mubr.bf16.gmra.mrb[0].mxu0 %v1082
    %v1196 = vpop.f32.mrb[0].mxu0
    %v1197 = vadd.f32 %v904, %v1196
    %v1198 = vpop.f32.mrb[0].mxu0
    %v1199 = vpop.f32.mrb[0].mxu0
    %v1200 = vpop.f32.mrb[0].mxu0
    %1201 = vmatprep.mubr.bf16.mxu0 0
    %1202 = vmatmul.mubr.bf16.gmra.mrb[0].mxu0 %v1085
    %v1203 = vpop.f32.mrb[0].mxu0
    %v1204 = vadd.f32 %v911, %v1203
    %v1205 = vpop.f32.mrb[0].mxu0
    %v1206 = vpop.f32.mrb[0].mxu0
    %v1207 = vadd.f32 %v914, %v1206
    %v1208 = vpop.f32.mrb[0].mxu0
    %1209 = vmatprep.mubr.bf16.mxu0 0
    %1210 = vmatmul.mubr.bf16.gmra.mrb[0].mxu0 %v1088
    %v1211 = vpop.f32.mrb[0].mxu0
    %v1212 = vpop.f32.mrb[0].mxu0
    %v1213 = vpop.f32.mrb[0].mxu0
    %v1214 = vadd.f32 %v921, %v1213
    %v1215 = vpop.f32.mrb[0].mxu0
    %1216 = vmatprep.mubr.bf16.mxu0 0
    %1217 = vmatmul.mubr.bf16.gmra.mrb[0].mxu0 %v1091
    %v1218 = vpop.f32.mrb[0].mxu0
    %v1219 = vadd.f32 %v926, %v1218
    %v1220 = vpop.f32.mrb[0].mxu0
    %v1221 = vpop.f32.mrb[0].mxu0
    %v1222 = vpop.f32.mrb[0].mxu0
    %1223 = vmatprep.mubr.bf16.mxu0 0
    %1224 = vmatmul.mubr.bf16.gmra.mrb[0].mxu0 %v1094
    %v1225 = vpop.f32.mrb[0].mxu0
    %v1226 = vadd.f32 %v933, %v1225
    %v1227 = vpop.f32.mrb[0].mxu0
    %v1228 = vpop.f32.mrb[0].mxu0
    %v1229 = vadd.f32 %v936, %v1228
    %v1230 = vpop.f32.mrb[0].mxu0
    %1231 = vmatprep.mubr.bf16.mxu0 0
    %1232 = vmatmul.mubr.bf16.gmra.mrb[0].mxu0 %v1097
    %v1233 = vpop.f32.mrb[0].mxu0
    %v1234 = vpop.f32.mrb[0].mxu0
    %v1235 = vpop.f32.mrb[0].mxu0
    %v1236 = vadd.f32 %v943, %v1235
    %v1237 = vpop.f32.mrb[0].mxu0
    %1238 = vmatprep.mubr.bf16.mxu0 0
    %1239 = vmatmul.mubr.bf16.gmra.mrb[0].mxu0 %v1100
    %v1240 = vpop.f32.mrb[0].mxu0
    %v1241 = vadd.f32 %v948, %v1240
    %v1242 = vpop.f32.mrb[0].mxu0
    %v1243 = vpop.f32.mrb[0].mxu0
    %v1244 = vpop.f32.mrb[0].mxu0
    %1245 = vmatprep.mubr.bf16.mxu0 0
    %1246 = vmatmul.mubr.bf16.gmra.mrb[0].mxu0 %v1103
    %v1247 = vpop.f32.mrb[0].mxu0
    %v1248 = vadd.f32 %v955, %v1247
    %v1249 = vpop.f32.mrb[0].mxu0
    %v1250 = vpop.f32.mrb[0].mxu0
    %v1251 = vadd.f32 %v958, %v1250
    %v1252 = vpop.f32.mrb[0].mxu0
    %1253 = vmatprep.mubr.bf16.mxu0 0
    %1254 = vmatmul.mubr.bf16.gmra.mrb[0].mxu0 %v1106
    %v1255 = vpop.f32.mrb[0].mxu0
    %v1256 = vpop.f32.mrb[0].mxu0
    %v1257 = vpop.f32.mrb[0].mxu0
    %v1258 = vadd.f32 %v965, %v1257
    %v1259 = vpop.f32.mrb[0].mxu0
    %1260 = vmatprep.mubr.bf16.mxu0 0
    %1261 = vmatmul.mubr.bf16.gmra.mrb[0].mxu0 %v1109
    %v1262 = vpop.f32.mrb[0].mxu0
    %v1263 = vadd.f32 %v970, %v1262
    %v1264 = vpop.f32.mrb[0].mxu0
    %v1265 = vpop.f32.mrb[0].mxu0
    %v1266 = vpop.f32.mrb[0].mxu0
    %1267 = vmatprep.mubr.bf16.mxu0 0
    %1268 = vmatmul.mubr.bf16.gmra.mrb[0].mxu0 %v1112
    %v1269 = vpop.f32.mrb[0].mxu0
    %v1270 = vadd.f32 %v977, %v1269
    %v1271 = vpop.f32.mrb[0].mxu0
    %v1272 = vpop.f32.mrb[0].mxu0
    %v1273 = vadd.f32 %v980, %v1272
    %v1274 = vpop.f32.mrb[0].mxu0
    %1275 = vmatprep.mubr.bf16.mxu0 0
    %1276 = vmatmul.mubr.bf16.gmra.mrb[0].mxu0 %v1115
    %v1277 = vpop.f32.mrb[0].mxu0
    %v1278 = vpop.f32.mrb[0].mxu0
    %v1279 = vpop.f32.mrb[0].mxu0
    %v1280 = vadd.f32 %v987, %v1279
    %v1281 = vpop.f32.mrb[0].mxu0
    %1282 = vmatprep.mubr.bf16.mxu0 0
    %1283 = vmatmul.mubr.bf16.gmra.mrb[0].mxu0 %v1118
    %v1284 = vpop.f32.mrb[0].mxu0
    %v1285 = vadd.f32 %v992, %v1284
    %v1286 = vpop.f32.mrb[0].mxu0
    %v1287 = vpop.f32.mrb[0].mxu0
    %v1288 = vpop.f32.mrb[0].mxu0
    %1289 = vmatprep.mubr.bf16.mxu0 0
    %1290 = vmatmul.mubr.bf16.gmra.mrb[0].mxu0 %v1121
    %v1291 = vpop.f32.mrb[0].mxu0
    %v1292 = vadd.f32 %v999, %v1291
    %v1293 = vpop.f32.mrb[0].mxu0
    %v1294 = vpop.f32.mrb[0].mxu0
    %v1295 = vadd.f32 %v1002, %v1294
    %v1296 = vpop.f32.mrb[0].mxu0
    %1297 = vmatprep.mubr.bf16.mxu0 0
    %1298 = vmatmul.mubr.bf16.gmra.mrb[0].mxu0 %v1124
    %v1299 = vpop.f32.mrb[0].mxu0
    %v1300 = vpop.f32.mrb[0].mxu0
    %v1301 = vpop.f32.mrb[0].mxu0
    %v1302 = vadd.f32 %v1009, %v1301
    %v1303 = vpop.f32.mrb[0].mxu0
    %1304 = vmatprep.mubr.bf16.mxu0 0
    %1305 = vmatmul.mubr.bf16.gmra.mrb[0].mxu0 %v1127
    %v1306 = vpop.f32.mrb[0].mxu0
    %v1307 = vadd.f32 %v1014, %v1306
    %v1308 = vpop.f32.mrb[0].mxu0
    %v1309 = vpop.f32.mrb[0].mxu0
    %v1310 = vpop.f32.mrb[0].mxu0
    %1311 = vmatprep.mubr.bf16.mxu0 0
    %1312 = vmatmul.mubr.bf16.gmra.mrb[0].mxu0 %v1130
    %v1313 = vpop.f32.mrb[0].mxu0
    %v1314 = vadd.f32 %v1021, %v1313
    %v1315 = vpop.f32.mrb[0].mxu0
    %v1316 = vpop.f32.mrb[0].mxu0
    %v1317 = vadd.f32 %v1024, %v1316
    %v1318 = vpop.f32.mrb[0].mxu0
    %1319 = vmatprep.mubr.bf16.mxu0 0
    %1320 = vmatmul.mubr.bf16.gmra.mrb[0].mxu0 %v1133
    %v1321 = vpop.f32.mrb[0].mxu0
    %v1322 = vpop.f32.mrb[0].mxu0
    %v1323 = vpop.f32.mrb[0].mxu0
    %v1324 = vadd.f32 %v1031, %v1323
    %v1325 = vpop.f32.mrb[0].mxu0
    %1326 = vmatprep.mubr.bf16.mxu0 0
    %1327 = vmatmul.mubr.bf16.gmra.mrb[0].mxu0 %v1136
    %v1328 = vpop.f32.mrb[0].mxu0
    %v1329 = vadd.f32 %v1036, %v1328
    %v1330 = vpop.f32.mrb[0].mxu0
    %v1331 = vpop.f32.mrb[0].mxu0
    %v1332 = vpop.f32.mrb[0].mxu0
    %1333 = vmatprep.mubr.bf16.mxu0 0
    %1334 = vmatmul.mubr.bf16.gmra.mrb[0].mxu0 %v1139
    %v1335 = vpop.f32.mrb[0].mxu0
    %v1336 = vadd.f32 %v1043, %v1335
    %v1337 = vpop.f32.mrb[0].mxu0
    %v1338 = vpop.f32.mrb[0].mxu0
    %v1339 = vadd.f32 %v1046, %v1338
    %v1340 = vpop.f32.mrb[0].mxu0
    %1341 = vmatprep.mubr.bf16.mxu0 0
    %1342 = vmatmul.mubr.bf16.gmra.mrb[0].mxu0 %v1142
    %v1343 = vpop.f32.mrb[0].mxu0
    %v1344 = vpop.f32.mrb[0].mxu0
    %v1345 = vpop.f32.mrb[0].mxu0
    %v1346 = vadd.f32 %v1053, %v1345
    %v1347 = vpop.f32.mrb[0].mxu0
    %1348 = vmatprep.mubr.bf16.mxu0 0
    %1349 = vmatmul.mubr.bf16.gmra.mrb[0].mxu0 %v1145
    %v1350 = vpop.f32.mrb[0].mxu0
    %v1351 = vadd.f32 %v1058, %v1350
    %v1352 = vpop.f32.mrb[0].mxu0
    %v1353 = vpop.f32.mrb[0].mxu0
    %v1354 = vpop.f32.mrb[0].mxu0
    %1355 = vdwg.mxu0
    %v1356 = vld [vmem:[#allocation2 + $0x9] sm:$0xff]
    %v1357 = vld [vmem:[#allocation2 + $0x11] sm:$0xff]
    %v1358 = vld [vmem:[#allocation2 + $0x19] sm:$0xff]
    %v1359 = vld [vmem:[#allocation2 + $0x21] sm:$0xff]
    %v1360 = vld [vmem:[#allocation2 + $0x29] sm:$0xff]
    %v1361 = vld [vmem:[#allocation2 + $0x31] sm:$0xff]
    %v1362 = vld [vmem:[#allocation2 + $0x39] sm:$0xff]
    %v1363 = vld [vmem:[#allocation2 + $0x41] sm:$0xff]
    %v1364 = vld [vmem:[#allocation2 + $0x49] sm:$0xff]
    %v1365 = vld [vmem:[#allocation2 + $0x51] sm:$0xff]
    %v1366 = vld [vmem:[#allocation2 + $0x59] sm:$0xff]
    %v1367 = vld [vmem:[#allocation2 + $0x61] sm:$0xff]
    %v1368 = vld [vmem:[#allocation2 + $0x69] sm:$0xff]
    %v1369 = vld [vmem:[#allocation2 + $0x71] sm:$0xff]
    %v1370 = vld [vmem:[#allocation2 + $0x79] sm:$0xff]
    %v1371 = vld [vmem:[#allocation2 + $0x81] sm:$0xff]
    %v1372 = vld [vmem:[#allocation2 + $0x89] sm:$0xff]
    %v1373 = vld [vmem:[#allocation2 + $0x91] sm:$0xff]
    %v1374 = vld [vmem:[#allocation2 + $0x99] sm:$0xff]
    %v1375 = vld [vmem:[#allocation2 + $0xa1] sm:$0xff]
    %v1376 = vld [vmem:[#allocation2 + $0xa9] sm:$0xff]
    %v1377 = vld [vmem:[#allocation2 + $0xb1] sm:$0xff]
    %v1378 = vld [vmem:[#allocation2 + $0xb9] sm:$0xff]
    %v1379 = vld [vmem:[#allocation2 + $0xc1] sm:$0xff]
    %v1380 = vld [vmem:[#allocation2 + $0xc9] sm:$0xff]
    %v1381 = vld [vmem:[#allocation2 + $0xd1] sm:$0xff]
    %v1382 = vld [vmem:[#allocation2 + $0xd9] sm:$0xff]
    %v1383 = vld [vmem:[#allocation2 + $0xe1] sm:$0xff]
    %v1384 = vld [vmem:[#allocation2 + $0xe9] sm:$0xff]
    %v1385 = vld [vmem:[#allocation2 + $0xf1] sm:$0xff]
    %v1386 = vld [vmem:[#allocation2 + $0xf9] sm:$0xff]
    %v1387 = vld [vmem:[#allocation2 + $0x101] sm:$0xff]
    %v1388 = vld [vmem:[#allocation2 + $0x109] sm:$0xff]
    %v1389 = vld [vmem:[#allocation2 + $0x111] sm:$0xff]
    %v1390 = vld [vmem:[#allocation2 + $0x119] sm:$0xff]
    %v1391 = vld [vmem:[#allocation2 + $0x121] sm:$0xff]
    %v1392 = vld [vmem:[#allocation2 + $0x129] sm:$0xff]
    %v1393 = vld [vmem:[#allocation2 + $0x131] sm:$0xff]
    %v1394 = vld [vmem:[#allocation2 + $0x139] sm:$0xff]
    %v1395 = vld [vmem:[#allocation2 + $0x141] sm:$0xff]
    %v1396 = vld [vmem:[#allocation2 + $0x149] sm:$0xff]
    %v1397 = vld [vmem:[#allocation2 + $0x151] sm:$0xff]
    %v1398 = vld [vmem:[#allocation2 + $0x159] sm:$0xff]
    %v1399 = vld [vmem:[#allocation2 + $0x161] sm:$0xff]
    %v1400 = vld [vmem:[#allocation2 + $0x169] sm:$0xff]
    %v1401 = vld [vmem:[#allocation2 + $0x171] sm:$0xff]
    %v1402 = vld [vmem:[#allocation2 + $0x179] sm:$0xff]
    %v1403 = vld [vmem:[#allocation2 + $0x181] sm:$0xff]
    %v1404 = vpack.c.bf16 %v1357, %v1356
    %v1405 = vpack.c.bf16 %v1359, %v1358
    %v1406 = vpack.c.bf16 %v1361, %v1360
    %v1407 = vpack.c.bf16 %v1363, %v1362
    %v1408 = vpack.c.bf16 %v1365, %v1364
    %v1409 = vpack.c.bf16 %v1367, %v1366
    %v1410 = vpack.c.bf16 %v1369, %v1368
    %v1411 = vpack.c.bf16 %v1371, %v1370
    %v1412 = vpack.c.bf16 %v1373, %v1372
    %v1413 = vpack.c.bf16 %v1375, %v1374
    %v1414 = vpack.c.bf16 %v1377, %v1376
    %v1415 = vpack.c.bf16 %v1379, %v1378
    %v1416 = vpack.c.bf16 %v1381, %v1380
    %v1417 = vpack.c.bf16 %v1383, %v1382
    %v1418 = vpack.c.bf16 %v1385, %v1384
    %v1419 = vpack.c.bf16 %v1387, %v1386
    %v1420 = vpack.c.bf16 %v1389, %v1388
    %v1421 = vpack.c.bf16 %v1391, %v1390
    %v1422 = vpack.c.bf16 %v1393, %v1392
    %v1423 = vpack.c.bf16 %v1395, %v1394
    %v1424 = vpack.c.bf16 %v1397, %v1396
    %v1425 = vpack.c.bf16 %v1399, %v1398
    %v1426 = vpack.c.bf16 %v1401, %v1400
    %v1427 = vpack.c.bf16 %v1403, %v1402
    %s1428 = scalar_lea.vmem [#allocation6], 32
    %v1429 = vld [vmem:[%s1428] sm:$0xf]
    %v1430 = vld [vmem:[%s1428 + $0x4] sm:$0xf]
    %v1431 = vld [vmem:[%s1428 + $0x8] sm:$0xf]
    %v1432 = vld [vmem:[%s1428 + $0xc] sm:$0xf]
    %v1437 = vunpack.c.l.b16 %v1429
    %v1438 = vunpack.c.l.b16 %v1430
    %v1439 = vunpack.c.l.b16 %v1431
    %v1440 = vunpack.c.l.b16 %v1432
    %v1441 = vpack.c.b16 %v1438, %v1437
    %v1442 = vpack.c.b16 %v1440, %v1439
    %v1446 = vsel %vm65, %v1404, 0
    %v1449 = vsel %vm65, %v1405, 0
    %v1452 = vsel %vm65, %v1406, 0
    %v1455 = vsel %vm65, %v1407, 0
    %v1458 = vsel %vm65, %v1408, 0
    %v1461 = vsel %vm65, %v1409, 0
    %v1464 = vsel %vm65, %v1410, 0
    %v1467 = vsel %vm65, %v1411, 0
    %v1470 = vsel %vm65, %v1412, 0
    %v1473 = vsel %vm65, %v1413, 0
    %v1476 = vsel %vm65, %v1414, 0
    %v1479 = vsel %vm65, %v1415, 0
    %v1482 = vsel %vm65, %v1416, 0
    %v1485 = vsel %vm65, %v1417, 0
    %v1488 = vsel %vm65, %v1418, 0
    %v1491 = vsel %vm65, %v1419, 0
    %v1494 = vsel %vm65, %v1420, 0
    %v1497 = vsel %vm65, %v1421, 0
    %v1500 = vsel %vm65, %v1422, 0
    %v1503 = vsel %vm65, %v1423, 0
    %v1506 = vsel %vm65, %v1424, 0
    %v1509 = vsel %vm65, %v1425, 0
    %v1512 = vsel %vm65, %v1426, 0
    %v1515 = vsel %vm65, %v1427, 0
    %1517 = vmatprep.subr.bf16.mxu0 0
    %1518 = vmatpush1.bf16.msra.mxu0 %v1441
    %1519 = vmatprep.subr.bf16.mxu0 0
    %1520 = vmatpush1.bf16.msra.mxu0 %v1442
    %1521 = vmatprep.subr.bf16.mxu0 0
    %1522 = vmatpush1.bf16.msra.mxu0 0
    %1523 = vmatprep.subr.bf16.mxu0 0
    %1524 = vmatpush1.bf16.msra.mxu0 0
    %1525 = vmatprep.subr.bf16.mxu0 0
    %1526 = vmatpush1.bf16.msra.mxu0 0
    %1527 = vmatprep.subr.bf16.mxu0 0
    %1528 = vmatpush1.bf16.msra.mxu0 0
    %1529 = vmatprep.subr.bf16.mxu0 0
    %1530 = vmatpush1.bf16.msra.mxu0 0
    %1531 = vmatprep.subr.bf16.mxu0 0
    %1532 = vmatpush1.bf16.msra.mxu0 0
    %1533 = vmatprep.subr.bf16.mxu0 0
    %1534 = vmatpush1.bf16.msra.mxu0 0
    %1535 = vmatprep.subr.bf16.mxu0 0
    %1536 = vmatpush1.bf16.msra.mxu0 0
    %1537 = vmatprep.subr.bf16.mxu0 0
    %1538 = vmatpush1.bf16.msra.mxu0 0
    %1539 = vmatprep.subr.bf16.mxu0 0
    %1540 = vmatpush1.bf16.msra.mxu0 0
    %1541 = vmatprep.subr.bf16.mxu0 0
    %1542 = vmatpush1.bf16.msra.mxu0 0
    %1543 = vmatprep.subr.bf16.mxu0 0
    %1544 = vmatpush1.bf16.msra.mxu0 0
    %1545 = vmatprep.subr.bf16.mxu0 0
    %1546 = vmatpush1.bf16.msra.mxu0 0
    %1547 = vmatprep.subr.bf16.mxu0 0
    %1548 = vmatpush1.bf16.msra.mxu0 0
    %1549 = vmatprep.mubr.bf16.mxu0 0
    %1550 = vmatmul.mubr.bf16.gmra.mrb[0].mxu0 %v1446
    %v1551 = vpop.f32.mrb[0].mxu0
    %v1552 = vadd.f32 0.0, %v1551
    %v1553 = vpop.f32.mrb[0].mxu0
    %v1554 = vpop.f32.mrb[0].mxu0
    %v1555 = vadd.f32 0.0, %v1554
    %v1556 = vpop.f32.mrb[0].mxu0
    %1557 = vmatprep.mubr.bf16.mxu0 0
    %1558 = vmatmul.mubr.bf16.gmra.mrb[0].mxu0 %v1449
    %v1559 = vpop.f32.mrb[0].mxu0
    %v1560 = vpop.f32.mrb[0].mxu0
    %v1561 = vpop.f32.mrb[0].mxu0
    %v1562 = vadd.f32 0.0, %v1561
    %v1563 = vpop.f32.mrb[0].mxu0
    %1564 = vmatprep.mubr.bf16.mxu0 0
    %1565 = vmatmul.mubr.bf16.gmra.mrb[0].mxu0 %v1452
    %v1566 = vpop.f32.mrb[0].mxu0
    %v1567 = vadd.f32 0.0, %v1566
    %v1568 = vpop.f32.mrb[0].mxu0
    %v1569 = vpop.f32.mrb[0].mxu0
    %v1570 = vpop.f32.mrb[0].mxu0
    %1571 = vmatprep.mubr.bf16.mxu0 0
    %1572 = vmatmul.mubr.bf16.gmra.mrb[0].mxu0 %v1455
    %v1573 = vpop.f32.mrb[0].mxu0
    %v1574 = vadd.f32 0.0, %v1573
    %v1575 = vpop.f32.mrb[0].mxu0
    %v1576 = vpop.f32.mrb[0].mxu0
    %v1577 = vadd.f32 0.0, %v1576
    %v1578 = vpop.f32.mrb[0].mxu0
    %1579 = vmatprep.mubr.bf16.mxu0 0
    %1580 = vmatmul.mubr.bf16.gmra.mrb[0].mxu0 %v1458
    %v1581 = vpop.f32.mrb[0].mxu0
    %v1582 = vpop.f32.mrb[0].mxu0
    %v1583 = vpop.f32.mrb[0].mxu0
    %v1584 = vadd.f32 0.0, %v1583
    %v1585 = vpop.f32.mrb[0].mxu0
    %1586 = vmatprep.mubr.bf16.mxu0 0
    %1587 = vmatmul.mubr.bf16.gmra.mrb[0].mxu0 %v1461
    %v1588 = vpop.f32.mrb[0].mxu0
    %v1589 = vadd.f32 0.0, %v1588
    %v1590 = vpop.f32.mrb[0].mxu0
    %v1591 = vpop.f32.mrb[0].mxu0
    %v1592 = vpop.f32.mrb[0].mxu0
    %1593 = vmatprep.mubr.bf16.mxu0 0
    %1594 = vmatmul.mubr.bf16.gmra.mrb[0].mxu0 %v1464
    %v1595 = vpop.f32.mrb[0].mxu0
    %v1596 = vadd.f32 0.0, %v1595
    %v1597 = vpop.f32.mrb[0].mxu0
    %v1598 = vpop.f32.mrb[0].mxu0
    %v1599 = vadd.f32 0.0, %v1598
    %v1600 = vpop.f32.mrb[0].mxu0
    %1601 = vmatprep.mubr.bf16.mxu0 0
    %1602 = vmatmul.mubr.bf16.gmra.mrb[0].mxu0 %v1467
    %v1603 = vpop.f32.mrb[0].mxu0
    %v1604 = vpop.f32.mrb[0].mxu0
    %v1605 = vpop.f32.mrb[0].mxu0
    %v1606 = vadd.f32 0.0, %v1605
    %v1607 = vpop.f32.mrb[0].mxu0
    %1608 = vmatprep.mubr.bf16.mxu0 0
    %1609 = vmatmul.mubr.bf16.gmra.mrb[0].mxu0 %v1470
    %v1610 = vpop.f32.mrb[0].mxu0
    %v1611 = vadd.f32 0.0, %v1610
    %v1612 = vpop.f32.mrb[0].mxu0
    %v1613 = vpop.f32.mrb[0].mxu0
    %v1614 = vpop.f32.mrb[0].mxu0
    %1615 = vmatprep.mubr.bf16.mxu0 0
    %1616 = vmatmul.mubr.bf16.gmra.mrb[0].mxu0 %v1473
    %v1617 = vpop.f32.mrb[0].mxu0
    %v1618 = vadd.f32 0.0, %v1617
    %v1619 = vpop.f32.mrb[0].mxu0
    %v1620 = vpop.f32.mrb[0].mxu0
    %v1621 = vadd.f32 0.0, %v1620
    %v1622 = vpop.f32.mrb[0].mxu0
    %1623 = vmatprep.mubr.bf16.mxu0 0
    %1624 = vmatmul.mubr.bf16.gmra.mrb[0].mxu0 %v1476
    %v1625 = vpop.f32.mrb[0].mxu0
    %v1626 = vpop.f32.mrb[0].mxu0
    %v1627 = vpop.f32.mrb[0].mxu0
    %v1628 = vadd.f32 0.0, %v1627
    %v1629 = vpop.f32.mrb[0].mxu0
    %1630 = vmatprep.mubr.bf16.mxu0 0
    %1631 = vmatmul.mubr.bf16.gmra.mrb[0].mxu0 %v1479
    %v1632 = vpop.f32.mrb[0].mxu0
    %v1633 = vadd.f32 0.0, %v1632
    %v1634 = vpop.f32.mrb[0].mxu0
    %v1635 = vpop.f32.mrb[0].mxu0
    %v1636 = vpop.f32.mrb[0].mxu0
    %1637 = vmatprep.mubr.bf16.mxu0 0
    %1638 = vmatmul.mubr.bf16.gmra.mrb[0].mxu0 %v1482
    %v1639 = vpop.f32.mrb[0].mxu0
    %v1640 = vadd.f32 0.0, %v1639
    %v1641 = vpop.f32.mrb[0].mxu0
    %v1642 = vpop.f32.mrb[0].mxu0
    %v1643 = vadd.f32 0.0, %v1642
    %v1644 = vpop.f32.mrb[0].mxu0
    %1645 = vmatprep.mubr.bf16.mxu0 0
    %1646 = vmatmul.mubr.bf16.gmra.mrb[0].mxu0 %v1485
    %v1647 = vpop.f32.mrb[0].mxu0
    %v1648 = vpop.f32.mrb[0].mxu0
    %v1649 = vpop.f32.mrb[0].mxu0
    %v1650 = vadd.f32 0.0, %v1649
    %v1651 = vpop.f32.mrb[0].mxu0
    %1652 = vmatprep.mubr.bf16.mxu0 0
    %1653 = vmatmul.mubr.bf16.gmra.mrb[0].mxu0 %v1488
    %v1654 = vpop.f32.mrb[0].mxu0
    %v1655 = vadd.f32 0.0, %v1654
    %v1656 = vpop.f32.mrb[0].mxu0
    %v1657 = vpop.f32.mrb[0].mxu0
    %v1658 = vpop.f32.mrb[0].mxu0
    %1659 = vmatprep.mubr.bf16.mxu0 0
    %1660 = vmatmul.mubr.bf16.gmra.mrb[0].mxu0 %v1491
    %v1661 = vpop.f32.mrb[0].mxu0
    %v1662 = vadd.f32 0.0, %v1661
    %v1663 = vpop.f32.mrb[0].mxu0
    %v1664 = vpop.f32.mrb[0].mxu0
    %v1665 = vadd.f32 0.0, %v1664
    %v1666 = vpop.f32.mrb[0].mxu0
    %1667 = vmatprep.mubr.bf16.mxu0 0
    %1668 = vmatmul.mubr.bf16.gmra.mrb[0].mxu0 %v1494
    %v1669 = vpop.f32.mrb[0].mxu0
    %v1670 = vpop.f32.mrb[0].mxu0
    %v1671 = vpop.f32.mrb[0].mxu0
    %v1672 = vadd.f32 0.0, %v1671
    %v1673 = vpop.f32.mrb[0].mxu0
    %1674 = vmatprep.mubr.bf16.mxu0 0
    %1675 = vmatmul.mubr.bf16.gmra.mrb[0].mxu0 %v1497
    %v1676 = vpop.f32.mrb[0].mxu0
    %v1677 = vadd.f32 0.0, %v1676
    %v1678 = vpop.f32.mrb[0].mxu0
    %v1679 = vpop.f32.mrb[0].mxu0
    %v1680 = vpop.f32.mrb[0].mxu0
    %1681 = vmatprep.mubr.bf16.mxu0 0
    %1682 = vmatmul.mubr.bf16.gmra.mrb[0].mxu0 %v1500
    %v1683 = vpop.f32.mrb[0].mxu0
    %v1684 = vadd.f32 0.0, %v1683
    %v1685 = vpop.f32.mrb[0].mxu0
    %v1686 = vpop.f32.mrb[0].mxu0
    %v1687 = vadd.f32 0.0, %v1686
    %v1688 = vpop.f32.mrb[0].mxu0
    %1689 = vmatprep.mubr.bf16.mxu0 0
    %1690 = vmatmul.mubr.bf16.gmra.mrb[0].mxu0 %v1503
    %v1691 = vpop.f32.mrb[0].mxu0
    %v1692 = vpop.f32.mrb[0].mxu0
    %v1693 = vpop.f32.mrb[0].mxu0
    %v1694 = vadd.f32 0.0, %v1693
    %v1695 = vpop.f32.mrb[0].mxu0
    %1696 = vmatprep.mubr.bf16.mxu0 0
    %1697 = vmatmul.mubr.bf16.gmra.mrb[0].mxu0 %v1506
    %v1698 = vpop.f32.mrb[0].mxu0
    %v1699 = vadd.f32 0.0, %v1698
    %v1700 = vpop.f32.mrb[0].mxu0
    %v1701 = vpop.f32.mrb[0].mxu0
    %v1702 = vpop.f32.mrb[0].mxu0
    %1703 = vmatprep.mubr.bf16.mxu0 0
    %1704 = vmatmul.mubr.bf16.gmra.mrb[0].mxu0 %v1509
    %v1705 = vpop.f32.mrb[0].mxu0
    %v1706 = vadd.f32 0.0, %v1705
    %v1707 = vpop.f32.mrb[0].mxu0
    %v1708 = vpop.f32.mrb[0].mxu0
    %v1709 = vadd.f32 0.0, %v1708
    %v1710 = vpop.f32.mrb[0].mxu0
    %1711 = vmatprep.mubr.bf16.mxu0 0
    %1712 = vmatmul.mubr.bf16.gmra.mrb[0].mxu0 %v1512
    %v1713 = vpop.f32.mrb[0].mxu0
    %v1714 = vpop.f32.mrb[0].mxu0
    %v1715 = vpop.f32.mrb[0].mxu0
    %v1716 = vadd.f32 0.0, %v1715
    %v1717 = vpop.f32.mrb[0].mxu0
    %1718 = vmatprep.mubr.bf16.mxu0 0
    %1719 = vmatmul.mubr.bf16.gmra.mrb[0].mxu0 %v1515
    %v1720 = vpop.f32.mrb[0].mxu0
    %v1721 = vadd.f32 0.0, %v1720
    %v1722 = vpop.f32.mrb[0].mxu0
    %v1723 = vpop.f32.mrb[0].mxu0
    %v1724 = vpop.f32.mrb[0].mxu0
    %1725 = vdwg.mxu0
    %v1726 = vadd.f32 %v1182, %v1552
    %v1727 = vadd.f32 %v1185, %v1555
    %v1728 = vadd.f32 %v1192, %v1562
    %v1729 = vadd.f32 %v1197, %v1567
    %v1730 = vadd.f32 %v1204, %v1574
    %v1731 = vadd.f32 %v1207, %v1577
    %v1732 = vadd.f32 %v1214, %v1584
    %v1733 = vadd.f32 %v1219, %v1589
    %v1734 = vadd.f32 %v1226, %v1596
    %v1735 = vadd.f32 %v1229, %v1599
    %v1736 = vadd.f32 %v1236, %v1606
    %v1737 = vadd.f32 %v1241, %v1611
    %v1738 = vadd.f32 %v1248, %v1618
    %v1739 = vadd.f32 %v1251, %v1621
    %v1740 = vadd.f32 %v1258, %v1628
    %v1741 = vadd.f32 %v1263, %v1633
    %v1742 = vadd.f32 %v1270, %v1640
    %v1743 = vadd.f32 %v1273, %v1643
    %v1744 = vadd.f32 %v1280, %v1650
    %v1745 = vadd.f32 %v1285, %v1655
    %v1746 = vadd.f32 %v1292, %v1662
    %v1747 = vadd.f32 %v1295, %v1665
    %v1748 = vadd.f32 %v1302, %v1672
    %v1749 = vadd.f32 %v1307, %v1677
    %v1750 = vadd.f32 %v1314, %v1684
    %v1751 = vadd.f32 %v1317, %v1687
    %v1752 = vadd.f32 %v1324, %v1694
    %v1753 = vadd.f32 %v1329, %v1699
    %v1754 = vadd.f32 %v1336, %v1706
    %v1755 = vadd.f32 %v1339, %v1709
    %v1756 = vadd.f32 %v1346, %v1716
    %v1757 = vadd.f32 %v1351, %v1721
    %v1758 = vld [vmem:[#allocation2 + $0x1f] sm:$0xff]
    %v1759 = vld [vmem:[#allocation2 + $0x27] sm:$0xff]
    %v1760 = vld [vmem:[#allocation2 + $0x2f] sm:$0xff]
    %v1761 = vld [vmem:[#allocation2 + $0x37] sm:$0xff]
    %v1762 = vld [vmem:[#allocation2 + $0x3f] sm:$0xff]
    %v1763 = vld [vmem:[#allocation2 + $0x47] sm:$0xff]
    %v1764 = vld [vmem:[#allocation2 + $0x4f] sm:$0xff]
    %v1765 = vld [vmem:[#allocation2 + $0x57] sm:$0xff]
    %v1766 = vld [vmem:[#allocation2 + $0x5f] sm:$0xff]
    %v1767 = vld [vmem:[#allocation2 + $0x67] sm:$0xff]
    %v1768 = vld [vmem:[#allocation2 + $0x6f] sm:$0xff]
    %v1769 = vld [vmem:[#allocation2 + $0x77] sm:$0xff]
    %v1770 = vld [vmem:[#allocation2 + $0x7f] sm:$0xff]
    %v1771 = vld [vmem:[#allocation2 + $0x87] sm:$0xff]
    %v1772 = vld [vmem:[#allocation2 + $0x8f] sm:$0xff]
    %v1773 = vld [vmem:[#allocation2 + $0x97] sm:$0xff]
    %v1774 = vld [vmem:[#allocation2 + $0x9f] sm:$0xff]
    %v1775 = vld [vmem:[#allocation2 + $0xa7] sm:$0xff]
    %v1776 = vld [vmem:[#allocation2 + $0xaf] sm:$0xff]
    %v1777 = vld [vmem:[#allocation2 + $0xb7] sm:$0xff]
    %v1778 = vld [vmem:[#allocation2 + $0xbf] sm:$0xff]
    %v1779 = vld [vmem:[#allocation2 + $0xc7] sm:$0xff]
    %v1780 = vld [vmem:[#allocation2 + $0xcf] sm:$0xff]
    %v1781 = vld [vmem:[#allocation2 + $0xd7] sm:$0xff]
    %v1782 = vld [vmem:[#allocation2 + $0xdf] sm:$0xff]
    %v1783 = vld [vmem:[#allocation2 + $0xe7] sm:$0xff]
    %v1784 = vld [vmem:[#allocation2 + $0xef] sm:$0xff]
    %v1785 = vld [vmem:[#allocation2 + $0xf7] sm:$0xff]
    %v1786 = vld [vmem:[#allocation2 + $0xff] sm:$0xff]
    %v1787 = vld [vmem:[#allocation2 + $0x107] sm:$0xff]
    %v1788 = vld [vmem:[#allocation2 + $0x10f] sm:$0xff]
    %v1789 = vld [vmem:[#allocation2 + $0x117] sm:$0xff]
    %v1790 = vld [vmem:[#allocation2 + $0x11f] sm:$0xff]
    %v1791 = vld [vmem:[#allocation2 + $0x127] sm:$0xff]
    %v1792 = vld [vmem:[#allocation2 + $0x12f] sm:$0xff]
    %v1793 = vld [vmem:[#allocation2 + $0x137] sm:$0xff]
    %v1794 = vld [vmem:[#allocation2 + $0x13f] sm:$0xff]
    %v1795 = vld [vmem:[#allocation2 + $0x147] sm:$0xff]
    %v1796 = vld [vmem:[#allocation2 + $0x14f] sm:$0xff]
    %v1797 = vld [vmem:[#allocation2 + $0x157] sm:$0xff]
    %v1798 = vld [vmem:[#allocation2 + $0x15f] sm:$0xff]
    %v1799 = vld [vmem:[#allocation2 + $0x167] sm:$0xff]
    %v1800 = vld [vmem:[#allocation2 + $0x16f] sm:$0xff]
    %v1801 = vld [vmem:[#allocation2 + $0x177] sm:$0xff]
    %v1802 = vld [vmem:[#allocation2 + $0x17f] sm:$0xff]
    %v1803 = vld [vmem:[#allocation2 + $0x187] sm:$0xff]
    %v1804 = vld [vmem:[#allocation2 + $0x18f] sm:$0xff]
    %v1805 = vld [vmem:[#allocation2 + $0x197] sm:$0xff]
    %v1806 = vpack.c.bf16 %v1759, %v1758
    %v1807 = vpack.c.bf16 %v1761, %v1760
    %v1808 = vpack.c.bf16 %v1763, %v1762
    %v1809 = vpack.c.bf16 %v1765, %v1764
    %v1810 = vpack.c.bf16 %v1767, %v1766
    %v1811 = vpack.c.bf16 %v1769, %v1768
    %v1812 = vpack.c.bf16 %v1771, %v1770
    %v1813 = vpack.c.bf16 %v1773, %v1772
    %v1814 = vpack.c.bf16 %v1775, %v1774
    %v1815 = vpack.c.bf16 %v1777, %v1776
    %v1816 = vpack.c.bf16 %v1779, %v1778
    %v1817 = vpack.c.bf16 %v1781, %v1780
    %v1818 = vpack.c.bf16 %v1783, %v1782
    %v1819 = vpack.c.bf16 %v1785, %v1784
    %v1820 = vpack.c.bf16 %v1787, %v1786
    %v1821 = vpack.c.bf16 %v1789, %v1788
    %v1822 = vpack.c.bf16 %v1791, %v1790
    %v1823 = vpack.c.bf16 %v1793, %v1792
    %v1824 = vpack.c.bf16 %v1795, %v1794
    %v1825 = vpack.c.bf16 %v1797, %v1796
    %v1826 = vpack.c.bf16 %v1799, %v1798
    %v1827 = vpack.c.bf16 %v1801, %v1800
    %v1828 = vpack.c.bf16 %v1803, %v1802
    %v1829 = vpack.c.bf16 %v1805, %v1804
    %s1830 = scalar_lea.vmem [#allocation6], 48
    %v1831 = vld [vmem:[%s1830] sm:$0xf]
    %v1832 = vld [vmem:[%s1830 + $0x4] sm:$0xf]
    %v1833 = vld [vmem:[%s1830 + $0x8] sm:$0xf]
    %v1834 = vld [vmem:[%s1830 + $0xc] sm:$0xf]
    %v1839 = vunpack.c.l.b16 %v1831
    %v1840 = vunpack.c.l.b16 %v1832
    %v1841 = vunpack.c.l.b16 %v1833
    %v1842 = vunpack.c.l.b16 %v1834
    %v1843 = vpack.c.b16 %v1840, %v1839
    %v1844 = vpack.c.b16 %v1842, %v1841
    %v1848 = vsel %vm65, %v1806, 0
    %v1851 = vsel %vm65, %v1807, 0
    %v1854 = vsel %vm65, %v1808, 0
    %v1857 = vsel %vm65, %v1809, 0
    %v1860 = vsel %vm65, %v1810, 0
    %v1863 = vsel %vm65, %v1811, 0
    %v1866 = vsel %vm65, %v1812, 0
    %v1869 = vsel %vm65, %v1813, 0
    %v1872 = vsel %vm65, %v1814, 0
    %v1875 = vsel %vm65, %v1815, 0
    %v1878 = vsel %vm65, %v1816, 0
    %v1881 = vsel %vm65, %v1817, 0
    %v1884 = vsel %vm65, %v1818, 0
    %v1887 = vsel %vm65, %v1819, 0
    %v1890 = vsel %vm65, %v1820, 0
    %v1893 = vsel %vm65, %v1821, 0
    %v1896 = vsel %vm65, %v1822, 0
    %v1899 = vsel %vm65, %v1823, 0
    %v1902 = vsel %vm65, %v1824, 0
    %v1905 = vsel %vm65, %v1825, 0
    %v1908 = vsel %vm65, %v1826, 0
    %v1911 = vsel %vm65, %v1827, 0
    %v1914 = vsel %vm65, %v1828, 0
    %v1917 = vsel %vm65, %v1829, 0
    %1919 = vmatprep.subr.bf16.mxu0 0
    %1920 = vmatpush1.bf16.msra.mxu0 %v1843
    %1921 = vmatprep.subr.bf16.mxu0 0
    %1922 = vmatpush1.bf16.msra.mxu0 %v1844
    %1923 = vmatprep.subr.bf16.mxu0 0
    %1924 = vmatpush1.bf16.msra.mxu0 0
    %1925 = vmatprep.subr.bf16.mxu0 0
    %1926 = vmatpush1.bf16.msra.mxu0 0
    %1927 = vmatprep.subr.bf16.mxu0 0
    %1928 = vmatpush1.bf16.msra.mxu0 0
    %1929 = vmatprep.subr.bf16.mxu0 0
    %1930 = vmatpush1.bf16.msra.mxu0 0
    %1931 = vmatprep.subr.bf16.mxu0 0
    %1932 = vmatpush1.bf16.msra.mxu0 0
    %1933 = vmatprep.subr.bf16.mxu0 0
    %1934 = vmatpush1.bf16.msra.mxu0 0
    %1935 = vmatprep.subr.bf16.mxu0 0
    %1936 = vmatpush1.bf16.msra.mxu0 0
    %1937 = vmatprep.subr.bf16.mxu0 0
    %1938 = vmatpush1.bf16.msra.mxu0 0
    %1939 = vmatprep.subr.bf16.mxu0 0
    %1940 = vmatpush1.bf16.msra.mxu0 0
    %1941 = vmatprep.subr.bf16.mxu0 0
    %1942 = vmatpush1.bf16.msra.mxu0 0
    %1943 = vmatprep.subr.bf16.mxu0 0
    %1944 = vmatpush1.bf16.msra.mxu0 0
    %1945 = vmatprep.subr.bf16.mxu0 0
    %1946 = vmatpush1.bf16.msra.mxu0 0
    %1947 = vmatprep.subr.bf16.mxu0 0
    %1948 = vmatpush1.bf16.msra.mxu0 0
    %1949 = vmatprep.subr.bf16.mxu0 0
    %1950 = vmatpush1.bf16.msra.mxu0 0
    %1951 = vmatprep.mubr.bf16.mxu0 0
    %1952 = vmatmul.mubr.bf16.gmra.mrb[0].mxu0 %v1848
    %v1953 = vpop.f32.mrb[0].mxu0
    %v1954 = vadd.f32 0.0, %v1953
    %v1955 = vpop.f32.mrb[0].mxu0
    %v1956 = vpop.f32.mrb[0].mxu0
    %v1957 = vadd.f32 0.0, %v1956
    %v1958 = vpop.f32.mrb[0].mxu0
    %1959 = vmatprep.mubr.bf16.mxu0 0
    %1960 = vmatmul.mubr.bf16.gmra.mrb[0].mxu0 %v1851
    %v1961 = vpop.f32.mrb[0].mxu0
    %v1962 = vpop.f32.mrb[0].mxu0
    %v1963 = vpop.f32.mrb[0].mxu0
    %v1964 = vadd.f32 0.0, %v1963
    %v1965 = vpop.f32.mrb[0].mxu0
    %1966 = vmatprep.mubr.bf16.mxu0 0
    %1967 = vmatmul.mubr.bf16.gmra.mrb[0].mxu0 %v1854
    %v1968 = vpop.f32.mrb[0].mxu0
    %v1969 = vadd.f32 0.0, %v1968
    %v1970 = vpop.f32.mrb[0].mxu0
    %v1971 = vpop.f32.mrb[0].mxu0
    %v1972 = vpop.f32.mrb[0].mxu0
    %1973 = vmatprep.mubr.bf16.mxu0 0
    %1974 = vmatmul.mubr.bf16.gmra.mrb[0].mxu0 %v1857
    %v1975 = vpop.f32.mrb[0].mxu0
    %v1976 = vadd.f32 0.0, %v1975
    %v1977 = vpop.f32.mrb[0].mxu0
    %v1978 = vpop.f32.mrb[0].mxu0
    %v1979 = vadd.f32 0.0, %v1978
    %v1980 = vpop.f32.mrb[0].mxu0
    %1981 = vmatprep.mubr.bf16.mxu0 0
    %1982 = vmatmul.mubr.bf16.gmra.mrb[0].mxu0 %v1860
    %v1983 = vpop.f32.mrb[0].mxu0
    %v1984 = vpop.f32.mrb[0].mxu0
    %v1985 = vpop.f32.mrb[0].mxu0
    %v1986 = vadd.f32 0.0, %v1985
    %v1987 = vpop.f32.mrb[0].mxu0
    %1988 = vmatprep.mubr.bf16.mxu0 0
    %1989 = vmatmul.mubr.bf16.gmra.mrb[0].mxu0 %v1863
    %v1990 = vpop.f32.mrb[0].mxu0
    %v1991 = vadd.f32 0.0, %v1990
    %v1992 = vpop.f32.mrb[0].mxu0
    %v1993 = vpop.f32.mrb[0].mxu0
    %v1994 = vpop.f32.mrb[0].mxu0
    %1995 = vmatprep.mubr.bf16.mxu0 0
    %1996 = vmatmul.mubr.bf16.gmra.mrb[0].mxu0 %v1866
    %v1997 = vpop.f32.mrb[0].mxu0
    %v1998 = vadd.f32 0.0, %v1997
    %v1999 = vpop.f32.mrb[0].mxu0
    %v2000 = vpop.f32.mrb[0].mxu0
    %v2001 = vadd.f32 0.0, %v2000
    %v2002 = vpop.f32.mrb[0].mxu0
    %2003 = vmatprep.mubr.bf16.mxu0 0
    %2004 = vmatmul.mubr.bf16.gmra.mrb[0].mxu0 %v1869
    %v2005 = vpop.f32.mrb[0].mxu0
    %v2006 = vpop.f32.mrb[0].mxu0
    %v2007 = vpop.f32.mrb[0].mxu0
    %v2008 = vadd.f32 0.0, %v2007
    %v2009 = vpop.f32.mrb[0].mxu0
    %2010 = vmatprep.mubr.bf16.mxu0 0
    %2011 = vmatmul.mubr.bf16.gmra.mrb[0].mxu0 %v1872
    %v2012 = vpop.f32.mrb[0].mxu0
    %v2013 = vadd.f32 0.0, %v2012
    %v2014 = vpop.f32.mrb[0].mxu0
    %v2015 = vpop.f32.mrb[0].mxu0
    %v2016 = vpop.f32.mrb[0].mxu0
    %2017 = vmatprep.mubr.bf16.mxu0 0
    %2018 = vmatmul.mubr.bf16.gmra.mrb[0].mxu0 %v1875
    %v2019 = vpop.f32.mrb[0].mxu0
    %v2020 = vadd.f32 0.0, %v2019
    %v2021 = vpop.f32.mrb[0].mxu0
    %v2022 = vpop.f32.mrb[0].mxu0
    %v2023 = vadd.f32 0.0, %v2022
    %v2024 = vpop.f32.mrb[0].mxu0
    %2025 = vmatprep.mubr.bf16.mxu0 0
    %2026 = vmatmul.mubr.bf16.gmra.mrb[0].mxu0 %v1878
    %v2027 = vpop.f32.mrb[0].mxu0
    %v2028 = vpop.f32.mrb[0].mxu0
    %v2029 = vpop.f32.mrb[0].mxu0
    %v2030 = vadd.f32 0.0, %v2029
    %v2031 = vpop.f32.mrb[0].mxu0
    %2032 = vmatprep.mubr.bf16.mxu0 0
    %2033 = vmatmul.mubr.bf16.gmra.mrb[0].mxu0 %v1881
    %v2034 = vpop.f32.mrb[0].mxu0
    %v2035 = vadd.f32 0.0, %v2034
    %v2036 = vpop.f32.mrb[0].mxu0
    %v2037 = vpop.f32.mrb[0].mxu0
    %v2038 = vpop.f32.mrb[0].mxu0
    %2039 = vmatprep.mubr.bf16.mxu0 0
    %2040 = vmatmul.mubr.bf16.gmra.mrb[0].mxu0 %v1884
    %v2041 = vpop.f32.mrb[0].mxu0
    %v2042 = vadd.f32 0.0, %v2041
    %v2043 = vpop.f32.mrb[0].mxu0
    %v2044 = vpop.f32.mrb[0].mxu0
    %v2045 = vadd.f32 0.0, %v2044
    %v2046 = vpop.f32.mrb[0].mxu0
    %2047 = vmatprep.mubr.bf16.mxu0 0
    %2048 = vmatmul.mubr.bf16.gmra.mrb[0].mxu0 %v1887
    %v2049 = vpop.f32.mrb[0].mxu0
    %v2050 = vpop.f32.mrb[0].mxu0
    %v2051 = vpop.f32.mrb[0].mxu0
    %v2052 = vadd.f32 0.0, %v2051
    %v2053 = vpop.f32.mrb[0].mxu0
    %2054 = vmatprep.mubr.bf16.mxu0 0
    %2055 = vmatmul.mubr.bf16.gmra.mrb[0].mxu0 %v1890
    %v2056 = vpop.f32.mrb[0].mxu0
    %v2057 = vadd.f32 0.0, %v2056
    %v2058 = vpop.f32.mrb[0].mxu0
    %v2059 = vpop.f32.mrb[0].mxu0
    %v2060 = vpop.f32.mrb[0].mxu0
    %2061 = vmatprep.mubr.bf16.mxu0 0
    %2062 = vmatmul.mubr.bf16.gmra.mrb[0].mxu0 %v1893
    %v2063 = vpop.f32.mrb[0].mxu0
    %v2064 = vadd.f32 0.0, %v2063
    %v2065 = vpop.f32.mrb[0].mxu0
    %v2066 = vpop.f32.mrb[0].mxu0
    %v2067 = vadd.f32 0.0, %v2066
    %v2068 = vpop.f32.mrb[0].mxu0
    %2069 = vmatprep.mubr.bf16.mxu0 0
    %2070 = vmatmul.mubr.bf16.gmra.mrb[0].mxu0 %v1896
    %v2071 = vpop.f32.mrb[0].mxu0
    %v2072 = vpop.f32.mrb[0].mxu0
    %v2073 = vpop.f32.mrb[0].mxu0
    %v2074 = vadd.f32 0.0, %v2073
    %v2075 = vpop.f32.mrb[0].mxu0
    %2076 = vmatprep.mubr.bf16.mxu0 0
    %2077 = vmatmul.mubr.bf16.gmra.mrb[0].mxu0 %v1899
    %v2078 = vpop.f32.mrb[0].mxu0
    %v2079 = vadd.f32 0.0, %v2078
    %v2080 = vpop.f32.mrb[0].mxu0
    %v2081 = vpop.f32.mrb[0].mxu0
    %v2082 = vpop.f32.mrb[0].mxu0
    %2083 = vmatprep.mubr.bf16.mxu0 0
    %2084 = vmatmul.mubr.bf16.gmra.mrb[0].mxu0 %v1902
    %v2085 = vpop.f32.mrb[0].mxu0
    %v2086 = vadd.f32 0.0, %v2085
    %v2087 = vpop.f32.mrb[0].mxu0
    %v2088 = vpop.f32.mrb[0].mxu0
    %v2089 = vadd.f32 0.0, %v2088
    %v2090 = vpop.f32.mrb[0].mxu0
    %2091 = vmatprep.mubr.bf16.mxu0 0
    %2092 = vmatmul.mubr.bf16.gmra.mrb[0].mxu0 %v1905
    %v2093 = vpop.f32.mrb[0].mxu0
    %v2094 = vpop.f32.mrb[0].mxu0
    %v2095 = vpop.f32.mrb[0].mxu0
    %v2096 = vadd.f32 0.0, %v2095
    %v2097 = vpop.f32.mrb[0].mxu0
    %2098 = vmatprep.mubr.bf16.mxu0 0
    %2099 = vmatmul.mubr.bf16.gmra.mrb[0].mxu0 %v1908
    %v2100 = vpop.f32.mrb[0].mxu0
    %v2101 = vadd.f32 0.0, %v2100
    %v2102 = vpop.f32.mrb[0].mxu0
    %v2103 = vpop.f32.mrb[0].mxu0
    %v2104 = vpop.f32.mrb[0].mxu0
    %2105 = vmatprep.mubr.bf16.mxu0 0
    %2106 = vmatmul.mubr.bf16.gmra.mrb[0].mxu0 %v1911
    %v2107 = vpop.f32.mrb[0].mxu0
    %v2108 = vadd.f32 0.0, %v2107
    %v2109 = vpop.f32.mrb[0].mxu0
    %v2110 = vpop.f32.mrb[0].mxu0
    %v2111 = vadd.f32 0.0, %v2110
    %v2112 = vpop.f32.mrb[0].mxu0
    %2113 = vmatprep.mubr.bf16.mxu0 0
    %2114 = vmatmul.mubr.bf16.gmra.mrb[0].mxu0 %v1914
    %v2115 = vpop.f32.mrb[0].mxu0
    %v2116 = vpop.f32.mrb[0].mxu0
    %v2117 = vpop.f32.mrb[0].mxu0
    %v2118 = vadd.f32 0.0, %v2117
    %v2119 = vpop.f32.mrb[0].mxu0
    %2120 = vmatprep.mubr.bf16.mxu0 0
    %2121 = vmatmul.mubr.bf16.gmra.mrb[0].mxu0 %v1917
    %v2122 = vpop.f32.mrb[0].mxu0
    %v2123 = vadd.f32 0.0, %v2122
    %v2124 = vpop.f32.mrb[0].mxu0
    %v2125 = vpop.f32.mrb[0].mxu0
    %v2126 = vpop.f32.mrb[0].mxu0
    %2127 = vdwg.mxu0
    %v2128 = vadd.f32 %v1726, %v1954
    %v2129 = vadd.f32 %v1727, %v1957
    %v2130 = vadd.f32 %v1728, %v1964
    %v2131 = vadd.f32 %v1729, %v1969
    %v2132 = vadd.f32 %v1730, %v1976
    %v2133 = vadd.f32 %v1731, %v1979
    %v2134 = vadd.f32 %v1732, %v1986
    %v2135 = vadd.f32 %v1733, %v1991
    %v2136 = vadd.f32 %v1734, %v1998
    %v2137 = vadd.f32 %v1735, %v2001
    %v2138 = vadd.f32 %v1736, %v2008
    %v2139 = vadd.f32 %v1737, %v2013
    %v2140 = vadd.f32 %v1738, %v2020
    %v2141 = vadd.f32 %v1739, %v2023
    %v2142 = vadd.f32 %v1740, %v2030
    %v2143 = vadd.f32 %v1741, %v2035
    %v2144 = vadd.f32 %v1742, %v2042
    %v2145 = vadd.f32 %v1743, %v2045
    %v2146 = vadd.f32 %v1744, %v2052
    %v2147 = vadd.f32 %v1745, %v2057
    %v2148 = vadd.f32 %v1746, %v2064
    %v2149 = vadd.f32 %v1747, %v2067
    %v2150 = vadd.f32 %v1748, %v2074
    %v2151 = vadd.f32 %v1749, %v2079
    %v2152 = vadd.f32 %v1750, %v2086
    %v2153 = vadd.f32 %v1751, %v2089
    %v2154 = vadd.f32 %v1752, %v2096
    %v2155 = vadd.f32 %v1753, %v2101
    %v2156 = vadd.f32 %v1754, %v2108
    %v2157 = vadd.f32 %v1755, %v2111
    %v2158 = vadd.f32 %v1756, %v2118
    %v2159 = vadd.f32 %v1757, %v2123
    %v2160 = vld [vmem:[#allocation2 + $0x20] sm:$0xff]
    %v2161 = vld [vmem:[#allocation2 + $0x28] sm:$0xff]
    %v2162 = vld [vmem:[#allocation2 + $0x30] sm:$0xff]
    %v2163 = vld [vmem:[#allocation2 + $0x38] sm:$0xff]
    %v2164 = vld [vmem:[#allocation2 + $0x40] sm:$0xff]
    %v2165 = vld [vmem:[#allocation2 + $0x48] sm:$0xff]
    %v2166 = vld [vmem:[#allocation2 + $0x50] sm:$0xff]
    %v2167 = vld [vmem:[#allocation2 + $0x58] sm:$0xff]
    %v2168 = vld [vmem:[#allocation2 + $0x60] sm:$0xff]
    %v2169 = vld [vmem:[#allocation2 + $0x68] sm:$0xff]
    %v2170 = vld [vmem:[#allocation2 + $0x70] sm:$0xff]
    %v2171 = vld [vmem:[#allocation2 + $0x78] sm:$0xff]
    %v2172 = vld [vmem:[#allocation2 + $0x80] sm:$0xff]
    %v2173 = vld [vmem:[#allocation2 + $0x88] sm:$0xff]
    %v2174 = vld [vmem:[#allocation2 + $0x90] sm:$0xff]
    %v2175 = vld [vmem:[#allocation2 + $0x98] sm:$0xff]
    %v2176 = vld [vmem:[#allocation2 + $0xa0] sm:$0xff]
    %v2177 = vld [vmem:[#allocation2 + $0xa8] sm:$0xff]
    %v2178 = vld [vmem:[#allocation2 + $0xb0] sm:$0xff]
    %v2179 = vld [vmem:[#allocation2 + $0xb8] sm:$0xff]
    %v2180 = vld [vmem:[#allocation2 + $0xc0] sm:$0xff]
    %v2181 = vld [vmem:[#allocation2 + $0xc8] sm:$0xff]
    %v2182 = vld [vmem:[#allocation2 + $0xd0] sm:$0xff]
    %v2183 = vld [vmem:[#allocation2 + $0xd8] sm:$0xff]
    %v2184 = vld [vmem:[#allocation2 + $0xe0] sm:$0xff]
    %v2185 = vld [vmem:[#allocation2 + $0xe8] sm:$0xff]
    %v2186 = vld [vmem:[#allocation2 + $0xf0] sm:$0xff]
    %v2187 = vld [vmem:[#allocation2 + $0xf8] sm:$0xff]
    %v2188 = vld [vmem:[#allocation2 + $0x100] sm:$0xff]
    %v2189 = vld [vmem:[#allocation2 + $0x108] sm:$0xff]
    %v2190 = vld [vmem:[#allocation2 + $0x110] sm:$0xff]
    %v2191 = vld [vmem:[#allocation2 + $0x118] sm:$0xff]
    %v2192 = vld [vmem:[#allocation2 + $0x120] sm:$0xff]
    %v2193 = vld [vmem:[#allocation2 + $0x128] sm:$0xff]
    %v2194 = vld [vmem:[#allocation2 + $0x130] sm:$0xff]
    %v2195 = vld [vmem:[#allocation2 + $0x138] sm:$0xff]
    %v2196 = vld [vmem:[#allocation2 + $0x140] sm:$0xff]
    %v2197 = vld [vmem:[#allocation2 + $0x148] sm:$0xff]
    %v2198 = vld [vmem:[#allocation2 + $0x150] sm:$0xff]
    %v2199 = vld [vmem:[#allocation2 + $0x158] sm:$0xff]
    %v2200 = vld [vmem:[#allocation2 + $0x160] sm:$0xff]
    %v2201 = vld [vmem:[#allocation2 + $0x168] sm:$0xff]
    %v2202 = vld [vmem:[#allocation2 + $0x170] sm:$0xff]
    %v2203 = vld [vmem:[#allocation2 + $0x178] sm:$0xff]
    %v2204 = vld [vmem:[#allocation2 + $0x180] sm:$0xff]
    %v2205 = vld [vmem:[#allocation2 + $0x188] sm:$0xff]
    %v2206 = vld [vmem:[#allocation2 + $0x190] sm:$0xff]
    %v2207 = vld [vmem:[#allocation2 + $0x198] sm:$0xff]
    %v2208 = vpack.c.bf16 %v2161, %v2160
    %v2209 = vpack.c.bf16 %v2163, %v2162
    %v2210 = vpack.c.bf16 %v2165, %v2164
    %v2211 = vpack.c.bf16 %v2167, %v2166
    %v2212 = vpack.c.bf16 %v2169, %v2168
    %v2213 = vpack.c.bf16 %v2171, %v2170
    %v2214 = vpack.c.bf16 %v2173, %v2172
    %v2215 = vpack.c.bf16 %v2175, %v2174
    %v2216 = vpack.c.bf16 %v2177, %v2176
    %v2217 = vpack.c.bf16 %v2179, %v2178
    %v2218 = vpack.c.bf16 %v2181, %v2180
    %v2219 = vpack.c.bf16 %v2183, %v2182
    %v2220 = vpack.c.bf16 %v2185, %v2184
    %v2221 = vpack.c.bf16 %v2187, %v2186
    %v2222 = vpack.c.bf16 %v2189, %v2188
    %v2223 = vpack.c.bf16 %v2191, %v2190
    %v2224 = vpack.c.bf16 %v2193, %v2192
    %v2225 = vpack.c.bf16 %v2195, %v2194
    %v2226 = vpack.c.bf16 %v2197, %v2196
    %v2227 = vpack.c.bf16 %v2199, %v2198
    %v2228 = vpack.c.bf16 %v2201, %v2200
    %v2229 = vpack.c.bf16 %v2203, %v2202
    %v2230 = vpack.c.bf16 %v2205, %v2204
    %v2231 = vpack.c.bf16 %v2207, %v2206
    %s2232 = scalar_lea.vmem [#allocation6], 64
    %v2233 = vld [vmem:[%s2232] sm:$0xf]
    %v2234 = vld [vmem:[%s2232 + $0x4] sm:$0xf]
    %v2235 = vld [vmem:[%s2232 + $0x8] sm:$0xf]
    %v2236 = vld [vmem:[%s2232 + $0xc] sm:$0xf]
    %v2241 = vunpack.c.l.b16 %v2233
    %v2242 = vunpack.c.l.b16 %v2234
    %v2243 = vunpack.c.l.b16 %v2235
    %v2244 = vunpack.c.l.b16 %v2236
    %v2245 = vpack.c.b16 %v2242, %v2241
    %v2246 = vpack.c.b16 %v2244, %v2243
    %v2250 = vsel %vm65, %v2208, 0
    %v2253 = vsel %vm65, %v2209, 0
    %v2256 = vsel %vm65, %v2210, 0
    %v2259 = vsel %vm65, %v2211, 0
    %v2262 = vsel %vm65, %v2212, 0
    %v2265 = vsel %vm65, %v2213, 0
    %v2268 = vsel %vm65, %v2214, 0
    %v2271 = vsel %vm65, %v2215, 0
    %v2274 = vsel %vm65, %v2216, 0
    %v2277 = vsel %vm65, %v2217, 0
    %v2280 = vsel %vm65, %v2218, 0
    %v2283 = vsel %vm65, %v2219, 0
    %v2286 = vsel %vm65, %v2220, 0
    %v2289 = vsel %vm65, %v2221, 0
    %v2292 = vsel %vm65, %v2222, 0
    %v2295 = vsel %vm65, %v2223, 0
    %v2298 = vsel %vm65, %v2224, 0
    %v2301 = vsel %vm65, %v2225, 0
    %v2304 = vsel %vm65, %v2226, 0
    %v2307 = vsel %vm65, %v2227, 0
    %v2310 = vsel %vm65, %v2228, 0
    %v2313 = vsel %vm65, %v2229, 0
    %v2316 = vsel %vm65, %v2230, 0
    %v2319 = vsel %vm65, %v2231, 0
    %2321 = vmatprep.subr.bf16.mxu0 0
    %2322 = vmatpush1.bf16.msra.mxu0 %v2245
    %2323 = vmatprep.subr.bf16.mxu0 0
    %2324 = vmatpush1.bf16.msra.mxu0 %v2246
    %2325 = vmatprep.subr.bf16.mxu0 0
    %2326 = vmatpush1.bf16.msra.mxu0 0
    %2327 = vmatprep.subr.bf16.mxu0 0
    %2328 = vmatpush1.bf16.msra.mxu0 0
    %2329 = vmatprep.subr.bf16.mxu0 0
    %2330 = vmatpush1.bf16.msra.mxu0 0
    %2331 = vmatprep.subr.bf16.mxu0 0
    %2332 = vmatpush1.bf16.msra.mxu0 0
    %2333 = vmatprep.subr.bf16.mxu0 0
    %2334 = vmatpush1.bf16.msra.mxu0 0
    %2335 = vmatprep.subr.bf16.mxu0 0
    %2336 = vmatpush1.bf16.msra.mxu0 0
    %2337 = vmatprep.subr.bf16.mxu0 0
    %2338 = vmatpush1.bf16.msra.mxu0 0
    %2339 = vmatprep.subr.bf16.mxu0 0
    %2340 = vmatpush1.bf16.msra.mxu0 0
    %2341 = vmatprep.subr.bf16.mxu0 0
    %2342 = vmatpush1.bf16.msra.mxu0 0
    %2343 = vmatprep.subr.bf16.mxu0 0
    %2344 = vmatpush1.bf16.msra.mxu0 0
    %2345 = vmatprep.subr.bf16.mxu0 0
    %2346 = vmatpush1.bf16.msra.mxu0 0
    %2347 = vmatprep.subr.bf16.mxu0 0
    %2348 = vmatpush1.bf16.msra.mxu0 0
    %2349 = vmatprep.subr.bf16.mxu0 0
    %2350 = vmatpush1.bf16.msra.mxu0 0
    %2351 = vmatprep.subr.bf16.mxu0 0
    %2352 = vmatpush1.bf16.msra.mxu0 0
    %2353 = vmatprep.mubr.bf16.mxu0 0
    %2354 = vmatmul.mubr.bf16.gmra.mrb[0].mxu0 %v2250
    %v2355 = vpop.f32.mrb[0].mxu0
    %v2356 = vadd.f32 0.0, %v2355
    %v2357 = vpop.f32.mrb[0].mxu0
    %v2358 = vpop.f32.mrb[0].mxu0
    %v2359 = vadd.f32 0.0, %v2358
    %v2360 = vpop.f32.mrb[0].mxu0
    %2361 = vmatprep.mubr.bf16.mxu0 0
    %2362 = vmatmul.mubr.bf16.gmra.mrb[0].mxu0 %v2253
    %v2363 = vpop.f32.mrb[0].mxu0
    %v2364 = vpop.f32.mrb[0].mxu0
    %v2365 = vpop.f32.mrb[0].mxu0
    %v2366 = vadd.f32 0.0, %v2365
    %v2367 = vpop.f32.mrb[0].mxu0
    %2368 = vmatprep.mubr.bf16.mxu0 0
    %2369 = vmatmul.mubr.bf16.gmra.mrb[0].mxu0 %v2256
    %v2370 = vpop.f32.mrb[0].mxu0
    %v2371 = vadd.f32 0.0, %v2370
    %v2372 = vpop.f32.mrb[0].mxu0
    %v2373 = vpop.f32.mrb[0].mxu0
    %v2374 = vpop.f32.mrb[0].mxu0
    %2375 = vmatprep.mubr.bf16.mxu0 0
    %2376 = vmatmul.mubr.bf16.gmra.mrb[0].mxu0 %v2259
    %v2377 = vpop.f32.mrb[0].mxu0
    %v2378 = vadd.f32 0.0, %v2377
    %v2379 = vpop.f32.mrb[0].mxu0
    %v2380 = vpop.f32.mrb[0].mxu0
    %v2381 = vadd.f32 0.0, %v2380
    %v2382 = vpop.f32.mrb[0].mxu0
    %2383 = vmatprep.mubr.bf16.mxu0 0
    %2384 = vmatmul.mubr.bf16.gmra.mrb[0].mxu0 %v2262
    %v2385 = vpop.f32.mrb[0].mxu0
    %v2386 = vpop.f32.mrb[0].mxu0
    %v2387 = vpop.f32.mrb[0].mxu0
    %v2388 = vadd.f32 0.0, %v2387
    %v2389 = vpop.f32.mrb[0].mxu0
    %2390 = vmatprep.mubr.bf16.mxu0 0
    %2391 = vmatmul.mubr.bf16.gmra.mrb[0].mxu0 %v2265
    %v2392 = vpop.f32.mrb[0].mxu0
    %v2393 = vadd.f32 0.0, %v2392
    %v2394 = vpop.f32.mrb[0].mxu0
    %v2395 = vpop.f32.mrb[0].mxu0
    %v2396 = vpop.f32.mrb[0].mxu0
    %2397 = vmatprep.mubr.bf16.mxu0 0
    %2398 = vmatmul.mubr.bf16.gmra.mrb[0].mxu0 %v2268
    %v2399 = vpop.f32.mrb[0].mxu0
    %v2400 = vadd.f32 0.0, %v2399
    %v2401 = vpop.f32.mrb[0].mxu0
    %v2402 = vpop.f32.mrb[0].mxu0
    %v2403 = vadd.f32 0.0, %v2402
    %v2404 = vpop.f32.mrb[0].mxu0
    %2405 = vmatprep.mubr.bf16.mxu0 0
    %2406 = vmatmul.mubr.bf16.gmra.mrb[0].mxu0 %v2271
    %v2407 = vpop.f32.mrb[0].mxu0
    %v2408 = vpop.f32.mrb[0].mxu0
    %v2409 = vpop.f32.mrb[0].mxu0
    %v2410 = vadd.f32 0.0, %v2409
    %v2411 = vpop.f32.mrb[0].mxu0
    %2412 = vmatprep.mubr.bf16.mxu0 0
    %2413 = vmatmul.mubr.bf16.gmra.mrb[0].mxu0 %v2274
    %v2414 = vpop.f32.mrb[0].mxu0
    %v2415 = vadd.f32 0.0, %v2414
    %v2416 = vpop.f32.mrb[0].mxu0
    %v2417 = vpop.f32.mrb[0].mxu0
    %v2418 = vpop.f32.mrb[0].mxu0
    %2419 = vmatprep.mubr.bf16.mxu0 0
    %2420 = vmatmul.mubr.bf16.gmra.mrb[0].mxu0 %v2277
    %v2421 = vpop.f32.mrb[0].mxu0
    %v2422 = vadd.f32 0.0, %v2421
    %v2423 = vpop.f32.mrb[0].mxu0
    %v2424 = vpop.f32.mrb[0].mxu0
    %v2425 = vadd.f32 0.0, %v2424
    %v2426 = vpop.f32.mrb[0].mxu0
    %2427 = vmatprep.mubr.bf16.mxu0 0
    %2428 = vmatmul.mubr.bf16.gmra.mrb[0].mxu0 %v2280
    %v2429 = vpop.f32.mrb[0].mxu0
    %v2430 = vpop.f32.mrb[0].mxu0
    %v2431 = vpop.f32.mrb[0].mxu0
    %v2432 = vadd.f32 0.0, %v2431
    %v2433 = vpop.f32.mrb[0].mxu0
    %2434 = vmatprep.mubr.bf16.mxu0 0
    %2435 = vmatmul.mubr.bf16.gmra.mrb[0].mxu0 %v2283
    %v2436 = vpop.f32.mrb[0].mxu0
    %v2437 = vadd.f32 0.0, %v2436
    %v2438 = vpop.f32.mrb[0].mxu0
    %v2439 = vpop.f32.mrb[0].mxu0
    %v2440 = vpop.f32.mrb[0].mxu0
    %2441 = vmatprep.mubr.bf16.mxu0 0
    %2442 = vmatmul.mubr.bf16.gmra.mrb[0].mxu0 %v2286
    %v2443 = vpop.f32.mrb[0].mxu0
    %v2444 = vadd.f32 0.0, %v2443
    %v2445 = vpop.f32.mrb[0].mxu0
    %v2446 = vpop.f32.mrb[0].mxu0
    %v2447 = vadd.f32 0.0, %v2446
    %v2448 = vpop.f32.mrb[0].mxu0
    %2449 = vmatprep.mubr.bf16.mxu0 0
    %2450 = vmatmul.mubr.bf16.gmra.mrb[0].mxu0 %v2289
    %v2451 = vpop.f32.mrb[0].mxu0
    %v2452 = vpop.f32.mrb[0].mxu0
    %v2453 = vpop.f32.mrb[0].mxu0
    %v2454 = vadd.f32 0.0, %v2453
    %v2455 = vpop.f32.mrb[0].mxu0
    %2456 = vmatprep.mubr.bf16.mxu0 0
    %2457 = vmatmul.mubr.bf16.gmra.mrb[0].mxu0 %v2292
    %v2458 = vpop.f32.mrb[0].mxu0
    %v2459 = vadd.f32 0.0, %v2458
    %v2460 = vpop.f32.mrb[0].mxu0
    %v2461 = vpop.f32.mrb[0].mxu0
    %v2462 = vpop.f32.mrb[0].mxu0
    %2463 = vmatprep.mubr.bf16.mxu0 0
    %2464 = vmatmul.mubr.bf16.gmra.mrb[0].mxu0 %v2295
    %v2465 = vpop.f32.mrb[0].mxu0
    %v2466 = vadd.f32 0.0, %v2465
    %v2467 = vpop.f32.mrb[0].mxu0
    %v2468 = vpop.f32.mrb[0].mxu0
    %v2469 = vadd.f32 0.0, %v2468
    %v2470 = vpop.f32.mrb[0].mxu0
    %2471 = vmatprep.mubr.bf16.mxu0 0
    %2472 = vmatmul.mubr.bf16.gmra.mrb[0].mxu0 %v2298
    %v2473 = vpop.f32.mrb[0].mxu0
    %v2474 = vpop.f32.mrb[0].mxu0
    %v2475 = vpop.f32.mrb[0].mxu0
    %v2476 = vadd.f32 0.0, %v2475
    %v2477 = vpop.f32.mrb[0].mxu0
    %2478 = vmatprep.mubr.bf16.mxu0 0
    %2479 = vmatmul.mubr.bf16.gmra.mrb[0].mxu0 %v2301
    %v2480 = vpop.f32.mrb[0].mxu0
    %v2481 = vadd.f32 0.0, %v2480
    %v2482 = vpop.f32.mrb[0].mxu0
    %v2483 = vpop.f32.mrb[0].mxu0
    %v2484 = vpop.f32.mrb[0].mxu0
    %2485 = vmatprep.mubr.bf16.mxu0 0
    %2486 = vmatmul.mubr.bf16.gmra.mrb[0].mxu0 %v2304
    %v2487 = vpop.f32.mrb[0].mxu0
    %v2488 = vadd.f32 0.0, %v2487
    %v2489 = vpop.f32.mrb[0].mxu0
    %v2490 = vpop.f32.mrb[0].mxu0
    %v2491 = vadd.f32 0.0, %v2490
    %v2492 = vpop.f32.mrb[0].mxu0
    %2493 = vmatprep.mubr.bf16.mxu0 0
    %2494 = vmatmul.mubr.bf16.gmra.mrb[0].mxu0 %v2307
    %v2495 = vpop.f32.mrb[0].mxu0
    %v2496 = vpop.f32.mrb[0].mxu0
    %v2497 = vpop.f32.mrb[0].mxu0
    %v2498 = vadd.f32 0.0, %v2497
    %v2499 = vpop.f32.mrb[0].mxu0
    %2500 = vmatprep.mubr.bf16.mxu0 0
    %2501 = vmatmul.mubr.bf16.gmra.mrb[0].mxu0 %v2310
    %v2502 = vpop.f32.mrb[0].mxu0
    %v2503 = vadd.f32 0.0, %v2502
    %v2504 = vpop.f32.mrb[0].mxu0
    %v2505 = vpop.f32.mrb[0].mxu0
    %v2506 = vpop.f32.mrb[0].mxu0
    %2507 = vmatprep.mubr.bf16.mxu0 0
    %2508 = vmatmul.mubr.bf16.gmra.mrb[0].mxu0 %v2313
    %v2509 = vpop.f32.mrb[0].mxu0
    %v2510 = vadd.f32 0.0, %v2509
    %v2511 = vpop.f32.mrb[0].mxu0
    %v2512 = vpop.f32.mrb[0].mxu0
    %v2513 = vadd.f32 0.0, %v2512
    %v2514 = vpop.f32.mrb[0].mxu0
    %2515 = vmatprep.mubr.bf16.mxu0 0
    %2516 = vmatmul.mubr.bf16.gmra.mrb[0].mxu0 %v2316
    %v2517 = vpop.f32.mrb[0].mxu0
    %v2518 = vpop.f32.mrb[0].mxu0
    %v2519 = vpop.f32.mrb[0].mxu0
    %v2520 = vadd.f32 0.0, %v2519
    %v2521 = vpop.f32.mrb[0].mxu0
    %2522 = vmatprep.mubr.bf16.mxu0 0
    %2523 = vmatmul.mubr.bf16.gmra.mrb[0].mxu0 %v2319
    %v2524 = vpop.f32.mrb[0].mxu0
    %v2525 = vadd.f32 0.0, %v2524
    %v2526 = vpop.f32.mrb[0].mxu0
    %v2527 = vpop.f32.mrb[0].mxu0
    %v2528 = vpop.f32.mrb[0].mxu0
    %2529 = vdwg.mxu0
    %v2530 = vadd.f32 %v2128, %v2356
    %v2531 = vadd.f32 %v2129, %v2359
    %v2532 = vadd.f32 %v2130, %v2366
    %v2533 = vadd.f32 %v2131, %v2371
    %v2534 = vadd.f32 %v2132, %v2378
    %v2535 = vadd.f32 %v2133, %v2381
    %v2536 = vadd.f32 %v2134, %v2388
    %v2537 = vadd.f32 %v2135, %v2393
    %v2538 = vadd.f32 %v2136, %v2400
    %v2539 = vadd.f32 %v2137, %v2403
    %v2540 = vadd.f32 %v2138, %v2410
    %v2541 = vadd.f32 %v2139, %v2415
    %v2542 = vadd.f32 %v2140, %v2422
    %v2543 = vadd.f32 %v2141, %v2425
    %v2544 = vadd.f32 %v2142, %v2432
    %v2545 = vadd.f32 %v2143, %v2437
    %v2546 = vadd.f32 %v2144, %v2444
    %v2547 = vadd.f32 %v2145, %v2447
    %v2548 = vadd.f32 %v2146, %v2454
    %v2549 = vadd.f32 %v2147, %v2459
    %v2550 = vadd.f32 %v2148, %v2466
    %v2551 = vadd.f32 %v2149, %v2469
    %v2552 = vadd.f32 %v2150, %v2476
    %v2553 = vadd.f32 %v2151, %v2481
    %v2554 = vadd.f32 %v2152, %v2488
    %v2555 = vadd.f32 %v2153, %v2491
    %v2556 = vadd.f32 %v2154, %v2498
    %v2557 = vadd.f32 %v2155, %v2503
    %v2558 = vadd.f32 %v2156, %v2510
    %v2559 = vadd.f32 %v2157, %v2513
    %v2560 = vadd.f32 %v2158, %v2520
    %v2561 = vadd.f32 %v2159, %v2525
    %v2562 = vld [vmem:[#allocation2 + $0x21] sm:$0xff]
    %v2563 = vld [vmem:[#allocation2 + $0x29] sm:$0xff]
    %v2564 = vld [vmem:[#allocation2 + $0x31] sm:$0xff]
    %v2565 = vld [vmem:[#allocation2 + $0x39] sm:$0xff]
    %v2566 = vld [vmem:[#allocation2 + $0x41] sm:$0xff]
    %v2567 = vld [vmem:[#allocation2 + $0x49] sm:$0xff]
    %v2568 = vld [vmem:[#allocation2 + $0x51] sm:$0xff]
    %v2569 = vld [vmem:[#allocation2 + $0x59] sm:$0xff]
    %v2570 = vld [vmem:[#allocation2 + $0x61] sm:$0xff]
    %v2571 = vld [vmem:[#allocation2 + $0x69] sm:$0xff]
    %v2572 = vld [vmem:[#allocation2 + $0x71] sm:$0xff]
    %v2573 = vld [vmem:[#allocation2 + $0x79] sm:$0xff]
    %v2574 = vld [vmem:[#allocation2 + $0x81] sm:$0xff]
    %v2575 = vld [vmem:[#allocation2 + $0x89] sm:$0xff]
    %v2576 = vld [vmem:[#allocation2 + $0x91] sm:$0xff]
    %v2577 = vld [vmem:[#allocation2 + $0x99] sm:$0xff]
    %v2578 = vld [vmem:[#allocation2 + $0xa1] sm:$0xff]
    %v2579 = vld [vmem:[#allocation2 + $0xa9] sm:$0xff]
    %v2580 = vld [vmem:[#allocation2 + $0xb1] sm:$0xff]
    %v2581 = vld [vmem:[#allocation2 + $0xb9] sm:$0xff]
    %v2582 = vld [vmem:[#allocation2 + $0xc1] sm:$0xff]
    %v2583 = vld [vmem:[#allocation2 + $0xc9] sm:$0xff]
    %v2584 = vld [vmem:[#allocation2 + $0xd1] sm:$0xff]
    %v2585 = vld [vmem:[#allocation2 + $0xd9] sm:$0xff]
    %v2586 = vld [vmem:[#allocation2 + $0xe1] sm:$0xff]
    %v2587 = vld [vmem:[#allocation2 + $0xe9] sm:$0xff]
    %v2588 = vld [vmem:[#allocation2 + $0xf1] sm:$0xff]
    %v2589 = vld [vmem:[#allocation2 + $0xf9] sm:$0xff]
    %v2590 = vld [vmem:[#allocation2 + $0x101] sm:$0xff]
    %v2591 = vld [vmem:[#allocation2 + $0x109] sm:$0xff]
    %v2592 = vld [vmem:[#allocation2 + $0x111] sm:$0xff]
    %v2593 = vld [vmem:[#allocation2 + $0x119] sm:$0xff]
    %v2594 = vld [vmem:[#allocation2 + $0x121] sm:$0xff]
    %v2595 = vld [vmem:[#allocation2 + $0x129] sm:$0xff]
    %v2596 = vld [vmem:[#allocation2 + $0x131] sm:$0xff]
    %v2597 = vld [vmem:[#allocation2 + $0x139] sm:$0xff]
    %v2598 = vld [vmem:[#allocation2 + $0x141] sm:$0xff]
    %v2599 = vld [vmem:[#allocation2 + $0x149] sm:$0xff]
    %v2600 = vld [vmem:[#allocation2 + $0x151] sm:$0xff]
    %v2601 = vld [vmem:[#allocation2 + $0x159] sm:$0xff]
    %v2602 = vld [vmem:[#allocation2 + $0x161] sm:$0xff]
    %v2603 = vld [vmem:[#allocation2 + $0x169] sm:$0xff]
    %v2604 = vld [vmem:[#allocation2 + $0x171] sm:$0xff]
    %v2605 = vld [vmem:[#allocation2 + $0x179] sm:$0xff]
    %v2606 = vld [vmem:[#allocation2 + $0x181] sm:$0xff]
    %v2607 = vld [vmem:[#allocation2 + $0x189] sm:$0xff]
    %v2608 = vld [vmem:[#allocation2 + $0x191] sm:$0xff]
    %v2609 = vld [vmem:[#allocation2 + $0x199] sm:$0xff]
    %v2610 = vpack.c.bf16 %v2563, %v2562
    %v2611 = vpack.c.bf16 %v2565, %v2564
    %v2612 = vpack.c.bf16 %v2567, %v2566
    %v2613 = vpack.c.bf16 %v2569, %v2568
    %v2614 = vpack.c.bf16 %v2571, %v2570
    %v2615 = vpack.c.bf16 %v2573, %v2572
    %v2616 = vpack.c.bf16 %v2575, %v2574
    %v2617 = vpack.c.bf16 %v2577, %v2576
    %v2618 = vpack.c.bf16 %v2579, %v2578
    %v2619 = vpack.c.bf16 %v2581, %v2580
    %v2620 = vpack.c.bf16 %v2583, %v2582
    %v2621 = vpack.c.bf16 %v2585, %v2584
    %v2622 = vpack.c.bf16 %v2587, %v2586
    %v2623 = vpack.c.bf16 %v2589, %v2588
    %v2624 = vpack.c.bf16 %v2591, %v2590
    %v2625 = vpack.c.bf16 %v2593, %v2592
    %v2626 = vpack.c.bf16 %v2595, %v2594
    %v2627 = vpack.c.bf16 %v2597, %v2596
    %v2628 = vpack.c.bf16 %v2599, %v2598
    %v2629 = vpack.c.bf16 %v2601, %v2600
    %v2630 = vpack.c.bf16 %v2603, %v2602
    %v2631 = vpack.c.bf16 %v2605, %v2604
    %v2632 = vpack.c.bf16 %v2607, %v2606
    %v2633 = vpack.c.bf16 %v2609, %v2608
    %s2634 = scalar_lea.vmem [#allocation6], 80
    %v2635 = vld [vmem:[%s2634] sm:$0xf]
    %v2636 = vld [vmem:[%s2634 + $0x4] sm:$0xf]
    %v2637 = vld [vmem:[%s2634 + $0x8] sm:$0xf]
    %v2638 = vld [vmem:[%s2634 + $0xc] sm:$0xf]
    %v2643 = vunpack.c.l.b16 %v2635
    %v2644 = vunpack.c.l.b16 %v2636
    %v2645 = vunpack.c.l.b16 %v2637
    %v2646 = vunpack.c.l.b16 %v2638
    %v2647 = vpack.c.b16 %v2644, %v2643
    %v2648 = vpack.c.b16 %v2646, %v2645
    %v2652 = vsel %vm65, %v2610, 0
    %v2655 = vsel %vm65, %v2611, 0
    %v2658 = vsel %vm65, %v2612, 0
    %v2661 = vsel %vm65, %v2613, 0
    %v2664 = vsel %vm65, %v2614, 0
    %v2667 = vsel %vm65, %v2615, 0
    %v2670 = vsel %vm65, %v2616, 0
    %v2673 = vsel %vm65, %v2617, 0
    %v2676 = vsel %vm65, %v2618, 0
    %v2679 = vsel %vm65, %v2619, 0
    %v2682 = vsel %vm65, %v2620, 0
    %v2685 = vsel %vm65, %v2621, 0
    %v2688 = vsel %vm65, %v2622, 0
    %v2691 = vsel %vm65, %v2623, 0
    %v2694 = vsel %vm65, %v2624, 0
    %v2697 = vsel %vm65, %v2625, 0
    %v2700 = vsel %vm65, %v2626, 0
    %v2703 = vsel %vm65, %v2627, 0
    %v2706 = vsel %vm65, %v2628, 0
    %v2709 = vsel %vm65, %v2629, 0
    %v2712 = vsel %vm65, %v2630, 0
    %v2715 = vsel %vm65, %v2631, 0
    %v2718 = vsel %vm65, %v2632, 0
    %v2721 = vsel %vm65, %v2633, 0
    %2723 = vmatprep.subr.bf16.mxu0 0
    %2724 = vmatpush1.bf16.msra.mxu0 %v2647
    %2725 = vmatprep.subr.bf16.mxu0 0
    %2726 = vmatpush1.bf16.msra.mxu0 %v2648
    %2727 = vmatprep.subr.bf16.mxu0 0
    %2728 = vmatpush1.bf16.msra.mxu0 0
    %2729 = vmatprep.subr.bf16.mxu0 0
    %2730 = vmatpush1.bf16.msra.mxu0 0
    %2731 = vmatprep.subr.bf16.mxu0 0
    %2732 = vmatpush1.bf16.msra.mxu0 0
    %2733 = vmatprep.subr.bf16.mxu0 0
    %2734 = vmatpush1.bf16.msra.mxu0 0
    %2735 = vmatprep.subr.bf16.mxu0 0
    %2736 = vmatpush1.bf16.msra.mxu0 0
    %2737 = vmatprep.subr.bf16.mxu0 0
    %2738 = vmatpush1.bf16.msra.mxu0 0
    %2739 = vmatprep.subr.bf16.mxu0 0
    %2740 = vmatpush1.bf16.msra.mxu0 0
    %2741 = vmatprep.subr.bf16.mxu0 0
    %2742 = vmatpush1.bf16.msra.mxu0 0
    %2743 = vmatprep.subr.bf16.mxu0 0
    %2744 = vmatpush1.bf16.msra.mxu0 0
    %2745 = vmatprep.subr.bf16.mxu0 0
    %2746 = vmatpush1.bf16.msra.mxu0 0
    %2747 = vmatprep.subr.bf16.mxu0 0
    %2748 = vmatpush1.bf16.msra.mxu0 0
    %2749 = vmatprep.subr.bf16.mxu0 0
    %2750 = vmatpush1.bf16.msra.mxu0 0
    %2751 = vmatprep.subr.bf16.mxu0 0
    %2752 = vmatpush1.bf16.msra.mxu0 0
    %2753 = vmatprep.subr.bf16.mxu0 0
    %2754 = vmatpush1.bf16.msra.mxu0 0
    %2755 = vmatprep.mubr.bf16.mxu0 0
    %2756 = vmatmul.mubr.bf16.gmra.mrb[0].mxu0 %v2652
    %v2757 = vpop.f32.mrb[0].mxu0
    %v2758 = vadd.f32 0.0, %v2757
    %v2759 = vpop.f32.mrb[0].mxu0
    %v2760 = vpop.f32.mrb[0].mxu0
    %v2761 = vadd.f32 0.0, %v2760
    %v2762 = vpop.f32.mrb[0].mxu0
    %2763 = vmatprep.mubr.bf16.mxu0 0
    %2764 = vmatmul.mubr.bf16.gmra.mrb[0].mxu0 %v2655
    %v2765 = vpop.f32.mrb[0].mxu0
    %v2766 = vpop.f32.mrb[0].mxu0
    %v2767 = vpop.f32.mrb[0].mxu0
    %v2768 = vadd.f32 0.0, %v2767
    %v2769 = vpop.f32.mrb[0].mxu0
    %2770 = vmatprep.mubr.bf16.mxu0 0
    %2771 = vmatmul.mubr.bf16.gmra.mrb[0].mxu0 %v2658
    %v2772 = vpop.f32.mrb[0].mxu0
    %v2773 = vadd.f32 0.0, %v2772
    %v2774 = vpop.f32.mrb[0].mxu0
    %v2775 = vpop.f32.mrb[0].mxu0
    %v2776 = vpop.f32.mrb[0].mxu0
    %2777 = vmatprep.mubr.bf16.mxu0 0
    %2778 = vmatmul.mubr.bf16.gmra.mrb[0].mxu0 %v2661
    %v2779 = vpop.f32.mrb[0].mxu0
    %v2780 = vadd.f32 0.0, %v2779
    %v2781 = vpop.f32.mrb[0].mxu0
    %v2782 = vpop.f32.mrb[0].mxu0
    %v2783 = vadd.f32 0.0, %v2782
    %v2784 = vpop.f32.mrb[0].mxu0
    %2785 = vmatprep.mubr.bf16.mxu0 0
    %2786 = vmatmul.mubr.bf16.gmra.mrb[0].mxu0 %v2664
    %v2787 = vpop.f32.mrb[0].mxu0
    %v2788 = vpop.f32.mrb[0].mxu0
    %v2789 = vpop.f32.mrb[0].mxu0
    %v2790 = vadd.f32 0.0, %v2789
    %v2791 = vpop.f32.mrb[0].mxu0
    %2792 = vmatprep.mubr.bf16.mxu0 0
    %2793 = vmatmul.mubr.bf16.gmra.mrb[0].mxu0 %v2667
    %v2794 = vpop.f32.mrb[0].mxu0
    %v2795 = vadd.f32 0.0, %v2794
    %v2796 = vpop.f32.mrb[0].mxu0
    %v2797 = vpop.f32.mrb[0].mxu0
    %v2798 = vpop.f32.mrb[0].mxu0
    %2799 = vmatprep.mubr.bf16.mxu0 0
    %2800 = vmatmul.mubr.bf16.gmra.mrb[0].mxu0 %v2670
    %v2801 = vpop.f32.mrb[0].mxu0
    %v2802 = vadd.f32 0.0, %v2801
    %v2803 = vpop.f32.mrb[0].mxu0
    %v2804 = vpop.f32.mrb[0].mxu0
    %v2805 = vadd.f32 0.0, %v2804
    %v2806 = vpop.f32.mrb[0].mxu0
    %2807 = vmatprep.mubr.bf16.mxu0 0
    %2808 = vmatmul.mubr.bf16.gmra.mrb[0].mxu0 %v2673
    %v2809 = vpop.f32.mrb[0].mxu0
    %v2810 = vpop.f32.mrb[0].mxu0
    %v2811 = vpop.f32.mrb[0].mxu0
    %v2812 = vadd.f32 0.0, %v2811
    %v2813 = vpop.f32.mrb[0].mxu0
    %2814 = vmatprep.mubr.bf16.mxu0 0
    %2815 = vmatmul.mubr.bf16.gmra.mrb[0].mxu0 %v2676
    %v2816 = vpop.f32.mrb[0].mxu0
    %v2817 = vadd.f32 0.0, %v2816
    %v2818 = vpop.f32.mrb[0].mxu0
    %v2819 = vpop.f32.mrb[0].mxu0
    %v2820 = vpop.f32.mrb[0].mxu0
    %2821 = vmatprep.mubr.bf16.mxu0 0
    %2822 = vmatmul.mubr.bf16.gmra.mrb[0].mxu0 %v2679
    %v2823 = vpop.f32.mrb[0].mxu0
    %v2824 = vadd.f32 0.0, %v2823
    %v2825 = vpop.f32.mrb[0].mxu0
    %v2826 = vpop.f32.mrb[0].mxu0
    %v2827 = vadd.f32 0.0, %v2826
    %v2828 = vpop.f32.mrb[0].mxu0
    %2829 = vmatprep.mubr.bf16.mxu0 0
    %2830 = vmatmul.mubr.bf16.gmra.mrb[0].mxu0 %v2682
    %v2831 = vpop.f32.mrb[0].mxu0
    %v2832 = vpop.f32.mrb[0].mxu0
    %v2833 = vpop.f32.mrb[0].mxu0
    %v2834 = vadd.f32 0.0, %v2833
    %v2835 = vpop.f32.mrb[0].mxu0
    %2836 = vmatprep.mubr.bf16.mxu0 0
    %2837 = vmatmul.mubr.bf16.gmra.mrb[0].mxu0 %v2685
    %v2838 = vpop.f32.mrb[0].mxu0
    %v2839 = vadd.f32 0.0, %v2838
    %v2840 = vpop.f32.mrb[0].mxu0
    %v2841 = vpop.f32.mrb[0].mxu0
    %v2842 = vpop.f32.mrb[0].mxu0
    %2843 = vmatprep.mubr.bf16.mxu0 0
    %2844 = vmatmul.mubr.bf16.gmra.mrb[0].mxu0 %v2688
    %v2845 = vpop.f32.mrb[0].mxu0
    %v2846 = vadd.f32 0.0, %v2845
    %v2847 = vpop.f32.mrb[0].mxu0
    %v2848 = vpop.f32.mrb[0].mxu0
    %v2849 = vadd.f32 0.0, %v2848
    %v2850 = vpop.f32.mrb[0].mxu0
    %2851 = vmatprep.mubr.bf16.mxu0 0
    %2852 = vmatmul.mubr.bf16.gmra.mrb[0].mxu0 %v2691
    %v2853 = vpop.f32.mrb[0].mxu0
    %v2854 = vpop.f32.mrb[0].mxu0
    %v2855 = vpop.f32.mrb[0].mxu0
    %v2856 = vadd.f32 0.0, %v2855
    %v2857 = vpop.f32.mrb[0].mxu0
    %2858 = vmatprep.mubr.bf16.mxu0 0
    %2859 = vmatmul.mubr.bf16.gmra.mrb[0].mxu0 %v2694
    %v2860 = vpop.f32.mrb[0].mxu0
    %v2861 = vadd.f32 0.0, %v2860
    %v2862 = vpop.f32.mrb[0].mxu0
    %v2863 = vpop.f32.mrb[0].mxu0
    %v2864 = vpop.f32.mrb[0].mxu0
    %2865 = vmatprep.mubr.bf16.mxu0 0
    %2866 = vmatmul.mubr.bf16.gmra.mrb[0].mxu0 %v2697
    %v2867 = vpop.f32.mrb[0].mxu0
    %v2868 = vadd.f32 0.0, %v2867
    %v2869 = vpop.f32.mrb[0].mxu0
    %v2870 = vpop.f32.mrb[0].mxu0
    %v2871 = vadd.f32 0.0, %v2870
    %v2872 = vpop.f32.mrb[0].mxu0
    %2873 = vmatprep.mubr.bf16.mxu0 0
    %2874 = vmatmul.mubr.bf16.gmra.mrb[0].mxu0 %v2700
    %v2875 = vpop.f32.mrb[0].mxu0
    %v2876 = vpop.f32.mrb[0].mxu0
    %v2877 = vpop.f32.mrb[0].mxu0
    %v2878 = vadd.f32 0.0, %v2877
    %v2879 = vpop.f32.mrb[0].mxu0
    %2880 = vmatprep.mubr.bf16.mxu0 0
    %2881 = vmatmul.mubr.bf16.gmra.mrb[0].mxu0 %v2703
    %v2882 = vpop.f32.mrb[0].mxu0
    %v2883 = vadd.f32 0.0, %v2882
    %v2884 = vpop.f32.mrb[0].mxu0
    %v2885 = vpop.f32.mrb[0].mxu0
    %v2886 = vpop.f32.mrb[0].mxu0
    %2887 = vmatprep.mubr.bf16.mxu0 0
    %2888 = vmatmul.mubr.bf16.gmra.mrb[0].mxu0 %v2706
    %v2889 = vpop.f32.mrb[0].mxu0
    %v2890 = vadd.f32 0.0, %v2889
    %v2891 = vpop.f32.mrb[0].mxu0
    %v2892 = vpop.f32.mrb[0].mxu0
    %v2893 = vadd.f32 0.0, %v2892
    %v2894 = vpop.f32.mrb[0].mxu0
    %2895 = vmatprep.mubr.bf16.mxu0 0
    %2896 = vmatmul.mubr.bf16.gmra.mrb[0].mxu0 %v2709
    %v2897 = vpop.f32.mrb[0].mxu0
    %v2898 = vpop.f32.mrb[0].mxu0
    %v2899 = vpop.f32.mrb[0].mxu0
    %v2900 = vadd.f32 0.0, %v2899
    %v2901 = vpop.f32.mrb[0].mxu0
    %2902 = vmatprep.mubr.bf16.mxu0 0
    %2903 = vmatmul.mubr.bf16.gmra.mrb[0].mxu0 %v2712
    %v2904 = vpop.f32.mrb[0].mxu0
    %v2905 = vadd.f32 0.0, %v2904
    %v2906 = vpop.f32.mrb[0].mxu0
    %v2907 = vpop.f32.mrb[0].mxu0
    %v2908 = vpop.f32.mrb[0].mxu0
    %2909 = vmatprep.mubr.bf16.mxu0 0
    %2910 = vmatmul.mubr.bf16.gmra.mrb[0].mxu0 %v2715
    %v2911 = vpop.f32.mrb[0].mxu0
    %v2912 = vadd.f32 0.0, %v2911
    %v2913 = vpop.f32.mrb[0].mxu0
    %v2914 = vpop.f32.mrb[0].mxu0
    %v2915 = vadd.f32 0.0, %v2914
    %v2916 = vpop.f32.mrb[0].mxu0
    %2917 = vmatprep.mubr.bf16.mxu0 0
    %2918 = vmatmul.mubr.bf16.gmra.mrb[0].mxu0 %v2718
    %v2919 = vpop.f32.mrb[0].mxu0
    %v2920 = vpop.f32.mrb[0].mxu0
    %v2921 = vpop.f32.mrb[0].mxu0
    %v2922 = vadd.f32 0.0, %v2921
    %v2923 = vpop.f32.mrb[0].mxu0
    %2924 = vmatprep.mubr.bf16.mxu0 0
    %2925 = vmatmul.mubr.bf16.gmra.mrb[0].mxu0 %v2721
    %v2926 = vpop.f32.mrb[0].mxu0
    %v2927 = vadd.f32 0.0, %v2926
    %v2928 = vpop.f32.mrb[0].mxu0
    %v2929 = vpop.f32.mrb[0].mxu0
    %v2930 = vpop.f32.mrb[0].mxu0
    %2931 = vdwg.mxu0
    %v2932 = vadd.f32 %v2530, %v2758
    %v2933 = vadd.f32 %v2531, %v2761
    %v2934 = vadd.f32 %v2532, %v2768
    %v2935 = vadd.f32 %v2533, %v2773
    %v2936 = vadd.f32 %v2534, %v2780
    %v2937 = vadd.f32 %v2535, %v2783
    %v2938 = vadd.f32 %v2536, %v2790
    %v2939 = vadd.f32 %v2537, %v2795
    %v2940 = vadd.f32 %v2538, %v2802
    %v2941 = vadd.f32 %v2539, %v2805
    %v2942 = vadd.f32 %v2540, %v2812
    %v2943 = vadd.f32 %v2541, %v2817
    %v2944 = vadd.f32 %v2542, %v2824
    %v2945 = vadd.f32 %v2543, %v2827
    %v2946 = vadd.f32 %v2544, %v2834
    %v2947 = vadd.f32 %v2545, %v2839
    %v2948 = vadd.f32 %v2546, %v2846
    %v2949 = vadd.f32 %v2547, %v2849
    %v2950 = vadd.f32 %v2548, %v2856
    %v2951 = vadd.f32 %v2549, %v2861
    %v2952 = vadd.f32 %v2550, %v2868
    %v2953 = vadd.f32 %v2551, %v2871
    %v2954 = vadd.f32 %v2552, %v2878
    %v2955 = vadd.f32 %v2553, %v2883
    %v2956 = vadd.f32 %v2554, %v2890
    %v2957 = vadd.f32 %v2555, %v2893
    %v2958 = vadd.f32 %v2556, %v2900
    %v2959 = vadd.f32 %v2557, %v2905
    %v2960 = vadd.f32 %v2558, %v2912
    %v2961 = vadd.f32 %v2559, %v2915
    %v2962 = vadd.f32 %v2560, %v2922
    %v2963 = vadd.f32 %v2561, %v2927
    %v2964 = vld [vmem:[#allocation2 + $0x37] sm:$0xff]
    %v2965 = vld [vmem:[#allocation2 + $0x3f] sm:$0xff]
    %v2966 = vld [vmem:[#allocation2 + $0x47] sm:$0xff]
    %v2967 = vld [vmem:[#allocation2 + $0x4f] sm:$0xff]
    %v2968 = vld [vmem:[#allocation2 + $0x57] sm:$0xff]
    %v2969 = vld [vmem:[#allocation2 + $0x5f] sm:$0xff]
    %v2970 = vld [vmem:[#allocation2 + $0x67] sm:$0xff]
    %v2971 = vld [vmem:[#allocation2 + $0x6f] sm:$0xff]
    %v2972 = vld [vmem:[#allocation2 + $0x77] sm:$0xff]
    %v2973 = vld [vmem:[#allocation2 + $0x7f] sm:$0xff]
    %v2974 = vld [vmem:[#allocation2 + $0x87] sm:$0xff]
    %v2975 = vld [vmem:[#allocation2 + $0x8f] sm:$0xff]
    %v2976 = vld [vmem:[#allocation2 + $0x97] sm:$0xff]
    %v2977 = vld [vmem:[#allocation2 + $0x9f] sm:$0xff]
    %v2978 = vld [vmem:[#allocation2 + $0xa7] sm:$0xff]
    %v2979 = vld [vmem:[#allocation2 + $0xaf] sm:$0xff]
    %v2980 = vld [vmem:[#allocation2 + $0xb7] sm:$0xff]
    %v2981 = vld [vmem:[#allocation2 + $0xbf] sm:$0xff]
    %v2982 = vld [vmem:[#allocation2 + $0xc7] sm:$0xff]
    %v2983 = vld [vmem:[#allocation2 + $0xcf] sm:$0xff]
    %v2984 = vld [vmem:[#allocation2 + $0xd7] sm:$0xff]
    %v2985 = vld [vmem:[#allocation2 + $0xdf] sm:$0xff]
    %v2986 = vld [vmem:[#allocation2 + $0xe7] sm:$0xff]
    %v2987 = vld [vmem:[#allocation2 + $0xef] sm:$0xff]
    %v2988 = vld [vmem:[#allocation2 + $0xf7] sm:$0xff]
    %v2989 = vld [vmem:[#allocation2 + $0xff] sm:$0xff]
    %v2990 = vld [vmem:[#allocation2 + $0x107] sm:$0xff]
    %v2991 = vld [vmem:[#allocation2 + $0x10f] sm:$0xff]
    %v2992 = vld [vmem:[#allocation2 + $0x117] sm:$0xff]
    %v2993 = vld [vmem:[#allocation2 + $0x11f] sm:$0xff]
    %v2994 = vld [vmem:[#allocation2 + $0x127] sm:$0xff]
    %v2995 = vld [vmem:[#allocation2 + $0x12f] sm:$0xff]
    %v2996 = vld [vmem:[#allocation2 + $0x137] sm:$0xff]
    %v2997 = vld [vmem:[#allocation2 + $0x13f] sm:$0xff]
    %v2998 = vld [vmem:[#allocation2 + $0x147] sm:$0xff]
    %v2999 = vld [vmem:[#allocation2 + $0x14f] sm:$0xff]
    %v3000 = vld [vmem:[#allocation2 + $0x157] sm:$0xff]
    %v3001 = vld [vmem:[#allocation2 + $0x15f] sm:$0xff]
    %v3002 = vld [vmem:[#allocation2 + $0x167] sm:$0xff]
    %v3003 = vld [vmem:[#allocation2 + $0x16f] sm:$0xff]
    %v3004 = vld [vmem:[#allocation2 + $0x177] sm:$0xff]
    %v3005 = vld [vmem:[#allocation2 + $0x17f] sm:$0xff]
    %v3006 = vld [vmem:[#allocation2 + $0x187] sm:$0xff]
    %v3007 = vld [vmem:[#allocation2 + $0x18f] sm:$0xff]
    %v3008 = vld [vmem:[#allocation2 + $0x197] sm:$0xff]
    %v3009 = vld [vmem:[#allocation2 + $0x19f] sm:$0xff]
    %v3010 = vld [vmem:[#allocation2 + $0x1a7] sm:$0xff]
    %v3011 = vld [vmem:[#allocation2 + $0x1af] sm:$0xff]
    %v3012 = vpack.c.bf16 %v2965, %v2964
    %v3013 = vpack.c.bf16 %v2967, %v2966
    %v3014 = vpack.c.bf16 %v2969, %v2968
    %v3015 = vpack.c.bf16 %v2971, %v2970
    %v3016 = vpack.c.bf16 %v2973, %v2972
    %v3017 = vpack.c.bf16 %v2975, %v2974
    %v3018 = vpack.c.bf16 %v2977, %v2976
    %v3019 = vpack.c.bf16 %v2979, %v2978
    %v3020 = vpack.c.bf16 %v2981, %v2980
    %v3021 = vpack.c.bf16 %v2983, %v2982
    %v3022 = vpack.c.bf16 %v2985, %v2984
    %v3023 = vpack.c.bf16 %v2987, %v2986
    %v3024 = vpack.c.bf16 %v2989, %v2988
    %v3025 = vpack.c.bf16 %v2991, %v2990
    %v3026 = vpack.c.bf16 %v2993, %v2992
    %v3027 = vpack.c.bf16 %v2995, %v2994
    %v3028 = vpack.c.bf16 %v2997, %v2996
    %v3029 = vpack.c.bf16 %v2999, %v2998
    %v3030 = vpack.c.bf16 %v3001, %v3000
    %v3031 = vpack.c.bf16 %v3003, %v3002
    %v3032 = vpack.c.bf16 %v3005, %v3004
    %v3033 = vpack.c.bf16 %v3007, %v3006
    %v3034 = vpack.c.bf16 %v3009, %v3008
    %v3035 = vpack.c.bf16 %v3011, %v3010
    %s3036 = scalar_lea.vmem [#allocation6], 96
    %v3037 = vld [vmem:[%s3036] sm:$0xf]
    %v3038 = vld [vmem:[%s3036 + $0x4] sm:$0xf]
    %v3039 = vld [vmem:[%s3036 + $0x8] sm:$0xf]
    %v3040 = vld [vmem:[%s3036 + $0xc] sm:$0xf]
    %v3045 = vunpack.c.l.b16 %v3037
    %v3046 = vunpack.c.l.b16 %v3038
    %v3047 = vunpack.c.l.b16 %v3039
    %v3048 = vunpack.c.l.b16 %v3040
    %v3049 = vpack.c.b16 %v3046, %v3045
    %v3050 = vpack.c.b16 %v3048, %v3047
    %v3054 = vsel %vm65, %v3012, 0
    %v3057 = vsel %vm65, %v3013, 0
    %v3060 = vsel %vm65, %v3014, 0
    %v3063 = vsel %vm65, %v3015, 0
    %v3066 = vsel %vm65, %v3016, 0
    %v3069 = vsel %vm65, %v3017, 0
    %v3072 = vsel %vm65, %v3018, 0
    %v3075 = vsel %vm65, %v3019, 0
    %v3078 = vsel %vm65, %v3020, 0
    %v3081 = vsel %vm65, %v3021, 0
    %v3084 = vsel %vm65, %v3022, 0
    %v3087 = vsel %vm65, %v3023, 0
    %v3090 = vsel %vm65, %v3024, 0
    %v3093 = vsel %vm65, %v3025, 0
    %v3096 = vsel %vm65, %v3026, 0
    %v3099 = vsel %vm65, %v3027, 0
    %v3102 = vsel %vm65, %v3028, 0
    %v3105 = vsel %vm65, %v3029, 0
    %v3108 = vsel %vm65, %v3030, 0
    %v3111 = vsel %vm65, %v3031, 0
    %v3114 = vsel %vm65, %v3032, 0
    %v3117 = vsel %vm65, %v3033, 0
    %v3120 = vsel %vm65, %v3034, 0
    %v3123 = vsel %vm65, %v3035, 0
    %3125 = vmatprep.subr.bf16.mxu0 0
    %3126 = vmatpush1.bf16.msra.mxu0 %v3049
    %3127 = vmatprep.subr.bf16.mxu0 0
    %3128 = vmatpush1.bf16.msra.mxu0 %v3050
    %3129 = vmatprep.subr.bf16.mxu0 0
    %3130 = vmatpush1.bf16.msra.mxu0 0
    %3131 = vmatprep.subr.bf16.mxu0 0
    %3132 = vmatpush1.bf16.msra.mxu0 0
    %3133 = vmatprep.subr.bf16.mxu0 0
    %3134 = vmatpush1.bf16.msra.mxu0 0
    %3135 = vmatprep.subr.bf16.mxu0 0
    %3136 = vmatpush1.bf16.msra.mxu0 0
    %3137 = vmatprep.subr.bf16.mxu0 0
    %3138 = vmatpush1.bf16.msra.mxu0 0
    %3139 = vmatprep.subr.bf16.mxu0 0
    %3140 = vmatpush1.bf16.msra.mxu0 0
    %3141 = vmatprep.subr.bf16.mxu0 0
    %3142 = vmatpush1.bf16.msra.mxu0 0
    %3143 = vmatprep.subr.bf16.mxu0 0
    %3144 = vmatpush1.bf16.msra.mxu0 0
    %3145 = vmatprep.subr.bf16.mxu0 0
    %3146 = vmatpush1.bf16.msra.mxu0 0
    %3147 = vmatprep.subr.bf16.mxu0 0
    %3148 = vmatpush1.bf16.msra.mxu0 0
    %3149 = vmatprep.subr.bf16.mxu0 0
    %3150 = vmatpush1.bf16.msra.mxu0 0
    %3151 = vmatprep.subr.bf16.mxu0 0
    %3152 = vmatpush1.bf16.msra.mxu0 0
    %3153 = vmatprep.subr.bf16.mxu0 0
    %3154 = vmatpush1.bf16.msra.mxu0 0
    %3155 = vmatprep.subr.bf16.mxu0 0
    %3156 = vmatpush1.bf16.msra.mxu0 0
    %3157 = vmatprep.mubr.bf16.mxu0 0
    %3158 = vmatmul.mubr.bf16.gmra.mrb[0].mxu0 %v3054
    %v3159 = vpop.f32.mrb[0].mxu0
    %v3160 = vadd.f32 0.0, %v3159
    %v3161 = vpop.f32.mrb[0].mxu0
    %v3162 = vpop.f32.mrb[0].mxu0
    %v3163 = vadd.f32 0.0, %v3162
    %v3164 = vpop.f32.mrb[0].mxu0
    %3165 = vmatprep.mubr.bf16.mxu0 0
    %3166 = vmatmul.mubr.bf16.gmra.mrb[0].mxu0 %v3057
    %v3167 = vpop.f32.mrb[0].mxu0
    %v3168 = vpop.f32.mrb[0].mxu0
    %v3169 = vpop.f32.mrb[0].mxu0
    %v3170 = vadd.f32 0.0, %v3169
    %v3171 = vpop.f32.mrb[0].mxu0
    %3172 = vmatprep.mubr.bf16.mxu0 0
    %3173 = vmatmul.mubr.bf16.gmra.mrb[0].mxu0 %v3060
    %v3174 = vpop.f32.mrb[0].mxu0
    %v3175 = vadd.f32 0.0, %v3174
    %v3176 = vpop.f32.mrb[0].mxu0
    %v3177 = vpop.f32.mrb[0].mxu0
    %v3178 = vpop.f32.mrb[0].mxu0
    %3179 = vmatprep.mubr.bf16.mxu0 0
    %3180 = vmatmul.mubr.bf16.gmra.mrb[0].mxu0 %v3063
    %v3181 = vpop.f32.mrb[0].mxu0
    %v3182 = vadd.f32 0.0, %v3181
    %v3183 = vpop.f32.mrb[0].mxu0
    %v3184 = vpop.f32.mrb[0].mxu0
    %v3185 = vadd.f32 0.0, %v3184
    %v3186 = vpop.f32.mrb[0].mxu0
    %3187 = vmatprep.mubr.bf16.mxu0 0
    %3188 = vmatmul.mubr.bf16.gmra.mrb[0].mxu0 %v3066
    %v3189 = vpop.f32.mrb[0].mxu0
    %v3190 = vpop.f32.mrb[0].mxu0
    %v3191 = vpop.f32.mrb[0].mxu0
    %v3192 = vadd.f32 0.0, %v3191
    %v3193 = vpop.f32.mrb[0].mxu0
    %3194 = vmatprep.mubr.bf16.mxu0 0
    %3195 = vmatmul.mubr.bf16.gmra.mrb[0].mxu0 %v3069
    %v3196 = vpop.f32.mrb[0].mxu0
    %v3197 = vadd.f32 0.0, %v3196
    %v3198 = vpop.f32.mrb[0].mxu0
    %v3199 = vpop.f32.mrb[0].mxu0
    %v3200 = vpop.f32.mrb[0].mxu0
    %3201 = vmatprep.mubr.bf16.mxu0 0
    %3202 = vmatmul.mubr.bf16.gmra.mrb[0].mxu0 %v3072
    %v3203 = vpop.f32.mrb[0].mxu0
    %v3204 = vadd.f32 0.0, %v3203
    %v3205 = vpop.f32.mrb[0].mxu0
    %v3206 = vpop.f32.mrb[0].mxu0
    %v3207 = vadd.f32 0.0, %v3206
    %v3208 = vpop.f32.mrb[0].mxu0
    %3209 = vmatprep.mubr.bf16.mxu0 0
    %3210 = vmatmul.mubr.bf16.gmra.mrb[0].mxu0 %v3075
    %v3211 = vpop.f32.mrb[0].mxu0
    %v3212 = vpop.f32.mrb[0].mxu0
    %v3213 = vpop.f32.mrb[0].mxu0
    %v3214 = vadd.f32 0.0, %v3213
    %v3215 = vpop.f32.mrb[0].mxu0
    %3216 = vmatprep.mubr.bf16.mxu0 0
    %3217 = vmatmul.mubr.bf16.gmra.mrb[0].mxu0 %v3078
    %v3218 = vpop.f32.mrb[0].mxu0
    %v3219 = vadd.f32 0.0, %v3218
    %v3220 = vpop.f32.mrb[0].mxu0
    %v3221 = vpop.f32.mrb[0].mxu0
    %v3222 = vpop.f32.mrb[0].mxu0
    %3223 = vmatprep.mubr.bf16.mxu0 0
    %3224 = vmatmul.mubr.bf16.gmra.mrb[0].mxu0 %v3081
    %v3225 = vpop.f32.mrb[0].mxu0
    %v3226 = vadd.f32 0.0, %v3225
    %v3227 = vpop.f32.mrb[0].mxu0
    %v3228 = vpop.f32.mrb[0].mxu0
    %v3229 = vadd.f32 0.0, %v3228
    %v3230 = vpop.f32.mrb[0].mxu0
    %3231 = vmatprep.mubr.bf16.mxu0 0
    %3232 = vmatmul.mubr.bf16.gmra.mrb[0].mxu0 %v3084
    %v3233 = vpop.f32.mrb[0].mxu0
    %v3234 = vpop.f32.mrb[0].mxu0
    %v3235 = vpop.f32.mrb[0].mxu0
    %v3236 = vadd.f32 0.0, %v3235
    %v3237 = vpop.f32.mrb[0].mxu0
    %3238 = vmatprep.mubr.bf16.mxu0 0
    %3239 = vmatmul.mubr.bf16.gmra.mrb[0].mxu0 %v3087
    %v3240 = vpop.f32.mrb[0].mxu0
    %v3241 = vadd.f32 0.0, %v3240
    %v3242 = vpop.f32.mrb[0].mxu0
    %v3243 = vpop.f32.mrb[0].mxu0
    %v3244 = vpop.f32.mrb[0].mxu0
    %3245 = vmatprep.mubr.bf16.mxu0 0
    %3246 = vmatmul.mubr.bf16.gmra.mrb[0].mxu0 %v3090
    %v3247 = vpop.f32.mrb[0].mxu0
    %v3248 = vadd.f32 0.0, %v3247
    %v3249 = vpop.f32.mrb[0].mxu0
    %v3250 = vpop.f32.mrb[0].mxu0
    %v3251 = vadd.f32 0.0, %v3250
    %v3252 = vpop.f32.mrb[0].mxu0
    %3253 = vmatprep.mubr.bf16.mxu0 0
    %3254 = vmatmul.mubr.bf16.gmra.mrb[0].mxu0 %v3093
    %v3255 = vpop.f32.mrb[0].mxu0
    %v3256 = vpop.f32.mrb[0].mxu0
    %v3257 = vpop.f32.mrb[0].mxu0
    %v3258 = vadd.f32 0.0, %v3257
    %v3259 = vpop.f32.mrb[0].mxu0
    %3260 = vmatprep.mubr.bf16.mxu0 0
    %3261 = vmatmul.mubr.bf16.gmra.mrb[0].mxu0 %v3096
    %v3262 = vpop.f32.mrb[0].mxu0
    %v3263 = vadd.f32 0.0, %v3262
    %v3264 = vpop.f32.mrb[0].mxu0
    %v3265 = vpop.f32.mrb[0].mxu0
    %v3266 = vpop.f32.mrb[0].mxu0
    %3267 = vmatprep.mubr.bf16.mxu0 0
    %3268 = vmatmul.mubr.bf16.gmra.mrb[0].mxu0 %v3099
    %v3269 = vpop.f32.mrb[0].mxu0
    %v3270 = vadd.f32 0.0, %v3269
    %v3271 = vpop.f32.mrb[0].mxu0
    %v3272 = vpop.f32.mrb[0].mxu0
    %v3273 = vadd.f32 0.0, %v3272
    %v3274 = vpop.f32.mrb[0].mxu0
    %3275 = vmatprep.mubr.bf16.mxu0 0
    %3276 = vmatmul.mubr.bf16.gmra.mrb[0].mxu0 %v3102
    %v3277 = vpop.f32.mrb[0].mxu0
    %v3278 = vpop.f32.mrb[0].mxu0
    %v3279 = vpop.f32.mrb[0].mxu0
    %v3280 = vadd.f32 0.0, %v3279
    %v3281 = vpop.f32.mrb[0].mxu0
    %3282 = vmatprep.mubr.bf16.mxu0 0
    %3283 = vmatmul.mubr.bf16.gmra.mrb[0].mxu0 %v3105
    %v3284 = vpop.f32.mrb[0].mxu0
    %v3285 = vadd.f32 0.0, %v3284
    %v3286 = vpop.f32.mrb[0].mxu0
    %v3287 = vpop.f32.mrb[0].mxu0
    %v3288 = vpop.f32.mrb[0].mxu0
    %3289 = vmatprep.mubr.bf16.mxu0 0
    %3290 = vmatmul.mubr.bf16.gmra.mrb[0].mxu0 %v3108
    %v3291 = vpop.f32.mrb[0].mxu0
    %v3292 = vadd.f32 0.0, %v3291
    %v3293 = vpop.f32.mrb[0].mxu0
    %v3294 = vpop.f32.mrb[0].mxu0
    %v3295 = vadd.f32 0.0, %v3294
    %v3296 = vpop.f32.mrb[0].mxu0
    %3297 = vmatprep.mubr.bf16.mxu0 0
    %3298 = vmatmul.mubr.bf16.gmra.mrb[0].mxu0 %v3111
    %v3299 = vpop.f32.mrb[0].mxu0
    %v3300 = vpop.f32.mrb[0].mxu0
    %v3301 = vpop.f32.mrb[0].mxu0
    %v3302 = vadd.f32 0.0, %v3301
    %v3303 = vpop.f32.mrb[0].mxu0
    %3304 = vmatprep.mubr.bf16.mxu0 0
    %3305 = vmatmul.mubr.bf16.gmra.mrb[0].mxu0 %v3114
    %v3306 = vpop.f32.mrb[0].mxu0
    %v3307 = vadd.f32 0.0, %v3306
    %v3308 = vpop.f32.mrb[0].mxu0
    %v3309 = vpop.f32.mrb[0].mxu0
    %v3310 = vpop.f32.mrb[0].mxu0
    %3311 = vmatprep.mubr.bf16.mxu0 0
    %3312 = vmatmul.mubr.bf16.gmra.mrb[0].mxu0 %v3117
    %v3313 = vpop.f32.mrb[0].mxu0
    %v3314 = vadd.f32 0.0, %v3313
    %v3315 = vpop.f32.mrb[0].mxu0
    %v3316 = vpop.f32.mrb[0].mxu0
    %v3317 = vadd.f32 0.0, %v3316
    %v3318 = vpop.f32.mrb[0].mxu0
    %3319 = vmatprep.mubr.bf16.mxu0 0
    %3320 = vmatmul.mubr.bf16.gmra.mrb[0].mxu0 %v3120
    %v3321 = vpop.f32.mrb[0].mxu0
    %v3322 = vpop.f32.mrb[0].mxu0
    %v3323 = vpop.f32.mrb[0].mxu0
    %v3324 = vadd.f32 0.0, %v3323
    %v3325 = vpop.f32.mrb[0].mxu0
    %3326 = vmatprep.mubr.bf16.mxu0 0
    %3327 = vmatmul.mubr.bf16.gmra.mrb[0].mxu0 %v3123
    %v3328 = vpop.f32.mrb[0].mxu0
    %v3329 = vadd.f32 0.0, %v3328
    %v3330 = vpop.f32.mrb[0].mxu0
    %v3331 = vpop.f32.mrb[0].mxu0
    %v3332 = vpop.f32.mrb[0].mxu0
    %3333 = vdwg.mxu0
    %v3334 = vadd.f32 %v2932, %v3160
    %v3335 = vadd.f32 %v2933, %v3163
    %v3336 = vadd.f32 %v2934, %v3170
    %v3337 = vadd.f32 %v2935, %v3175
    %v3338 = vadd.f32 %v2936, %v3182
    %v3339 = vadd.f32 %v2937, %v3185
    %v3340 = vadd.f32 %v2938, %v3192
    %v3341 = vadd.f32 %v2939, %v3197
    %v3342 = vadd.f32 %v2940, %v3204
    %v3343 = vadd.f32 %v2941, %v3207
    %v3344 = vadd.f32 %v2942, %v3214
    %v3345 = vadd.f32 %v2943, %v3219
    %v3346 = vadd.f32 %v2944, %v3226
    %v3347 = vadd.f32 %v2945, %v3229
    %v3348 = vadd.f32 %v2946, %v3236
    %v3349 = vadd.f32 %v2947, %v3241
    %v3350 = vadd.f32 %v2948, %v3248
    %v3351 = vadd.f32 %v2949, %v3251
    %v3352 = vadd.f32 %v2950, %v3258
    %v3353 = vadd.f32 %v2951, %v3263
    %v3354 = vadd.f32 %v2952, %v3270
    %v3355 = vadd.f32 %v2953, %v3273
    %v3356 = vadd.f32 %v2954, %v3280
    %v3357 = vadd.f32 %v2955, %v3285
    %v3358 = vadd.f32 %v2956, %v3292
    %v3359 = vadd.f32 %v2957, %v3295
    %v3360 = vadd.f32 %v2958, %v3302
    %v3361 = vadd.f32 %v2959, %v3307
    %v3362 = vadd.f32 %v2960, %v3314
    %v3363 = vadd.f32 %v2961, %v3317
    %v3364 = vadd.f32 %v2962, %v3324
    %v3365 = vadd.f32 %v2963, %v3329
    %v3366 = vld [vmem:[#allocation2 + $0x38] sm:$0xff]
    %v3367 = vld [vmem:[#allocation2 + $0x40] sm:$0xff]
    %v3368 = vld [vmem:[#allocation2 + $0x48] sm:$0xff]
    %v3369 = vld [vmem:[#allocation2 + $0x50] sm:$0xff]
    %v3370 = vld [vmem:[#allocation2 + $0x58] sm:$0xff]
    %v3371 = vld [vmem:[#allocation2 + $0x60] sm:$0xff]
    %v3372 = vld [vmem:[#allocation2 + $0x68] sm:$0xff]
    %v3373 = vld [vmem:[#allocation2 + $0x70] sm:$0xff]
    %v3374 = vld [vmem:[#allocation2 + $0x78] sm:$0xff]
    %v3375 = vld [vmem:[#allocation2 + $0x80] sm:$0xff]
    %v3376 = vld [vmem:[#allocation2 + $0x88] sm:$0xff]
    %v3377 = vld [vmem:[#allocation2 + $0x90] sm:$0xff]
    %v3378 = vld [vmem:[#allocation2 + $0x98] sm:$0xff]
    %v3379 = vld [vmem:[#allocation2 + $0xa0] sm:$0xff]
    %v3380 = vld [vmem:[#allocation2 + $0xa8] sm:$0xff]
    %v3381 = vld [vmem:[#allocation2 + $0xb0] sm:$0xff]
    %v3382 = vld [vmem:[#allocation2 + $0xb8] sm:$0xff]
    %v3383 = vld [vmem:[#allocation2 + $0xc0] sm:$0xff]
    %v3384 = vld [vmem:[#allocation2 + $0xc8] sm:$0xff]
    %v3385 = vld [vmem:[#allocation2 + $0xd0] sm:$0xff]
    %v3386 = vld [vmem:[#allocation2 + $0xd8] sm:$0xff]
    %v3387 = vld [vmem:[#allocation2 + $0xe0] sm:$0xff]
    %v3388 = vld [vmem:[#allocation2 + $0xe8] sm:$0xff]
    %v3389 = vld [vmem:[#allocation2 + $0xf0] sm:$0xff]
    %v3390 = vld [vmem:[#allocation2 + $0xf8] sm:$0xff]
    %v3391 = vld [vmem:[#allocation2 + $0x100] sm:$0xff]
    %v3392 = vld [vmem:[#allocation2 + $0x108] sm:$0xff]
    %v3393 = vld [vmem:[#allocation2 + $0x110] sm:$0xff]
    %v3394 = vld [vmem:[#allocation2 + $0x118] sm:$0xff]
    %v3395 = vld [vmem:[#allocation2 + $0x120] sm:$0xff]
    %v3396 = vld [vmem:[#allocation2 + $0x128] sm:$0xff]
    %v3397 = vld [vmem:[#allocation2 + $0x130] sm:$0xff]
    %v3398 = vld [vmem:[#allocation2 + $0x138] sm:$0xff]
    %v3399 = vld [vmem:[#allocation2 + $0x140] sm:$0xff]
    %v3400 = vld [vmem:[#allocation2 + $0x148] sm:$0xff]
    %v3401 = vld [vmem:[#allocation2 + $0x150] sm:$0xff]
    %v3402 = vld [vmem:[#allocation2 + $0x158] sm:$0xff]
    %v3403 = vld [vmem:[#allocation2 + $0x160] sm:$0xff]
    %v3404 = vld [vmem:[#allocation2 + $0x168] sm:$0xff]
    %v3405 = vld [vmem:[#allocation2 + $0x170] sm:$0xff]
    %v3406 = vld [vmem:[#allocation2 + $0x178] sm:$0xff]
    %v3407 = vld [vmem:[#allocation2 + $0x180] sm:$0xff]
    %v3408 = vld [vmem:[#allocation2 + $0x188] sm:$0xff]
    %v3409 = vld [vmem:[#allocation2 + $0x190] sm:$0xff]
    %v3410 = vld [vmem:[#allocation2 + $0x198] sm:$0xff]
    %v3411 = vld [vmem:[#allocation2 + $0x1a0] sm:$0xff]
    %v3412 = vld [vmem:[#allocation2 + $0x1a8] sm:$0xff]
    %v3413 = vld [vmem:[#allocation2 + $0x1b0] sm:$0xff]
    %v3414 = vpack.c.bf16 %v3367, %v3366
    %v3415 = vpack.c.bf16 %v3369, %v3368
    %v3416 = vpack.c.bf16 %v3371, %v3370
    %v3417 = vpack.c.bf16 %v3373, %v3372
    %v3418 = vpack.c.bf16 %v3375, %v3374
    %v3419 = vpack.c.bf16 %v3377, %v3376
    %v3420 = vpack.c.bf16 %v3379, %v3378
    %v3421 = vpack.c.bf16 %v3381, %v3380
    %v3422 = vpack.c.bf16 %v3383, %v3382
    %v3423 = vpack.c.bf16 %v3385, %v3384
    %v3424 = vpack.c.bf16 %v3387, %v3386
    %v3425 = vpack.c.bf16 %v3389, %v3388
    %v3426 = vpack.c.bf16 %v3391, %v3390
    %v3427 = vpack.c.bf16 %v3393, %v3392
    %v3428 = vpack.c.bf16 %v3395, %v3394
    %v3429 = vpack.c.bf16 %v3397, %v3396
    %v3430 = vpack.c.bf16 %v3399, %v3398
    %v3431 = vpack.c.bf16 %v3401, %v3400
    %v3432 = vpack.c.bf16 %v3403, %v3402
    %v3433 = vpack.c.bf16 %v3405, %v3404
    %v3434 = vpack.c.bf16 %v3407, %v3406
    %v3435 = vpack.c.bf16 %v3409, %v3408
    %v3436 = vpack.c.bf16 %v3411, %v3410
    %v3437 = vpack.c.bf16 %v3413, %v3412
    %s3438 = scalar_lea.vmem [#allocation6], 112
    %v3439 = vld [vmem:[%s3438] sm:$0xf]
    %v3440 = vld [vmem:[%s3438 + $0x4] sm:$0xf]
    %v3441 = vld [vmem:[%s3438 + $0x8] sm:$0xf]
    %v3442 = vld [vmem:[%s3438 + $0xc] sm:$0xf]
    %v3447 = vunpack.c.l.b16 %v3439
    %v3448 = vunpack.c.l.b16 %v3440
    %v3449 = vunpack.c.l.b16 %v3441
    %v3450 = vunpack.c.l.b16 %v3442
    %v3451 = vpack.c.b16 %v3448, %v3447
    %v3452 = vpack.c.b16 %v3450, %v3449
    %v3456 = vsel %vm65, %v3414, 0
    %v3459 = vsel %vm65, %v3415, 0
    %v3462 = vsel %vm65, %v3416, 0
    %v3465 = vsel %vm65, %v3417, 0
    %v3468 = vsel %vm65, %v3418, 0
    %v3471 = vsel %vm65, %v3419, 0
    %v3474 = vsel %vm65, %v3420, 0
    %v3477 = vsel %vm65, %v3421, 0
    %v3480 = vsel %vm65, %v3422, 0
    %v3483 = vsel %vm65, %v3423, 0
    %v3486 = vsel %vm65, %v3424, 0
    %v3489 = vsel %vm65, %v3425, 0
    %v3492 = vsel %vm65, %v3426, 0
    %v3495 = vsel %vm65, %v3427, 0
    %v3498 = vsel %vm65, %v3428, 0
    %v3501 = vsel %vm65, %v3429, 0
    %v3504 = vsel %vm65, %v3430, 0
    %v3507 = vsel %vm65, %v3431, 0
    %v3510 = vsel %vm65, %v3432, 0
    %v3513 = vsel %vm65, %v3433, 0
    %v3516 = vsel %vm65, %v3434, 0
    %v3519 = vsel %vm65, %v3435, 0
    %v3522 = vsel %vm65, %v3436, 0
    %v3525 = vsel %vm65, %v3437, 0
    %3527 = vmatprep.subr.bf16.mxu0 0
    %3528 = vmatpush1.bf16.msra.mxu0 %v3451
    %3529 = vmatprep.subr.bf16.mxu0 0
    %3530 = vmatpush1.bf16.msra.mxu0 %v3452
    %3531 = vmatprep.subr.bf16.mxu0 0
    %3532 = vmatpush1.bf16.msra.mxu0 0
    %3533 = vmatprep.subr.bf16.mxu0 0
    %3534 = vmatpush1.bf16.msra.mxu0 0
    %3535 = vmatprep.subr.bf16.mxu0 0
    %3536 = vmatpush1.bf16.msra.mxu0 0
    %3537 = vmatprep.subr.bf16.mxu0 0
    %3538 = vmatpush1.bf16.msra.mxu0 0
    %3539 = vmatprep.subr.bf16.mxu0 0
    %3540 = vmatpush1.bf16.msra.mxu0 0
    %3541 = vmatprep.subr.bf16.mxu0 0
    %3542 = vmatpush1.bf16.msra.mxu0 0
    %3543 = vmatprep.subr.bf16.mxu0 0
    %3544 = vmatpush1.bf16.msra.mxu0 0
    %3545 = vmatprep.subr.bf16.mxu0 0
    %3546 = vmatpush1.bf16.msra.mxu0 0
    %3547 = vmatprep.subr.bf16.mxu0 0
    %3548 = vmatpush1.bf16.msra.mxu0 0
    %3549 = vmatprep.subr.bf16.mxu0 0
    %3550 = vmatpush1.bf16.msra.mxu0 0
    %3551 = vmatprep.subr.bf16.mxu0 0
    %3552 = vmatpush1.bf16.msra.mxu0 0
    %3553 = vmatprep.subr.bf16.mxu0 0
    %3554 = vmatpush1.bf16.msra.mxu0 0
    %3555 = vmatprep.subr.bf16.mxu0 0
    %3556 = vmatpush1.bf16.msra.mxu0 0
    %3557 = vmatprep.subr.bf16.mxu0 0
    %3558 = vmatpush1.bf16.msra.mxu0 0
    %3559 = vmatprep.mubr.bf16.mxu0 0
    %3560 = vmatmul.mubr.bf16.gmra.mrb[0].mxu0 %v3456
    %v3561 = vpop.f32.mrb[0].mxu0
    %v3562 = vadd.f32 0.0, %v3561
    %v3563 = vpop.f32.mrb[0].mxu0
    %v3564 = vpop.f32.mrb[0].mxu0
    %v3565 = vadd.f32 0.0, %v3564
    %v3566 = vpop.f32.mrb[0].mxu0
    %3567 = vmatprep.mubr.bf16.mxu0 0
    %3568 = vmatmul.mubr.bf16.gmra.mrb[0].mxu0 %v3459
    %v3569 = vpop.f32.mrb[0].mxu0
    %v3570 = vpop.f32.mrb[0].mxu0
    %v3571 = vpop.f32.mrb[0].mxu0
    %v3572 = vadd.f32 0.0, %v3571
    %v3573 = vpop.f32.mrb[0].mxu0
    %3574 = vmatprep.mubr.bf16.mxu0 0
    %3575 = vmatmul.mubr.bf16.gmra.mrb[0].mxu0 %v3462
    %v3576 = vpop.f32.mrb[0].mxu0
    %v3577 = vadd.f32 0.0, %v3576
    %v3578 = vpop.f32.mrb[0].mxu0
    %v3579 = vpop.f32.mrb[0].mxu0
    %v3580 = vpop.f32.mrb[0].mxu0
    %3581 = vmatprep.mubr.bf16.mxu0 0
    %3582 = vmatmul.mubr.bf16.gmra.mrb[0].mxu0 %v3465
    %v3583 = vpop.f32.mrb[0].mxu0
    %v3584 = vadd.f32 0.0, %v3583
    %v3585 = vpop.f32.mrb[0].mxu0
    %v3586 = vpop.f32.mrb[0].mxu0
    %v3587 = vadd.f32 0.0, %v3586
    %v3588 = vpop.f32.mrb[0].mxu0
    %3589 = vmatprep.mubr.bf16.mxu0 0
    %3590 = vmatmul.mubr.bf16.gmra.mrb[0].mxu0 %v3468
    %v3591 = vpop.f32.mrb[0].mxu0
    %v3592 = vpop.f32.mrb[0].mxu0
    %v3593 = vpop.f32.mrb[0].mxu0
    %v3594 = vadd.f32 0.0, %v3593
    %v3595 = vpop.f32.mrb[0].mxu0
    %3596 = vmatprep.mubr.bf16.mxu0 0
    %3597 = vmatmul.mubr.bf16.gmra.mrb[0].mxu0 %v3471
    %v3598 = vpop.f32.mrb[0].mxu0
    %v3599 = vadd.f32 0.0, %v3598
    %v3600 = vpop.f32.mrb[0].mxu0
    %v3601 = vpop.f32.mrb[0].mxu0
    %v3602 = vpop.f32.mrb[0].mxu0
    %3603 = vmatprep.mubr.bf16.mxu0 0
    %3604 = vmatmul.mubr.bf16.gmra.mrb[0].mxu0 %v3474
    %v3605 = vpop.f32.mrb[0].mxu0
    %v3606 = vadd.f32 0.0, %v3605
    %v3607 = vpop.f32.mrb[0].mxu0
    %v3608 = vpop.f32.mrb[0].mxu0
    %v3609 = vadd.f32 0.0, %v3608
    %v3610 = vpop.f32.mrb[0].mxu0
    %3611 = vmatprep.mubr.bf16.mxu0 0
    %3612 = vmatmul.mubr.bf16.gmra.mrb[0].mxu0 %v3477
    %v3613 = vpop.f32.mrb[0].mxu0
    %v3614 = vpop.f32.mrb[0].mxu0
    %v3615 = vpop.f32.mrb[0].mxu0
    %v3616 = vadd.f32 0.0, %v3615
    %v3617 = vpop.f32.mrb[0].mxu0
    %3618 = vmatprep.mubr.bf16.mxu0 0
    %3619 = vmatmul.mubr.bf16.gmra.mrb[0].mxu0 %v3480
    %v3620 = vpop.f32.mrb[0].mxu0
    %v3621 = vadd.f32 0.0, %v3620
    %v3622 = vpop.f32.mrb[0].mxu0
    %v3623 = vpop.f32.mrb[0].mxu0
    %v3624 = vpop.f32.mrb[0].mxu0
    %3625 = vmatprep.mubr.bf16.mxu0 0
    %3626 = vmatmul.mubr.bf16.gmra.mrb[0].mxu0 %v3483
    %v3627 = vpop.f32.mrb[0].mxu0
    %v3628 = vadd.f32 0.0, %v3627
    %v3629 = vpop.f32.mrb[0].mxu0
    %v3630 = vpop.f32.mrb[0].mxu0
    %v3631 = vadd.f32 0.0, %v3630
    %v3632 = vpop.f32.mrb[0].mxu0
    %3633 = vmatprep.mubr.bf16.mxu0 0
    %3634 = vmatmul.mubr.bf16.gmra.mrb[0].mxu0 %v3486
    %v3635 = vpop.f32.mrb[0].mxu0
    %v3636 = vpop.f32.mrb[0].mxu0
    %v3637 = vpop.f32.mrb[0].mxu0
    %v3638 = vadd.f32 0.0, %v3637
    %v3639 = vpop.f32.mrb[0].mxu0
    %3640 = vmatprep.mubr.bf16.mxu0 0
    %3641 = vmatmul.mubr.bf16.gmra.mrb[0].mxu0 %v3489
    %v3642 = vpop.f32.mrb[0].mxu0
    %v3643 = vadd.f32 0.0, %v3642
    %v3644 = vpop.f32.mrb[0].mxu0
    %v3645 = vpop.f32.mrb[0].mxu0
    %v3646 = vpop.f32.mrb[0].mxu0
    %3647 = vmatprep.mubr.bf16.mxu0 0
    %3648 = vmatmul.mubr.bf16.gmra.mrb[0].mxu0 %v3492
    %v3649 = vpop.f32.mrb[0].mxu0
    %v3650 = vadd.f32 0.0, %v3649
    %v3651 = vpop.f32.mrb[0].mxu0
    %v3652 = vpop.f32.mrb[0].mxu0
    %v3653 = vadd.f32 0.0, %v3652
    %v3654 = vpop.f32.mrb[0].mxu0
    %3655 = vmatprep.mubr.bf16.mxu0 0
    %3656 = vmatmul.mubr.bf16.gmra.mrb[0].mxu0 %v3495
    %v3657 = vpop.f32.mrb[0].mxu0
    %v3658 = vpop.f32.mrb[0].mxu0
    %v3659 = vpop.f32.mrb[0].mxu0
    %v3660 = vadd.f32 0.0, %v3659
    %v3661 = vpop.f32.mrb[0].mxu0
    %3662 = vmatprep.mubr.bf16.mxu0 0
    %3663 = vmatmul.mubr.bf16.gmra.mrb[0].mxu0 %v3498
    %v3664 = vpop.f32.mrb[0].mxu0
    %v3665 = vadd.f32 0.0, %v3664
    %v3666 = vpop.f32.mrb[0].mxu0
    %v3667 = vpop.f32.mrb[0].mxu0
    %v3668 = vpop.f32.mrb[0].mxu0
    %3669 = vmatprep.mubr.bf16.mxu0 0
    %3670 = vmatmul.mubr.bf16.gmra.mrb[0].mxu0 %v3501
    %v3671 = vpop.f32.mrb[0].mxu0
    %v3672 = vadd.f32 0.0, %v3671
    %v3673 = vpop.f32.mrb[0].mxu0
    %v3674 = vpop.f32.mrb[0].mxu0
    %v3675 = vadd.f32 0.0, %v3674
    %v3676 = vpop.f32.mrb[0].mxu0
    %3677 = vmatprep.mubr.bf16.mxu0 0
    %3678 = vmatmul.mubr.bf16.gmra.mrb[0].mxu0 %v3504
    %v3679 = vpop.f32.mrb[0].mxu0
    %v3680 = vpop.f32.mrb[0].mxu0
    %v3681 = vpop.f32.mrb[0].mxu0
    %v3682 = vadd.f32 0.0, %v3681
    %v3683 = vpop.f32.mrb[0].mxu0
    %3684 = vmatprep.mubr.bf16.mxu0 0
    %3685 = vmatmul.mubr.bf16.gmra.mrb[0].mxu0 %v3507
    %v3686 = vpop.f32.mrb[0].mxu0
    %v3687 = vadd.f32 0.0, %v3686
    %v3688 = vpop.f32.mrb[0].mxu0
    %v3689 = vpop.f32.mrb[0].mxu0
    %v3690 = vpop.f32.mrb[0].mxu0
    %3691 = vmatprep.mubr.bf16.mxu0 0
    %3692 = vmatmul.mubr.bf16.gmra.mrb[0].mxu0 %v3510
    %v3693 = vpop.f32.mrb[0].mxu0
    %v3694 = vadd.f32 0.0, %v3693
    %v3695 = vpop.f32.mrb[0].mxu0
    %v3696 = vpop.f32.mrb[0].mxu0
    %v3697 = vadd.f32 0.0, %v3696
    %v3698 = vpop.f32.mrb[0].mxu0
    %3699 = vmatprep.mubr.bf16.mxu0 0
    %3700 = vmatmul.mubr.bf16.gmra.mrb[0].mxu0 %v3513
    %v3701 = vpop.f32.mrb[0].mxu0
    %v3702 = vpop.f32.mrb[0].mxu0
    %v3703 = vpop.f32.mrb[0].mxu0
    %v3704 = vadd.f32 0.0, %v3703
    %v3705 = vpop.f32.mrb[0].mxu0
    %3706 = vmatprep.mubr.bf16.mxu0 0
    %3707 = vmatmul.mubr.bf16.gmra.mrb[0].mxu0 %v3516
    %v3708 = vpop.f32.mrb[0].mxu0
    %v3709 = vadd.f32 0.0, %v3708
    %v3710 = vpop.f32.mrb[0].mxu0
    %v3711 = vpop.f32.mrb[0].mxu0
    %v3712 = vpop.f32.mrb[0].mxu0
    %3713 = vmatprep.mubr.bf16.mxu0 0
    %3714 = vmatmul.mubr.bf16.gmra.mrb[0].mxu0 %v3519
    %v3715 = vpop.f32.mrb[0].mxu0
    %v3716 = vadd.f32 0.0, %v3715
    %v3717 = vpop.f32.mrb[0].mxu0
    %v3718 = vpop.f32.mrb[0].mxu0
    %v3719 = vadd.f32 0.0, %v3718
    %v3720 = vpop.f32.mrb[0].mxu0
    %3721 = vmatprep.mubr.bf16.mxu0 0
    %3722 = vmatmul.mubr.bf16.gmra.mrb[0].mxu0 %v3522
    %v3723 = vpop.f32.mrb[0].mxu0
    %v3724 = vpop.f32.mrb[0].mxu0
    %v3725 = vpop.f32.mrb[0].mxu0
    %v3726 = vadd.f32 0.0, %v3725
    %v3727 = vpop.f32.mrb[0].mxu0
    %3728 = vmatprep.mubr.bf16.mxu0 0
    %3729 = vmatmul.mubr.bf16.gmra.mrb[0].mxu0 %v3525
    %v3730 = vpop.f32.mrb[0].mxu0
    %v3731 = vadd.f32 0.0, %v3730
    %v3732 = vpop.f32.mrb[0].mxu0
    %v3733 = vpop.f32.mrb[0].mxu0
    %v3734 = vpop.f32.mrb[0].mxu0
    %3735 = vdwg.mxu0
    %v3736 = vadd.f32 %v3334, %v3562
    %v3737 = vadd.f32 %v3335, %v3565
    %v3738 = vadd.f32 %v3336, %v3572
    %v3739 = vadd.f32 %v3337, %v3577
    %v3740 = vadd.f32 %v3338, %v3584
    %v3741 = vadd.f32 %v3339, %v3587
    %v3742 = vadd.f32 %v3340, %v3594
    %v3743 = vadd.f32 %v3341, %v3599
    %v3744 = vadd.f32 %v3342, %v3606
    %v3745 = vadd.f32 %v3343, %v3609
    %v3746 = vadd.f32 %v3344, %v3616
    %v3747 = vadd.f32 %v3345, %v3621
    %v3748 = vadd.f32 %v3346, %v3628
    %v3749 = vadd.f32 %v3347, %v3631
    %v3750 = vadd.f32 %v3348, %v3638
    %v3751 = vadd.f32 %v3349, %v3643
    %v3752 = vadd.f32 %v3350, %v3650
    %v3753 = vadd.f32 %v3351, %v3653
    %v3754 = vadd.f32 %v3352, %v3660
    %v3755 = vadd.f32 %v3353, %v3665
    %v3756 = vadd.f32 %v3354, %v3672
    %v3757 = vadd.f32 %v3355, %v3675
    %v3758 = vadd.f32 %v3356, %v3682
    %v3759 = vadd.f32 %v3357, %v3687
    %v3760 = vadd.f32 %v3358, %v3694
    %v3761 = vadd.f32 %v3359, %v3697
    %v3762 = vadd.f32 %v3360, %v3704
    %v3763 = vadd.f32 %v3361, %v3709
    %v3764 = vadd.f32 %v3362, %v3716
    %v3765 = vadd.f32 %v3363, %v3719
    %v3766 = vadd.f32 %v3364, %v3726
    %v3767 = vadd.f32 %v3365, %v3731
    %v3768 = vld [vmem:[#allocation2 + $0x39] sm:$0xff]
    %v3769 = vld [vmem:[#allocation2 + $0x41] sm:$0xff]
    %v3770 = vld [vmem:[#allocation2 + $0x49] sm:$0xff]
    %v3771 = vld [vmem:[#allocation2 + $0x51] sm:$0xff]
    %v3772 = vld [vmem:[#allocation2 + $0x59] sm:$0xff]
    %v3773 = vld [vmem:[#allocation2 + $0x61] sm:$0xff]
    %v3774 = vld [vmem:[#allocation2 + $0x69] sm:$0xff]
    %v3775 = vld [vmem:[#allocation2 + $0x71] sm:$0xff]
    %v3776 = vld [vmem:[#allocation2 + $0x79] sm:$0xff]
    %v3777 = vld [vmem:[#allocation2 + $0x81] sm:$0xff]
    %v3778 = vld [vmem:[#allocation2 + $0x89] sm:$0xff]
    %v3779 = vld [vmem:[#allocation2 + $0x91] sm:$0xff]
    %v3780 = vld [vmem:[#allocation2 + $0x99] sm:$0xff]
    %v3781 = vld [vmem:[#allocation2 + $0xa1] sm:$0xff]
    %v3782 = vld [vmem:[#allocation2 + $0xa9] sm:$0xff]
    %v3783 = vld [vmem:[#allocation2 + $0xb1] sm:$0xff]
    %v3784 = vld [vmem:[#allocation2 + $0xb9] sm:$0xff]
    %v3785 = vld [vmem:[#allocation2 + $0xc1] sm:$0xff]
    %v3786 = vld [vmem:[#allocation2 + $0xc9] sm:$0xff]
    %v3787 = vld [vmem:[#allocation2 + $0xd1] sm:$0xff]
    %v3788 = vld [vmem:[#allocation2 + $0xd9] sm:$0xff]
    %v3789 = vld [vmem:[#allocation2 + $0xe1] sm:$0xff]
    %v3790 = vld [vmem:[#allocation2 + $0xe9] sm:$0xff]
    %v3791 = vld [vmem:[#allocation2 + $0xf1] sm:$0xff]
    %v3792 = vld [vmem:[#allocation2 + $0xf9] sm:$0xff]
    %v3793 = vld [vmem:[#allocation2 + $0x101] sm:$0xff]
    %v3794 = vld [vmem:[#allocation2 + $0x109] sm:$0xff]
    %v3795 = vld [vmem:[#allocation2 + $0x111] sm:$0xff]
    %v3796 = vld [vmem:[#allocation2 + $0x119] sm:$0xff]
    %v3797 = vld [vmem:[#allocation2 + $0x121] sm:$0xff]
    %v3798 = vld [vmem:[#allocation2 + $0x129] sm:$0xff]
    %v3799 = vld [vmem:[#allocation2 + $0x131] sm:$0xff]
    %v3800 = vld [vmem:[#allocation2 + $0x139] sm:$0xff]
    %v3801 = vld [vmem:[#allocation2 + $0x141] sm:$0xff]
    %v3802 = vld [vmem:[#allocation2 + $0x149] sm:$0xff]
    %v3803 = vld [vmem:[#allocation2 + $0x151] sm:$0xff]
    %v3804 = vld [vmem:[#allocation2 + $0x159] sm:$0xff]
    %v3805 = vld [vmem:[#allocation2 + $0x161] sm:$0xff]
    %v3806 = vld [vmem:[#allocation2 + $0x169] sm:$0xff]
    %v3807 = vld [vmem:[#allocation2 + $0x171] sm:$0xff]
    %v3808 = vld [vmem:[#allocation2 + $0x179] sm:$0xff]
    %v3809 = vld [vmem:[#allocation2 + $0x181] sm:$0xff]
    %v3810 = vld [vmem:[#allocation2 + $0x189] sm:$0xff]
    %v3811 = vld [vmem:[#allocation2 + $0x191] sm:$0xff]
    %v3812 = vld [vmem:[#allocation2 + $0x199] sm:$0xff]
    %v3813 = vld [vmem:[#allocation2 + $0x1a1] sm:$0xff]
    %v3814 = vld [vmem:[#allocation2 + $0x1a9] sm:$0xff]
    %v3815 = vld [vmem:[#allocation2 + $0x1b1] sm:$0xff]
    %v3816 = vpack.c.bf16 %v3769, %v3768
    %v3817 = vpack.c.bf16 %v3771, %v3770
    %v3818 = vpack.c.bf16 %v3773, %v3772
    %v3819 = vpack.c.bf16 %v3775, %v3774
    %v3820 = vpack.c.bf16 %v3777, %v3776
    %v3821 = vpack.c.bf16 %v3779, %v3778
    %v3822 = vpack.c.bf16 %v3781, %v3780
    %v3823 = vpack.c.bf16 %v3783, %v3782
    %v3824 = vpack.c.bf16 %v3785, %v3784
    %v3825 = vpack.c.bf16 %v3787, %v3786
    %v3826 = vpack.c.bf16 %v3789, %v3788
    %v3827 = vpack.c.bf16 %v3791, %v3790
    %v3828 = vpack.c.bf16 %v3793, %v3792
    %v3829 = vpack.c.bf16 %v3795, %v3794
    %v3830 = vpack.c.bf16 %v3797, %v3796
    %v3831 = vpack.c.bf16 %v3799, %v3798
    %v3832 = vpack.c.bf16 %v3801, %v3800
    %v3833 = vpack.c.bf16 %v3803, %v3802
    %v3834 = vpack.c.bf16 %v3805, %v3804
    %v3835 = vpack.c.bf16 %v3807, %v3806
    %v3836 = vpack.c.bf16 %v3809, %v3808
    %v3837 = vpack.c.bf16 %v3811, %v3810
    %v3838 = vpack.c.bf16 %v3813, %v3812
    %v3839 = vpack.c.bf16 %v3815, %v3814
    %s3840 = scalar_lea.vmem [#allocation6], 128
    %v3841 = vld [vmem:[%s3840] sm:$0xf]
    %v3842 = vld [vmem:[%s3840 + $0x4] sm:$0xf]
    %v3843 = vld [vmem:[%s3840 + $0x8] sm:$0xf]
    %v3844 = vld [vmem:[%s3840 + $0xc] sm:$0xf]
    %v3849 = vunpack.c.l.b16 %v3841
    %v3850 = vunpack.c.l.b16 %v3842
    %v3851 = vunpack.c.l.b16 %v3843
    %v3852 = vunpack.c.l.b16 %v3844
    %v3853 = vpack.c.b16 %v3850, %v3849
    %v3854 = vpack.c.b16 %v3852, %v3851
    %v3858 = vsel %vm65, %v3816, 0
    %v3861 = vsel %vm65, %v3817, 0
    %v3864 = vsel %vm65, %v3818, 0
    %v3867 = vsel %vm65, %v3819, 0
    %v3870 = vsel %vm65, %v3820, 0
    %v3873 = vsel %vm65, %v3821, 0
    %v3876 = vsel %vm65, %v3822, 0
    %v3879 = vsel %vm65, %v3823, 0
    %v3882 = vsel %vm65, %v3824, 0
    %v3885 = vsel %vm65, %v3825, 0
    %v3888 = vsel %vm65, %v3826, 0
    %v3891 = vsel %vm65, %v3827, 0
    %v3894 = vsel %vm65, %v3828, 0
    %v3897 = vsel %vm65, %v3829, 0
    %v3900 = vsel %vm65, %v3830, 0
    %v3903 = vsel %vm65, %v3831, 0
    %v3906 = vsel %vm65, %v3832, 0
    %v3909 = vsel %vm65, %v3833, 0
    %v3912 = vsel %vm65, %v3834, 0
    %v3915 = vsel %vm65, %v3835, 0
    %v3918 = vsel %vm65, %v3836, 0
    %v3921 = vsel %vm65, %v3837, 0
    %v3924 = vsel %vm65, %v3838, 0
    %v3927 = vsel %vm65, %v3839, 0
    %3929 = vmatprep.subr.bf16.mxu0 0
    %3930 = vmatpush1.bf16.msra.mxu0 %v3853
    %3931 = vmatprep.subr.bf16.mxu0 0
    %3932 = vmatpush1.bf16.msra.mxu0 %v3854
    %3933 = vmatprep.subr.bf16.mxu0 0
    %3934 = vmatpush1.bf16.msra.mxu0 0
    %3935 = vmatprep.subr.bf16.mxu0 0
    %3936 = vmatpush1.bf16.msra.mxu0 0
    %3937 = vmatprep.subr.bf16.mxu0 0
    %3938 = vmatpush1.bf16.msra.mxu0 0
    %3939 = vmatprep.subr.bf16.mxu0 0
    %3940 = vmatpush1.bf16.msra.mxu0 0
    %3941 = vmatprep.subr.bf16.mxu0 0
    %3942 = vmatpush1.bf16.msra.mxu0 0
    %3943 = vmatprep.subr.bf16.mxu0 0
    %3944 = vmatpush1.bf16.msra.mxu0 0
    %3945 = vmatprep.subr.bf16.mxu0 0
    %3946 = vmatpush1.bf16.msra.mxu0 0
    %3947 = vmatprep.subr.bf16.mxu0 0
    %3948 = vmatpush1.bf16.msra.mxu0 0
    %3949 = vmatprep.subr.bf16.mxu0 0
    %3950 = vmatpush1.bf16.msra.mxu0 0
    %3951 = vmatprep.subr.bf16.mxu0 0
    %3952 = vmatpush1.bf16.msra.mxu0 0
    %3953 = vmatprep.subr.bf16.mxu0 0
    %3954 = vmatpush1.bf16.msra.mxu0 0
    %3955 = vmatprep.subr.bf16.mxu0 0
    %3956 = vmatpush1.bf16.msra.mxu0 0
    %3957 = vmatprep.subr.bf16.mxu0 0
    %3958 = vmatpush1.bf16.msra.mxu0 0
    %3959 = vmatprep.subr.bf16.mxu0 0
    %3960 = vmatpush1.bf16.msra.mxu0 0
    %3961 = vmatprep.mubr.bf16.mxu0 0
    %3962 = vmatmul.mubr.bf16.gmra.mrb[0].mxu0 %v3858
    %v3963 = vpop.f32.mrb[0].mxu0
    %v3964 = vadd.f32 0.0, %v3963
    %v3965 = vpop.f32.mrb[0].mxu0
    %v3966 = vpop.f32.mrb[0].mxu0
    %v3967 = vadd.f32 0.0, %v3966
    %v3968 = vpop.f32.mrb[0].mxu0
    %3969 = vmatprep.mubr.bf16.mxu0 0
    %3970 = vmatmul.mubr.bf16.gmra.mrb[0].mxu0 %v3861
    %v3971 = vpop.f32.mrb[0].mxu0
    %v3972 = vpop.f32.mrb[0].mxu0
    %v3973 = vpop.f32.mrb[0].mxu0
    %v3974 = vadd.f32 0.0, %v3973
    %v3975 = vpop.f32.mrb[0].mxu0
    %3976 = vmatprep.mubr.bf16.mxu0 0
    %3977 = vmatmul.mubr.bf16.gmra.mrb[0].mxu0 %v3864
    %v3978 = vpop.f32.mrb[0].mxu0
    %v3979 = vadd.f32 0.0, %v3978
    %v3980 = vpop.f32.mrb[0].mxu0
    %v3981 = vpop.f32.mrb[0].mxu0
    %v3982 = vpop.f32.mrb[0].mxu0
    %3983 = vmatprep.mubr.bf16.mxu0 0
    %3984 = vmatmul.mubr.bf16.gmra.mrb[0].mxu0 %v3867
    %v3985 = vpop.f32.mrb[0].mxu0
    %v3986 = vadd.f32 0.0, %v3985
    %v3987 = vpop.f32.mrb[0].mxu0
    %v3988 = vpop.f32.mrb[0].mxu0
    %v3989 = vadd.f32 0.0, %v3988
    %v3990 = vpop.f32.mrb[0].mxu0
    %3991 = vmatprep.mubr.bf16.mxu0 0
    %3992 = vmatmul.mubr.bf16.gmra.mrb[0].mxu0 %v3870
    %v3993 = vpop.f32.mrb[0].mxu0
    %v3994 = vpop.f32.mrb[0].mxu0
    %v3995 = vpop.f32.mrb[0].mxu0
    %v3996 = vadd.f32 0.0, %v3995
    %v3997 = vpop.f32.mrb[0].mxu0
    %3998 = vmatprep.mubr.bf16.mxu0 0
    %3999 = vmatmul.mubr.bf16.gmra.mrb[0].mxu0 %v3873
    %v4000 = vpop.f32.mrb[0].mxu0
    %v4001 = vadd.f32 0.0, %v4000
    %v4002 = vpop.f32.mrb[0].mxu0
    %v4003 = vpop.f32.mrb[0].mxu0
    %v4004 = vpop.f32.mrb[0].mxu0
    %4005 = vmatprep.mubr.bf16.mxu0 0
    %4006 = vmatmul.mubr.bf16.gmra.mrb[0].mxu0 %v3876
    %v4007 = vpop.f32.mrb[0].mxu0
    %v4008 = vadd.f32 0.0, %v4007
    %v4009 = vpop.f32.mrb[0].mxu0
    %v4010 = vpop.f32.mrb[0].mxu0
    %v4011 = vadd.f32 0.0, %v4010
    %v4012 = vpop.f32.mrb[0].mxu0
    %4013 = vmatprep.mubr.bf16.mxu0 0
    %4014 = vmatmul.mubr.bf16.gmra.mrb[0].mxu0 %v3879
    %v4015 = vpop.f32.mrb[0].mxu0
    %v4016 = vpop.f32.mrb[0].mxu0
    %v4017 = vpop.f32.mrb[0].mxu0
    %v4018 = vadd.f32 0.0, %v4017
    %v4019 = vpop.f32.mrb[0].mxu0
    %4020 = vmatprep.mubr.bf16.mxu0 0
    %4021 = vmatmul.mubr.bf16.gmra.mrb[0].mxu0 %v3882
    %v4022 = vpop.f32.mrb[0].mxu0
    %v4023 = vadd.f32 0.0, %v4022
    %v4024 = vpop.f32.mrb[0].mxu0
    %v4025 = vpop.f32.mrb[0].mxu0
    %v4026 = vpop.f32.mrb[0].mxu0
    %4027 = vmatprep.mubr.bf16.mxu0 0
    %4028 = vmatmul.mubr.bf16.gmra.mrb[0].mxu0 %v3885
    %v4029 = vpop.f32.mrb[0].mxu0
    %v4030 = vadd.f32 0.0, %v4029
    %v4031 = vpop.f32.mrb[0].mxu0
    %v4032 = vpop.f32.mrb[0].mxu0
    %v4033 = vadd.f32 0.0, %v4032
    %v4034 = vpop.f32.mrb[0].mxu0
    %4035 = vmatprep.mubr.bf16.mxu0 0
    %4036 = vmatmul.mubr.bf16.gmra.mrb[0].mxu0 %v3888
    %v4037 = vpop.f32.mrb[0].mxu0
    %v4038 = vpop.f32.mrb[0].mxu0
    %v4039 = vpop.f32.mrb[0].mxu0
    %v4040 = vadd.f32 0.0, %v4039
    %v4041 = vpop.f32.mrb[0].mxu0
    %4042 = vmatprep.mubr.bf16.mxu0 0
    %4043 = vmatmul.mubr.bf16.gmra.mrb[0].mxu0 %v3891
    %v4044 = vpop.f32.mrb[0].mxu0
    %v4045 = vadd.f32 0.0, %v4044
    %v4046 = vpop.f32.mrb[0].mxu0
    %v4047 = vpop.f32.mrb[0].mxu0
    %v4048 = vpop.f32.mrb[0].mxu0
    %4049 = vmatprep.mubr.bf16.mxu0 0
    %4050 = vmatmul.mubr.bf16.gmra.mrb[0].mxu0 %v3894
    %v4051 = vpop.f32.mrb[0].mxu0
    %v4052 = vadd.f32 0.0, %v4051
    %v4053 = vpop.f32.mrb[0].mxu0
    %v4054 = vpop.f32.mrb[0].mxu0
    %v4055 = vadd.f32 0.0, %v4054
    %v4056 = vpop.f32.mrb[0].mxu0
    %4057 = vmatprep.mubr.bf16.mxu0 0
    %4058 = vmatmul.mubr.bf16.gmra.mrb[0].mxu0 %v3897
    %v4059 = vpop.f32.mrb[0].mxu0
    %v4060 = vpop.f32.mrb[0].mxu0
    %v4061 = vpop.f32.mrb[0].mxu0
    %v4062 = vadd.f32 0.0, %v4061
    %v4063 = vpop.f32.mrb[0].mxu0
    %4064 = vmatprep.mubr.bf16.mxu0 0
    %4065 = vmatmul.mubr.bf16.gmra.mrb[0].mxu0 %v3900
    %v4066 = vpop.f32.mrb[0].mxu0
    %v4067 = vadd.f32 0.0, %v4066
    %v4068 = vpop.f32.mrb[0].mxu0
    %v4069 = vpop.f32.mrb[0].mxu0
    %v4070 = vpop.f32.mrb[0].mxu0
    %4071 = vmatprep.mubr.bf16.mxu0 0
    %4072 = vmatmul.mubr.bf16.gmra.mrb[0].mxu0 %v3903
    %v4073 = vpop.f32.mrb[0].mxu0
    %v4074 = vadd.f32 0.0, %v4073
    %v4075 = vpop.f32.mrb[0].mxu0
    %v4076 = vpop.f32.mrb[0].mxu0
    %v4077 = vadd.f32 0.0, %v4076
    %v4078 = vpop.f32.mrb[0].mxu0
    %4079 = vmatprep.mubr.bf16.mxu0 0
    %4080 = vmatmul.mubr.bf16.gmra.mrb[0].mxu0 %v3906
    %v4081 = vpop.f32.mrb[0].mxu0
    %v4082 = vpop.f32.mrb[0].mxu0
    %v4083 = vpop.f32.mrb[0].mxu0
    %v4084 = vadd.f32 0.0, %v4083
    %v4085 = vpop.f32.mrb[0].mxu0
    %4086 = vmatprep.mubr.bf16.mxu0 0
    %4087 = vmatmul.mubr.bf16.gmra.mrb[0].mxu0 %v3909
    %v4088 = vpop.f32.mrb[0].mxu0
    %v4089 = vadd.f32 0.0, %v4088
    %v4090 = vpop.f32.mrb[0].mxu0
    %v4091 = vpop.f32.mrb[0].mxu0
    %v4092 = vpop.f32.mrb[0].mxu0
    %4093 = vmatprep.mubr.bf16.mxu0 0
    %4094 = vmatmul.mubr.bf16.gmra.mrb[0].mxu0 %v3912
    %v4095 = vpop.f32.mrb[0].mxu0
    %v4096 = vadd.f32 0.0, %v4095
    %v4097 = vpop.f32.mrb[0].mxu0
    %v4098 = vpop.f32.mrb[0].mxu0
    %v4099 = vadd.f32 0.0, %v4098
    %v4100 = vpop.f32.mrb[0].mxu0
    %4101 = vmatprep.mubr.bf16.mxu0 0
    %4102 = vmatmul.mubr.bf16.gmra.mrb[0].mxu0 %v3915
    %v4103 = vpop.f32.mrb[0].mxu0
    %v4104 = vpop.f32.mrb[0].mxu0
    %v4105 = vpop.f32.mrb[0].mxu0
    %v4106 = vadd.f32 0.0, %v4105
    %v4107 = vpop.f32.mrb[0].mxu0
    %4108 = vmatprep.mubr.bf16.mxu0 0
    %4109 = vmatmul.mubr.bf16.gmra.mrb[0].mxu0 %v3918
    %v4110 = vpop.f32.mrb[0].mxu0
    %v4111 = vadd.f32 0.0, %v4110
    %v4112 = vpop.f32.mrb[0].mxu0
    %v4113 = vpop.f32.mrb[0].mxu0
    %v4114 = vpop.f32.mrb[0].mxu0
    %4115 = vmatprep.mubr.bf16.mxu0 0
    %4116 = vmatmul.mubr.bf16.gmra.mrb[0].mxu0 %v3921
    %v4117 = vpop.f32.mrb[0].mxu0
    %v4118 = vadd.f32 0.0, %v4117
    %v4119 = vpop.f32.mrb[0].mxu0
    %v4120 = vpop.f32.mrb[0].mxu0
    %v4121 = vadd.f32 0.0, %v4120
    %v4122 = vpop.f32.mrb[0].mxu0
    %4123 = vmatprep.mubr.bf16.mxu0 0
    %4124 = vmatmul.mubr.bf16.gmra.mrb[0].mxu0 %v3924
    %v4125 = vpop.f32.mrb[0].mxu0
    %v4126 = vpop.f32.mrb[0].mxu0
    %v4127 = vpop.f32.mrb[0].mxu0
    %v4128 = vadd.f32 0.0, %v4127
    %v4129 = vpop.f32.mrb[0].mxu0
    %4130 = vmatprep.mubr.bf16.mxu0 0
    %4131 = vmatmul.mubr.bf16.gmra.mrb[0].mxu0 %v3927
    %v4132 = vpop.f32.mrb[0].mxu0
    %v4133 = vadd.f32 0.0, %v4132
    %v4134 = vpop.f32.mrb[0].mxu0
    %v4135 = vpop.f32.mrb[0].mxu0
    %v4136 = vpop.f32.mrb[0].mxu0
    %4137 = vdwg.mxu0
    %v4138 = vadd.f32 %v3736, %v3964
    %v4139 = vadd.f32 %v3737, %v3967
    %v4140 = vadd.f32 %v3738, %v3974
    %v4141 = vadd.f32 %v3739, %v3979
    %v4142 = vadd.f32 %v3740, %v3986
    %v4143 = vadd.f32 %v3741, %v3989
    %v4144 = vadd.f32 %v3742, %v3996
    %v4145 = vadd.f32 %v3743, %v4001
    %v4146 = vadd.f32 %v3744, %v4008
    %v4147 = vadd.f32 %v3745, %v4011
    %v4148 = vadd.f32 %v3746, %v4018
    %v4149 = vadd.f32 %v3747, %v4023
    %v4150 = vadd.f32 %v3748, %v4030
    %v4151 = vadd.f32 %v3749, %v4033
    %v4152 = vadd.f32 %v3750, %v4040
    %v4153 = vadd.f32 %v3751, %v4045
    %v4154 = vadd.f32 %v3752, %v4052
    %v4155 = vadd.f32 %v3753, %v4055
    %v4156 = vadd.f32 %v3754, %v4062
    %v4157 = vadd.f32 %v3755, %v4067
    %v4158 = vadd.f32 %v3756, %v4074
    %v4159 = vadd.f32 %v3757, %v4077
    %v4160 = vadd.f32 %v3758, %v4084
    %v4161 = vadd.f32 %v3759, %v4089
    %v4162 = vadd.f32 %v3760, %v4096
    %v4163 = vadd.f32 %v3761, %v4099
    %v4164 = vadd.f32 %v3762, %v4106
    %v4165 = vadd.f32 %v3763, %v4111
    %v4166 = vadd.f32 %v3764, %v4118
    %v4167 = vadd.f32 %v3765, %v4121
    %v4168 = vadd.f32 %v3766, %v4128
    %v4169 = vadd.f32 %v3767, %v4133
    %v4170 = vld [vmem:[%s5] sm:$0x1]
    %v4172 = vlaneseq
    %v4173 = vshrl.u32 %v4172, 7
    %v4174 = vsub.s32 0, %v4173
    %v4175 = vrot.slane %v4170, %v4174
    %v4177 = vmul.f32 %v4138, %v4175
    %v4178 = vmul.f32 %v4139, %v4175
    %v4179 = vmul.f32 %v4140, %v4175
    %v4180 = vmul.f32 %v4141, %v4175
    %v4181 = vmul.f32 %v4142, %v4175
    %v4182 = vmul.f32 %v4143, %v4175
    %v4183 = vmul.f32 %v4144, %v4175
    %v4184 = vmul.f32 %v4145, %v4175
    %v4185 = vmul.f32 %v4146, %v4175
    %v4186 = vmul.f32 %v4147, %v4175
    %v4187 = vmul.f32 %v4148, %v4175
    %v4188 = vmul.f32 %v4149, %v4175
    %v4189 = vmul.f32 %v4150, %v4175
    %v4190 = vmul.f32 %v4151, %v4175
    %v4191 = vmul.f32 %v4152, %v4175
    %v4192 = vmul.f32 %v4153, %v4175
    %v4193 = vmul.f32 %v4154, %v4175
    %v4194 = vmul.f32 %v4155, %v4175
    %v4195 = vmul.f32 %v4156, %v4175
    %v4196 = vmul.f32 %v4157, %v4175
    %v4197 = vmul.f32 %v4158, %v4175
    %v4198 = vmul.f32 %v4159, %v4175
    %v4199 = vmul.f32 %v4160, %v4175
    %v4200 = vmul.f32 %v4161, %v4175
    %v4201 = vmul.f32 %v4162, %v4175
    %v4202 = vmul.f32 %v4163, %v4175
    %v4203 = vmul.f32 %v4164, %v4175
    %v4204 = vmul.f32 %v4165, %v4175
    %v4205 = vmul.f32 %v4166, %v4175
    %v4206 = vmul.f32 %v4167, %v4175
    %v4207 = vmul.f32 %v4168, %v4175
    %v4208 = vmul.f32 %v4169, %v4175
    %v4209 = vld [vmem:[%s6] sm:$0x1]
    %v4211 = vlaneseq
    %v4212 = vshrl.u32 %v4211, 7
    %v4213 = vsub.s32 0, %v4212
    %v4214 = vrot.slane %v4209, %v4213
    %v4216 = vadd.f32 %v4177, %v4214
    %v4217 = vadd.f32 %v4178, %v4214
    %v4218 = vadd.f32 %v4179, %v4214
    %v4219 = vadd.f32 %v4180, %v4214
    %v4220 = vadd.f32 %v4181, %v4214
    %v4221 = vadd.f32 %v4182, %v4214
    %v4222 = vadd.f32 %v4183, %v4214
    %v4223 = vadd.f32 %v4184, %v4214
    %v4224 = vadd.f32 %v4185, %v4214
    %v4225 = vadd.f32 %v4186, %v4214
    %v4226 = vadd.f32 %v4187, %v4214
    %v4227 = vadd.f32 %v4188, %v4214
    %v4228 = vadd.f32 %v4189, %v4214
    %v4229 = vadd.f32 %v4190, %v4214
    %v4230 = vadd.f32 %v4191, %v4214
    %v4231 = vadd.f32 %v4192, %v4214
    %v4232 = vadd.f32 %v4193, %v4214
    %v4233 = vadd.f32 %v4194, %v4214
    %v4234 = vadd.f32 %v4195, %v4214
    %v4235 = vadd.f32 %v4196, %v4214
    %v4236 = vadd.f32 %v4197, %v4214
    %v4237 = vadd.f32 %v4198, %v4214
    %v4238 = vadd.f32 %v4199, %v4214
    %v4239 = vadd.f32 %v4200, %v4214
    %v4240 = vadd.f32 %v4201, %v4214
    %v4241 = vadd.f32 %v4202, %v4214
    %v4242 = vadd.f32 %v4203, %v4214
    %v4243 = vadd.f32 %v4204, %v4214
    %v4244 = vadd.f32 %v4205, %v4214
    %v4245 = vadd.f32 %v4206, %v4214
    %v4246 = vadd.f32 %v4207, %v4214
    %v4247 = vadd.f32 %v4208, %v4214
    %v4248 = vmax.f32 %v4216, 0.0
    %v4249 = vmax.f32 %v4217, 0.0
    %v4250 = vmax.f32 %v4218, 0.0
    %v4251 = vmax.f32 %v4219, 0.0
    %v4252 = vmax.f32 %v4220, 0.0
    %v4253 = vmax.f32 %v4221, 0.0
    %v4254 = vmax.f32 %v4222, 0.0
    %v4255 = vmax.f32 %v4223, 0.0
    %v4256 = vmax.f32 %v4224, 0.0
    %v4257 = vmax.f32 %v4225, 0.0
    %v4258 = vmax.f32 %v4226, 0.0
    %v4259 = vmax.f32 %v4227, 0.0
    %v4260 = vmax.f32 %v4228, 0.0
    %v4261 = vmax.f32 %v4229, 0.0
    %v4262 = vmax.f32 %v4230, 0.0
    %v4263 = vmax.f32 %v4231, 0.0
    %v4264 = vmax.f32 %v4232, 0.0
    %v4265 = vmax.f32 %v4233, 0.0
    %v4266 = vmax.f32 %v4234, 0.0
    %v4267 = vmax.f32 %v4235, 0.0
    %v4268 = vmax.f32 %v4236, 0.0
    %v4269 = vmax.f32 %v4237, 0.0
    %v4270 = vmax.f32 %v4238, 0.0
    %v4271 = vmax.f32 %v4239, 0.0
    %v4272 = vmax.f32 %v4240, 0.0
    %v4273 = vmax.f32 %v4241, 0.0
    %v4274 = vmax.f32 %v4242, 0.0
    %v4275 = vmax.f32 %v4243, 0.0
    %v4276 = vmax.f32 %v4244, 0.0
    %v4277 = vmax.f32 %v4245, 0.0
    %v4278 = vmax.f32 %v4246, 0.0
    %v4279 = vmax.f32 %v4247, 0.0
    %v4280 = vpack.c.bf16 %v4249, %v4248
    %v4281 = vpack.c.bf16 %v4251, %v4250
    %v4282 = vpack.c.bf16 %v4253, %v4252
    %v4283 = vpack.c.bf16 %v4255, %v4254
    %v4284 = vpack.c.bf16 %v4257, %v4256
    %v4285 = vpack.c.bf16 %v4259, %v4258
    %v4286 = vpack.c.bf16 %v4261, %v4260
    %v4287 = vpack.c.bf16 %v4263, %v4262
    %v4288 = vpack.c.bf16 %v4265, %v4264
    %v4289 = vpack.c.bf16 %v4267, %v4266
    %v4290 = vpack.c.bf16 %v4269, %v4268
    %v4291 = vpack.c.bf16 %v4271, %v4270
    %v4292 = vpack.c.bf16 %v4273, %v4272
    %v4293 = vpack.c.bf16 %v4275, %v4274
    %v4294 = vpack.c.bf16 %v4277, %v4276
    %v4295 = vpack.c.bf16 %v4279, %v4278
    %v4296 = vld [vmem:[%s7] sm:$0xf]
    %v4297 = vld [vmem:[%s7 + $0x4] sm:$0xf]
    %v4298 = vld [vmem:[%s7 + $0x8] sm:$0xf]
    %v4299 = vld [vmem:[%s7 + $0xc] sm:$0xf]
    %v4304 = vunpack.c.l.b16 %v4296
    %v4305 = vunpack.c.l.b16 %v4297
    %v4306 = vunpack.c.l.b16 %v4298
    %v4307 = vunpack.c.l.b16 %v4299
    %v4308 = vpack.c.b16 %v4305, %v4304
    %v4309 = vpack.c.b16 %v4307, %v4306
    %v4313 = vsel %vm65, %v4280, 0
    %v4316 = vsel %vm65, %v4281, 0
    %v4319 = vsel %vm65, %v4282, 0
    %v4322 = vsel %vm65, %v4283, 0
    %v4325 = vsel %vm65, %v4284, 0
    %v4328 = vsel %vm65, %v4285, 0
    %v4331 = vsel %vm65, %v4286, 0
    %v4334 = vsel %vm65, %v4287, 0
    %v4337 = vsel %vm65, %v4288, 0
    %v4340 = vsel %vm65, %v4289, 0
    %v4343 = vsel %vm65, %v4290, 0
    %v4346 = vsel %vm65, %v4291, 0
    %v4349 = vsel %vm65, %v4292, 0
    %v4352 = vsel %vm65, %v4293, 0
    %v4355 = vsel %vm65, %v4294, 0
    %v4358 = vsel %vm65, %v4295, 0
    %4360 = vmatprep.subr.bf16.mxu0 0
    %4361 = vmatpush1.bf16.msra.mxu0 %v4308
    %4362 = vmatprep.subr.bf16.mxu0 0
    %4363 = vmatpush1.bf16.msra.mxu0 %v4309
    %4364 = vmatprep.subr.bf16.mxu0 0
    %4365 = vmatpush1.bf16.msra.mxu0 0
    %4366 = vmatprep.subr.bf16.mxu0 0
    %4367 = vmatpush1.bf16.msra.mxu0 0
    %4368 = vmatprep.subr.bf16.mxu0 0
    %4369 = vmatpush1.bf16.msra.mxu0 0
    %4370 = vmatprep.subr.bf16.mxu0 0
    %4371 = vmatpush1.bf16.msra.mxu0 0
    %4372 = vmatprep.subr.bf16.mxu0 0
    %4373 = vmatpush1.bf16.msra.mxu0 0
    %4374 = vmatprep.subr.bf16.mxu0 0
    %4375 = vmatpush1.bf16.msra.mxu0 0
    %4376 = vmatprep.subr.bf16.mxu0 0
    %4377 = vmatpush1.bf16.msra.mxu0 0
    %4378 = vmatprep.subr.bf16.mxu0 0
    %4379 = vmatpush1.bf16.msra.mxu0 0
    %4380 = vmatprep.subr.bf16.mxu0 0
    %4381 = vmatpush1.bf16.msra.mxu0 0
    %4382 = vmatprep.subr.bf16.mxu0 0
    %4383 = vmatpush1.bf16.msra.mxu0 0
    %4384 = vmatprep.subr.bf16.mxu0 0
    %4385 = vmatpush1.bf16.msra.mxu0 0
    %4386 = vmatprep.subr.bf16.mxu0 0
    %4387 = vmatpush1.bf16.msra.mxu0 0
    %4388 = vmatprep.subr.bf16.mxu0 0
    %4389 = vmatpush1.bf16.msra.mxu0 0
    %4390 = vmatprep.subr.bf16.mxu0 0
    %4391 = vmatpush1.bf16.msra.mxu0 0
    %4392 = vmatprep.mubr.bf16.mxu0 0
    %4393 = vmatmul.mubr.bf16.gmra.mrb[0].mxu0 %v4313
    %v4394 = vpop.f32.mrb[0].mxu0
    %v4395 = vadd.f32 0.0, %v4394
    %v4396 = vpop.f32.mrb[0].mxu0
    %v4397 = vpop.f32.mrb[0].mxu0
    %v4398 = vadd.f32 0.0, %v4397
    %v4399 = vpop.f32.mrb[0].mxu0
    %4400 = vmatprep.mubr.bf16.mxu0 0
    %4401 = vmatmul.mubr.bf16.gmra.mrb[0].mxu0 %v4316
    %v4402 = vpop.f32.mrb[0].mxu0
    %v4403 = vadd.f32 0.0, %v4402
    %v4404 = vpop.f32.mrb[0].mxu0
    %v4405 = vpop.f32.mrb[0].mxu0
    %v4406 = vadd.f32 0.0, %v4405
    %v4407 = vpop.f32.mrb[0].mxu0
    %4408 = vmatprep.mubr.bf16.mxu0 0
    %4409 = vmatmul.mubr.bf16.gmra.mrb[0].mxu0 %v4319
    %v4410 = vpop.f32.mrb[0].mxu0
    %v4411 = vadd.f32 0.0, %v4410
    %v4412 = vpop.f32.mrb[0].mxu0
    %v4413 = vpop.f32.mrb[0].mxu0
    %v4414 = vadd.f32 0.0, %v4413
    %v4415 = vpop.f32.mrb[0].mxu0
    %4416 = vmatprep.mubr.bf16.mxu0 0
    %4417 = vmatmul.mubr.bf16.gmra.mrb[0].mxu0 %v4322
    %v4418 = vpop.f32.mrb[0].mxu0
    %v4419 = vadd.f32 0.0, %v4418
    %v4420 = vpop.f32.mrb[0].mxu0
    %v4421 = vpop.f32.mrb[0].mxu0
    %v4422 = vadd.f32 0.0, %v4421
    %v4423 = vpop.f32.mrb[0].mxu0
    %4424 = vmatprep.mubr.bf16.mxu0 0
    %4425 = vmatmul.mubr.bf16.gmra.mrb[0].mxu0 %v4325
    %v4426 = vpop.f32.mrb[0].mxu0
    %v4427 = vadd.f32 0.0, %v4426
    %v4428 = vpop.f32.mrb[0].mxu0
    %v4429 = vpop.f32.mrb[0].mxu0
    %v4430 = vadd.f32 0.0, %v4429
    %v4431 = vpop.f32.mrb[0].mxu0
    %4432 = vmatprep.mubr.bf16.mxu0 0
    %4433 = vmatmul.mubr.bf16.gmra.mrb[0].mxu0 %v4328
    %v4434 = vpop.f32.mrb[0].mxu0
    %v4435 = vadd.f32 0.0, %v4434
    %v4436 = vpop.f32.mrb[0].mxu0
    %v4437 = vpop.f32.mrb[0].mxu0
    %v4438 = vadd.f32 0.0, %v4437
    %v4439 = vpop.f32.mrb[0].mxu0
    %4440 = vmatprep.mubr.bf16.mxu0 0
    %4441 = vmatmul.mubr.bf16.gmra.mrb[0].mxu0 %v4331
    %v4442 = vpop.f32.mrb[0].mxu0
    %v4443 = vadd.f32 0.0, %v4442
    %v4444 = vpop.f32.mrb[0].mxu0
    %v4445 = vpop.f32.mrb[0].mxu0
    %v4446 = vadd.f32 0.0, %v4445
    %v4447 = vpop.f32.mrb[0].mxu0
    %4448 = vmatprep.mubr.bf16.mxu0 0
    %4449 = vmatmul.mubr.bf16.gmra.mrb[0].mxu0 %v4334
    %v4450 = vpop.f32.mrb[0].mxu0
    %v4451 = vadd.f32 0.0, %v4450
    %v4452 = vpop.f32.mrb[0].mxu0
    %v4453 = vpop.f32.mrb[0].mxu0
    %v4454 = vadd.f32 0.0, %v4453
    %v4455 = vpop.f32.mrb[0].mxu0
    %4456 = vmatprep.mubr.bf16.mxu0 0
    %4457 = vmatmul.mubr.bf16.gmra.mrb[0].mxu0 %v4337
    %v4458 = vpop.f32.mrb[0].mxu0
    %v4459 = vadd.f32 0.0, %v4458
    %v4460 = vpop.f32.mrb[0].mxu0
    %v4461 = vpop.f32.mrb[0].mxu0
    %v4462 = vadd.f32 0.0, %v4461
    %v4463 = vpop.f32.mrb[0].mxu0
    %4464 = vmatprep.mubr.bf16.mxu0 0
    %4465 = vmatmul.mubr.bf16.gmra.mrb[0].mxu0 %v4340
    %v4466 = vpop.f32.mrb[0].mxu0
    %v4467 = vadd.f32 0.0, %v4466
    %v4468 = vpop.f32.mrb[0].mxu0
    %v4469 = vpop.f32.mrb[0].mxu0
    %v4470 = vadd.f32 0.0, %v4469
    %v4471 = vpop.f32.mrb[0].mxu0
    %4472 = vmatprep.mubr.bf16.mxu0 0
    %4473 = vmatmul.mubr.bf16.gmra.mrb[0].mxu0 %v4343
    %v4474 = vpop.f32.mrb[0].mxu0
    %v4475 = vadd.f32 0.0, %v4474
    %v4476 = vpop.f32.mrb[0].mxu0
    %v4477 = vpop.f32.mrb[0].mxu0
    %v4478 = vadd.f32 0.0, %v4477
    %v4479 = vpop.f32.mrb[0].mxu0
    %4480 = vmatprep.mubr.bf16.mxu0 0
    %4481 = vmatmul.mubr.bf16.gmra.mrb[0].mxu0 %v4346
    %v4482 = vpop.f32.mrb[0].mxu0
    %v4483 = vadd.f32 0.0, %v4482
    %v4484 = vpop.f32.mrb[0].mxu0
    %v4485 = vpop.f32.mrb[0].mxu0
    %v4486 = vadd.f32 0.0, %v4485
    %v4487 = vpop.f32.mrb[0].mxu0
    %4488 = vmatprep.mubr.bf16.mxu0 0
    %4489 = vmatmul.mubr.bf16.gmra.mrb[0].mxu0 %v4349
    %v4490 = vpop.f32.mrb[0].mxu0
    %v4491 = vadd.f32 0.0, %v4490
    %v4492 = vpop.f32.mrb[0].mxu0
    %v4493 = vpop.f32.mrb[0].mxu0
    %v4494 = vadd.f32 0.0, %v4493
    %v4495 = vpop.f32.mrb[0].mxu0
    %4496 = vmatprep.mubr.bf16.mxu0 0
    %4497 = vmatmul.mubr.bf16.gmra.mrb[0].mxu0 %v4352
    %v4498 = vpop.f32.mrb[0].mxu0
    %v4499 = vadd.f32 0.0, %v4498
    %v4500 = vpop.f32.mrb[0].mxu0
    %v4501 = vpop.f32.mrb[0].mxu0
    %v4502 = vadd.f32 0.0, %v4501
    %v4503 = vpop.f32.mrb[0].mxu0
    %4504 = vmatprep.mubr.bf16.mxu0 0
    %4505 = vmatmul.mubr.bf16.gmra.mrb[0].mxu0 %v4355
    %v4506 = vpop.f32.mrb[0].mxu0
    %v4507 = vadd.f32 0.0, %v4506
    %v4508 = vpop.f32.mrb[0].mxu0
    %v4509 = vpop.f32.mrb[0].mxu0
    %v4510 = vadd.f32 0.0, %v4509
    %v4511 = vpop.f32.mrb[0].mxu0
    %4512 = vmatprep.mubr.bf16.mxu0 0
    %4513 = vmatmul.mubr.bf16.gmra.mrb[0].mxu0 %v4358
    %v4514 = vpop.f32.mrb[0].mxu0
    %v4515 = vadd.f32 0.0, %v4514
    %v4516 = vpop.f32.mrb[0].mxu0
    %v4517 = vpop.f32.mrb[0].mxu0
    %v4518 = vadd.f32 0.0, %v4517
    %v4519 = vpop.f32.mrb[0].mxu0
    %4520 = vdwg.mxu0
    %v4521 = vld [vmem:[%s8] sm:$0x1]
    %v4523 = vlaneseq
    %v4524 = vshrl.u32 %v4523, 7
    %v4525 = vsub.s32 0, %v4524
    %v4526 = vrot.slane %v4521, %v4525
    %v4528 = vmul.f32 %v4395, %v4526
    %v4529 = vmul.f32 %v4398, %v4526
    %v4530 = vmul.f32 %v4403, %v4526
    %v4531 = vmul.f32 %v4406, %v4526
    %v4532 = vmul.f32 %v4411, %v4526
    %v4533 = vmul.f32 %v4414, %v4526
    %v4534 = vmul.f32 %v4419, %v4526
    %v4535 = vmul.f32 %v4422, %v4526
    %v4536 = vmul.f32 %v4427, %v4526
    %v4537 = vmul.f32 %v4430, %v4526
    %v4538 = vmul.f32 %v4435, %v4526
    %v4539 = vmul.f32 %v4438, %v4526
    %v4540 = vmul.f32 %v4443, %v4526
    %v4541 = vmul.f32 %v4446, %v4526
    %v4542 = vmul.f32 %v4451, %v4526
    %v4543 = vmul.f32 %v4454, %v4526
    %v4544 = vmul.f32 %v4459, %v4526
    %v4545 = vmul.f32 %v4462, %v4526
    %v4546 = vmul.f32 %v4467, %v4526
    %v4547 = vmul.f32 %v4470, %v4526
    %v4548 = vmul.f32 %v4475, %v4526
    %v4549 = vmul.f32 %v4478, %v4526
    %v4550 = vmul.f32 %v4483, %v4526
    %v4551 = vmul.f32 %v4486, %v4526
    %v4552 = vmul.f32 %v4491, %v4526
    %v4553 = vmul.f32 %v4494, %v4526
    %v4554 = vmul.f32 %v4499, %v4526
    %v4555 = vmul.f32 %v4502, %v4526
    %v4556 = vmul.f32 %v4507, %v4526
    %v4557 = vmul.f32 %v4510, %v4526
    %v4558 = vmul.f32 %v4515, %v4526
    %v4559 = vmul.f32 %v4518, %v4526
    %v4560 = vld [vmem:[%s9] sm:$0x1]
    %v4562 = vlaneseq
    %v4563 = vshrl.u32 %v4562, 7
    %v4564 = vsub.s32 0, %v4563
    %v4565 = vrot.slane %v4560, %v4564
    %v4567 = vadd.f32 %v4528, %v4565
    %v4568 = vadd.f32 %v4529, %v4565
    %v4569 = vadd.f32 %v4530, %v4565
    %v4570 = vadd.f32 %v4531, %v4565
    %v4571 = vadd.f32 %v4532, %v4565
    %v4572 = vadd.f32 %v4533, %v4565
    %v4573 = vadd.f32 %v4534, %v4565
    %v4574 = vadd.f32 %v4535, %v4565
    %v4575 = vadd.f32 %v4536, %v4565
    %v4576 = vadd.f32 %v4537, %v4565
    %v4577 = vadd.f32 %v4538, %v4565
    %v4578 = vadd.f32 %v4539, %v4565
    %v4579 = vadd.f32 %v4540, %v4565
    %v4580 = vadd.f32 %v4541, %v4565
    %v4581 = vadd.f32 %v4542, %v4565
    %v4582 = vadd.f32 %v4543, %v4565
    %v4583 = vadd.f32 %v4544, %v4565
    %v4584 = vadd.f32 %v4545, %v4565
    %v4585 = vadd.f32 %v4546, %v4565
    %v4586 = vadd.f32 %v4547, %v4565
    %v4587 = vadd.f32 %v4548, %v4565
    %v4588 = vadd.f32 %v4549, %v4565
    %v4589 = vadd.f32 %v4550, %v4565
    %v4590 = vadd.f32 %v4551, %v4565
    %v4591 = vadd.f32 %v4552, %v4565
    %v4592 = vadd.f32 %v4553, %v4565
    %v4593 = vadd.f32 %v4554, %v4565
    %v4594 = vadd.f32 %v4555, %v4565
    %v4595 = vadd.f32 %v4556, %v4565
    %v4596 = vadd.f32 %v4557, %v4565
    %v4597 = vadd.f32 %v4558, %v4565
    %v4598 = vadd.f32 %v4559, %v4565
    %v4599 = vunpack.c.l.bf16 %v122
    %v4600 = vunpack.c.l.bf16 %v123
    %v4601 = vunpack.c.l.bf16 %v124
    %v4602 = vunpack.c.l.bf16 %v125
    %v4603 = vunpack.c.l.bf16 %v126
    %v4604 = vunpack.c.l.bf16 %v127
    %v4605 = vunpack.c.l.bf16 %v128
    %v4606 = vunpack.c.l.bf16 %v129
    %v4607 = vunpack.c.l.bf16 %v130
    %v4608 = vunpack.c.l.bf16 %v131
    %v4609 = vunpack.c.l.bf16 %v132
    %v4610 = vunpack.c.l.bf16 %v133
    %v4611 = vunpack.c.l.bf16 %v134
    %v4612 = vunpack.c.l.bf16 %v135
    %v4613 = vunpack.c.l.bf16 %v136
    %v4614 = vunpack.c.l.bf16 %v137
    %v4615 = vunpack.c.l.bf16 %v138
    %v4616 = vunpack.c.l.bf16 %v139
    %v4617 = vunpack.c.l.bf16 %v140
    %v4618 = vunpack.c.l.bf16 %v141
    %v4619 = vunpack.c.l.bf16 %v142
    %v4620 = vunpack.c.l.bf16 %v143
    %v4621 = vunpack.c.l.bf16 %v144
    %v4622 = vunpack.c.l.bf16 %v145
    %v4623 = vunpack.c.l.bf16 %v146
    %v4624 = vunpack.c.l.bf16 %v147
    %v4625 = vunpack.c.l.bf16 %v148
    %v4626 = vunpack.c.l.bf16 %v149
    %v4627 = vunpack.c.l.bf16 %v150
    %v4628 = vunpack.c.l.bf16 %v151
    %v4629 = vunpack.c.l.bf16 %v152
    %v4630 = vunpack.c.l.bf16 %v153
    %v4631 = vadd.f32 %v4567, %v4599
    %v4632 = vadd.f32 %v4568, %v4600
    %v4633 = vadd.f32 %v4569, %v4601
    %v4634 = vadd.f32 %v4570, %v4602
    %v4635 = vadd.f32 %v4571, %v4603
    %v4636 = vadd.f32 %v4572, %v4604
    %v4637 = vadd.f32 %v4573, %v4605
    %v4638 = vadd.f32 %v4574, %v4606
    %v4639 = vadd.f32 %v4575, %v4607
    %v4640 = vadd.f32 %v4576, %v4608
    %v4641 = vadd.f32 %v4577, %v4609
    %v4642 = vadd.f32 %v4578, %v4610
    %v4643 = vadd.f32 %v4579, %v4611
    %v4644 = vadd.f32 %v4580, %v4612
    %v4645 = vadd.f32 %v4581, %v4613
    %v4646 = vadd.f32 %v4582, %v4614
    %v4647 = vadd.f32 %v4583, %v4615
    %v4648 = vadd.f32 %v4584, %v4616
    %v4649 = vadd.f32 %v4585, %v4617
    %v4650 = vadd.f32 %v4586, %v4618
    %v4651 = vadd.f32 %v4587, %v4619
    %v4652 = vadd.f32 %v4588, %v4620
    %v4653 = vadd.f32 %v4589, %v4621
    %v4654 = vadd.f32 %v4590, %v4622
    %v4655 = vadd.f32 %v4591, %v4623
    %v4656 = vadd.f32 %v4592, %v4624
    %v4657 = vadd.f32 %v4593, %v4625
    %v4658 = vadd.f32 %v4594, %v4626
    %v4659 = vadd.f32 %v4595, %v4627
    %v4660 = vadd.f32 %v4596, %v4628
    %v4661 = vadd.f32 %v4597, %v4629
    %v4662 = vadd.f32 %v4598, %v4630
    %v4663 = vmax.f32 %v4631, 0.0
    %v4664 = vmax.f32 %v4632, 0.0
    %v4665 = vmax.f32 %v4633, 0.0
    %v4666 = vmax.f32 %v4634, 0.0
    %v4667 = vmax.f32 %v4635, 0.0
    %v4668 = vmax.f32 %v4636, 0.0
    %v4669 = vmax.f32 %v4637, 0.0
    %v4670 = vmax.f32 %v4638, 0.0
    %v4671 = vmax.f32 %v4639, 0.0
    %v4672 = vmax.f32 %v4640, 0.0
    %v4673 = vmax.f32 %v4641, 0.0
    %v4674 = vmax.f32 %v4642, 0.0
    %v4675 = vmax.f32 %v4643, 0.0
    %v4676 = vmax.f32 %v4644, 0.0
    %v4677 = vmax.f32 %v4645, 0.0
    %v4678 = vmax.f32 %v4646, 0.0
    %v4679 = vmax.f32 %v4647, 0.0
    %v4680 = vmax.f32 %v4648, 0.0
    %v4681 = vmax.f32 %v4649, 0.0
    %v4682 = vmax.f32 %v4650, 0.0
    %v4683 = vmax.f32 %v4651, 0.0
    %v4684 = vmax.f32 %v4652, 0.0
    %v4685 = vmax.f32 %v4653, 0.0
    %v4686 = vmax.f32 %v4654, 0.0
    %v4687 = vmax.f32 %v4655, 0.0
    %v4688 = vmax.f32 %v4656, 0.0
    %v4689 = vmax.f32 %v4657, 0.0
    %v4690 = vmax.f32 %v4658, 0.0
    %v4691 = vmax.f32 %v4659, 0.0
    %v4692 = vmax.f32 %v4660, 0.0
    %v4693 = vmax.f32 %v4661, 0.0
    %v4694 = vmax.f32 %v4662, 0.0
    %v4695 = vpack.c.bf16 %v4664, %v4663
    %v4696 = vpack.c.bf16 %v4666, %v4665
    %v4697 = vpack.c.bf16 %v4668, %v4667
    %v4698 = vpack.c.bf16 %v4670, %v4669
    %v4699 = vpack.c.bf16 %v4672, %v4671
    %v4700 = vpack.c.bf16 %v4674, %v4673
    %v4701 = vpack.c.bf16 %v4676, %v4675
    %v4702 = vpack.c.bf16 %v4678, %v4677
    %v4703 = vpack.c.bf16 %v4680, %v4679
    %v4704 = vpack.c.bf16 %v4682, %v4681
    %v4705 = vpack.c.bf16 %v4684, %v4683
    %v4706 = vpack.c.bf16 %v4686, %v4685
    %v4707 = vpack.c.bf16 %v4688, %v4687
    %v4708 = vpack.c.bf16 %v4690, %v4689
    %v4709 = vpack.c.bf16 %v4692, %v4691
    %v4710 = vpack.c.bf16 %v4694, %v4693
    %v4727 = vunpack.c.l.b16 %v4695
    %v4728 = vunpack.c.h.b16 %v4695
    %v4729 = vunpack.c.l.b16 %v4696
    %v4730 = vunpack.c.h.b16 %v4696
    %v4731 = vunpack.c.l.b16 %v4697
    %v4732 = vunpack.c.h.b16 %v4697
    %v4733 = vunpack.c.l.b16 %v4698
    %v4734 = vunpack.c.h.b16 %v4698
    %v4735 = vunpack.c.l.b16 %v4699
    %v4736 = vunpack.c.h.b16 %v4699
    %v4737 = vunpack.c.l.b16 %v4700
    %v4738 = vunpack.c.h.b16 %v4700
    %v4739 = vunpack.c.l.b16 %v4701
    %v4740 = vunpack.c.h.b16 %v4701
    %v4741 = vunpack.c.l.b16 %v4702
    %v4742 = vunpack.c.h.b16 %v4702
    %v4743 = vunpack.c.l.b16 %v4703
    %v4744 = vunpack.c.h.b16 %v4703
    %v4745 = vunpack.c.l.b16 %v4704
    %v4746 = vunpack.c.h.b16 %v4704
    %v4747 = vunpack.c.l.b16 %v4705
    %v4748 = vunpack.c.h.b16 %v4705
    %v4749 = vunpack.c.l.b16 %v4706
    %v4750 = vunpack.c.h.b16 %v4706
    %v4751 = vunpack.c.l.b16 %v4707
    %v4752 = vunpack.c.h.b16 %v4707
    %v4753 = vunpack.c.l.b16 %v4708
    %v4754 = vunpack.c.h.b16 %v4708
    %v4755 = vunpack.c.l.b16 %v4709
    %v4756 = vunpack.c.h.b16 %v4709
    %v4757 = vunpack.c.l.b16 %v4710
    %v4758 = vunpack.c.h.b16 %v4710
    %v4759 = vpack.c.b16 %v4727, %v4727
    %v4760 = vpack.c.b16 %v4728, %v4728
    %v4761 = vpack.c.b16 %v4729, %v4729
    %v4762 = vpack.c.b16 %v4730, %v4730
    %v4763 = vpack.c.b16 %v4731, %v4731
    %v4764 = vpack.c.b16 %v4732, %v4732
    %v4765 = vpack.c.b16 %v4733, %v4733
    %v4766 = vpack.c.b16 %v4734, %v4734
    %v4767 = vpack.c.b16 %v4735, %v4735
    %v4768 = vpack.c.b16 %v4736, %v4736
    %v4769 = vpack.c.b16 %v4737, %v4737
    %v4770 = vpack.c.b16 %v4738, %v4738
    %v4771 = vpack.c.b16 %v4739, %v4739
    %v4772 = vpack.c.b16 %v4740, %v4740
    %v4773 = vpack.c.b16 %v4741, %v4741
    %v4774 = vpack.c.b16 %v4742, %v4742
    %v4775 = vpack.c.b16 %v4743, %v4743
    %v4776 = vpack.c.b16 %v4744, %v4744
    %v4777 = vpack.c.b16 %v4745, %v4745
    %v4778 = vpack.c.b16 %v4746, %v4746
    %v4779 = vpack.c.b16 %v4747, %v4747
    %v4780 = vpack.c.b16 %v4748, %v4748
    %v4781 = vpack.c.b16 %v4749, %v4749
    %v4782 = vpack.c.b16 %v4750, %v4750
    %v4783 = vpack.c.b16 %v4751, %v4751
    %v4784 = vpack.c.b16 %v4752, %v4752
    %v4785 = vpack.c.b16 %v4753, %v4753
    %v4786 = vpack.c.b16 %v4754, %v4754
    %v4787 = vpack.c.b16 %v4755, %v4755
    %v4788 = vpack.c.b16 %v4756, %v4756
    %v4789 = vpack.c.b16 %v4757, %v4757
    %v4790 = vpack.c.b16 %v4758, %v4758
    %4823 = vst [vmem:[#allocation8] sm:$0xf] %v4759
    %4824 = vst [vmem:[#allocation8 + $0x4] sm:$0xf] %v4760
    %4825 = vst [vmem:[#allocation8 + $0x8] sm:$0xf] %v4761
    %4826 = vst [vmem:[#allocation8 + $0xc] sm:$0xf] %v4762
    %4827 = vst [vmem:[#allocation8 + $0x10] sm:$0xf] %v4763
    %4828 = vst [vmem:[#allocation8 + $0x14] sm:$0xf] %v4764
    %4829 = vst [vmem:[#allocation8 + $0x18] sm:$0xf] %v4765
    %4830 = vst [vmem:[#allocation8 + $0x1c] sm:$0xf] %v4766
    %4831 = vst [vmem:[#allocation8 + $0x20] sm:$0xf] %v4767
    %4832 = vst [vmem:[#allocation8 + $0x24] sm:$0xf] %v4768
    %4833 = vst [vmem:[#allocation8 + $0x28] sm:$0xf] %v4769
    %4834 = vst [vmem:[#allocation8 + $0x2c] sm:$0xf] %v4770
    %4835 = vst [vmem:[#allocation8 + $0x30] sm:$0xf] %v4771
    %4836 = vst [vmem:[#allocation8 + $0x34] sm:$0xf] %v4772
    %4837 = vst [vmem:[#allocation8 + $0x38] sm:$0xf] %v4773
    %4838 = vst [vmem:[#allocation8 + $0x3c] sm:$0xf] %v4774
    %4839 = vst [vmem:[#allocation8 + $0x40] sm:$0xf] %v4775
    %4840 = vst [vmem:[#allocation8 + $0x44] sm:$0xf] %v4776
    %4841 = vst [vmem:[#allocation8 + $0x48] sm:$0xf] %v4777
    %4842 = vst [vmem:[#allocation8 + $0x4c] sm:$0xf] %v4778
    %4843 = vst [vmem:[#allocation8 + $0x50] sm:$0xf] %v4779
    %4844 = vst [vmem:[#allocation8 + $0x54] sm:$0xf] %v4780
    %4845 = vst [vmem:[#allocation8 + $0x58] sm:$0xf] %v4781
    %4846 = vst [vmem:[#allocation8 + $0x5c] sm:$0xf] %v4782
    %4847 = vst [vmem:[#allocation8 + $0x60] sm:$0xf] %v4783
    %4848 = vst [vmem:[#allocation8 + $0x64] sm:$0xf] %v4784
    %4849 = vst [vmem:[#allocation8 + $0x68] sm:$0xf] %v4785
    %4850 = vst [vmem:[#allocation8 + $0x6c] sm:$0xf] %v4786
    %4851 = vst [vmem:[#allocation8 + $0x70] sm:$0xf] %v4787
    %4852 = vst [vmem:[#allocation8 + $0x74] sm:$0xf] %v4788
    %4853 = vst [vmem:[#allocation8 + $0x78] sm:$0xf] %v4789
    %4854 = vst [vmem:[#allocation8 + $0x7c] sm:$0xf] %v4790
    %s4855 = scalar_lea.vmem [#allocation3], 128
    %v4856 = vld [vmem:[%s4855] sm:$0xf]
    %v4857 = vld [vmem:[%s4855 + $0x4] sm:$0xf]
    %v4858 = vld [vmem:[%s4855 + $0x8] sm:$0xf]
    %v4859 = vld [vmem:[%s4855 + $0xc] sm:$0xf]
    %v4860 = vld [vmem:[%s4855 + $0x10] sm:$0xf]
    %v4861 = vld [vmem:[%s4855 + $0x14] sm:$0xf]
    %v4862 = vld [vmem:[%s4855 + $0x18] sm:$0xf]
    %v4863 = vld [vmem:[%s4855 + $0x1c] sm:$0xf]
    %v4864 = vld [vmem:[%s4855 + $0x20] sm:$0xf]
    %v4865 = vld [vmem:[%s4855 + $0x24] sm:$0xf]
    %v4866 = vld [vmem:[%s4855 + $0x28] sm:$0xf]
    %v4867 = vld [vmem:[%s4855 + $0x2c] sm:$0xf]
    %v4868 = vld [vmem:[%s4855 + $0x30] sm:$0xf]
    %v4869 = vld [vmem:[%s4855 + $0x34] sm:$0xf]
    %v4870 = vld [vmem:[%s4855 + $0x38] sm:$0xf]
    %v4871 = vld [vmem:[%s4855 + $0x3c] sm:$0xf]
    %v4872 = vld [vmem:[%s4855 + $0x40] sm:$0xf]
    %v4873 = vld [vmem:[%s4855 + $0x44] sm:$0xf]
    %v4874 = vld [vmem:[%s4855 + $0x48] sm:$0xf]
    %v4875 = vld [vmem:[%s4855 + $0x4c] sm:$0xf]
    %v4876 = vld [vmem:[%s4855 + $0x50] sm:$0xf]
    %v4877 = vld [vmem:[%s4855 + $0x54] sm:$0xf]
    %v4878 = vld [vmem:[%s4855 + $0x58] sm:$0xf]
    %v4879 = vld [vmem:[%s4855 + $0x5c] sm:$0xf]
    %v4880 = vld [vmem:[%s4855 + $0x60] sm:$0xf]
    %v4881 = vld [vmem:[%s4855 + $0x64] sm:$0xf]
    %v4882 = vld [vmem:[%s4855 + $0x68] sm:$0xf]
    %v4883 = vld [vmem:[%s4855 + $0x6c] sm:$0xf]
    %v4884 = vld [vmem:[%s4855 + $0x70] sm:$0xf]
    %v4885 = vld [vmem:[%s4855 + $0x74] sm:$0xf]
    %v4886 = vld [vmem:[%s4855 + $0x78] sm:$0xf]
    %v4887 = vld [vmem:[%s4855 + $0x7c] sm:$0xf]
    %v4888 = vld [vmem:[%s1] sm:$0xf]
    %v4889 = vld [vmem:[%s1 + $0x4] sm:$0xf]
    %v4890 = vld [vmem:[%s1 + $0x8] sm:$0xf]
    %v4891 = vld [vmem:[%s1 + $0xc] sm:$0xf]
    %v4892 = vld [vmem:[%s1 + $0x10] sm:$0xf]
    %v4893 = vld [vmem:[%s1 + $0x14] sm:$0xf]
    %v4894 = vld [vmem:[%s1 + $0x18] sm:$0xf]
    %v4895 = vld [vmem:[%s1 + $0x1c] sm:$0xf]
    %v4896 = vld [vmem:[%s1 + $0x20] sm:$0xf]
    %v4897 = vld [vmem:[%s1 + $0x24] sm:$0xf]
    %v4898 = vld [vmem:[%s1 + $0x28] sm:$0xf]
    %v4899 = vld [vmem:[%s1 + $0x2c] sm:$0xf]
    %v4900 = vld [vmem:[%s1 + $0x30] sm:$0xf]
    %v4901 = vld [vmem:[%s1 + $0x34] sm:$0xf]
    %v4902 = vld [vmem:[%s1 + $0x38] sm:$0xf]
    %v4903 = vld [vmem:[%s1 + $0x3c] sm:$0xf]
    %v4936 = vunpack.c.l.b16 %v4856
    %v4937 = vunpack.c.l.b16 %v4857
    %v4938 = vunpack.c.l.b16 %v4858
    %v4939 = vunpack.c.l.b16 %v4859
    %v4940 = vunpack.c.l.b16 %v4860
    %v4941 = vunpack.c.l.b16 %v4861
    %v4942 = vunpack.c.l.b16 %v4862
    %v4943 = vunpack.c.l.b16 %v4863
    %v4944 = vunpack.c.l.b16 %v4864
    %v4945 = vunpack.c.l.b16 %v4865
    %v4946 = vunpack.c.l.b16 %v4866
    %v4947 = vunpack.c.l.b16 %v4867
    %v4948 = vunpack.c.l.b16 %v4868
    %v4949 = vunpack.c.l.b16 %v4869
    %v4950 = vunpack.c.l.b16 %v4870
    %v4951 = vunpack.c.l.b16 %v4871
    %v4952 = vunpack.c.l.b16 %v4872
    %v4953 = vunpack.c.l.b16 %v4873
    %v4954 = vunpack.c.l.b16 %v4874
    %v4955 = vunpack.c.l.b16 %v4875
    %v4956 = vunpack.c.l.b16 %v4876
    %v4957 = vunpack.c.l.b16 %v4877
    %v4958 = vunpack.c.l.b16 %v4878
    %v4959 = vunpack.c.l.b16 %v4879
    %v4960 = vunpack.c.l.b16 %v4880
    %v4961 = vunpack.c.l.b16 %v4881
    %v4962 = vunpack.c.l.b16 %v4882
    %v4963 = vunpack.c.l.b16 %v4883
    %v4964 = vunpack.c.l.b16 %v4884
    %v4965 = vunpack.c.l.b16 %v4885
    %v4966 = vunpack.c.l.b16 %v4886
    %v4967 = vunpack.c.l.b16 %v4887
    %v4968 = vpack.c.b16 %v4937, %v4936
    %v4969 = vpack.c.b16 %v4939, %v4938
    %v4970 = vpack.c.b16 %v4941, %v4940
    %v4971 = vpack.c.b16 %v4943, %v4942
    %v4972 = vpack.c.b16 %v4945, %v4944
    %v4973 = vpack.c.b16 %v4947, %v4946
    %v4974 = vpack.c.b16 %v4949, %v4948
    %v4975 = vpack.c.b16 %v4951, %v4950
    %v4976 = vpack.c.b16 %v4953, %v4952
    %v4977 = vpack.c.b16 %v4955, %v4954
    %v4978 = vpack.c.b16 %v4957, %v4956
    %v4979 = vpack.c.b16 %v4959, %v4958
    %v4980 = vpack.c.b16 %v4961, %v4960
    %v4981 = vpack.c.b16 %v4963, %v4962
    %v4982 = vpack.c.b16 %v4965, %v4964
    %v4983 = vpack.c.b16 %v4967, %v4966
    %v5016 = vunpack.c.l.b16 %v4888
    %v5017 = vunpack.c.l.b16 %v4889
    %v5018 = vunpack.c.l.b16 %v4890
    %v5019 = vunpack.c.l.b16 %v4891
    %v5020 = vunpack.c.l.b16 %v4892
    %v5021 = vunpack.c.l.b16 %v4893
    %v5022 = vunpack.c.l.b16 %v4894
    %v5023 = vunpack.c.l.b16 %v4895
    %v5024 = vunpack.c.l.b16 %v4896
    %v5025 = vunpack.c.l.b16 %v4897
    %v5026 = vunpack.c.l.b16 %v4898
    %v5027 = vunpack.c.l.b16 %v4899
    %v5028 = vunpack.c.l.b16 %v4900
    %v5029 = vunpack.c.l.b16 %v4901
    %v5030 = vunpack.c.l.b16 %v4902
    %v5031 = vunpack.c.l.b16 %v4903
    %v5032 = vpack.c.b16 %v5017, %v5016
    %v5033 = vpack.c.b16 %v5019, %v5018
    %v5034 = vpack.c.b16 %v5021, %v5020
    %v5035 = vpack.c.b16 %v5023, %v5022
    %v5036 = vpack.c.b16 %v5025, %v5024
    %v5037 = vpack.c.b16 %v5027, %v5026
    %v5038 = vpack.c.b16 %v5029, %v5028
    %v5039 = vpack.c.b16 %v5031, %v5030
    %5048 = vmatprep.subr.bf16.mxu0 0
    %5049 = vmatpush1.bf16.msra.mxu0 %v5032
    %5050 = vmatprep.subr.bf16.mxu0 0
    %5051 = vmatpush1.bf16.msra.mxu0 %v5033
    %5052 = vmatprep.subr.bf16.mxu0 0
    %5053 = vmatpush1.bf16.msra.mxu0 %v5034
    %5054 = vmatprep.subr.bf16.mxu0 0
    %5055 = vmatpush1.bf16.msra.mxu0 %v5035
    %5056 = vmatprep.subr.bf16.mxu0 0
    %5057 = vmatpush1.bf16.msra.mxu0 %v5036
    %5058 = vmatprep.subr.bf16.mxu0 0
    %5059 = vmatpush1.bf16.msra.mxu0 %v5037
    %5060 = vmatprep.subr.bf16.mxu0 0
    %5061 = vmatpush1.bf16.msra.mxu0 %v5038
    %5062 = vmatprep.subr.bf16.mxu0 0
    %5063 = vmatpush1.bf16.msra.mxu0 %v5039
    %5064 = vmatprep.subr.bf16.mxu0 0
    %5065 = vmatpush1.bf16.msra.mxu0 0
    %5066 = vmatprep.subr.bf16.mxu0 0
    %5067 = vmatpush1.bf16.msra.mxu0 0
    %5068 = vmatprep.subr.bf16.mxu0 0
    %5069 = vmatpush1.bf16.msra.mxu0 0
    %5070 = vmatprep.subr.bf16.mxu0 0
    %5071 = vmatpush1.bf16.msra.mxu0 0
    %5072 = vmatprep.subr.bf16.mxu0 0
    %5073 = vmatpush1.bf16.msra.mxu0 0
    %5074 = vmatprep.subr.bf16.mxu0 0
    %5075 = vmatpush1.bf16.msra.mxu0 0
    %5076 = vmatprep.subr.bf16.mxu0 0
    %5077 = vmatpush1.bf16.msra.mxu0 0
    %5078 = vmatprep.subr.bf16.mxu0 0
    %5079 = vmatpush1.bf16.msra.mxu0 0
    %5080 = vmatprep.mubr.bf16.mxu0 0
    %5081 = vmatmul.mubr.bf16.gmra.mrb[0].mxu0 %v4968
    %v5082 = vpop.f32.mrb[0].mxu0
    %v5083 = vadd.f32 0.0, %v5082
    %v5084 = vpop.f32.mrb[0].mxu0
    %v5085 = vpop.f32.mrb[0].mxu0
    %v5086 = vadd.f32 0.0, %v5085
    %v5087 = vpop.f32.mrb[0].mxu0
    %5088 = vmatprep.mubr.bf16.mxu0 0
    %5089 = vmatmul.mubr.bf16.gmra.mrb[0].mxu0 %v4969
    %v5090 = vpop.f32.mrb[0].mxu0
    %v5091 = vadd.f32 0.0, %v5090
    %v5092 = vpop.f32.mrb[0].mxu0
    %v5093 = vpop.f32.mrb[0].mxu0
    %v5094 = vadd.f32 0.0, %v5093
    %v5095 = vpop.f32.mrb[0].mxu0
    %5096 = vmatprep.mubr.bf16.mxu0 0
    %5097 = vmatmul.mubr.bf16.gmra.mrb[0].mxu0 %v4970
    %v5098 = vpop.f32.mrb[0].mxu0
    %v5099 = vadd.f32 0.0, %v5098
    %v5100 = vpop.f32.mrb[0].mxu0
    %v5101 = vpop.f32.mrb[0].mxu0
    %v5102 = vadd.f32 0.0, %v5101
    %v5103 = vpop.f32.mrb[0].mxu0
    %5104 = vmatprep.mubr.bf16.mxu0 0
    %5105 = vmatmul.mubr.bf16.gmra.mrb[0].mxu0 %v4971
    %v5106 = vpop.f32.mrb[0].mxu0
    %v5107 = vadd.f32 0.0, %v5106
    %v5108 = vpop.f32.mrb[0].mxu0
    %v5109 = vpop.f32.mrb[0].mxu0
    %v5110 = vadd.f32 0.0, %v5109
    %v5111 = vpop.f32.mrb[0].mxu0
    %5112 = vmatprep.mubr.bf16.mxu0 0
    %5113 = vmatmul.mubr.bf16.gmra.mrb[0].mxu0 %v4972
    %v5114 = vpop.f32.mrb[0].mxu0
    %v5115 = vadd.f32 0.0, %v5114
    %v5116 = vpop.f32.mrb[0].mxu0
    %v5117 = vpop.f32.mrb[0].mxu0
    %v5118 = vadd.f32 0.0, %v5117
    %v5119 = vpop.f32.mrb[0].mxu0
    %5120 = vmatprep.mubr.bf16.mxu0 0
    %5121 = vmatmul.mubr.bf16.gmra.mrb[0].mxu0 %v4973
    %v5122 = vpop.f32.mrb[0].mxu0
    %v5123 = vadd.f32 0.0, %v5122
    %v5124 = vpop.f32.mrb[0].mxu0
    %v5125 = vpop.f32.mrb[0].mxu0
    %v5126 = vadd.f32 0.0, %v5125
    %v5127 = vpop.f32.mrb[0].mxu0
    %5128 = vmatprep.mubr.bf16.mxu0 0
    %5129 = vmatmul.mubr.bf16.gmra.mrb[0].mxu0 %v4974
    %v5130 = vpop.f32.mrb[0].mxu0
    %v5131 = vadd.f32 0.0, %v5130
    %v5132 = vpop.f32.mrb[0].mxu0
    %v5133 = vpop.f32.mrb[0].mxu0
    %v5134 = vadd.f32 0.0, %v5133
    %v5135 = vpop.f32.mrb[0].mxu0
    %5136 = vmatprep.mubr.bf16.mxu0 0
    %5137 = vmatmul.mubr.bf16.gmra.mrb[0].mxu0 %v4975
    %v5138 = vpop.f32.mrb[0].mxu0
    %v5139 = vadd.f32 0.0, %v5138
    %v5140 = vpop.f32.mrb[0].mxu0
    %v5141 = vpop.f32.mrb[0].mxu0
    %v5142 = vadd.f32 0.0, %v5141
    %v5143 = vpop.f32.mrb[0].mxu0
    %5144 = vmatprep.mubr.bf16.mxu0 0
    %5145 = vmatmul.mubr.bf16.gmra.mrb[0].mxu0 %v4976
    %v5146 = vpop.f32.mrb[0].mxu0
    %v5147 = vadd.f32 0.0, %v5146
    %v5148 = vpop.f32.mrb[0].mxu0
    %v5149 = vpop.f32.mrb[0].mxu0
    %v5150 = vadd.f32 0.0, %v5149
    %v5151 = vpop.f32.mrb[0].mxu0
    %5152 = vmatprep.mubr.bf16.mxu0 0
    %5153 = vmatmul.mubr.bf16.gmra.mrb[0].mxu0 %v4977
    %v5154 = vpop.f32.mrb[0].mxu0
    %v5155 = vadd.f32 0.0, %v5154
    %v5156 = vpop.f32.mrb[0].mxu0
    %v5157 = vpop.f32.mrb[0].mxu0
    %v5158 = vadd.f32 0.0, %v5157
    %v5159 = vpop.f32.mrb[0].mxu0
    %5160 = vmatprep.mubr.bf16.mxu0 0
    %5161 = vmatmul.mubr.bf16.gmra.mrb[0].mxu0 %v4978
    %v5162 = vpop.f32.mrb[0].mxu0
    %v5163 = vadd.f32 0.0, %v5162
    %v5164 = vpop.f32.mrb[0].mxu0
    %v5165 = vpop.f32.mrb[0].mxu0
    %v5166 = vadd.f32 0.0, %v5165
    %v5167 = vpop.f32.mrb[0].mxu0
    %5168 = vmatprep.mubr.bf16.mxu0 0
    %5169 = vmatmul.mubr.bf16.gmra.mrb[0].mxu0 %v4979
    %v5170 = vpop.f32.mrb[0].mxu0
    %v5171 = vadd.f32 0.0, %v5170
    %v5172 = vpop.f32.mrb[0].mxu0
    %v5173 = vpop.f32.mrb[0].mxu0
    %v5174 = vadd.f32 0.0, %v5173
    %v5175 = vpop.f32.mrb[0].mxu0
    %5176 = vmatprep.mubr.bf16.mxu0 0
    %5177 = vmatmul.mubr.bf16.gmra.mrb[0].mxu0 %v4980
    %v5178 = vpop.f32.mrb[0].mxu0
    %v5179 = vadd.f32 0.0, %v5178
    %v5180 = vpop.f32.mrb[0].mxu0
    %v5181 = vpop.f32.mrb[0].mxu0
    %v5182 = vadd.f32 0.0, %v5181
    %v5183 = vpop.f32.mrb[0].mxu0
    %5184 = vmatprep.mubr.bf16.mxu0 0
    %5185 = vmatmul.mubr.bf16.gmra.mrb[0].mxu0 %v4981
    %v5186 = vpop.f32.mrb[0].mxu0
    %v5187 = vadd.f32 0.0, %v5186
    %v5188 = vpop.f32.mrb[0].mxu0
    %v5189 = vpop.f32.mrb[0].mxu0
    %v5190 = vadd.f32 0.0, %v5189
    %v5191 = vpop.f32.mrb[0].mxu0
    %5192 = vmatprep.mubr.bf16.mxu0 0
    %5193 = vmatmul.mubr.bf16.gmra.mrb[0].mxu0 %v4982
    %v5194 = vpop.f32.mrb[0].mxu0
    %v5195 = vadd.f32 0.0, %v5194
    %v5196 = vpop.f32.mrb[0].mxu0
    %v5197 = vpop.f32.mrb[0].mxu0
    %v5198 = vadd.f32 0.0, %v5197
    %v5199 = vpop.f32.mrb[0].mxu0
    %5200 = vmatprep.mubr.bf16.mxu0 0
    %5201 = vmatmul.mubr.bf16.gmra.mrb[0].mxu0 %v4983
    %v5202 = vpop.f32.mrb[0].mxu0
    %v5203 = vadd.f32 0.0, %v5202
    %v5204 = vpop.f32.mrb[0].mxu0
    %v5205 = vpop.f32.mrb[0].mxu0
    %v5206 = vadd.f32 0.0, %v5205
    %v5207 = vpop.f32.mrb[0].mxu0
    %5208 = vdwg.mxu0
    %v5209 = vld [vmem:[%s2] sm:$0x1]
    %v5211 = vlaneseq
    %v5212 = vshrl.u32 %v5211, 7
    %v5213 = vsub.s32 0, %v5212
    %v5214 = vrot.slane %v5209, %v5213
    %v5216 = vmul.f32 %v5083, %v5214
    %v5217 = vmul.f32 %v5086, %v5214
    %v5218 = vmul.f32 %v5091, %v5214
    %v5219 = vmul.f32 %v5094, %v5214
    %v5220 = vmul.f32 %v5099, %v5214
    %v5221 = vmul.f32 %v5102, %v5214
    %v5222 = vmul.f32 %v5107, %v5214
    %v5223 = vmul.f32 %v5110, %v5214
    %v5224 = vmul.f32 %v5115, %v5214
    %v5225 = vmul.f32 %v5118, %v5214
    %v5226 = vmul.f32 %v5123, %v5214
    %v5227 = vmul.f32 %v5126, %v5214
    %v5228 = vmul.f32 %v5131, %v5214
    %v5229 = vmul.f32 %v5134, %v5214
    %v5230 = vmul.f32 %v5139, %v5214
    %v5231 = vmul.f32 %v5142, %v5214
    %v5232 = vmul.f32 %v5147, %v5214
    %v5233 = vmul.f32 %v5150, %v5214
    %v5234 = vmul.f32 %v5155, %v5214
    %v5235 = vmul.f32 %v5158, %v5214
    %v5236 = vmul.f32 %v5163, %v5214
    %v5237 = vmul.f32 %v5166, %v5214
    %v5238 = vmul.f32 %v5171, %v5214
    %v5239 = vmul.f32 %v5174, %v5214
    %v5240 = vmul.f32 %v5179, %v5214
    %v5241 = vmul.f32 %v5182, %v5214
    %v5242 = vmul.f32 %v5187, %v5214
    %v5243 = vmul.f32 %v5190, %v5214
    %v5244 = vmul.f32 %v5195, %v5214
    %v5245 = vmul.f32 %v5198, %v5214
    %v5246 = vmul.f32 %v5203, %v5214
    %v5247 = vmul.f32 %v5206, %v5214
    %v5248 = vld [vmem:[%s3] sm:$0x1]
    %v5250 = vlaneseq
    %v5251 = vshrl.u32 %v5250, 7
    %v5252 = vsub.s32 0, %v5251
    %v5253 = vrot.slane %v5248, %v5252
    %v5255 = vadd.f32 %v5216, %v5253
    %v5256 = vadd.f32 %v5217, %v5253
    %v5257 = vadd.f32 %v5218, %v5253
    %v5258 = vadd.f32 %v5219, %v5253
    %v5259 = vadd.f32 %v5220, %v5253
    %v5260 = vadd.f32 %v5221, %v5253
    %v5261 = vadd.f32 %v5222, %v5253
    %v5262 = vadd.f32 %v5223, %v5253
    %v5263 = vadd.f32 %v5224, %v5253
    %v5264 = vadd.f32 %v5225, %v5253
    %v5265 = vadd.f32 %v5226, %v5253
    %v5266 = vadd.f32 %v5227, %v5253
    %v5267 = vadd.f32 %v5228, %v5253
    %v5268 = vadd.f32 %v5229, %v5253
    %v5269 = vadd.f32 %v5230, %v5253
    %v5270 = vadd.f32 %v5231, %v5253
    %v5271 = vadd.f32 %v5232, %v5253
    %v5272 = vadd.f32 %v5233, %v5253
    %v5273 = vadd.f32 %v5234, %v5253
    %v5274 = vadd.f32 %v5235, %v5253
    %v5275 = vadd.f32 %v5236, %v5253
    %v5276 = vadd.f32 %v5237, %v5253
    %v5277 = vadd.f32 %v5238, %v5253
    %v5278 = vadd.f32 %v5239, %v5253
    %v5279 = vadd.f32 %v5240, %v5253
    %v5280 = vadd.f32 %v5241, %v5253
    %v5281 = vadd.f32 %v5242, %v5253
    %v5282 = vadd.f32 %v5243, %v5253
    %v5283 = vadd.f32 %v5244, %v5253
    %v5284 = vadd.f32 %v5245, %v5253
    %v5285 = vadd.f32 %v5246, %v5253
    %v5286 = vadd.f32 %v5247, %v5253
    %v5287 = vmax.f32 %v5255, 0.0
    %v5288 = vmax.f32 %v5256, 0.0
    %v5289 = vmax.f32 %v5257, 0.0
    %v5290 = vmax.f32 %v5258, 0.0
    %v5291 = vmax.f32 %v5259, 0.0
    %v5292 = vmax.f32 %v5260, 0.0
    %v5293 = vmax.f32 %v5261, 0.0
    %v5294 = vmax.f32 %v5262, 0.0
    %v5295 = vmax.f32 %v5263, 0.0
    %v5296 = vmax.f32 %v5264, 0.0
    %v5297 = vmax.f32 %v5265, 0.0
    %v5298 = vmax.f32 %v5266, 0.0
    %v5299 = vmax.f32 %v5267, 0.0
    %v5300 = vmax.f32 %v5268, 0.0
    %v5301 = vmax.f32 %v5269, 0.0
    %v5302 = vmax.f32 %v5270, 0.0
    %v5303 = vmax.f32 %v5271, 0.0
    %v5304 = vmax.f32 %v5272, 0.0
    %v5305 = vmax.f32 %v5273, 0.0
    %v5306 = vmax.f32 %v5274, 0.0
    %v5307 = vmax.f32 %v5275, 0.0
    %v5308 = vmax.f32 %v5276, 0.0
    %v5309 = vmax.f32 %v5277, 0.0
    %v5310 = vmax.f32 %v5278, 0.0
    %v5311 = vmax.f32 %v5279, 0.0
    %v5312 = vmax.f32 %v5280, 0.0
    %v5313 = vmax.f32 %v5281, 0.0
    %v5314 = vmax.f32 %v5282, 0.0
    %v5315 = vmax.f32 %v5283, 0.0
    %v5316 = vmax.f32 %v5284, 0.0
    %v5317 = vmax.f32 %v5285, 0.0
    %v5318 = vmax.f32 %v5286, 0.0
    %5319 = vst.msk [vmem:[#allocation2 + $0x20] sm:$0xff] %vm65, %v5287
    %5320 = vst.msk [vmem:[#allocation2 + $0x28] sm:$0xff] %vm65, %v5288
    %5321 = vst.msk [vmem:[#allocation2 + $0x38] sm:$0xff] %vm65, %v5289
    %5322 = vst.msk [vmem:[#allocation2 + $0x40] sm:$0xff] %vm65, %v5290
    %5323 = vst.msk [vmem:[#allocation2 + $0x50] sm:$0xff] %vm65, %v5291
    %5324 = vst.msk [vmem:[#allocation2 + $0x58] sm:$0xff] %vm65, %v5292
    %5325 = vst.msk [vmem:[#allocation2 + $0x68] sm:$0xff] %vm65, %v5293
    %5326 = vst.msk [vmem:[#allocation2 + $0x70] sm:$0xff] %vm65, %v5294
    %5327 = vst.msk [vmem:[#allocation2 + $0x80] sm:$0xff] %vm65, %v5295
    %5328 = vst.msk [vmem:[#allocation2 + $0x88] sm:$0xff] %vm65, %v5296
    %5329 = vst.msk [vmem:[#allocation2 + $0x98] sm:$0xff] %vm65, %v5297
    %5330 = vst.msk [vmem:[#allocation2 + $0xa0] sm:$0xff] %vm65, %v5298
    %5331 = vst.msk [vmem:[#allocation2 + $0xb0] sm:$0xff] %vm65, %v5299
    %5332 = vst.msk [vmem:[#allocation2 + $0xb8] sm:$0xff] %vm65, %v5300
    %5333 = vst.msk [vmem:[#allocation2 + $0xc8] sm:$0xff] %vm65, %v5301
    %5334 = vst.msk [vmem:[#allocation2 + $0xd0] sm:$0xff] %vm65, %v5302
    %5335 = vst.msk [vmem:[#allocation2 + $0xe0] sm:$0xff] %vm65, %v5303
    %5336 = vst.msk [vmem:[#allocation2 + $0xe8] sm:$0xff] %vm65, %v5304
    %5337 = vst.msk [vmem:[#allocation2 + $0xf8] sm:$0xff] %vm65, %v5305
    %5338 = vst.msk [vmem:[#allocation2 + $0x100] sm:$0xff] %vm65, %v5306
    %5339 = vst.msk [vmem:[#allocation2 + $0x110] sm:$0xff] %vm65, %v5307
    %5340 = vst.msk [vmem:[#allocation2 + $0x118] sm:$0xff] %vm65, %v5308
    %5341 = vst.msk [vmem:[#allocation2 + $0x128] sm:$0xff] %vm65, %v5309
    %5342 = vst.msk [vmem:[#allocation2 + $0x130] sm:$0xff] %vm65, %v5310
    %5343 = vst.msk [vmem:[#allocation2 + $0x140] sm:$0xff] %vm65, %v5311
    %5344 = vst.msk [vmem:[#allocation2 + $0x148] sm:$0xff] %vm65, %v5312
    %5345 = vst.msk [vmem:[#allocation2 + $0x158] sm:$0xff] %vm65, %v5313
    %5346 = vst.msk [vmem:[#allocation2 + $0x160] sm:$0xff] %vm65, %v5314
    %5347 = vst.msk [vmem:[#allocation2 + $0x170] sm:$0xff] %vm65, %v5315
    %5348 = vst.msk [vmem:[#allocation2 + $0x178] sm:$0xff] %vm65, %v5316
    %5349 = vst.msk [vmem:[#allocation2 + $0x188] sm:$0xff] %vm65, %v5317
    %5350 = vst.msk [vmem:[#allocation2 + $0x190] sm:$0xff] %vm65, %v5318
    %v5351 = vld [vmem:[#allocation2 + $0x7] sm:$0xff]
    %v5352 = vld [vmem:[#allocation2 + $0xf] sm:$0xff]
    %v5353 = vld [vmem:[#allocation2 + $0x17] sm:$0xff]
    %v5354 = vld [vmem:[#allocation2 + $0x1f] sm:$0xff]
    %v5355 = vld [vmem:[#allocation2 + $0x27] sm:$0xff]
    %v5356 = vld [vmem:[#allocation2 + $0x2f] sm:$0xff]
    %v5357 = vld [vmem:[#allocation2 + $0x37] sm:$0xff]
    %v5358 = vld [vmem:[#allocation2 + $0x3f] sm:$0xff]
    %v5359 = vld [vmem:[#allocation2 + $0x47] sm:$0xff]
    %v5360 = vld [vmem:[#allocation2 + $0x4f] sm:$0xff]
    %v5361 = vld [vmem:[#allocation2 + $0x57] sm:$0xff]
    %v5362 = vld [vmem:[#allocation2 + $0x5f] sm:$0xff]
    %v5363 = vld [vmem:[#allocation2 + $0x67] sm:$0xff]
    %v5364 = vld [vmem:[#allocation2 + $0x6f] sm:$0xff]
    %v5365 = vld [vmem:[#allocation2 + $0x77] sm:$0xff]
    %v5366 = vld [vmem:[#allocation2 + $0x7f] sm:$0xff]
    %v5367 = vld [vmem:[#allocation2 + $0x87] sm:$0xff]
    %v5368 = vld [vmem:[#allocation2 + $0x8f] sm:$0xff]
    %v5369 = vld [vmem:[#allocation2 + $0x97] sm:$0xff]
    %v5370 = vld [vmem:[#allocation2 + $0x9f] sm:$0xff]
    %v5371 = vld [vmem:[#allocation2 + $0xa7] sm:$0xff]
    %v5372 = vld [vmem:[#allocation2 + $0xaf] sm:$0xff]
    %v5373 = vld [vmem:[#allocation2 + $0xb7] sm:$0xff]
    %v5374 = vld [vmem:[#allocation2 + $0xbf] sm:$0xff]
    %v5375 = vld [vmem:[#allocation2 + $0xc7] sm:$0xff]
    %v5376 = vld [vmem:[#allocation2 + $0xcf] sm:$0xff]
    %v5377 = vld [vmem:[#allocation2 + $0xd7] sm:$0xff]
    %v5378 = vld [vmem:[#allocation2 + $0xdf] sm:$0xff]
    %v5379 = vld [vmem:[#allocation2 + $0xe7] sm:$0xff]
    %v5380 = vld [vmem:[#allocation2 + $0xef] sm:$0xff]
    %v5381 = vld [vmem:[#allocation2 + $0xf7] sm:$0xff]
    %v5382 = vld [vmem:[#allocation2 + $0xff] sm:$0xff]
    %v5383 = vld [vmem:[#allocation2 + $0x107] sm:$0xff]
    %v5384 = vld [vmem:[#allocation2 + $0x10f] sm:$0xff]
    %v5385 = vld [vmem:[#allocation2 + $0x117] sm:$0xff]
    %v5386 = vld [vmem:[#allocation2 + $0x11f] sm:$0xff]
    %v5387 = vld [vmem:[#allocation2 + $0x127] sm:$0xff]
    %v5388 = vld [vmem:[#allocation2 + $0x12f] sm:$0xff]
    %v5389 = vld [vmem:[#allocation2 + $0x137] sm:$0xff]
    %v5390 = vld [vmem:[#allocation2 + $0x13f] sm:$0xff]
    %v5391 = vld [vmem:[#allocation2 + $0x147] sm:$0xff]
    %v5392 = vld [vmem:[#allocation2 + $0x14f] sm:$0xff]
    %v5393 = vld [vmem:[#allocation2 + $0x157] sm:$0xff]
    %v5394 = vld [vmem:[#allocation2 + $0x15f] sm:$0xff]
    %v5395 = vld [vmem:[#allocation2 + $0x167] sm:$0xff]
    %v5396 = vld [vmem:[#allocation2 + $0x16f] sm:$0xff]
    %v5397 = vld [vmem:[#allocation2 + $0x177] sm:$0xff]
    %v5398 = vld [vmem:[#allocation2 + $0x17f] sm:$0xff]
    %v5399 = vpack.c.bf16 %v5352, %v5351
    %v5400 = vpack.c.bf16 %v5354, %v5353
    %v5401 = vpack.c.bf16 %v5356, %v5355
    %v5402 = vpack.c.bf16 %v5358, %v5357
    %v5403 = vpack.c.bf16 %v5360, %v5359
    %v5404 = vpack.c.bf16 %v5362, %v5361
    %v5405 = vpack.c.bf16 %v5364, %v5363
    %v5406 = vpack.c.bf16 %v5366, %v5365
    %v5407 = vpack.c.bf16 %v5368, %v5367
    %v5408 = vpack.c.bf16 %v5370, %v5369
    %v5409 = vpack.c.bf16 %v5372, %v5371
    %v5410 = vpack.c.bf16 %v5374, %v5373
    %v5411 = vpack.c.bf16 %v5376, %v5375
    %v5412 = vpack.c.bf16 %v5378, %v5377
    %v5413 = vpack.c.bf16 %v5380, %v5379
    %v5414 = vpack.c.bf16 %v5382, %v5381
    %v5415 = vpack.c.bf16 %v5384, %v5383
    %v5416 = vpack.c.bf16 %v5386, %v5385
    %v5417 = vpack.c.bf16 %v5388, %v5387
    %v5418 = vpack.c.bf16 %v5390, %v5389
    %v5419 = vpack.c.bf16 %v5392, %v5391
    %v5420 = vpack.c.bf16 %v5394, %v5393
    %v5421 = vpack.c.bf16 %v5396, %v5395
    %v5422 = vpack.c.bf16 %v5398, %v5397
    %v5423 = vld [vmem:[#allocation6] sm:$0xf]
    %v5424 = vld [vmem:[#allocation6 + $0x4] sm:$0xf]
    %v5425 = vld [vmem:[#allocation6 + $0x8] sm:$0xf]
    %v5426 = vld [vmem:[#allocation6 + $0xc] sm:$0xf]
    %v5427 = vld [vmem:[#allocation2 + $0x8] sm:$0xff]
    %v5428 = vld [vmem:[#allocation2 + $0x10] sm:$0xff]
    %v5429 = vld [vmem:[#allocation2 + $0x18] sm:$0xff]
    %v5430 = vld [vmem:[#allocation2 + $0x20] sm:$0xff]
    %v5431 = vld [vmem:[#allocation2 + $0x28] sm:$0xff]
    %v5432 = vld [vmem:[#allocation2 + $0x30] sm:$0xff]
    %v5433 = vld [vmem:[#allocation2 + $0x38] sm:$0xff]
    %v5434 = vld [vmem:[#allocation2 + $0x40] sm:$0xff]
    %v5435 = vld [vmem:[#allocation2 + $0x48] sm:$0xff]
    %v5436 = vld [vmem:[#allocation2 + $0x50] sm:$0xff]
    %v5437 = vld [vmem:[#allocation2 + $0x58] sm:$0xff]
    %v5438 = vld [vmem:[#allocation2 + $0x60] sm:$0xff]
    %v5439 = vld [vmem:[#allocation2 + $0x68] sm:$0xff]
    %v5440 = vld [vmem:[#allocation2 + $0x70] sm:$0xff]
    %v5441 = vld [vmem:[#allocation2 + $0x78] sm:$0xff]
    %v5442 = vld [vmem:[#allocation2 + $0x80] sm:$0xff]
    %v5443 = vld [vmem:[#allocation2 + $0x88] sm:$0xff]
    %v5444 = vld [vmem:[#allocation2 + $0x90] sm:$0xff]
    %v5445 = vld [vmem:[#allocation2 + $0x98] sm:$0xff]
    %v5446 = vld [vmem:[#allocation2 + $0xa0] sm:$0xff]
    %v5447 = vld [vmem:[#allocation2 + $0xa8] sm:$0xff]
    %v5448 = vld [vmem:[#allocation2 + $0xb0] sm:$0xff]
    %v5449 = vld [vmem:[#allocation2 + $0xb8] sm:$0xff]
    %v5450 = vld [vmem:[#allocation2 + $0xc0] sm:$0xff]
    %v5451 = vld [vmem:[#allocation2 + $0xc8] sm:$0xff]
    %v5452 = vld [vmem:[#allocation2 + $0xd0] sm:$0xff]
    %v5453 = vld [vmem:[#allocation2 + $0xd8] sm:$0xff]
    %v5454 = vld [vmem:[#allocation2 + $0xe0] sm:$0xff]
    %v5455 = vld [vmem:[#allocation2 + $0xe8] sm:$0xff]
    %v5456 = vld [vmem:[#allocation2 + $0xf0] sm:$0xff]
    %v5457 = vld [vmem:[#allocation2 + $0xf8] sm:$0xff]
    %v5458 = vld [vmem:[#allocation2 + $0x100] sm:$0xff]
    %v5459 = vld [vmem:[#allocation2 + $0x108] sm:$0xff]
    %v5460 = vld [vmem:[#allocation2 + $0x110] sm:$0xff]
    %v5461 = vld [vmem:[#allocation2 + $0x118] sm:$0xff]
    %v5462 = vld [vmem:[#allocation2 + $0x120] sm:$0xff]
    %v5463 = vld [vmem:[#allocation2 + $0x128] sm:$0xff]
    %v5464 = vld [vmem:[#allocation2 + $0x130] sm:$0xff]
    %v5465 = vld [vmem:[#allocation2 + $0x138] sm:$0xff]
    %v5466 = vld [vmem:[#allocation2 + $0x140] sm:$0xff]
    %v5467 = vld [vmem:[#allocation2 + $0x148] sm:$0xff]
    %v5468 = vld [vmem:[#allocation2 + $0x150] sm:$0xff]
    %v5469 = vld [vmem:[#allocation2 + $0x158] sm:$0xff]
    %v5470 = vld [vmem:[#allocation2 + $0x160] sm:$0xff]
    %v5471 = vld [vmem:[#allocation2 + $0x168] sm:$0xff]
    %v5472 = vld [vmem:[#allocation2 + $0x170] sm:$0xff]
    %v5473 = vld [vmem:[#allocation2 + $0x178] sm:$0xff]
    %v5474 = vld [vmem:[#allocation2 + $0x180] sm:$0xff]
    %v5475 = vpack.c.bf16 %v5428, %v5427
    %v5476 = vpack.c.bf16 %v5430, %v5429
    %v5477 = vpack.c.bf16 %v5432, %v5431
    %v5478 = vpack.c.bf16 %v5434, %v5433
    %v5479 = vpack.c.bf16 %v5436, %v5435
    %v5480 = vpack.c.bf16 %v5438, %v5437
    %v5481 = vpack.c.bf16 %v5440, %v5439
    %v5482 = vpack.c.bf16 %v5442, %v5441
    %v5483 = vpack.c.bf16 %v5444, %v5443
    %v5484 = vpack.c.bf16 %v5446, %v5445
    %v5485 = vpack.c.bf16 %v5448, %v5447
    %v5486 = vpack.c.bf16 %v5450, %v5449
    %v5487 = vpack.c.bf16 %v5452, %v5451
    %v5488 = vpack.c.bf16 %v5454, %v5453
    %v5489 = vpack.c.bf16 %v5456, %v5455
    %v5490 = vpack.c.bf16 %v5458, %v5457
    %v5491 = vpack.c.bf16 %v5460, %v5459
    %v5492 = vpack.c.bf16 %v5462, %v5461
    %v5493 = vpack.c.bf16 %v5464, %v5463
    %v5494 = vpack.c.bf16 %v5466, %v5465
    %v5495 = vpack.c.bf16 %v5468, %v5467
    %v5496 = vpack.c.bf16 %v5470, %v5469
    %v5497 = vpack.c.bf16 %v5472, %v5471
    %v5498 = vpack.c.bf16 %v5474, %v5473
    %v5499 = vld [vmem:[%s765] sm:$0xf]
    %v5500 = vld [vmem:[%s765 + $0x4] sm:$0xf]
    %v5501 = vld [vmem:[%s765 + $0x8] sm:$0xf]
    %v5502 = vld [vmem:[%s765 + $0xc] sm:$0xf]
    %v5507 = vunpack.c.l.b16 %v5499
    %v5508 = vunpack.c.l.b16 %v5500
    %v5509 = vunpack.c.l.b16 %v5501
    %v5510 = vunpack.c.l.b16 %v5502
    %v5511 = vpack.c.b16 %v5508, %v5507
    %v5512 = vpack.c.b16 %v5510, %v5509
    %v5516 = vsel %vm65, %v5475, 0
    %v5519 = vsel %vm65, %v5476, 0
    %v5522 = vsel %vm65, %v5477, 0
    %v5525 = vsel %vm65, %v5478, 0
    %v5528 = vsel %vm65, %v5479, 0
    %v5531 = vsel %vm65, %v5480, 0
    %v5534 = vsel %vm65, %v5481, 0
    %v5537 = vsel %vm65, %v5482, 0
    %v5540 = vsel %vm65, %v5483, 0
    %v5543 = vsel %vm65, %v5484, 0
    %v5546 = vsel %vm65, %v5485, 0
    %v5549 = vsel %vm65, %v5486, 0
    %v5552 = vsel %vm65, %v5487, 0
    %v5555 = vsel %vm65, %v5488, 0
    %v5558 = vsel %vm65, %v5489, 0
    %v5561 = vsel %vm65, %v5490, 0
    %v5564 = vsel %vm65, %v5491, 0
    %v5567 = vsel %vm65, %v5492, 0
    %v5570 = vsel %vm65, %v5493, 0
    %v5573 = vsel %vm65, %v5494, 0
    %v5576 = vsel %vm65, %v5495, 0
    %v5579 = vsel %vm65, %v5496, 0
    %v5582 = vsel %vm65, %v5497, 0
    %v5585 = vsel %vm65, %v5498, 0
    %5587 = vmatprep.subr.bf16.mxu0 0
    %5588 = vmatpush1.bf16.msra.mxu0 %v5511
    %5589 = vmatprep.subr.bf16.mxu0 0
    %5590 = vmatpush1.bf16.msra.mxu0 %v5512
    %5591 = vmatprep.subr.bf16.mxu0 0
    %5592 = vmatpush1.bf16.msra.mxu0 0
    %5593 = vmatprep.subr.bf16.mxu0 0
    %5594 = vmatpush1.bf16.msra.mxu0 0
    %5595 = vmatprep.subr.bf16.mxu0 0
    %5596 = vmatpush1.bf16.msra.mxu0 0
    %5597 = vmatprep.subr.bf16.mxu0 0
    %5598 = vmatpush1.bf16.msra.mxu0 0
    %5599 = vmatprep.subr.bf16.mxu0 0
    %5600 = vmatpush1.bf16.msra.mxu0 0
    %5601 = vmatprep.subr.bf16.mxu0 0
    %5602 = vmatpush1.bf16.msra.mxu0 0
    %5603 = vmatprep.subr.bf16.mxu0 0
    %5604 = vmatpush1.bf16.msra.mxu0 0
    %5605 = vmatprep.subr.bf16.mxu0 0
    %5606 = vmatpush1.bf16.msra.mxu0 0
    %5607 = vmatprep.subr.bf16.mxu0 0
    %5608 = vmatpush1.bf16.msra.mxu0 0
    %5609 = vmatprep.subr.bf16.mxu0 0
    %5610 = vmatpush1.bf16.msra.mxu0 0
    %5611 = vmatprep.subr.bf16.mxu0 0
    %5612 = vmatpush1.bf16.msra.mxu0 0
    %5613 = vmatprep.subr.bf16.mxu0 0
    %5614 = vmatpush1.bf16.msra.mxu0 0
    %5615 = vmatprep.subr.bf16.mxu0 0
    %5616 = vmatpush1.bf16.msra.mxu0 0
    %5617 = vmatprep.subr.bf16.mxu0 0
    %5618 = vmatpush1.bf16.msra.mxu0 0
    %5619 = vmatprep.mubr.bf16.mxu0 0
    %5620 = vmatmul.mubr.bf16.gmra.mrb[0].mxu0 %v5516
    %v5621 = vpop.f32.mrb[0].mxu0
    %v5622 = vadd.f32 0.0, %v5621
    %v5623 = vpop.f32.mrb[0].mxu0
    %v5624 = vpop.f32.mrb[0].mxu0
    %v5625 = vadd.f32 0.0, %v5624
    %v5626 = vpop.f32.mrb[0].mxu0
    %5627 = vmatprep.mubr.bf16.mxu0 0
    %5628 = vmatmul.mubr.bf16.gmra.mrb[0].mxu0 %v5519
    %v5629 = vpop.f32.mrb[0].mxu0
    %v5630 = vpop.f32.mrb[0].mxu0
    %v5631 = vpop.f32.mrb[0].mxu0
    %v5632 = vadd.f32 0.0, %v5631
    %v5633 = vpop.f32.mrb[0].mxu0
    %5634 = vmatprep.mubr.bf16.mxu0 0
    %5635 = vmatmul.mubr.bf16.gmra.mrb[0].mxu0 %v5522
    %v5636 = vpop.f32.mrb[0].mxu0
    %v5637 = vadd.f32 0.0, %v5636
    %v5638 = vpop.f32.mrb[0].mxu0
    %v5639 = vpop.f32.mrb[0].mxu0
    %v5640 = vpop.f32.mrb[0].mxu0
    %5641 = vmatprep.mubr.bf16.mxu0 0
    %5642 = vmatmul.mubr.bf16.gmra.mrb[0].mxu0 %v5525
    %v5643 = vpop.f32.mrb[0].mxu0
    %v5644 = vadd.f32 0.0, %v5643
    %v5645 = vpop.f32.mrb[0].mxu0
    %v5646 = vpop.f32.mrb[0].mxu0
    %v5647 = vadd.f32 0.0, %v5646
    %v5648 = vpop.f32.mrb[0].mxu0
    %5649 = vmatprep.mubr.bf16.mxu0 0
    %5650 = vmatmul.mubr.bf16.gmra.mrb[0].mxu0 %v5528
    %v5651 = vpop.f32.mrb[0].mxu0
    %v5652 = vpop.f32.mrb[0].mxu0
    %v5653 = vpop.f32.mrb[0].mxu0
    %v5654 = vadd.f32 0.0, %v5653
    %v5655 = vpop.f32.mrb[0].mxu0
    %5656 = vmatprep.mubr.bf16.mxu0 0
    %5657 = vmatmul.mubr.bf16.gmra.mrb[0].mxu0 %v5531
    %v5658 = vpop.f32.mrb[0].mxu0
    %v5659 = vadd.f32 0.0, %v5658
    %v5660 = vpop.f32.mrb[0].mxu0
    %v5661 = vpop.f32.mrb[0].mxu0
    %v5662 = vpop.f32.mrb[0].mxu0
    %5663 = vmatprep.mubr.bf16.mxu0 0
    %5664 = vmatmul.mubr.bf16.gmra.mrb[0].mxu0 %v5534
    %v5665 = vpop.f32.mrb[0].mxu0
    %v5666 = vadd.f32 0.0, %v5665
    %v5667 = vpop.f32.mrb[0].mxu0
    %v5668 = vpop.f32.mrb[0].mxu0
    %v5669 = vadd.f32 0.0, %v5668
    %v5670 = vpop.f32.mrb[0].mxu0
    %5671 = vmatprep.mubr.bf16.mxu0 0
    %5672 = vmatmul.mubr.bf16.gmra.mrb[0].mxu0 %v5537
    %v5673 = vpop.f32.mrb[0].mxu0
    %v5674 = vpop.f32.mrb[0].mxu0
    %v5675 = vpop.f32.mrb[0].mxu0
    %v5676 = vadd.f32 0.0, %v5675
    %v5677 = vpop.f32.mrb[0].mxu0
    %5678 = vmatprep.mubr.bf16.mxu0 0
    %5679 = vmatmul.mubr.bf16.gmra.mrb[0].mxu0 %v5540
    %v5680 = vpop.f32.mrb[0].mxu0
    %v5681 = vadd.f32 0.0, %v5680
    %v5682 = vpop.f32.mrb[0].mxu0
    %v5683 = vpop.f32.mrb[0].mxu0
    %v5684 = vpop.f32.mrb[0].mxu0
    %5685 = vmatprep.mubr.bf16.mxu0 0
    %5686 = vmatmul.mubr.bf16.gmra.mrb[0].mxu0 %v5543
    %v5687 = vpop.f32.mrb[0].mxu0
    %v5688 = vadd.f32 0.0, %v5687
    %v5689 = vpop.f32.mrb[0].mxu0
    %v5690 = vpop.f32.mrb[0].mxu0
    %v5691 = vadd.f32 0.0, %v5690
    %v5692 = vpop.f32.mrb[0].mxu0
    %5693 = vmatprep.mubr.bf16.mxu0 0
    %5694 = vmatmul.mubr.bf16.gmra.mrb[0].mxu0 %v5546
    %v5695 = vpop.f32.mrb[0].mxu0
    %v5696 = vpop.f32.mrb[0].mxu0
    %v5697 = vpop.f32.mrb[0].mxu0
    %v5698 = vadd.f32 0.0, %v5697
    %v5699 = vpop.f32.mrb[0].mxu0
    %5700 = vmatprep.mubr.bf16.mxu0 0
    %5701 = vmatmul.mubr.bf16.gmra.mrb[0].mxu0 %v5549
    %v5702 = vpop.f32.mrb[0].mxu0
    %v5703 = vadd.f32 0.0, %v5702
    %v5704 = vpop.f32.mrb[0].mxu0
    %v5705 = vpop.f32.mrb[0].mxu0
    %v5706 = vpop.f32.mrb[0].mxu0
    %5707 = vmatprep.mubr.bf16.mxu0 0
    %5708 = vmatmul.mubr.bf16.gmra.mrb[0].mxu0 %v5552
    %v5709 = vpop.f32.mrb[0].mxu0
    %v5710 = vadd.f32 0.0, %v5709
    %v5711 = vpop.f32.mrb[0].mxu0
    %v5712 = vpop.f32.mrb[0].mxu0
    %v5713 = vadd.f32 0.0, %v5712
    %v5714 = vpop.f32.mrb[0].mxu0
    %5715 = vmatprep.mubr.bf16.mxu0 0
    %5716 = vmatmul.mubr.bf16.gmra.mrb[0].mxu0 %v5555
    %v5717 = vpop.f32.mrb[0].mxu0
    %v5718 = vpop.f32.mrb[0].mxu0
    %v5719 = vpop.f32.mrb[0].mxu0
    %v5720 = vadd.f32 0.0, %v5719
    %v5721 = vpop.f32.mrb[0].mxu0
    %5722 = vmatprep.mubr.bf16.mxu0 0
    %5723 = vmatmul.mubr.bf16.gmra.mrb[0].mxu0 %v5558
    %v5724 = vpop.f32.mrb[0].mxu0
    %v5725 = vadd.f32 0.0, %v5724
    %v5726 = vpop.f32.mrb[0].mxu0
    %v5727 = vpop.f32.mrb[0].mxu0
    %v5728 = vpop.f32.mrb[0].mxu0
    %5729 = vmatprep.mubr.bf16.mxu0 0
    %5730 = vmatmul.mubr.bf16.gmra.mrb[0].mxu0 %v5561
    %v5731 = vpop.f32.mrb[0].mxu0
    %v5732 = vadd.f32 0.0, %v5731
    %v5733 = vpop.f32.mrb[0].mxu0
    %v5734 = vpop.f32.mrb[0].mxu0
    %v5735 = vadd.f32 0.0, %v5734
    %v5736 = vpop.f32.mrb[0].mxu0
    %5737 = vmatprep.mubr.bf16.mxu0 0
    %5738 = vmatmul.mubr.bf16.gmra.mrb[0].mxu0 %v5564
    %v5739 = vpop.f32.mrb[0].mxu0
    %v5740 = vpop.f32.mrb[0].mxu0
    %v5741 = vpop.f32.mrb[0].mxu0
    %v5742 = vadd.f32 0.0, %v5741
    %v5743 = vpop.f32.mrb[0].mxu0
    %5744 = vmatprep.mubr.bf16.mxu0 0
    %5745 = vmatmul.mubr.bf16.gmra.mrb[0].mxu0 %v5567
    %v5746 = vpop.f32.mrb[0].mxu0
    %v5747 = vadd.f32 0.0, %v5746
    %v5748 = vpop.f32.mrb[0].mxu0
    %v5749 = vpop.f32.mrb[0].mxu0
    %v5750 = vpop.f32.mrb[0].mxu0
    %5751 = vmatprep.mubr.bf16.mxu0 0
    %5752 = vmatmul.mubr.bf16.gmra.mrb[0].mxu0 %v5570
    %v5753 = vpop.f32.mrb[0].mxu0
    %v5754 = vadd.f32 0.0, %v5753
    %v5755 = vpop.f32.mrb[0].mxu0
    %v5756 = vpop.f32.mrb[0].mxu0
    %v5757 = vadd.f32 0.0, %v5756
    %v5758 = vpop.f32.mrb[0].mxu0
    %5759 = vmatprep.mubr.bf16.mxu0 0
    %5760 = vmatmul.mubr.bf16.gmra.mrb[0].mxu0 %v5573
    %v5761 = vpop.f32.mrb[0].mxu0
    %v5762 = vpop.f32.mrb[0].mxu0
    %v5763 = vpop.f32.mrb[0].mxu0
    %v5764 = vadd.f32 0.0, %v5763
    %v5765 = vpop.f32.mrb[0].mxu0
    %5766 = vmatprep.mubr.bf16.mxu0 0
    %5767 = vmatmul.mubr.bf16.gmra.mrb[0].mxu0 %v5576
    %v5768 = vpop.f32.mrb[0].mxu0
    %v5769 = vadd.f32 0.0, %v5768
    %v5770 = vpop.f32.mrb[0].mxu0
    %v5771 = vpop.f32.mrb[0].mxu0
    %v5772 = vpop.f32.mrb[0].mxu0
    %5773 = vmatprep.mubr.bf16.mxu0 0
    %5774 = vmatmul.mubr.bf16.gmra.mrb[0].mxu0 %v5579
    %v5775 = vpop.f32.mrb[0].mxu0
    %v5776 = vadd.f32 0.0, %v5775
    %v5777 = vpop.f32.mrb[0].mxu0
    %v5778 = vpop.f32.mrb[0].mxu0
    %v5779 = vadd.f32 0.0, %v5778
    %v5780 = vpop.f32.mrb[0].mxu0
    %5781 = vmatprep.mubr.bf16.mxu0 0
    %5782 = vmatmul.mubr.bf16.gmra.mrb[0].mxu0 %v5582
    %v5783 = vpop.f32.mrb[0].mxu0
    %v5784 = vpop.f32.mrb[0].mxu0
    %v5785 = vpop.f32.mrb[0].mxu0
    %v5786 = vadd.f32 0.0, %v5785
    %v5787 = vpop.f32.mrb[0].mxu0
    %5788 = vmatprep.mubr.bf16.mxu0 0
    %5789 = vmatmul.mubr.bf16.gmra.mrb[0].mxu0 %v5585
    %v5790 = vpop.f32.mrb[0].mxu0
    %v5791 = vadd.f32 0.0, %v5790
    %v5792 = vpop.f32.mrb[0].mxu0
    %v5793 = vpop.f32.mrb[0].mxu0
    %v5794 = vpop.f32.mrb[0].mxu0
    %5795 = vdwg.mxu0
    %v5800 = vunpack.c.l.b16 %v5423
    %v5801 = vunpack.c.l.b16 %v5424
    %v5802 = vunpack.c.l.b16 %v5425
    %v5803 = vunpack.c.l.b16 %v5426
    %v5804 = vpack.c.b16 %v5801, %v5800
    %v5805 = vpack.c.b16 %v5803, %v5802
    %v5809 = vsel %vm65, %v5399, 0
    %v5812 = vsel %vm65, %v5400, 0
    %v5815 = vsel %vm65, %v5401, 0
    %v5818 = vsel %vm65, %v5402, 0
    %v5821 = vsel %vm65, %v5403, 0
    %v5824 = vsel %vm65, %v5404, 0
    %v5827 = vsel %vm65, %v5405, 0
    %v5830 = vsel %vm65, %v5406, 0
    %v5833 = vsel %vm65, %v5407, 0
    %v5836 = vsel %vm65, %v5408, 0
    %v5839 = vsel %vm65, %v5409, 0
    %v5842 = vsel %vm65, %v5410, 0
    %v5845 = vsel %vm65, %v5411, 0
    %v5848 = vsel %vm65, %v5412, 0
    %v5851 = vsel %vm65, %v5413, 0
    %v5854 = vsel %vm65, %v5414, 0
    %v5857 = vsel %vm65, %v5415, 0
    %v5860 = vsel %vm65, %v5416, 0
    %v5863 = vsel %vm65, %v5417, 0
    %v5866 = vsel %vm65, %v5418, 0
    %v5869 = vsel %vm65, %v5419, 0
    %v5872 = vsel %vm65, %v5420, 0
    %v5875 = vsel %vm65, %v5421, 0
    %v5878 = vsel %vm65, %v5422, 0
    %5880 = vmatprep.subr.bf16.mxu0 0
    %5881 = vmatpush1.bf16.msra.mxu0 %v5804
    %5882 = vmatprep.subr.bf16.mxu0 0
    %5883 = vmatpush1.bf16.msra.mxu0 %v5805
    %5884 = vmatprep.subr.bf16.mxu0 0
    %5885 = vmatpush1.bf16.msra.mxu0 0
    %5886 = vmatprep.subr.bf16.mxu0 0
    %5887 = vmatpush1.bf16.msra.mxu0 0
    %5888 = vmatprep.subr.bf16.mxu0 0
    %5889 = vmatpush1.bf16.msra.mxu0 0
    %5890 = vmatprep.subr.bf16.mxu0 0
    %5891 = vmatpush1.bf16.msra.mxu0 0
    %5892 = vmatprep.subr.bf16.mxu0 0
    %5893 = vmatpush1.bf16.msra.mxu0 0
    %5894 = vmatprep.subr.bf16.mxu0 0
    %5895 = vmatpush1.bf16.msra.mxu0 0
    %5896 = vmatprep.subr.bf16.mxu0 0
    %5897 = vmatpush1.bf16.msra.mxu0 0
    %5898 = vmatprep.subr.bf16.mxu0 0
    %5899 = vmatpush1.bf16.msra.mxu0 0
    %5900 = vmatprep.subr.bf16.mxu0 0
    %5901 = vmatpush1.bf16.msra.mxu0 0
    %5902 = vmatprep.subr.bf16.mxu0 0
    %5903 = vmatpush1.bf16.msra.mxu0 0
    %5904 = vmatprep.subr.bf16.mxu0 0
    %5905 = vmatpush1.bf16.msra.mxu0 0
    %5906 = vmatprep.subr.bf16.mxu0 0
    %5907 = vmatpush1.bf16.msra.mxu0 0
    %5908 = vmatprep.subr.bf16.mxu0 0
    %5909 = vmatpush1.bf16.msra.mxu0 0
    %5910 = vmatprep.subr.bf16.mxu0 0
    %5911 = vmatpush1.bf16.msra.mxu0 0
    %5912 = vmatprep.mubr.bf16.mxu0 0
    %5913 = vmatmul.mubr.bf16.gmra.mrb[0].mxu0 %v5809
    %v5914 = vpop.f32.mrb[0].mxu0
    %v5915 = vadd.f32 %v5622, %v5914
    %v5916 = vpop.f32.mrb[0].mxu0
    %v5917 = vpop.f32.mrb[0].mxu0
    %v5918 = vadd.f32 %v5625, %v5917
    %v5919 = vpop.f32.mrb[0].mxu0
    %5920 = vmatprep.mubr.bf16.mxu0 0
    %5921 = vmatmul.mubr.bf16.gmra.mrb[0].mxu0 %v5812
    %v5922 = vpop.f32.mrb[0].mxu0
    %v5923 = vpop.f32.mrb[0].mxu0
    %v5924 = vpop.f32.mrb[0].mxu0
    %v5925 = vadd.f32 %v5632, %v5924
    %v5926 = vpop.f32.mrb[0].mxu0
    %5927 = vmatprep.mubr.bf16.mxu0 0
    %5928 = vmatmul.mubr.bf16.gmra.mrb[0].mxu0 %v5815
    %v5929 = vpop.f32.mrb[0].mxu0
    %v5930 = vadd.f32 %v5637, %v5929
    %v5931 = vpop.f32.mrb[0].mxu0
    %v5932 = vpop.f32.mrb[0].mxu0
    %v5933 = vpop.f32.mrb[0].mxu0
    %5934 = vmatprep.mubr.bf16.mxu0 0
    %5935 = vmatmul.mubr.bf16.gmra.mrb[0].mxu0 %v5818
    %v5936 = vpop.f32.mrb[0].mxu0
    %v5937 = vadd.f32 %v5644, %v5936
    %v5938 = vpop.f32.mrb[0].mxu0
    %v5939 = vpop.f32.mrb[0].mxu0
    %v5940 = vadd.f32 %v5647, %v5939
    %v5941 = vpop.f32.mrb[0].mxu0
    %5942 = vmatprep.mubr.bf16.mxu0 0
    %5943 = vmatmul.mubr.bf16.gmra.mrb[0].mxu0 %v5821
    %v5944 = vpop.f32.mrb[0].mxu0
    %v5945 = vpop.f32.mrb[0].mxu0
    %v5946 = vpop.f32.mrb[0].mxu0
    %v5947 = vadd.f32 %v5654, %v5946
    %v5948 = vpop.f32.mrb[0].mxu0
    %5949 = vmatprep.mubr.bf16.mxu0 0
    %5950 = vmatmul.mubr.bf16.gmra.mrb[0].mxu0 %v5824
    %v5951 = vpop.f32.mrb[0].mxu0
    %v5952 = vadd.f32 %v5659, %v5951
    %v5953 = vpop.f32.mrb[0].mxu0
    %v5954 = vpop.f32.mrb[0].mxu0
    %v5955 = vpop.f32.mrb[0].mxu0
    %5956 = vmatprep.mubr.bf16.mxu0 0
    %5957 = vmatmul.mubr.bf16.gmra.mrb[0].mxu0 %v5827
    %v5958 = vpop.f32.mrb[0].mxu0
    %v5959 = vadd.f32 %v5666, %v5958
    %v5960 = vpop.f32.mrb[0].mxu0
    %v5961 = vpop.f32.mrb[0].mxu0
    %v5962 = vadd.f32 %v5669, %v5961
    %v5963 = vpop.f32.mrb[0].mxu0
    %5964 = vmatprep.mubr.bf16.mxu0 0
    %5965 = vmatmul.mubr.bf16.gmra.mrb[0].mxu0 %v5830
    %v5966 = vpop.f32.mrb[0].mxu0
    %v5967 = vpop.f32.mrb[0].mxu0
    %v5968 = vpop.f32.mrb[0].mxu0
    %v5969 = vadd.f32 %v5676, %v5968
    %v5970 = vpop.f32.mrb[0].mxu0
    %5971 = vmatprep.mubr.bf16.mxu0 0
    %5972 = vmatmul.mubr.bf16.gmra.mrb[0].mxu0 %v5833
    %v5973 = vpop.f32.mrb[0].mxu0
    %v5974 = vadd.f32 %v5681, %v5973
    %v5975 = vpop.f32.mrb[0].mxu0
    %v5976 = vpop.f32.mrb[0].mxu0
    %v5977 = vpop.f32.mrb[0].mxu0
    %5978 = vmatprep.mubr.bf16.mxu0 0
    %5979 = vmatmul.mubr.bf16.gmra.mrb[0].mxu0 %v5836
    %v5980 = vpop.f32.mrb[0].mxu0
    %v5981 = vadd.f32 %v5688, %v5980
    %v5982 = vpop.f32.mrb[0].mxu0
    %v5983 = vpop.f32.mrb[0].mxu0
    %v5984 = vadd.f32 %v5691, %v5983
    %v5985 = vpop.f32.mrb[0].mxu0
    %5986 = vmatprep.mubr.bf16.mxu0 0
    %5987 = vmatmul.mubr.bf16.gmra.mrb[0].mxu0 %v5839
    %v5988 = vpop.f32.mrb[0].mxu0
    %v5989 = vpop.f32.mrb[0].mxu0
    %v5990 = vpop.f32.mrb[0].mxu0
    %v5991 = vadd.f32 %v5698, %v5990
    %v5992 = vpop.f32.mrb[0].mxu0
    %5993 = vmatprep.mubr.bf16.mxu0 0
    %5994 = vmatmul.mubr.bf16.gmra.mrb[0].mxu0 %v5842
    %v5995 = vpop.f32.mrb[0].mxu0
    %v5996 = vadd.f32 %v5703, %v5995
    %v5997 = vpop.f32.mrb[0].mxu0
    %v5998 = vpop.f32.mrb[0].mxu0
    %v5999 = vpop.f32.mrb[0].mxu0
    %6000 = vmatprep.mubr.bf16.mxu0 0
    %6001 = vmatmul.mubr.bf16.gmra.mrb[0].mxu0 %v5845
    %v6002 = vpop.f32.mrb[0].mxu0
    %v6003 = vadd.f32 %v5710, %v6002
    %v6004 = vpop.f32.mrb[0].mxu0
    %v6005 = vpop.f32.mrb[0].mxu0
    %v6006 = vadd.f32 %v5713, %v6005
    %v6007 = vpop.f32.mrb[0].mxu0
    %6008 = vmatprep.mubr.bf16.mxu0 0
    %6009 = vmatmul.mubr.bf16.gmra.mrb[0].mxu0 %v5848
    %v6010 = vpop.f32.mrb[0].mxu0
    %v6011 = vpop.f32.mrb[0].mxu0
    %v6012 = vpop.f32.mrb[0].mxu0
    %v6013 = vadd.f32 %v5720, %v6012
    %v6014 = vpop.f32.mrb[0].mxu0
    %6015 = vmatprep.mubr.bf16.mxu0 0
    %6016 = vmatmul.mubr.bf16.gmra.mrb[0].mxu0 %v5851
    %v6017 = vpop.f32.mrb[0].mxu0
    %v6018 = vadd.f32 %v5725, %v6017
    %v6019 = vpop.f32.mrb[0].mxu0
    %v6020 = vpop.f32.mrb[0].mxu0
    %v6021 = vpop.f32.mrb[0].mxu0
    %6022 = vmatprep.mubr.bf16.mxu0 0
    %6023 = vmatmul.mubr.bf16.gmra.mrb[0].mxu0 %v5854
    %v6024 = vpop.f32.mrb[0].mxu0
    %v6025 = vadd.f32 %v5732, %v6024
    %v6026 = vpop.f32.mrb[0].mxu0
    %v6027 = vpop.f32.mrb[0].mxu0
    %v6028 = vadd.f32 %v5735, %v6027
    %v6029 = vpop.f32.mrb[0].mxu0
    %6030 = vmatprep.mubr.bf16.mxu0 0
    %6031 = vmatmul.mubr.bf16.gmra.mrb[0].mxu0 %v5857
    %v6032 = vpop.f32.mrb[0].mxu0
    %v6033 = vpop.f32.mrb[0].mxu0
    %v6034 = vpop.f32.mrb[0].mxu0
    %v6035 = vadd.f32 %v5742, %v6034
    %v6036 = vpop.f32.mrb[0].mxu0
    %6037 = vmatprep.mubr.bf16.mxu0 0
    %6038 = vmatmul.mubr.bf16.gmra.mrb[0].mxu0 %v5860
    %v6039 = vpop.f32.mrb[0].mxu0
    %v6040 = vadd.f32 %v5747, %v6039
    %v6041 = vpop.f32.mrb[0].mxu0
    %v6042 = vpop.f32.mrb[0].mxu0
    %v6043 = vpop.f32.mrb[0].mxu0
    %6044 = vmatprep.mubr.bf16.mxu0 0
    %6045 = vmatmul.mubr.bf16.gmra.mrb[0].mxu0 %v5863
    %v6046 = vpop.f32.mrb[0].mxu0
    %v6047 = vadd.f32 %v5754, %v6046
    %v6048 = vpop.f32.mrb[0].mxu0
    %v6049 = vpop.f32.mrb[0].mxu0
    %v6050 = vadd.f32 %v5757, %v6049
    %v6051 = vpop.f32.mrb[0].mxu0
    %6052 = vmatprep.mubr.bf16.mxu0 0
    %6053 = vmatmul.mubr.bf16.gmra.mrb[0].mxu0 %v5866
    %v6054 = vpop.f32.mrb[0].mxu0
    %v6055 = vpop.f32.mrb[0].mxu0
    %v6056 = vpop.f32.mrb[0].mxu0
    %v6057 = vadd.f32 %v5764, %v6056
    %v6058 = vpop.f32.mrb[0].mxu0
    %6059 = vmatprep.mubr.bf16.mxu0 0
    %6060 = vmatmul.mubr.bf16.gmra.mrb[0].mxu0 %v5869
    %v6061 = vpop.f32.mrb[0].mxu0
    %v6062 = vadd.f32 %v5769, %v6061
    %v6063 = vpop.f32.mrb[0].mxu0
    %v6064 = vpop.f32.mrb[0].mxu0
    %v6065 = vpop.f32.mrb[0].mxu0
    %6066 = vmatprep.mubr.bf16.mxu0 0
    %6067 = vmatmul.mubr.bf16.gmra.mrb[0].mxu0 %v5872
    %v6068 = vpop.f32.mrb[0].mxu0
    %v6069 = vadd.f32 %v5776, %v6068
    %v6070 = vpop.f32.mrb[0].mxu0
    %v6071 = vpop.f32.mrb[0].mxu0
    %v6072 = vadd.f32 %v5779, %v6071
    %v6073 = vpop.f32.mrb[0].mxu0
    %6074 = vmatprep.mubr.bf16.mxu0 0
    %6075 = vmatmul.mubr.bf16.gmra.mrb[0].mxu0 %v5875
    %v6076 = vpop.f32.mrb[0].mxu0
    %v6077 = vpop.f32.mrb[0].mxu0
    %v6078 = vpop.f32.mrb[0].mxu0
    %v6079 = vadd.f32 %v5786, %v6078
    %v6080 = vpop.f32.mrb[0].mxu0
    %6081 = vmatprep.mubr.bf16.mxu0 0
    %6082 = vmatmul.mubr.bf16.gmra.mrb[0].mxu0 %v5878
    %v6083 = vpop.f32.mrb[0].mxu0
    %v6084 = vadd.f32 %v5791, %v6083
    %v6085 = vpop.f32.mrb[0].mxu0
    %v6086 = vpop.f32.mrb[0].mxu0
    %v6087 = vpop.f32.mrb[0].mxu0
    %6088 = vdwg.mxu0
    %v6089 = vld [vmem:[#allocation2 + $0x9] sm:$0xff]
    %v6090 = vld [vmem:[#allocation2 + $0x11] sm:$0xff]
    %v6091 = vld [vmem:[#allocation2 + $0x19] sm:$0xff]
    %v6092 = vld [vmem:[#allocation2 + $0x21] sm:$0xff]
    %v6093 = vld [vmem:[#allocation2 + $0x29] sm:$0xff]
    %v6094 = vld [vmem:[#allocation2 + $0x31] sm:$0xff]
    %v6095 = vld [vmem:[#allocation2 + $0x39] sm:$0xff]
    %v6096 = vld [vmem:[#allocation2 + $0x41] sm:$0xff]
    %v6097 = vld [vmem:[#allocation2 + $0x49] sm:$0xff]
    %v6098 = vld [vmem:[#allocation2 + $0x51] sm:$0xff]
    %v6099 = vld [vmem:[#allocation2 + $0x59] sm:$0xff]
    %v6100 = vld [vmem:[#allocation2 + $0x61] sm:$0xff]
    %v6101 = vld [vmem:[#allocation2 + $0x69] sm:$0xff]
    %v6102 = vld [vmem:[#allocation2 + $0x71] sm:$0xff]
    %v6103 = vld [vmem:[#allocation2 + $0x79] sm:$0xff]
    %v6104 = vld [vmem:[#allocation2 + $0x81] sm:$0xff]
    %v6105 = vld [vmem:[#allocation2 + $0x89] sm:$0xff]
    %v6106 = vld [vmem:[#allocation2 + $0x91] sm:$0xff]
    %v6107 = vld [vmem:[#allocation2 + $0x99] sm:$0xff]
    %v6108 = vld [vmem:[#allocation2 + $0xa1] sm:$0xff]
    %v6109 = vld [vmem:[#allocation2 + $0xa9] sm:$0xff]
    %v6110 = vld [vmem:[#allocation2 + $0xb1] sm:$0xff]
    %v6111 = vld [vmem:[#allocation2 + $0xb9] sm:$0xff]
    %v6112 = vld [vmem:[#allocation2 + $0xc1] sm:$0xff]
    %v6113 = vld [vmem:[#allocation2 + $0xc9] sm:$0xff]
    %v6114 = vld [vmem:[#allocation2 + $0xd1] sm:$0xff]
    %v6115 = vld [vmem:[#allocation2 + $0xd9] sm:$0xff]
    %v6116 = vld [vmem:[#allocation2 + $0xe1] sm:$0xff]
    %v6117 = vld [vmem:[#allocation2 + $0xe9] sm:$0xff]
    %v6118 = vld [vmem:[#allocation2 + $0xf1] sm:$0xff]
    %v6119 = vld [vmem:[#allocation2 + $0xf9] sm:$0xff]
    %v6120 = vld [vmem:[#allocation2 + $0x101] sm:$0xff]
    %v6121 = vld [vmem:[#allocation2 + $0x109] sm:$0xff]
    %v6122 = vld [vmem:[#allocation2 + $0x111] sm:$0xff]
    %v6123 = vld [vmem:[#allocation2 + $0x119] sm:$0xff]
    %v6124 = vld [vmem:[#allocation2 + $0x121] sm:$0xff]
    %v6125 = vld [vmem:[#allocation2 + $0x129] sm:$0xff]
    %v6126 = vld [vmem:[#allocation2 + $0x131] sm:$0xff]
    %v6127 = vld [vmem:[#allocation2 + $0x139] sm:$0xff]
    %v6128 = vld [vmem:[#allocation2 + $0x141] sm:$0xff]
    %v6129 = vld [vmem:[#allocation2 + $0x149] sm:$0xff]
    %v6130 = vld [vmem:[#allocation2 + $0x151] sm:$0xff]
    %v6131 = vld [vmem:[#allocation2 + $0x159] sm:$0xff]
    %v6132 = vld [vmem:[#allocation2 + $0x161] sm:$0xff]
    %v6133 = vld [vmem:[#allocation2 + $0x169] sm:$0xff]
    %v6134 = vld [vmem:[#allocation2 + $0x171] sm:$0xff]
    %v6135 = vld [vmem:[#allocation2 + $0x179] sm:$0xff]
    %v6136 = vld [vmem:[#allocation2 + $0x181] sm:$0xff]
    %v6137 = vpack.c.bf16 %v6090, %v6089
    %v6138 = vpack.c.bf16 %v6092, %v6091
    %v6139 = vpack.c.bf16 %v6094, %v6093
    %v6140 = vpack.c.bf16 %v6096, %v6095
    %v6141 = vpack.c.bf16 %v6098, %v6097
    %v6142 = vpack.c.bf16 %v6100, %v6099
    %v6143 = vpack.c.bf16 %v6102, %v6101
    %v6144 = vpack.c.bf16 %v6104, %v6103
    %v6145 = vpack.c.bf16 %v6106, %v6105
    %v6146 = vpack.c.bf16 %v6108, %v6107
    %v6147 = vpack.c.bf16 %v6110, %v6109
    %v6148 = vpack.c.bf16 %v6112, %v6111
    %v6149 = vpack.c.bf16 %v6114, %v6113
    %v6150 = vpack.c.bf16 %v6116, %v6115
    %v6151 = vpack.c.bf16 %v6118, %v6117
    %v6152 = vpack.c.bf16 %v6120, %v6119
    %v6153 = vpack.c.bf16 %v6122, %v6121
    %v6154 = vpack.c.bf16 %v6124, %v6123
    %v6155 = vpack.c.bf16 %v6126, %v6125
    %v6156 = vpack.c.bf16 %v6128, %v6127
    %v6157 = vpack.c.bf16 %v6130, %v6129
    %v6158 = vpack.c.bf16 %v6132, %v6131
    %v6159 = vpack.c.bf16 %v6134, %v6133
    %v6160 = vpack.c.bf16 %v6136, %v6135
    %v6161 = vld [vmem:[%s1428] sm:$0xf]
    %v6162 = vld [vmem:[%s1428 + $0x4] sm:$0xf]
    %v6163 = vld [vmem:[%s1428 + $0x8] sm:$0xf]
    %v6164 = vld [vmem:[%s1428 + $0xc] sm:$0xf]
    %v6169 = vunpack.c.l.b16 %v6161
    %v6170 = vunpack.c.l.b16 %v6162
    %v6171 = vunpack.c.l.b16 %v6163
    %v6172 = vunpack.c.l.b16 %v6164
    %v6173 = vpack.c.b16 %v6170, %v6169
    %v6174 = vpack.c.b16 %v6172, %v6171
    %v6178 = vsel %vm65, %v6137, 0
    %v6181 = vsel %vm65, %v6138, 0
    %v6184 = vsel %vm65, %v6139, 0
    %v6187 = vsel %vm65, %v6140, 0
    %v6190 = vsel %vm65, %v6141, 0
    %v6193 = vsel %vm65, %v6142, 0
    %v6196 = vsel %vm65, %v6143, 0
    %v6199 = vsel %vm65, %v6144, 0
    %v6202 = vsel %vm65, %v6145, 0
    %v6205 = vsel %vm65, %v6146, 0
    %v6208 = vsel %vm65, %v6147, 0
    %v6211 = vsel %vm65, %v6148, 0
    %v6214 = vsel %vm65, %v6149, 0
    %v6217 = vsel %vm65, %v6150, 0
    %v6220 = vsel %vm65, %v6151, 0
    %v6223 = vsel %vm65, %v6152, 0
    %v6226 = vsel %vm65, %v6153, 0
    %v6229 = vsel %vm65, %v6154, 0
    %v6232 = vsel %vm65, %v6155, 0
    %v6235 = vsel %vm65, %v6156, 0
    %v6238 = vsel %vm65, %v6157, 0
    %v6241 = vsel %vm65, %v6158, 0
    %v6244 = vsel %vm65, %v6159, 0
    %v6247 = vsel %vm65, %v6160, 0
    %6249 = vmatprep.subr.bf16.mxu0 0
    %6250 = vmatpush1.bf16.msra.mxu0 %v6173
    %6251 = vmatprep.subr.bf16.mxu0 0
    %6252 = vmatpush1.bf16.msra.mxu0 %v6174
    %6253 = vmatprep.subr.bf16.mxu0 0
    %6254 = vmatpush1.bf16.msra.mxu0 0
    %6255 = vmatprep.subr.bf16.mxu0 0
    %6256 = vmatpush1.bf16.msra.mxu0 0
    %6257 = vmatprep.subr.bf16.mxu0 0
    %6258 = vmatpush1.bf16.msra.mxu0 0
    %6259 = vmatprep.subr.bf16.mxu0 0
    %6260 = vmatpush1.bf16.msra.mxu0 0
    %6261 = vmatprep.subr.bf16.mxu0 0
    %6262 = vmatpush1.bf16.msra.mxu0 0
    %6263 = vmatprep.subr.bf16.mxu0 0
    %6264 = vmatpush1.bf16.msra.mxu0 0
    %6265 = vmatprep.subr.bf16.mxu0 0
    %6266 = vmatpush1.bf16.msra.mxu0 0
    %6267 = vmatprep.subr.bf16.mxu0 0
    %6268 = vmatpush1.bf16.msra.mxu0 0
    %6269 = vmatprep.subr.bf16.mxu0 0
    %6270 = vmatpush1.bf16.msra.mxu0 0
    %6271 = vmatprep.subr.bf16.mxu0 0
    %6272 = vmatpush1.bf16.msra.mxu0 0
    %6273 = vmatprep.subr.bf16.mxu0 0
    %6274 = vmatpush1.bf16.msra.mxu0 0
    %6275 = vmatprep.subr.bf16.mxu0 0
    %6276 = vmatpush1.bf16.msra.mxu0 0
    %6277 = vmatprep.subr.bf16.mxu0 0
    %6278 = vmatpush1.bf16.msra.mxu0 0
    %6279 = vmatprep.subr.bf16.mxu0 0
    %6280 = vmatpush1.bf16.msra.mxu0 0
    %6281 = vmatprep.mubr.bf16.mxu0 0
    %6282 = vmatmul.mubr.bf16.gmra.mrb[0].mxu0 %v6178
    %v6283 = vpop.f32.mrb[0].mxu0
    %v6284 = vadd.f32 0.0, %v6283
    %v6285 = vpop.f32.mrb[0].mxu0
    %v6286 = vpop.f32.mrb[0].mxu0
    %v6287 = vadd.f32 0.0, %v6286
    %v6288 = vpop.f32.mrb[0].mxu0
    %6289 = vmatprep.mubr.bf16.mxu0 0
    %6290 = vmatmul.mubr.bf16.gmra.mrb[0].mxu0 %v6181
    %v6291 = vpop.f32.mrb[0].mxu0
    %v6292 = vpop.f32.mrb[0].mxu0
    %v6293 = vpop.f32.mrb[0].mxu0
    %v6294 = vadd.f32 0.0, %v6293
    %v6295 = vpop.f32.mrb[0].mxu0
    %6296 = vmatprep.mubr.bf16.mxu0 0
    %6297 = vmatmul.mubr.bf16.gmra.mrb[0].mxu0 %v6184
    %v6298 = vpop.f32.mrb[0].mxu0
    %v6299 = vadd.f32 0.0, %v6298
    %v6300 = vpop.f32.mrb[0].mxu0
    %v6301 = vpop.f32.mrb[0].mxu0
    %v6302 = vpop.f32.mrb[0].mxu0
    %6303 = vmatprep.mubr.bf16.mxu0 0
    %6304 = vmatmul.mubr.bf16.gmra.mrb[0].mxu0 %v6187
    %v6305 = vpop.f32.mrb[0].mxu0
    %v6306 = vadd.f32 0.0, %v6305
    %v6307 = vpop.f32.mrb[0].mxu0
    %v6308 = vpop.f32.mrb[0].mxu0
    %v6309 = vadd.f32 0.0, %v6308
    %v6310 = vpop.f32.mrb[0].mxu0
    %6311 = vmatprep.mubr.bf16.mxu0 0
    %6312 = vmatmul.mubr.bf16.gmra.mrb[0].mxu0 %v6190
    %v6313 = vpop.f32.mrb[0].mxu0
    %v6314 = vpop.f32.mrb[0].mxu0
    %v6315 = vpop.f32.mrb[0].mxu0
    %v6316 = vadd.f32 0.0, %v6315
    %v6317 = vpop.f32.mrb[0].mxu0
    %6318 = vmatprep.mubr.bf16.mxu0 0
    %6319 = vmatmul.mubr.bf16.gmra.mrb[0].mxu0 %v6193
    %v6320 = vpop.f32.mrb[0].mxu0
    %v6321 = vadd.f32 0.0, %v6320
    %v6322 = vpop.f32.mrb[0].mxu0
    %v6323 = vpop.f32.mrb[0].mxu0
    %v6324 = vpop.f32.mrb[0].mxu0
    %6325 = vmatprep.mubr.bf16.mxu0 0
    %6326 = vmatmul.mubr.bf16.gmra.mrb[0].mxu0 %v6196
    %v6327 = vpop.f32.mrb[0].mxu0
    %v6328 = vadd.f32 0.0, %v6327
    %v6329 = vpop.f32.mrb[0].mxu0
    %v6330 = vpop.f32.mrb[0].mxu0
    %v6331 = vadd.f32 0.0, %v6330
    %v6332 = vpop.f32.mrb[0].mxu0
    %6333 = vmatprep.mubr.bf16.mxu0 0
    %6334 = vmatmul.mubr.bf16.gmra.mrb[0].mxu0 %v6199
    %v6335 = vpop.f32.mrb[0].mxu0
    %v6336 = vpop.f32.mrb[0].mxu0
    %v6337 = vpop.f32.mrb[0].mxu0
    %v6338 = vadd.f32 0.0, %v6337
    %v6339 = vpop.f32.mrb[0].mxu0
    %6340 = vmatprep.mubr.bf16.mxu0 0
    %6341 = vmatmul.mubr.bf16.gmra.mrb[0].mxu0 %v6202
    %v6342 = vpop.f32.mrb[0].mxu0
    %v6343 = vadd.f32 0.0, %v6342
    %v6344 = vpop.f32.mrb[0].mxu0
    %v6345 = vpop.f32.mrb[0].mxu0
    %v6346 = vpop.f32.mrb[0].mxu0
    %6347 = vmatprep.mubr.bf16.mxu0 0
    %6348 = vmatmul.mubr.bf16.gmra.mrb[0].mxu0 %v6205
    %v6349 = vpop.f32.mrb[0].mxu0
    %v6350 = vadd.f32 0.0, %v6349
    %v6351 = vpop.f32.mrb[0].mxu0
    %v6352 = vpop.f32.mrb[0].mxu0
    %v6353 = vadd.f32 0.0, %v6352
    %v6354 = vpop.f32.mrb[0].mxu0
    %6355 = vmatprep.mubr.bf16.mxu0 0
    %6356 = vmatmul.mubr.bf16.gmra.mrb[0].mxu0 %v6208
    %v6357 = vpop.f32.mrb[0].mxu0
    %v6358 = vpop.f32.mrb[0].mxu0
    %v6359 = vpop.f32.mrb[0].mxu0
    %v6360 = vadd.f32 0.0, %v6359
    %v6361 = vpop.f32.mrb[0].mxu0
    %6362 = vmatprep.mubr.bf16.mxu0 0
    %6363 = vmatmul.mubr.bf16.gmra.mrb[0].mxu0 %v6211
    %v6364 = vpop.f32.mrb[0].mxu0
    %v6365 = vadd.f32 0.0, %v6364
    %v6366 = vpop.f32.mrb[0].mxu0
    %v6367 = vpop.f32.mrb[0].mxu0
    %v6368 = vpop.f32.mrb[0].mxu0
    %6369 = vmatprep.mubr.bf16.mxu0 0
    %6370 = vmatmul.mubr.bf16.gmra.mrb[0].mxu0 %v6214
    %v6371 = vpop.f32.mrb[0].mxu0
    %v6372 = vadd.f32 0.0, %v6371
    %v6373 = vpop.f32.mrb[0].mxu0
    %v6374 = vpop.f32.mrb[0].mxu0
    %v6375 = vadd.f32 0.0, %v6374
    %v6376 = vpop.f32.mrb[0].mxu0
    %6377 = vmatprep.mubr.bf16.mxu0 0
    %6378 = vmatmul.mubr.bf16.gmra.mrb[0].mxu0 %v6217
    %v6379 = vpop.f32.mrb[0].mxu0
    %v6380 = vpop.f32.mrb[0].mxu0
    %v6381 = vpop.f32.mrb[0].mxu0
    %v6382 = vadd.f32 0.0, %v6381
    %v6383 = vpop.f32.mrb[0].mxu0
    %6384 = vmatprep.mubr.bf16.mxu0 0
    %6385 = vmatmul.mubr.bf16.gmra.mrb[0].mxu0 %v6220
    %v6386 = vpop.f32.mrb[0].mxu0
    %v6387 = vadd.f32 0.0, %v6386
    %v6388 = vpop.f32.mrb[0].mxu0
    %v6389 = vpop.f32.mrb[0].mxu0
    %v6390 = vpop.f32.mrb[0].mxu0
    %6391 = vmatprep.mubr.bf16.mxu0 0
    %6392 = vmatmul.mubr.bf16.gmra.mrb[0].mxu0 %v6223
    %v6393 = vpop.f32.mrb[0].mxu0
    %v6394 = vadd.f32 0.0, %v6393
    %v6395 = vpop.f32.mrb[0].mxu0
    %v6396 = vpop.f32.mrb[0].mxu0
    %v6397 = vadd.f32 0.0, %v6396
    %v6398 = vpop.f32.mrb[0].mxu0
    %6399 = vmatprep.mubr.bf16.mxu0 0
    %6400 = vmatmul.mubr.bf16.gmra.mrb[0].mxu0 %v6226
    %v6401 = vpop.f32.mrb[0].mxu0
    %v6402 = vpop.f32.mrb[0].mxu0
    %v6403 = vpop.f32.mrb[0].mxu0
    %v6404 = vadd.f32 0.0, %v6403
    %v6405 = vpop.f32.mrb[0].mxu0
    %6406 = vmatprep.mubr.bf16.mxu0 0
    %6407 = vmatmul.mubr.bf16.gmra.mrb[0].mxu0 %v6229
    %v6408 = vpop.f32.mrb[0].mxu0
    %v6409 = vadd.f32 0.0, %v6408
    %v6410 = vpop.f32.mrb[0].mxu0
    %v6411 = vpop.f32.mrb[0].mxu0
    %v6412 = vpop.f32.mrb[0].mxu0
    %6413 = vmatprep.mubr.bf16.mxu0 0
    %6414 = vmatmul.mubr.bf16.gmra.mrb[0].mxu0 %v6232
    %v6415 = vpop.f32.mrb[0].mxu0
    %v6416 = vadd.f32 0.0, %v6415
    %v6417 = vpop.f32.mrb[0].mxu0
    %v6418 = vpop.f32.mrb[0].mxu0
    %v6419 = vadd.f32 0.0, %v6418
    %v6420 = vpop.f32.mrb[0].mxu0
    %6421 = vmatprep.mubr.bf16.mxu0 0
    %6422 = vmatmul.mubr.bf16.gmra.mrb[0].mxu0 %v6235
    %v6423 = vpop.f32.mrb[0].mxu0
    %v6424 = vpop.f32.mrb[0].mxu0
    %v6425 = vpop.f32.mrb[0].mxu0
    %v6426 = vadd.f32 0.0, %v6425
    %v6427 = vpop.f32.mrb[0].mxu0
    %6428 = vmatprep.mubr.bf16.mxu0 0
    %6429 = vmatmul.mubr.bf16.gmra.mrb[0].mxu0 %v6238
    %v6430 = vpop.f32.mrb[0].mxu0
    %v6431 = vadd.f32 0.0, %v6430
    %v6432 = vpop.f32.mrb[0].mxu0
    %v6433 = vpop.f32.mrb[0].mxu0
    %v6434 = vpop.f32.mrb[0].mxu0
    %6435 = vmatprep.mubr.bf16.mxu0 0
    %6436 = vmatmul.mubr.bf16.gmra.mrb[0].mxu0 %v6241
    %v6437 = vpop.f32.mrb[0].mxu0
    %v6438 = vadd.f32 0.0, %v6437
    %v6439 = vpop.f32.mrb[0].mxu0
    %v6440 = vpop.f32.mrb[0].mxu0
    %v6441 = vadd.f32 0.0, %v6440
    %v6442 = vpop.f32.mrb[0].mxu0
    %6443 = vmatprep.mubr.bf16.mxu0 0
    %6444 = vmatmul.mubr.bf16.gmra.mrb[0].mxu0 %v6244
    %v6445 = vpop.f32.mrb[0].mxu0
    %v6446 = vpop.f32.mrb[0].mxu0
    %v6447 = vpop.f32.mrb[0].mxu0
    %v6448 = vadd.f32 0.0, %v6447
    %v6449 = vpop.f32.mrb[0].mxu0
    %6450 = vmatprep.mubr.bf16.mxu0 0
    %6451 = vmatmul.mubr.bf16.gmra.mrb[0].mxu0 %v6247
    %v6452 = vpop.f32.mrb[0].mxu0
    %v6453 = vadd.f32 0.0, %v6452
    %v6454 = vpop.f32.mrb[0].mxu0
    %v6455 = vpop.f32.mrb[0].mxu0
    %v6456 = vpop.f32.mrb[0].mxu0
    %6457 = vdwg.mxu0
    %v6458 = vadd.f32 %v5915, %v6284
    %v6459 = vadd.f32 %v5918, %v6287
    %v6460 = vadd.f32 %v5925, %v6294
    %v6461 = vadd.f32 %v5930, %v6299
    %v6462 = vadd.f32 %v5937, %v6306
    %v6463 = vadd.f32 %v5940, %v6309
    %v6464 = vadd.f32 %v5947, %v6316
    %v6465 = vadd.f32 %v5952, %v6321
    %v6466 = vadd.f32 %v5959, %v6328
    %v6467 = vadd.f32 %v5962, %v6331
    %v6468 = vadd.f32 %v5969, %v6338
    %v6469 = vadd.f32 %v5974, %v6343
    %v6470 = vadd.f32 %v5981, %v6350
    %v6471 = vadd.f32 %v5984, %v6353
    %v6472 = vadd.f32 %v5991, %v6360
    %v6473 = vadd.f32 %v5996, %v6365
    %v6474 = vadd.f32 %v6003, %v6372
    %v6475 = vadd.f32 %v6006, %v6375
    %v6476 = vadd.f32 %v6013, %v6382
    %v6477 = vadd.f32 %v6018, %v6387
    %v6478 = vadd.f32 %v6025, %v6394
    %v6479 = vadd.f32 %v6028, %v6397
    %v6480 = vadd.f32 %v6035, %v6404
    %v6481 = vadd.f32 %v6040, %v6409
    %v6482 = vadd.f32 %v6047, %v6416
    %v6483 = vadd.f32 %v6050, %v6419
    %v6484 = vadd.f32 %v6057, %v6426
    %v6485 = vadd.f32 %v6062, %v6431
    %v6486 = vadd.f32 %v6069, %v6438
    %v6487 = vadd.f32 %v6072, %v6441
    %v6488 = vadd.f32 %v6079, %v6448
    %v6489 = vadd.f32 %v6084, %v6453
    %v6490 = vld [vmem:[#allocation2 + $0x1f] sm:$0xff]
    %v6491 = vld [vmem:[#allocation2 + $0x27] sm:$0xff]
    %v6492 = vld [vmem:[#allocation2 + $0x2f] sm:$0xff]
    %v6493 = vld [vmem:[#allocation2 + $0x37] sm:$0xff]
    %v6494 = vld [vmem:[#allocation2 + $0x3f] sm:$0xff]
    %v6495 = vld [vmem:[#allocation2 + $0x47] sm:$0xff]
    %v6496 = vld [vmem:[#allocation2 + $0x4f] sm:$0xff]
    %v6497 = vld [vmem:[#allocation2 + $0x57] sm:$0xff]
    %v6498 = vld [vmem:[#allocation2 + $0x5f] sm:$0xff]
    %v6499 = vld [vmem:[#allocation2 + $0x67] sm:$0xff]
    %v6500 = vld [vmem:[#allocation2 + $0x6f] sm:$0xff]
    %v6501 = vld [vmem:[#allocation2 + $0x77] sm:$0xff]
    %v6502 = vld [vmem:[#allocation2 + $0x7f] sm:$0xff]
    %v6503 = vld [vmem:[#allocation2 + $0x87] sm:$0xff]
    %v6504 = vld [vmem:[#allocation2 + $0x8f] sm:$0xff]
    %v6505 = vld [vmem:[#allocation2 + $0x97] sm:$0xff]
    %v6506 = vld [vmem:[#allocation2 + $0x9f] sm:$0xff]
    %v6507 = vld [vmem:[#allocation2 + $0xa7] sm:$0xff]
    %v6508 = vld [vmem:[#allocation2 + $0xaf] sm:$0xff]
    %v6509 = vld [vmem:[#allocation2 + $0xb7] sm:$0xff]
    %v6510 = vld [vmem:[#allocation2 + $0xbf] sm:$0xff]
    %v6511 = vld [vmem:[#allocation2 + $0xc7] sm:$0xff]
    %v6512 = vld [vmem:[#allocation2 + $0xcf] sm:$0xff]
    %v6513 = vld [vmem:[#allocation2 + $0xd7] sm:$0xff]
    %v6514 = vld [vmem:[#allocation2 + $0xdf] sm:$0xff]
    %v6515 = vld [vmem:[#allocation2 + $0xe7] sm:$0xff]
    %v6516 = vld [vmem:[#allocation2 + $0xef] sm:$0xff]
    %v6517 = vld [vmem:[#allocation2 + $0xf7] sm:$0xff]
    %v6518 = vld [vmem:[#allocation2 + $0xff] sm:$0xff]
    %v6519 = vld [vmem:[#allocation2 + $0x107] sm:$0xff]
    %v6520 = vld [vmem:[#allocation2 + $0x10f] sm:$0xff]
    %v6521 = vld [vmem:[#allocation2 + $0x117] sm:$0xff]
    %v6522 = vld [vmem:[#allocation2 + $0x11f] sm:$0xff]
    %v6523 = vld [vmem:[#allocation2 + $0x127] sm:$0xff]
    %v6524 = vld [vmem:[#allocation2 + $0x12f] sm:$0xff]
    %v6525 = vld [vmem:[#allocation2 + $0x137] sm:$0xff]
    %v6526 = vld [vmem:[#allocation2 + $0x13f] sm:$0xff]
    %v6527 = vld [vmem:[#allocation2 + $0x147] sm:$0xff]
    %v6528 = vld [vmem:[#allocation2 + $0x14f] sm:$0xff]
    %v6529 = vld [vmem:[#allocation2 + $0x157] sm:$0xff]
    %v6530 = vld [vmem:[#allocation2 + $0x15f] sm:$0xff]
    %v6531 = vld [vmem:[#allocation2 + $0x167] sm:$0xff]
    %v6532 = vld [vmem:[#allocation2 + $0x16f] sm:$0xff]
    %v6533 = vld [vmem:[#allocation2 + $0x177] sm:$0xff]
    %v6534 = vld [vmem:[#allocation2 + $0x17f] sm:$0xff]
    %v6535 = vld [vmem:[#allocation2 + $0x187] sm:$0xff]
    %v6536 = vld [vmem:[#allocation2 + $0x18f] sm:$0xff]
    %v6537 = vld [vmem:[#allocation2 + $0x197] sm:$0xff]
    %v6538 = vpack.c.bf16 %v6491, %v6490
    %v6539 = vpack.c.bf16 %v6493, %v6492
    %v6540 = vpack.c.bf16 %v6495, %v6494
    %v6541 = vpack.c.bf16 %v6497, %v6496
    %v6542 = vpack.c.bf16 %v6499, %v6498
    %v6543 = vpack.c.bf16 %v6501, %v6500
    %v6544 = vpack.c.bf16 %v6503, %v6502
    %v6545 = vpack.c.bf16 %v6505, %v6504
    %v6546 = vpack.c.bf16 %v6507, %v6506
    %v6547 = vpack.c.bf16 %v6509, %v6508
    %v6548 = vpack.c.bf16 %v6511, %v6510
    %v6549 = vpack.c.bf16 %v6513, %v6512
    %v6550 = vpack.c.bf16 %v6515, %v6514
    %v6551 = vpack.c.bf16 %v6517, %v6516
    %v6552 = vpack.c.bf16 %v6519, %v6518
    %v6553 = vpack.c.bf16 %v6521, %v6520
    %v6554 = vpack.c.bf16 %v6523, %v6522
    %v6555 = vpack.c.bf16 %v6525, %v6524
    %v6556 = vpack.c.bf16 %v6527, %v6526
    %v6557 = vpack.c.bf16 %v6529, %v6528
    %v6558 = vpack.c.bf16 %v6531, %v6530
    %v6559 = vpack.c.bf16 %v6533, %v6532
    %v6560 = vpack.c.bf16 %v6535, %v6534
    %v6561 = vpack.c.bf16 %v6537, %v6536
    %v6562 = vld [vmem:[%s1830] sm:$0xf]
    %v6563 = vld [vmem:[%s1830 + $0x4] sm:$0xf]
    %v6564 = vld [vmem:[%s1830 + $0x8] sm:$0xf]
    %v6565 = vld [vmem:[%s1830 + $0xc] sm:$0xf]
    %v6570 = vunpack.c.l.b16 %v6562
    %v6571 = vunpack.c.l.b16 %v6563
    %v6572 = vunpack.c.l.b16 %v6564
    %v6573 = vunpack.c.l.b16 %v6565
    %v6574 = vpack.c.b16 %v6571, %v6570
    %v6575 = vpack.c.b16 %v6573, %v6572
    %v6579 = vsel %vm65, %v6538, 0
    %v6582 = vsel %vm65, %v6539, 0
    %v6585 = vsel %vm65, %v6540, 0
    %v6588 = vsel %vm65, %v6541, 0
    %v6591 = vsel %vm65, %v6542, 0
    %v6594 = vsel %vm65, %v6543, 0
    %v6597 = vsel %vm65, %v6544, 0
    %v6600 = vsel %vm65, %v6545, 0
    %v6603 = vsel %vm65, %v6546, 0
    %v6606 = vsel %vm65, %v6547, 0
    %v6609 = vsel %vm65, %v6548, 0
    %v6612 = vsel %vm65, %v6549, 0
    %v6615 = vsel %vm65, %v6550, 0
    %v6618 = vsel %vm65, %v6551, 0
    %v6621 = vsel %vm65, %v6552, 0
    %v6624 = vsel %vm65, %v6553, 0
    %v6627 = vsel %vm65, %v6554, 0
    %v6630 = vsel %vm65, %v6555, 0
    %v6633 = vsel %vm65, %v6556, 0
    %v6636 = vsel %vm65, %v6557, 0
    %v6639 = vsel %vm65, %v6558, 0
    %v6642 = vsel %vm65, %v6559, 0
    %v6645 = vsel %vm65, %v6560, 0
    %v6648 = vsel %vm65, %v6561, 0
    %6650 = vmatprep.subr.bf16.mxu0 0
    %6651 = vmatpush1.bf16.msra.mxu0 %v6574
    %6652 = vmatprep.subr.bf16.mxu0 0
    %6653 = vmatpush1.bf16.msra.mxu0 %v6575
    %6654 = vmatprep.subr.bf16.mxu0 0
    %6655 = vmatpush1.bf16.msra.mxu0 0
    %6656 = vmatprep.subr.bf16.mxu0 0
    %6657 = vmatpush1.bf16.msra.mxu0 0
    %6658 = vmatprep.subr.bf16.mxu0 0
    %6659 = vmatpush1.bf16.msra.mxu0 0
    %6660 = vmatprep.subr.bf16.mxu0 0
    %6661 = vmatpush1.bf16.msra.mxu0 0
    %6662 = vmatprep.subr.bf16.mxu0 0
    %6663 = vmatpush1.bf16.msra.mxu0 0
    %6664 = vmatprep.subr.bf16.mxu0 0
    %6665 = vmatpush1.bf16.msra.mxu0 0
    %6666 = vmatprep.subr.bf16.mxu0 0
    %6667 = vmatpush1.bf16.msra.mxu0 0
    %6668 = vmatprep.subr.bf16.mxu0 0
    %6669 = vmatpush1.bf16.msra.mxu0 0
    %6670 = vmatprep.subr.bf16.mxu0 0
    %6671 = vmatpush1.bf16.msra.mxu0 0
    %6672 = vmatprep.subr.bf16.mxu0 0
    %6673 = vmatpush1.bf16.msra.mxu0 0
    %6674 = vmatprep.subr.bf16.mxu0 0
    %6675 = vmatpush1.bf16.msra.mxu0 0
    %6676 = vmatprep.subr.bf16.mxu0 0
    %6677 = vmatpush1.bf16.msra.mxu0 0
    %6678 = vmatprep.subr.bf16.mxu0 0
    %6679 = vmatpush1.bf16.msra.mxu0 0
    %6680 = vmatprep.subr.bf16.mxu0 0
    %6681 = vmatpush1.bf16.msra.mxu0 0
    %6682 = vmatprep.mubr.bf16.mxu0 0
    %6683 = vmatmul.mubr.bf16.gmra.mrb[0].mxu0 %v6579
    %v6684 = vpop.f32.mrb[0].mxu0
    %v6685 = vadd.f32 0.0, %v6684
    %v6686 = vpop.f32.mrb[0].mxu0
    %v6687 = vpop.f32.mrb[0].mxu0
    %v6688 = vadd.f32 0.0, %v6687
    %v6689 = vpop.f32.mrb[0].mxu0
    %6690 = vmatprep.mubr.bf16.mxu0 0
    %6691 = vmatmul.mubr.bf16.gmra.mrb[0].mxu0 %v6582
    %v6692 = vpop.f32.mrb[0].mxu0
    %v6693 = vpop.f32.mrb[0].mxu0
    %v6694 = vpop.f32.mrb[0].mxu0
    %v6695 = vadd.f32 0.0, %v6694
    %v6696 = vpop.f32.mrb[0].mxu0
    %6697 = vmatprep.mubr.bf16.mxu0 0
    %6698 = vmatmul.mubr.bf16.gmra.mrb[0].mxu0 %v6585
    %v6699 = vpop.f32.mrb[0].mxu0
    %v6700 = vadd.f32 0.0, %v6699
    %v6701 = vpop.f32.mrb[0].mxu0
    %v6702 = vpop.f32.mrb[0].mxu0
    %v6703 = vpop.f32.mrb[0].mxu0
    %6704 = vmatprep.mubr.bf16.mxu0 0
    %6705 = vmatmul.mubr.bf16.gmra.mrb[0].mxu0 %v6588
    %v6706 = vpop.f32.mrb[0].mxu0
    %v6707 = vadd.f32 0.0, %v6706
    %v6708 = vpop.f32.mrb[0].mxu0
    %v6709 = vpop.f32.mrb[0].mxu0
    %v6710 = vadd.f32 0.0, %v6709
    %v6711 = vpop.f32.mrb[0].mxu0
    %6712 = vmatprep.mubr.bf16.mxu0 0
    %6713 = vmatmul.mubr.bf16.gmra.mrb[0].mxu0 %v6591
    %v6714 = vpop.f32.mrb[0].mxu0
    %v6715 = vpop.f32.mrb[0].mxu0
    %v6716 = vpop.f32.mrb[0].mxu0
    %v6717 = vadd.f32 0.0, %v6716
    %v6718 = vpop.f32.mrb[0].mxu0
    %6719 = vmatprep.mubr.bf16.mxu0 0
    %6720 = vmatmul.mubr.bf16.gmra.mrb[0].mxu0 %v6594
    %v6721 = vpop.f32.mrb[0].mxu0
    %v6722 = vadd.f32 0.0, %v6721
    %v6723 = vpop.f32.mrb[0].mxu0
    %v6724 = vpop.f32.mrb[0].mxu0
    %v6725 = vpop.f32.mrb[0].mxu0
    %6726 = vmatprep.mubr.bf16.mxu0 0
    %6727 = vmatmul.mubr.bf16.gmra.mrb[0].mxu0 %v6597
    %v6728 = vpop.f32.mrb[0].mxu0
    %v6729 = vadd.f32 0.0, %v6728
    %v6730 = vpop.f32.mrb[0].mxu0
    %v6731 = vpop.f32.mrb[0].mxu0
    %v6732 = vadd.f32 0.0, %v6731
    %v6733 = vpop.f32.mrb[0].mxu0
    %6734 = vmatprep.mubr.bf16.mxu0 0
    %6735 = vmatmul.mubr.bf16.gmra.mrb[0].mxu0 %v6600
    %v6736 = vpop.f32.mrb[0].mxu0
    %v6737 = vpop.f32.mrb[0].mxu0
    %v6738 = vpop.f32.mrb[0].mxu0
    %v6739 = vadd.f32 0.0, %v6738
    %v6740 = vpop.f32.mrb[0].mxu0
    %6741 = vmatprep.mubr.bf16.mxu0 0
    %6742 = vmatmul.mubr.bf16.gmra.mrb[0].mxu0 %v6603
    %v6743 = vpop.f32.mrb[0].mxu0
    %v6744 = vadd.f32 0.0, %v6743
    %v6745 = vpop.f32.mrb[0].mxu0
    %v6746 = vpop.f32.mrb[0].mxu0
    %v6747 = vpop.f32.mrb[0].mxu0
    %6748 = vmatprep.mubr.bf16.mxu0 0
    %6749 = vmatmul.mubr.bf16.gmra.mrb[0].mxu0 %v6606
    %v6750 = vpop.f32.mrb[0].mxu0
    %v6751 = vadd.f32 0.0, %v6750
    %v6752 = vpop.f32.mrb[0].mxu0
    %v6753 = vpop.f32.mrb[0].mxu0
    %v6754 = vadd.f32 0.0, %v6753
    %v6755 = vpop.f32.mrb[0].mxu0
    %6756 = vmatprep.mubr.bf16.mxu0 0
    %6757 = vmatmul.mubr.bf16.gmra.mrb[0].mxu0 %v6609
    %v6758 = vpop.f32.mrb[0].mxu0
    %v6759 = vpop.f32.mrb[0].mxu0
    %v6760 = vpop.f32.mrb[0].mxu0
    %v6761 = vadd.f32 0.0, %v6760
    %v6762 = vpop.f32.mrb[0].mxu0
    %6763 = vmatprep.mubr.bf16.mxu0 0
    %6764 = vmatmul.mubr.bf16.gmra.mrb[0].mxu0 %v6612
    %v6765 = vpop.f32.mrb[0].mxu0
    %v6766 = vadd.f32 0.0, %v6765
    %v6767 = vpop.f32.mrb[0].mxu0
    %v6768 = vpop.f32.mrb[0].mxu0
    %v6769 = vpop.f32.mrb[0].mxu0
    %6770 = vmatprep.mubr.bf16.mxu0 0
    %6771 = vmatmul.mubr.bf16.gmra.mrb[0].mxu0 %v6615
    %v6772 = vpop.f32.mrb[0].mxu0
    %v6773 = vadd.f32 0.0, %v6772
    %v6774 = vpop.f32.mrb[0].mxu0
    %v6775 = vpop.f32.mrb[0].mxu0
    %v6776 = vadd.f32 0.0, %v6775
    %v6777 = vpop.f32.mrb[0].mxu0
    %6778 = vmatprep.mubr.bf16.mxu0 0
    %6779 = vmatmul.mubr.bf16.gmra.mrb[0].mxu0 %v6618
    %v6780 = vpop.f32.mrb[0].mxu0
    %v6781 = vpop.f32.mrb[0].mxu0
    %v6782 = vpop.f32.mrb[0].mxu0
    %v6783 = vadd.f32 0.0, %v6782
    %v6784 = vpop.f32.mrb[0].mxu0
    %6785 = vmatprep.mubr.bf16.mxu0 0
    %6786 = vmatmul.mubr.bf16.gmra.mrb[0].mxu0 %v6621
    %v6787 = vpop.f32.mrb[0].mxu0
    %v6788 = vadd.f32 0.0, %v6787
    %v6789 = vpop.f32.mrb[0].mxu0
    %v6790 = vpop.f32.mrb[0].mxu0
    %v6791 = vpop.f32.mrb[0].mxu0
    %6792 = vmatprep.mubr.bf16.mxu0 0
    %6793 = vmatmul.mubr.bf16.gmra.mrb[0].mxu0 %v6624
    %v6794 = vpop.f32.mrb[0].mxu0
    %v6795 = vadd.f32 0.0, %v6794
    %v6796 = vpop.f32.mrb[0].mxu0
    %v6797 = vpop.f32.mrb[0].mxu0
    %v6798 = vadd.f32 0.0, %v6797
    %v6799 = vpop.f32.mrb[0].mxu0
    %6800 = vmatprep.mubr.bf16.mxu0 0
    %6801 = vmatmul.mubr.bf16.gmra.mrb[0].mxu0 %v6627
    %v6802 = vpop.f32.mrb[0].mxu0
    %v6803 = vpop.f32.mrb[0].mxu0
    %v6804 = vpop.f32.mrb[0].mxu0
    %v6805 = vadd.f32 0.0, %v6804
    %v6806 = vpop.f32.mrb[0].mxu0
    %6807 = vmatprep.mubr.bf16.mxu0 0
    %6808 = vmatmul.mubr.bf16.gmra.mrb[0].mxu0 %v6630
    %v6809 = vpop.f32.mrb[0].mxu0
    %v6810 = vadd.f32 0.0, %v6809
    %v6811 = vpop.f32.mrb[0].mxu0
    %v6812 = vpop.f32.mrb[0].mxu0
    %v6813 = vpop.f32.mrb[0].mxu0
    %6814 = vmatprep.mubr.bf16.mxu0 0
    %6815 = vmatmul.mubr.bf16.gmra.mrb[0].mxu0 %v6633
    %v6816 = vpop.f32.mrb[0].mxu0
    %v6817 = vadd.f32 0.0, %v6816
    %v6818 = vpop.f32.mrb[0].mxu0
    %v6819 = vpop.f32.mrb[0].mxu0
    %v6820 = vadd.f32 0.0, %v6819
    %v6821 = vpop.f32.mrb[0].mxu0
    %6822 = vmatprep.mubr.bf16.mxu0 0
    %6823 = vmatmul.mubr.bf16.gmra.mrb[0].mxu0 %v6636
    %v6824 = vpop.f32.mrb[0].mxu0
    %v6825 = vpop.f32.mrb[0].mxu0
    %v6826 = vpop.f32.mrb[0].mxu0
    %v6827 = vadd.f32 0.0, %v6826
    %v6828 = vpop.f32.mrb[0].mxu0
    %6829 = vmatprep.mubr.bf16.mxu0 0
    %6830 = vmatmul.mubr.bf16.gmra.mrb[0].mxu0 %v6639
    %v6831 = vpop.f32.mrb[0].mxu0
    %v6832 = vadd.f32 0.0, %v6831
    %v6833 = vpop.f32.mrb[0].mxu0
    %v6834 = vpop.f32.mrb[0].mxu0
    %v6835 = vpop.f32.mrb[0].mxu0
    %6836 = vmatprep.mubr.bf16.mxu0 0
    %6837 = vmatmul.mubr.bf16.gmra.mrb[0].mxu0 %v6642
    %v6838 = vpop.f32.mrb[0].mxu0
    %v6839 = vadd.f32 0.0, %v6838
    %v6840 = vpop.f32.mrb[0].mxu0
    %v6841 = vpop.f32.mrb[0].mxu0
    %v6842 = vadd.f32 0.0, %v6841
    %v6843 = vpop.f32.mrb[0].mxu0
    %6844 = vmatprep.mubr.bf16.mxu0 0
    %6845 = vmatmul.mubr.bf16.gmra.mrb[0].mxu0 %v6645
    %v6846 = vpop.f32.mrb[0].mxu0
    %v6847 = vpop.f32.mrb[0].mxu0
    %v6848 = vpop.f32.mrb[0].mxu0
    %v6849 = vadd.f32 0.0, %v6848
    %v6850 = vpop.f32.mrb[0].mxu0
    %6851 = vmatprep.mubr.bf16.mxu0 0
    %6852 = vmatmul.mubr.bf16.gmra.mrb[0].mxu0 %v6648
    %v6853 = vpop.f32.mrb[0].mxu0
    %v6854 = vadd.f32 0.0, %v6853
    %v6855 = vpop.f32.mrb[0].mxu0
    %v6856 = vpop.f32.mrb[0].mxu0
    %v6857 = vpop.f32.mrb[0].mxu0
    %6858 = vdwg.mxu0
    %v6859 = vadd.f32 %v6458, %v6685
    %v6860 = vadd.f32 %v6459, %v6688
    %v6861 = vadd.f32 %v6460, %v6695
    %v6862 = vadd.f32 %v6461, %v6700
    %v6863 = vadd.f32 %v6462, %v6707
    %v6864 = vadd.f32 %v6463, %v6710
    %v6865 = vadd.f32 %v6464, %v6717
    %v6866 = vadd.f32 %v6465, %v6722
    %v6867 = vadd.f32 %v6466, %v6729
    %v6868 = vadd.f32 %v6467, %v6732
    %v6869 = vadd.f32 %v6468, %v6739
    %v6870 = vadd.f32 %v6469, %v6744
    %v6871 = vadd.f32 %v6470, %v6751
    %v6872 = vadd.f32 %v6471, %v6754
    %v6873 = vadd.f32 %v6472, %v6761
    %v6874 = vadd.f32 %v6473, %v6766
    %v6875 = vadd.f32 %v6474, %v6773
    %v6876 = vadd.f32 %v6475, %v6776
    %v6877 = vadd.f32 %v6476, %v6783
    %v6878 = vadd.f32 %v6477, %v6788
    %v6879 = vadd.f32 %v6478, %v6795
    %v6880 = vadd.f32 %v6479, %v6798
    %v6881 = vadd.f32 %v6480, %v6805
    %v6882 = vadd.f32 %v6481, %v6810
    %v6883 = vadd.f32 %v6482, %v6817
    %v6884 = vadd.f32 %v6483, %v6820
    %v6885 = vadd.f32 %v6484, %v6827
    %v6886 = vadd.f32 %v6485, %v6832
    %v6887 = vadd.f32 %v6486, %v6839
    %v6888 = vadd.f32 %v6487, %v6842
    %v6889 = vadd.f32 %v6488, %v6849
    %v6890 = vadd.f32 %v6489, %v6854
    %v6891 = vld [vmem:[#allocation2 + $0x20] sm:$0xff]
    %v6892 = vld [vmem:[#allocation2 + $0x28] sm:$0xff]
    %v6893 = vld [vmem:[#allocation2 + $0x30] sm:$0xff]
    %v6894 = vld [vmem:[#allocation2 + $0x38] sm:$0xff]
    %v6895 = vld [vmem:[#allocation2 + $0x40] sm:$0xff]
    %v6896 = vld [vmem:[#allocation2 + $0x48] sm:$0xff]
    %v6897 = vld [vmem:[#allocation2 + $0x50] sm:$0xff]
    %v6898 = vld [vmem:[#allocation2 + $0x58] sm:$0xff]
    %v6899 = vld [vmem:[#allocation2 + $0x60] sm:$0xff]
    %v6900 = vld [vmem:[#allocation2 + $0x68] sm:$0xff]
    %v6901 = vld [vmem:[#allocation2 + $0x70] sm:$0xff]
    %v6902 = vld [vmem:[#allocation2 + $0x78] sm:$0xff]
    %v6903 = vld [vmem:[#allocation2 + $0x80] sm:$0xff]
    %v6904 = vld [vmem:[#allocation2 + $0x88] sm:$0xff]
    %v6905 = vld [vmem:[#allocation2 + $0x90] sm:$0xff]
    %v6906 = vld [vmem:[#allocation2 + $0x98] sm:$0xff]
    %v6907 = vld [vmem:[#allocation2 + $0xa0] sm:$0xff]
    %v6908 = vld [vmem:[#allocation2 + $0xa8] sm:$0xff]
    %v6909 = vld [vmem:[#allocation2 + $0xb0] sm:$0xff]
    %v6910 = vld [vmem:[#allocation2 + $0xb8] sm:$0xff]
    %v6911 = vld [vmem:[#allocation2 + $0xc0] sm:$0xff]
    %v6912 = vld [vmem:[#allocation2 + $0xc8] sm:$0xff]
    %v6913 = vld [vmem:[#allocation2 + $0xd0] sm:$0xff]
    %v6914 = vld [vmem:[#allocation2 + $0xd8] sm:$0xff]
    %v6915 = vld [vmem:[#allocation2 + $0xe0] sm:$0xff]
    %v6916 = vld [vmem:[#allocation2 + $0xe8] sm:$0xff]
    %v6917 = vld [vmem:[#allocation2 + $0xf0] sm:$0xff]
    %v6918 = vld [vmem:[#allocation2 + $0xf8] sm:$0xff]
    %v6919 = vld [vmem:[#allocation2 + $0x100] sm:$0xff]
    %v6920 = vld [vmem:[#allocation2 + $0x108] sm:$0xff]
    %v6921 = vld [vmem:[#allocation2 + $0x110] sm:$0xff]
    %v6922 = vld [vmem:[#allocation2 + $0x118] sm:$0xff]
    %v6923 = vld [vmem:[#allocation2 + $0x120] sm:$0xff]
    %v6924 = vld [vmem:[#allocation2 + $0x128] sm:$0xff]
    %v6925 = vld [vmem:[#allocation2 + $0x130] sm:$0xff]
    %v6926 = vld [vmem:[#allocation2 + $0x138] sm:$0xff]
    %v6927 = vld [vmem:[#allocation2 + $0x140] sm:$0xff]
    %v6928 = vld [vmem:[#allocation2 + $0x148] sm:$0xff]
    %v6929 = vld [vmem:[#allocation2 + $0x150] sm:$0xff]
    %v6930 = vld [vmem:[#allocation2 + $0x158] sm:$0xff]
    %v6931 = vld [vmem:[#allocation2 + $0x160] sm:$0xff]
    %v6932 = vld [vmem:[#allocation2 + $0x168] sm:$0xff]
    %v6933 = vld [vmem:[#allocation2 + $0x170] sm:$0xff]
    %v6934 = vld [vmem:[#allocation2 + $0x178] sm:$0xff]
    %v6935 = vld [vmem:[#allocation2 + $0x180] sm:$0xff]
    %v6936 = vld [vmem:[#allocation2 + $0x188] sm:$0xff]
    %v6937 = vld [vmem:[#allocation2 + $0x190] sm:$0xff]
    %v6938 = vld [vmem:[#allocation2 + $0x198] sm:$0xff]
    %v6939 = vpack.c.bf16 %v6892, %v6891
    %v6940 = vpack.c.bf16 %v6894, %v6893
    %v6941 = vpack.c.bf16 %v6896, %v6895
    %v6942 = vpack.c.bf16 %v6898, %v6897
    %v6943 = vpack.c.bf16 %v6900, %v6899
    %v6944 = vpack.c.bf16 %v6902, %v6901
    %v6945 = vpack.c.bf16 %v6904, %v6903
    %v6946 = vpack.c.bf16 %v6906, %v6905
    %v6947 = vpack.c.bf16 %v6908, %v6907
    %v6948 = vpack.c.bf16 %v6910, %v6909
    %v6949 = vpack.c.bf16 %v6912, %v6911
    %v6950 = vpack.c.bf16 %v6914, %v6913
    %v6951 = vpack.c.bf16 %v6916, %v6915
    %v6952 = vpack.c.bf16 %v6918, %v6917
    %v6953 = vpack.c.bf16 %v6920, %v6919
    %v6954 = vpack.c.bf16 %v6922, %v6921
    %v6955 = vpack.c.bf16 %v6924, %v6923
    %v6956 = vpack.c.bf16 %v6926, %v6925
    %v6957 = vpack.c.bf16 %v6928, %v6927
    %v6958 = vpack.c.bf16 %v6930, %v6929
    %v6959 = vpack.c.bf16 %v6932, %v6931
    %v6960 = vpack.c.bf16 %v6934, %v6933
    %v6961 = vpack.c.bf16 %v6936, %v6935
    %v6962 = vpack.c.bf16 %v6938, %v6937
    %v6963 = vld [vmem:[%s2232] sm:$0xf]
    %v6964 = vld [vmem:[%s2232 + $0x4] sm:$0xf]
    %v6965 = vld [vmem:[%s2232 + $0x8] sm:$0xf]
    %v6966 = vld [vmem:[%s2232 + $0xc] sm:$0xf]
    %v6971 = vunpack.c.l.b16 %v6963
    %v6972 = vunpack.c.l.b16 %v6964
    %v6973 = vunpack.c.l.b16 %v6965
    %v6974 = vunpack.c.l.b16 %v6966
    %v6975 = vpack.c.b16 %v6972, %v6971
    %v6976 = vpack.c.b16 %v6974, %v6973
    %v6980 = vsel %vm65, %v6939, 0
    %v6983 = vsel %vm65, %v6940, 0
    %v6986 = vsel %vm65, %v6941, 0
    %v6989 = vsel %vm65, %v6942, 0
    %v6992 = vsel %vm65, %v6943, 0
    %v6995 = vsel %vm65, %v6944, 0
    %v6998 = vsel %vm65, %v6945, 0
    %v7001 = vsel %vm65, %v6946, 0
    %v7004 = vsel %vm65, %v6947, 0
    %v7007 = vsel %vm65, %v6948, 0
    %v7010 = vsel %vm65, %v6949, 0
    %v7013 = vsel %vm65, %v6950, 0
    %v7016 = vsel %vm65, %v6951, 0
    %v7019 = vsel %vm65, %v6952, 0
    %v7022 = vsel %vm65, %v6953, 0
    %v7025 = vsel %vm65, %v6954, 0
    %v7028 = vsel %vm65, %v6955, 0
    %v7031 = vsel %vm65, %v6956, 0
    %v7034 = vsel %vm65, %v6957, 0
    %v7037 = vsel %vm65, %v6958, 0
    %v7040 = vsel %vm65, %v6959, 0
    %v7043 = vsel %vm65, %v6960, 0
    %v7046 = vsel %vm65, %v6961, 0
    %v7049 = vsel %vm65, %v6962, 0
    %7051 = vmatprep.subr.bf16.mxu0 0
    %7052 = vmatpush1.bf16.msra.mxu0 %v6975
    %7053 = vmatprep.subr.bf16.mxu0 0
    %7054 = vmatpush1.bf16.msra.mxu0 %v6976
    %7055 = vmatprep.subr.bf16.mxu0 0
    %7056 = vmatpush1.bf16.msra.mxu0 0
    %7057 = vmatprep.subr.bf16.mxu0 0
    %7058 = vmatpush1.bf16.msra.mxu0 0
    %7059 = vmatprep.subr.bf16.mxu0 0
    %7060 = vmatpush1.bf16.msra.mxu0 0
    %7061 = vmatprep.subr.bf16.mxu0 0
    %7062 = vmatpush1.bf16.msra.mxu0 0
    %7063 = vmatprep.subr.bf16.mxu0 0
    %7064 = vmatpush1.bf16.msra.mxu0 0
    %7065 = vmatprep.subr.bf16.mxu0 0
    %7066 = vmatpush1.bf16.msra.mxu0 0
    %7067 = vmatprep.subr.bf16.mxu0 0
    %7068 = vmatpush1.bf16.msra.mxu0 0
    %7069 = vmatprep.subr.bf16.mxu0 0
    %7070 = vmatpush1.bf16.msra.mxu0 0
    %7071 = vmatprep.subr.bf16.mxu0 0
    %7072 = vmatpush1.bf16.msra.mxu0 0
    %7073 = vmatprep.subr.bf16.mxu0 0
    %7074 = vmatpush1.bf16.msra.mxu0 0
    %7075 = vmatprep.subr.bf16.mxu0 0
    %7076 = vmatpush1.bf16.msra.mxu0 0
    %7077 = vmatprep.subr.bf16.mxu0 0
    %7078 = vmatpush1.bf16.msra.mxu0 0
    %7079 = vmatprep.subr.bf16.mxu0 0
    %7080 = vmatpush1.bf16.msra.mxu0 0
    %7081 = vmatprep.subr.bf16.mxu0 0
    %7082 = vmatpush1.bf16.msra.mxu0 0
    %7083 = vmatprep.mubr.bf16.mxu0 0
    %7084 = vmatmul.mubr.bf16.gmra.mrb[0].mxu0 %v6980
    %v7085 = vpop.f32.mrb[0].mxu0
    %v7086 = vadd.f32 0.0, %v7085
    %v7087 = vpop.f32.mrb[0].mxu0
    %v7088 = vpop.f32.mrb[0].mxu0
    %v7089 = vadd.f32 0.0, %v7088
    %v7090 = vpop.f32.mrb[0].mxu0
    %7091 = vmatprep.mubr.bf16.mxu0 0
    %7092 = vmatmul.mubr.bf16.gmra.mrb[0].mxu0 %v6983
    %v7093 = vpop.f32.mrb[0].mxu0
    %v7094 = vpop.f32.mrb[0].mxu0
    %v7095 = vpop.f32.mrb[0].mxu0
    %v7096 = vadd.f32 0.0, %v7095
    %v7097 = vpop.f32.mrb[0].mxu0
    %7098 = vmatprep.mubr.bf16.mxu0 0
    %7099 = vmatmul.mubr.bf16.gmra.mrb[0].mxu0 %v6986
    %v7100 = vpop.f32.mrb[0].mxu0
    %v7101 = vadd.f32 0.0, %v7100
    %v7102 = vpop.f32.mrb[0].mxu0
    %v7103 = vpop.f32.mrb[0].mxu0
    %v7104 = vpop.f32.mrb[0].mxu0
    %7105 = vmatprep.mubr.bf16.mxu0 0
    %7106 = vmatmul.mubr.bf16.gmra.mrb[0].mxu0 %v6989
    %v7107 = vpop.f32.mrb[0].mxu0
    %v7108 = vadd.f32 0.0, %v7107
    %v7109 = vpop.f32.mrb[0].mxu0
    %v7110 = vpop.f32.mrb[0].mxu0
    %v7111 = vadd.f32 0.0, %v7110
    %v7112 = vpop.f32.mrb[0].mxu0
    %7113 = vmatprep.mubr.bf16.mxu0 0
    %7114 = vmatmul.mubr.bf16.gmra.mrb[0].mxu0 %v6992
    %v7115 = vpop.f32.mrb[0].mxu0
    %v7116 = vpop.f32.mrb[0].mxu0
    %v7117 = vpop.f32.mrb[0].mxu0
    %v7118 = vadd.f32 0.0, %v7117
    %v7119 = vpop.f32.mrb[0].mxu0
    %7120 = vmatprep.mubr.bf16.mxu0 0
    %7121 = vmatmul.mubr.bf16.gmra.mrb[0].mxu0 %v6995
    %v7122 = vpop.f32.mrb[0].mxu0
    %v7123 = vadd.f32 0.0, %v7122
    %v7124 = vpop.f32.mrb[0].mxu0
    %v7125 = vpop.f32.mrb[0].mxu0
    %v7126 = vpop.f32.mrb[0].mxu0
    %7127 = vmatprep.mubr.bf16.mxu0 0
    %7128 = vmatmul.mubr.bf16.gmra.mrb[0].mxu0 %v6998
    %v7129 = vpop.f32.mrb[0].mxu0
    %v7130 = vadd.f32 0.0, %v7129
    %v7131 = vpop.f32.mrb[0].mxu0
    %v7132 = vpop.f32.mrb[0].mxu0
    %v7133 = vadd.f32 0.0, %v7132
    %v7134 = vpop.f32.mrb[0].mxu0
    %7135 = vmatprep.mubr.bf16.mxu0 0
    %7136 = vmatmul.mubr.bf16.gmra.mrb[0].mxu0 %v7001
    %v7137 = vpop.f32.mrb[0].mxu0
    %v7138 = vpop.f32.mrb[0].mxu0
    %v7139 = vpop.f32.mrb[0].mxu0
    %v7140 = vadd.f32 0.0, %v7139
    %v7141 = vpop.f32.mrb[0].mxu0
    %7142 = vmatprep.mubr.bf16.mxu0 0
    %7143 = vmatmul.mubr.bf16.gmra.mrb[0].mxu0 %v7004
    %v7144 = vpop.f32.mrb[0].mxu0
    %v7145 = vadd.f32 0.0, %v7144
    %v7146 = vpop.f32.mrb[0].mxu0
    %v7147 = vpop.f32.mrb[0].mxu0
    %v7148 = vpop.f32.mrb[0].mxu0
    %7149 = vmatprep.mubr.bf16.mxu0 0
    %7150 = vmatmul.mubr.bf16.gmra.mrb[0].mxu0 %v7007
    %v7151 = vpop.f32.mrb[0].mxu0
    %v7152 = vadd.f32 0.0, %v7151
    %v7153 = vpop.f32.mrb[0].mxu0
    %v7154 = vpop.f32.mrb[0].mxu0
    %v7155 = vadd.f32 0.0, %v7154
    %v7156 = vpop.f32.mrb[0].mxu0
    %7157 = vmatprep.mubr.bf16.mxu0 0
    %7158 = vmatmul.mubr.bf16.gmra.mrb[0].mxu0 %v7010
    %v7159 = vpop.f32.mrb[0].mxu0
    %v7160 = vpop.f32.mrb[0].mxu0
    %v7161 = vpop.f32.mrb[0].mxu0
    %v7162 = vadd.f32 0.0, %v7161
    %v7163 = vpop.f32.mrb[0].mxu0
    %7164 = vmatprep.mubr.bf16.mxu0 0
    %7165 = vmatmul.mubr.bf16.gmra.mrb[0].mxu0 %v7013
    %v7166 = vpop.f32.mrb[0].mxu0
    %v7167 = vadd.f32 0.0, %v7166
    %v7168 = vpop.f32.mrb[0].mxu0
    %v7169 = vpop.f32.mrb[0].mxu0
    %v7170 = vpop.f32.mrb[0].mxu0
    %7171 = vmatprep.mubr.bf16.mxu0 0
    %7172 = vmatmul.mubr.bf16.gmra.mrb[0].mxu0 %v7016
    %v7173 = vpop.f32.mrb[0].mxu0
    %v7174 = vadd.f32 0.0, %v7173
    %v7175 = vpop.f32.mrb[0].mxu0
    %v7176 = vpop.f32.mrb[0].mxu0
    %v7177 = vadd.f32 0.0, %v7176
    %v7178 = vpop.f32.mrb[0].mxu0
    %7179 = vmatprep.mubr.bf16.mxu0 0
    %7180 = vmatmul.mubr.bf16.gmra.mrb[0].mxu0 %v7019
    %v7181 = vpop.f32.mrb[0].mxu0
    %v7182 = vpop.f32.mrb[0].mxu0
    %v7183 = vpop.f32.mrb[0].mxu0
    %v7184 = vadd.f32 0.0, %v7183
    %v7185 = vpop.f32.mrb[0].mxu0
    %7186 = vmatprep.mubr.bf16.mxu0 0
    %7187 = vmatmul.mubr.bf16.gmra.mrb[0].mxu0 %v7022
    %v7188 = vpop.f32.mrb[0].mxu0
    %v7189 = vadd.f32 0.0, %v7188
    %v7190 = vpop.f32.mrb[0].mxu0
    %v7191 = vpop.f32.mrb[0].mxu0
    %v7192 = vpop.f32.mrb[0].mxu0
    %7193 = vmatprep.mubr.bf16.mxu0 0
    %7194 = vmatmul.mubr.bf16.gmra.mrb[0].mxu0 %v7025
    %v7195 = vpop.f32.mrb[0].mxu0
    %v7196 = vadd.f32 0.0, %v7195
    %v7197 = vpop.f32.mrb[0].mxu0
    %v7198 = vpop.f32.mrb[0].mxu0
    %v7199 = vadd.f32 0.0, %v7198
    %v7200 = vpop.f32.mrb[0].mxu0
    %7201 = vmatprep.mubr.bf16.mxu0 0
    %7202 = vmatmul.mubr.bf16.gmra.mrb[0].mxu0 %v7028
    %v7203 = vpop.f32.mrb[0].mxu0
    %v7204 = vpop.f32.mrb[0].mxu0
    %v7205 = vpop.f32.mrb[0].mxu0
    %v7206 = vadd.f32 0.0, %v7205
    %v7207 = vpop.f32.mrb[0].mxu0
    %7208 = vmatprep.mubr.bf16.mxu0 0
    %7209 = vmatmul.mubr.bf16.gmra.mrb[0].mxu0 %v7031
    %v7210 = vpop.f32.mrb[0].mxu0
    %v7211 = vadd.f32 0.0, %v7210
    %v7212 = vpop.f32.mrb[0].mxu0
    %v7213 = vpop.f32.mrb[0].mxu0
    %v7214 = vpop.f32.mrb[0].mxu0
    %7215 = vmatprep.mubr.bf16.mxu0 0
    %7216 = vmatmul.mubr.bf16.gmra.mrb[0].mxu0 %v7034
    %v7217 = vpop.f32.mrb[0].mxu0
    %v7218 = vadd.f32 0.0, %v7217
    %v7219 = vpop.f32.mrb[0].mxu0
    %v7220 = vpop.f32.mrb[0].mxu0
    %v7221 = vadd.f32 0.0, %v7220
    %v7222 = vpop.f32.mrb[0].mxu0
    %7223 = vmatprep.mubr.bf16.mxu0 0
    %7224 = vmatmul.mubr.bf16.gmra.mrb[0].mxu0 %v7037
    %v7225 = vpop.f32.mrb[0].mxu0
    %v7226 = vpop.f32.mrb[0].mxu0
    %v7227 = vpop.f32.mrb[0].mxu0
    %v7228 = vadd.f32 0.0, %v7227
    %v7229 = vpop.f32.mrb[0].mxu0
    %7230 = vmatprep.mubr.bf16.mxu0 0
    %7231 = vmatmul.mubr.bf16.gmra.mrb[0].mxu0 %v7040
    %v7232 = vpop.f32.mrb[0].mxu0
    %v7233 = vadd.f32 0.0, %v7232
    %v7234 = vpop.f32.mrb[0].mxu0
    %v7235 = vpop.f32.mrb[0].mxu0
    %v7236 = vpop.f32.mrb[0].mxu0
    %7237 = vmatprep.mubr.bf16.mxu0 0
    %7238 = vmatmul.mubr.bf16.gmra.mrb[0].mxu0 %v7043
    %v7239 = vpop.f32.mrb[0].mxu0
    %v7240 = vadd.f32 0.0, %v7239
    %v7241 = vpop.f32.mrb[0].mxu0
    %v7242 = vpop.f32.mrb[0].mxu0
    %v7243 = vadd.f32 0.0, %v7242
    %v7244 = vpop.f32.mrb[0].mxu0
    %7245 = vmatprep.mubr.bf16.mxu0 0
    %7246 = vmatmul.mubr.bf16.gmra.mrb[0].mxu0 %v7046
    %v7247 = vpop.f32.mrb[0].mxu0
    %v7248 = vpop.f32.mrb[0].mxu0
    %v7249 = vpop.f32.mrb[0].mxu0
    %v7250 = vadd.f32 0.0, %v7249
    %v7251 = vpop.f32.mrb[0].mxu0
    %7252 = vmatprep.mubr.bf16.mxu0 0
    %7253 = vmatmul.mubr.bf16.gmra.mrb[0].mxu0 %v7049
    %v7254 = vpop.f32.mrb[0].mxu0
    %v7255 = vadd.f32 0.0, %v7254
    %v7256 = vpop.f32.mrb[0].mxu0
    %v7257 = vpop.f32.mrb[0].mxu0
    %v7258 = vpop.f32.mrb[0].mxu0
    %7259 = vdwg.mxu0
    %v7260 = vadd.f32 %v6859, %v7086
    %v7261 = vadd.f32 %v6860, %v7089
    %v7262 = vadd.f32 %v6861, %v7096
    %v7263 = vadd.f32 %v6862, %v7101
    %v7264 = vadd.f32 %v6863, %v7108
    %v7265 = vadd.f32 %v6864, %v7111
    %v7266 = vadd.f32 %v6865, %v7118
    %v7267 = vadd.f32 %v6866, %v7123
    %v7268 = vadd.f32 %v6867, %v7130
    %v7269 = vadd.f32 %v6868, %v7133
    %v7270 = vadd.f32 %v6869, %v7140
    %v7271 = vadd.f32 %v6870, %v7145
    %v7272 = vadd.f32 %v6871, %v7152
    %v7273 = vadd.f32 %v6872, %v7155
    %v7274 = vadd.f32 %v6873, %v7162
    %v7275 = vadd.f32 %v6874, %v7167
    %v7276 = vadd.f32 %v6875, %v7174
    %v7277 = vadd.f32 %v6876, %v7177
    %v7278 = vadd.f32 %v6877, %v7184
    %v7279 = vadd.f32 %v6878, %v7189
    %v7280 = vadd.f32 %v6879, %v7196
    %v7281 = vadd.f32 %v6880, %v7199
    %v7282 = vadd.f32 %v6881, %v7206
    %v7283 = vadd.f32 %v6882, %v7211
    %v7284 = vadd.f32 %v6883, %v7218
    %v7285 = vadd.f32 %v6884, %v7221
    %v7286 = vadd.f32 %v6885, %v7228
    %v7287 = vadd.f32 %v6886, %v7233
    %v7288 = vadd.f32 %v6887, %v7240
    %v7289 = vadd.f32 %v6888, %v7243
    %v7290 = vadd.f32 %v6889, %v7250
    %v7291 = vadd.f32 %v6890, %v7255
    %v7292 = vld [vmem:[#allocation2 + $0x21] sm:$0xff]
    %v7293 = vld [vmem:[#allocation2 + $0x29] sm:$0xff]
    %v7294 = vld [vmem:[#allocation2 + $0x31] sm:$0xff]
    %v7295 = vld [vmem:[#allocation2 + $0x39] sm:$0xff]
    %v7296 = vld [vmem:[#allocation2 + $0x41] sm:$0xff]
    %v7297 = vld [vmem:[#allocation2 + $0x49] sm:$0xff]
    %v7298 = vld [vmem:[#allocation2 + $0x51] sm:$0xff]
    %v7299 = vld [vmem:[#allocation2 + $0x59] sm:$0xff]
    %v7300 = vld [vmem:[#allocation2 + $0x61] sm:$0xff]
    %v7301 = vld [vmem:[#allocation2 + $0x69] sm:$0xff]
    %v7302 = vld [vmem:[#allocation2 + $0x71] sm:$0xff]
    %v7303 = vld [vmem:[#allocation2 + $0x79] sm:$0xff]
    %v7304 = vld [vmem:[#allocation2 + $0x81] sm:$0xff]
    %v7305 = vld [vmem:[#allocation2 + $0x89] sm:$0xff]
    %v7306 = vld [vmem:[#allocation2 + $0x91] sm:$0xff]
    %v7307 = vld [vmem:[#allocation2 + $0x99] sm:$0xff]
    %v7308 = vld [vmem:[#allocation2 + $0xa1] sm:$0xff]
    %v7309 = vld [vmem:[#allocation2 + $0xa9] sm:$0xff]
    %v7310 = vld [vmem:[#allocation2 + $0xb1] sm:$0xff]
    %v7311 = vld [vmem:[#allocation2 + $0xb9] sm:$0xff]
    %v7312 = vld [vmem:[#allocation2 + $0xc1] sm:$0xff]
    %v7313 = vld [vmem:[#allocation2 + $0xc9] sm:$0xff]
    %v7314 = vld [vmem:[#allocation2 + $0xd1] sm:$0xff]
    %v7315 = vld [vmem:[#allocation2 + $0xd9] sm:$0xff]
    %v7316 = vld [vmem:[#allocation2 + $0xe1] sm:$0xff]
    %v7317 = vld [vmem:[#allocation2 + $0xe9] sm:$0xff]
    %v7318 = vld [vmem:[#allocation2 + $0xf1] sm:$0xff]
    %v7319 = vld [vmem:[#allocation2 + $0xf9] sm:$0xff]
    %v7320 = vld [vmem:[#allocation2 + $0x101] sm:$0xff]
    %v7321 = vld [vmem:[#allocation2 + $0x109] sm:$0xff]
    %v7322 = vld [vmem:[#allocation2 + $0x111] sm:$0xff]
    %v7323 = vld [vmem:[#allocation2 + $0x119] sm:$0xff]
    %v7324 = vld [vmem:[#allocation2 + $0x121] sm:$0xff]
    %v7325 = vld [vmem:[#allocation2 + $0x129] sm:$0xff]
    %v7326 = vld [vmem:[#allocation2 + $0x131] sm:$0xff]
    %v7327 = vld [vmem:[#allocation2 + $0x139] sm:$0xff]
    %v7328 = vld [vmem:[#allocation2 + $0x141] sm:$0xff]
    %v7329 = vld [vmem:[#allocation2 + $0x149] sm:$0xff]
    %v7330 = vld [vmem:[#allocation2 + $0x151] sm:$0xff]
    %v7331 = vld [vmem:[#allocation2 + $0x159] sm:$0xff]
    %v7332 = vld [vmem:[#allocation2 + $0x161] sm:$0xff]
    %v7333 = vld [vmem:[#allocation2 + $0x169] sm:$0xff]
    %v7334 = vld [vmem:[#allocation2 + $0x171] sm:$0xff]
    %v7335 = vld [vmem:[#allocation2 + $0x179] sm:$0xff]
    %v7336 = vld [vmem:[#allocation2 + $0x181] sm:$0xff]
    %v7337 = vld [vmem:[#allocation2 + $0x189] sm:$0xff]
    %v7338 = vld [vmem:[#allocation2 + $0x191] sm:$0xff]
    %v7339 = vld [vmem:[#allocation2 + $0x199] sm:$0xff]
    %v7340 = vpack.c.bf16 %v7293, %v7292
    %v7341 = vpack.c.bf16 %v7295, %v7294
    %v7342 = vpack.c.bf16 %v7297, %v7296
    %v7343 = vpack.c.bf16 %v7299, %v7298
    %v7344 = vpack.c.bf16 %v7301, %v7300
    %v7345 = vpack.c.bf16 %v7303, %v7302
    %v7346 = vpack.c.bf16 %v7305, %v7304
    %v7347 = vpack.c.bf16 %v7307, %v7306
    %v7348 = vpack.c.bf16 %v7309, %v7308
    %v7349 = vpack.c.bf16 %v7311, %v7310
    %v7350 = vpack.c.bf16 %v7313, %v7312
    %v7351 = vpack.c.bf16 %v7315, %v7314
    %v7352 = vpack.c.bf16 %v7317, %v7316
    %v7353 = vpack.c.bf16 %v7319, %v7318
    %v7354 = vpack.c.bf16 %v7321, %v7320
    %v7355 = vpack.c.bf16 %v7323, %v7322
    %v7356 = vpack.c.bf16 %v7325, %v7324
    %v7357 = vpack.c.bf16 %v7327, %v7326
    %v7358 = vpack.c.bf16 %v7329, %v7328
    %v7359 = vpack.c.bf16 %v7331, %v7330
    %v7360 = vpack.c.bf16 %v7333, %v7332
    %v7361 = vpack.c.bf16 %v7335, %v7334
    %v7362 = vpack.c.bf16 %v7337, %v7336
    %v7363 = vpack.c.bf16 %v7339, %v7338
    %v7364 = vld [vmem:[%s2634] sm:$0xf]
    %v7365 = vld [vmem:[%s2634 + $0x4] sm:$0xf]
    %v7366 = vld [vmem:[%s2634 + $0x8] sm:$0xf]
    %v7367 = vld [vmem:[%s2634 + $0xc] sm:$0xf]
    %v7372 = vunpack.c.l.b16 %v7364
    %v7373 = vunpack.c.l.b16 %v7365
    %v7374 = vunpack.c.l.b16 %v7366
    %v7375 = vunpack.c.l.b16 %v7367
    %v7376 = vpack.c.b16 %v7373, %v7372
    %v7377 = vpack.c.b16 %v7375, %v7374
    %v7381 = vsel %vm65, %v7340, 0
    %v7384 = vsel %vm65, %v7341, 0
    %v7387 = vsel %vm65, %v7342, 0
    %v7390 = vsel %vm65, %v7343, 0
    %v7393 = vsel %vm65, %v7344, 0
    %v7396 = vsel %vm65, %v7345, 0
    %v7399 = vsel %vm65, %v7346, 0
    %v7402 = vsel %vm65, %v7347, 0
    %v7405 = vsel %vm65, %v7348, 0
    %v7408 = vsel %vm65, %v7349, 0
    %v7411 = vsel %vm65, %v7350, 0
    %v7414 = vsel %vm65, %v7351, 0
    %v7417 = vsel %vm65, %v7352, 0
    %v7420 = vsel %vm65, %v7353, 0
    %v7423 = vsel %vm65, %v7354, 0
    %v7426 = vsel %vm65, %v7355, 0
    %v7429 = vsel %vm65, %v7356, 0
    %v7432 = vsel %vm65, %v7357, 0
    %v7435 = vsel %vm65, %v7358, 0
    %v7438 = vsel %vm65, %v7359, 0
    %v7441 = vsel %vm65, %v7360, 0
    %v7444 = vsel %vm65, %v7361, 0
    %v7447 = vsel %vm65, %v7362, 0
    %v7450 = vsel %vm65, %v7363, 0
    %7452 = vmatprep.subr.bf16.mxu0 0
    %7453 = vmatpush1.bf16.msra.mxu0 %v7376
    %7454 = vmatprep.subr.bf16.mxu0 0
    %7455 = vmatpush1.bf16.msra.mxu0 %v7377
    %7456 = vmatprep.subr.bf16.mxu0 0
    %7457 = vmatpush1.bf16.msra.mxu0 0
    %7458 = vmatprep.subr.bf16.mxu0 0
    %7459 = vmatpush1.bf16.msra.mxu0 0
    %7460 = vmatprep.subr.bf16.mxu0 0
    %7461 = vmatpush1.bf16.msra.mxu0 0
    %7462 = vmatprep.subr.bf16.mxu0 0
    %7463 = vmatpush1.bf16.msra.mxu0 0
    %7464 = vmatprep.subr.bf16.mxu0 0
    %7465 = vmatpush1.bf16.msra.mxu0 0
    %7466 = vmatprep.subr.bf16.mxu0 0
    %7467 = vmatpush1.bf16.msra.mxu0 0
    %7468 = vmatprep.subr.bf16.mxu0 0
    %7469 = vmatpush1.bf16.msra.mxu0 0
    %7470 = vmatprep.subr.bf16.mxu0 0
    %7471 = vmatpush1.bf16.msra.mxu0 0
    %7472 = vmatprep.subr.bf16.mxu0 0
    %7473 = vmatpush1.bf16.msra.mxu0 0
    %7474 = vmatprep.subr.bf16.mxu0 0
    %7475 = vmatpush1.bf16.msra.mxu0 0
    %7476 = vmatprep.subr.bf16.mxu0 0
    %7477 = vmatpush1.bf16.msra.mxu0 0
    %7478 = vmatprep.subr.bf16.mxu0 0
    %7479 = vmatpush1.bf16.msra.mxu0 0
    %7480 = vmatprep.subr.bf16.mxu0 0
    %7481 = vmatpush1.bf16.msra.mxu0 0
    %7482 = vmatprep.subr.bf16.mxu0 0
    %7483 = vmatpush1.bf16.msra.mxu0 0
    %7484 = vmatprep.mubr.bf16.mxu0 0
    %7485 = vmatmul.mubr.bf16.gmra.mrb[0].mxu0 %v7381
    %v7486 = vpop.f32.mrb[0].mxu0
    %v7487 = vadd.f32 0.0, %v7486
    %v7488 = vpop.f32.mrb[0].mxu0
    %v7489 = vpop.f32.mrb[0].mxu0
    %v7490 = vadd.f32 0.0, %v7489
    %v7491 = vpop.f32.mrb[0].mxu0
    %7492 = vmatprep.mubr.bf16.mxu0 0
    %7493 = vmatmul.mubr.bf16.gmra.mrb[0].mxu0 %v7384
    %v7494 = vpop.f32.mrb[0].mxu0
    %v7495 = vpop.f32.mrb[0].mxu0
    %v7496 = vpop.f32.mrb[0].mxu0
    %v7497 = vadd.f32 0.0, %v7496
    %v7498 = vpop.f32.mrb[0].mxu0
    %7499 = vmatprep.mubr.bf16.mxu0 0
    %7500 = vmatmul.mubr.bf16.gmra.mrb[0].mxu0 %v7387
    %v7501 = vpop.f32.mrb[0].mxu0
    %v7502 = vadd.f32 0.0, %v7501
    %v7503 = vpop.f32.mrb[0].mxu0
    %v7504 = vpop.f32.mrb[0].mxu0
    %v7505 = vpop.f32.mrb[0].mxu0
    %7506 = vmatprep.mubr.bf16.mxu0 0
    %7507 = vmatmul.mubr.bf16.gmra.mrb[0].mxu0 %v7390
    %v7508 = vpop.f32.mrb[0].mxu0
    %v7509 = vadd.f32 0.0, %v7508
    %v7510 = vpop.f32.mrb[0].mxu0
    %v7511 = vpop.f32.mrb[0].mxu0
    %v7512 = vadd.f32 0.0, %v7511
    %v7513 = vpop.f32.mrb[0].mxu0
    %7514 = vmatprep.mubr.bf16.mxu0 0
    %7515 = vmatmul.mubr.bf16.gmra.mrb[0].mxu0 %v7393
    %v7516 = vpop.f32.mrb[0].mxu0
    %v7517 = vpop.f32.mrb[0].mxu0
    %v7518 = vpop.f32.mrb[0].mxu0
    %v7519 = vadd.f32 0.0, %v7518
    %v7520 = vpop.f32.mrb[0].mxu0
    %7521 = vmatprep.mubr.bf16.mxu0 0
    %7522 = vmatmul.mubr.bf16.gmra.mrb[0].mxu0 %v7396
    %v7523 = vpop.f32.mrb[0].mxu0
    %v7524 = vadd.f32 0.0, %v7523
    %v7525 = vpop.f32.mrb[0].mxu0
    %v7526 = vpop.f32.mrb[0].mxu0
    %v7527 = vpop.f32.mrb[0].mxu0
    %7528 = vmatprep.mubr.bf16.mxu0 0
    %7529 = vmatmul.mubr.bf16.gmra.mrb[0].mxu0 %v7399
    %v7530 = vpop.f32.mrb[0].mxu0
    %v7531 = vadd.f32 0.0, %v7530
    %v7532 = vpop.f32.mrb[0].mxu0
    %v7533 = vpop.f32.mrb[0].mxu0
    %v7534 = vadd.f32 0.0, %v7533
    %v7535 = vpop.f32.mrb[0].mxu0
    %7536 = vmatprep.mubr.bf16.mxu0 0
    %7537 = vmatmul.mubr.bf16.gmra.mrb[0].mxu0 %v7402
    %v7538 = vpop.f32.mrb[0].mxu0
    %v7539 = vpop.f32.mrb[0].mxu0
    %v7540 = vpop.f32.mrb[0].mxu0
    %v7541 = vadd.f32 0.0, %v7540
    %v7542 = vpop.f32.mrb[0].mxu0
    %7543 = vmatprep.mubr.bf16.mxu0 0
    %7544 = vmatmul.mubr.bf16.gmra.mrb[0].mxu0 %v7405
    %v7545 = vpop.f32.mrb[0].mxu0
    %v7546 = vadd.f32 0.0, %v7545
    %v7547 = vpop.f32.mrb[0].mxu0
    %v7548 = vpop.f32.mrb[0].mxu0
    %v7549 = vpop.f32.mrb[0].mxu0
    %7550 = vmatprep.mubr.bf16.mxu0 0
    %7551 = vmatmul.mubr.bf16.gmra.mrb[0].mxu0 %v7408
    %v7552 = vpop.f32.mrb[0].mxu0
    %v7553 = vadd.f32 0.0, %v7552
    %v7554 = vpop.f32.mrb[0].mxu0
    %v7555 = vpop.f32.mrb[0].mxu0
    %v7556 = vadd.f32 0.0, %v7555
    %v7557 = vpop.f32.mrb[0].mxu0
    %7558 = vmatprep.mubr.bf16.mxu0 0
    %7559 = vmatmul.mubr.bf16.gmra.mrb[0].mxu0 %v7411
    %v7560 = vpop.f32.mrb[0].mxu0
    %v7561 = vpop.f32.mrb[0].mxu0
    %v7562 = vpop.f32.mrb[0].mxu0
    %v7563 = vadd.f32 0.0, %v7562
    %v7564 = vpop.f32.mrb[0].mxu0
    %7565 = vmatprep.mubr.bf16.mxu0 0
    %7566 = vmatmul.mubr.bf16.gmra.mrb[0].mxu0 %v7414
    %v7567 = vpop.f32.mrb[0].mxu0
    %v7568 = vadd.f32 0.0, %v7567
    %v7569 = vpop.f32.mrb[0].mxu0
    %v7570 = vpop.f32.mrb[0].mxu0
    %v7571 = vpop.f32.mrb[0].mxu0
    %7572 = vmatprep.mubr.bf16.mxu0 0
    %7573 = vmatmul.mubr.bf16.gmra.mrb[0].mxu0 %v7417
    %v7574 = vpop.f32.mrb[0].mxu0
    %v7575 = vadd.f32 0.0, %v7574
    %v7576 = vpop.f32.mrb[0].mxu0
    %v7577 = vpop.f32.mrb[0].mxu0
    %v7578 = vadd.f32 0.0, %v7577
    %v7579 = vpop.f32.mrb[0].mxu0
    %7580 = vmatprep.mubr.bf16.mxu0 0
    %7581 = vmatmul.mubr.bf16.gmra.mrb[0].mxu0 %v7420
    %v7582 = vpop.f32.mrb[0].mxu0
    %v7583 = vpop.f32.mrb[0].mxu0
    %v7584 = vpop.f32.mrb[0].mxu0
    %v7585 = vadd.f32 0.0, %v7584
    %v7586 = vpop.f32.mrb[0].mxu0
    %7587 = vmatprep.mubr.bf16.mxu0 0
    %7588 = vmatmul.mubr.bf16.gmra.mrb[0].mxu0 %v7423
    %v7589 = vpop.f32.mrb[0].mxu0
    %v7590 = vadd.f32 0.0, %v7589
    %v7591 = vpop.f32.mrb[0].mxu0
    %v7592 = vpop.f32.mrb[0].mxu0
    %v7593 = vpop.f32.mrb[0].mxu0
    %7594 = vmatprep.mubr.bf16.mxu0 0
    %7595 = vmatmul.mubr.bf16.gmra.mrb[0].mxu0 %v7426
    %v7596 = vpop.f32.mrb[0].mxu0
    %v7597 = vadd.f32 0.0, %v7596
    %v7598 = vpop.f32.mrb[0].mxu0
    %v7599 = vpop.f32.mrb[0].mxu0
    %v7600 = vadd.f32 0.0, %v7599
    %v7601 = vpop.f32.mrb[0].mxu0
    %7602 = vmatprep.mubr.bf16.mxu0 0
    %7603 = vmatmul.mubr.bf16.gmra.mrb[0].mxu0 %v7429
    %v7604 = vpop.f32.mrb[0].mxu0
    %v7605 = vpop.f32.mrb[0].mxu0
    %v7606 = vpop.f32.mrb[0].mxu0
    %v7607 = vadd.f32 0.0, %v7606
    %v7608 = vpop.f32.mrb[0].mxu0
    %7609 = vmatprep.mubr.bf16.mxu0 0
    %7610 = vmatmul.mubr.bf16.gmra.mrb[0].mxu0 %v7432
    %v7611 = vpop.f32.mrb[0].mxu0
    %v7612 = vadd.f32 0.0, %v7611
    %v7613 = vpop.f32.mrb[0].mxu0
    %v7614 = vpop.f32.mrb[0].mxu0
    %v7615 = vpop.f32.mrb[0].mxu0
    %7616 = vmatprep.mubr.bf16.mxu0 0
    %7617 = vmatmul.mubr.bf16.gmra.mrb[0].mxu0 %v7435
    %v7618 = vpop.f32.mrb[0].mxu0
    %v7619 = vadd.f32 0.0, %v7618
    %v7620 = vpop.f32.mrb[0].mxu0
    %v7621 = vpop.f32.mrb[0].mxu0
    %v7622 = vadd.f32 0.0, %v7621
    %v7623 = vpop.f32.mrb[0].mxu0
    %7624 = vmatprep.mubr.bf16.mxu0 0
    %7625 = vmatmul.mubr.bf16.gmra.mrb[0].mxu0 %v7438
    %v7626 = vpop.f32.mrb[0].mxu0
    %v7627 = vpop.f32.mrb[0].mxu0
    %v7628 = vpop.f32.mrb[0].mxu0
    %v7629 = vadd.f32 0.0, %v7628
    %v7630 = vpop.f32.mrb[0].mxu0
    %7631 = vmatprep.mubr.bf16.mxu0 0
    %7632 = vmatmul.mubr.bf16.gmra.mrb[0].mxu0 %v7441
    %v7633 = vpop.f32.mrb[0].mxu0
    %v7634 = vadd.f32 0.0, %v7633
    %v7635 = vpop.f32.mrb[0].mxu0
    %v7636 = vpop.f32.mrb[0].mxu0
    %v7637 = vpop.f32.mrb[0].mxu0
    %7638 = vmatprep.mubr.bf16.mxu0 0
    %7639 = vmatmul.mubr.bf16.gmra.mrb[0].mxu0 %v7444
    %v7640 = vpop.f32.mrb[0].mxu0
    %v7641 = vadd.f32 0.0, %v7640
    %v7642 = vpop.f32.mrb[0].mxu0
    %v7643 = vpop.f32.mrb[0].mxu0
    %v7644 = vadd.f32 0.0, %v7643
    %v7645 = vpop.f32.mrb[0].mxu0
    %7646 = vmatprep.mubr.bf16.mxu0 0
    %7647 = vmatmul.mubr.bf16.gmra.mrb[0].mxu0 %v7447
    %v7648 = vpop.f32.mrb[0].mxu0
    %v7649 = vpop.f32.mrb[0].mxu0
    %v7650 = vpop.f32.mrb[0].mxu0
    %v7651 = vadd.f32 0.0, %v7650
    %v7652 = vpop.f32.mrb[0].mxu0
    %7653 = vmatprep.mubr.bf16.mxu0 0
    %7654 = vmatmul.mubr.bf16.gmra.mrb[0].mxu0 %v7450
    %v7655 = vpop.f32.mrb[0].mxu0
    %v7656 = vadd.f32 0.0, %v7655
    %v7657 = vpop.f32.mrb[0].mxu0
    %v7658 = vpop.f32.mrb[0].mxu0
    %v7659 = vpop.f32.mrb[0].mxu0
    %7660 = vdwg.mxu0
    %v7661 = vadd.f32 %v7260, %v7487
    %v7662 = vadd.f32 %v7261, %v7490
    %v7663 = vadd.f32 %v7262, %v7497
    %v7664 = vadd.f32 %v7263, %v7502
    %v7665 = vadd.f32 %v7264, %v7509
    %v7666 = vadd.f32 %v7265, %v7512
    %v7667 = vadd.f32 %v7266, %v7519
    %v7668 = vadd.f32 %v7267, %v7524
    %v7669 = vadd.f32 %v7268, %v7531
    %v7670 = vadd.f32 %v7269, %v7534
    %v7671 = vadd.f32 %v7270, %v7541
    %v7672 = vadd.f32 %v7271, %v7546
    %v7673 = vadd.f32 %v7272, %v7553
    %v7674 = vadd.f32 %v7273, %v7556
    %v7675 = vadd.f32 %v7274, %v7563
    %v7676 = vadd.f32 %v7275, %v7568
    %v7677 = vadd.f32 %v7276, %v7575
    %v7678 = vadd.f32 %v7277, %v7578
    %v7679 = vadd.f32 %v7278, %v7585
    %v7680 = vadd.f32 %v7279, %v7590
    %v7681 = vadd.f32 %v7280, %v7597
    %v7682 = vadd.f32 %v7281, %v7600
    %v7683 = vadd.f32 %v7282, %v7607
    %v7684 = vadd.f32 %v7283, %v7612
    %v7685 = vadd.f32 %v7284, %v7619
    %v7686 = vadd.f32 %v7285, %v7622
    %v7687 = vadd.f32 %v7286, %v7629
    %v7688 = vadd.f32 %v7287, %v7634
    %v7689 = vadd.f32 %v7288, %v7641
    %v7690 = vadd.f32 %v7289, %v7644
    %v7691 = vadd.f32 %v7290, %v7651
    %v7692 = vadd.f32 %v7291, %v7656
    %v7693 = vld [vmem:[#allocation2 + $0x37] sm:$0xff]
    %v7694 = vld [vmem:[#allocation2 + $0x3f] sm:$0xff]
    %v7695 = vld [vmem:[#allocation2 + $0x47] sm:$0xff]
    %v7696 = vld [vmem:[#allocation2 + $0x4f] sm:$0xff]
    %v7697 = vld [vmem:[#allocation2 + $0x57] sm:$0xff]
    %v7698 = vld [vmem:[#allocation2 + $0x5f] sm:$0xff]
    %v7699 = vld [vmem:[#allocation2 + $0x67] sm:$0xff]
    %v7700 = vld [vmem:[#allocation2 + $0x6f] sm:$0xff]
    %v7701 = vld [vmem:[#allocation2 + $0x77] sm:$0xff]
    %v7702 = vld [vmem:[#allocation2 + $0x7f] sm:$0xff]
    %v7703 = vld [vmem:[#allocation2 + $0x87] sm:$0xff]
    %v7704 = vld [vmem:[#allocation2 + $0x8f] sm:$0xff]
    %v7705 = vld [vmem:[#allocation2 + $0x97] sm:$0xff]
    %v7706 = vld [vmem:[#allocation2 + $0x9f] sm:$0xff]
    %v7707 = vld [vmem:[#allocation2 + $0xa7] sm:$0xff]
    %v7708 = vld [vmem:[#allocation2 + $0xaf] sm:$0xff]
    %v7709 = vld [vmem:[#allocation2 + $0xb7] sm:$0xff]
    %v7710 = vld [vmem:[#allocation2 + $0xbf] sm:$0xff]
    %v7711 = vld [vmem:[#allocation2 + $0xc7] sm:$0xff]
    %v7712 = vld [vmem:[#allocation2 + $0xcf] sm:$0xff]
    %v7713 = vld [vmem:[#allocation2 + $0xd7] sm:$0xff]
    %v7714 = vld [vmem:[#allocation2 + $0xdf] sm:$0xff]
    %v7715 = vld [vmem:[#allocation2 + $0xe7] sm:$0xff]
    %v7716 = vld [vmem:[#allocation2 + $0xef] sm:$0xff]
    %v7717 = vld [vmem:[#allocation2 + $0xf7] sm:$0xff]
    %v7718 = vld [vmem:[#allocation2 + $0xff] sm:$0xff]
    %v7719 = vld [vmem:[#allocation2 + $0x107] sm:$0xff]
    %v7720 = vld [vmem:[#allocation2 + $0x10f] sm:$0xff]
    %v7721 = vld [vmem:[#allocation2 + $0x117] sm:$0xff]
    %v7722 = vld [vmem:[#allocation2 + $0x11f] sm:$0xff]
    %v7723 = vld [vmem:[#allocation2 + $0x127] sm:$0xff]
    %v7724 = vld [vmem:[#allocation2 + $0x12f] sm:$0xff]
    %v7725 = vld [vmem:[#allocation2 + $0x137] sm:$0xff]
    %v7726 = vld [vmem:[#allocation2 + $0x13f] sm:$0xff]
    %v7727 = vld [vmem:[#allocation2 + $0x147] sm:$0xff]
    %v7728 = vld [vmem:[#allocation2 + $0x14f] sm:$0xff]
    %v7729 = vld [vmem:[#allocation2 + $0x157] sm:$0xff]
    %v7730 = vld [vmem:[#allocation2 + $0x15f] sm:$0xff]
    %v7731 = vld [vmem:[#allocation2 + $0x167] sm:$0xff]
    %v7732 = vld [vmem:[#allocation2 + $0x16f] sm:$0xff]
    %v7733 = vld [vmem:[#allocation2 + $0x177] sm:$0xff]
    %v7734 = vld [vmem:[#allocation2 + $0x17f] sm:$0xff]
    %v7735 = vld [vmem:[#allocation2 + $0x187] sm:$0xff]
    %v7736 = vld [vmem:[#allocation2 + $0x18f] sm:$0xff]
    %v7737 = vld [vmem:[#allocation2 + $0x197] sm:$0xff]
    %v7738 = vld [vmem:[#allocation2 + $0x19f] sm:$0xff]
    %v7739 = vld [vmem:[#allocation2 + $0x1a7] sm:$0xff]
    %v7740 = vld [vmem:[#allocation2 + $0x1af] sm:$0xff]
    %v7741 = vpack.c.bf16 %v7694, %v7693
    %v7742 = vpack.c.bf16 %v7696, %v7695
    %v7743 = vpack.c.bf16 %v7698, %v7697
    %v7744 = vpack.c.bf16 %v7700, %v7699
    %v7745 = vpack.c.bf16 %v7702, %v7701
    %v7746 = vpack.c.bf16 %v7704, %v7703
    %v7747 = vpack.c.bf16 %v7706, %v7705
    %v7748 = vpack.c.bf16 %v7708, %v7707
    %v7749 = vpack.c.bf16 %v7710, %v7709
    %v7750 = vpack.c.bf16 %v7712, %v7711
    %v7751 = vpack.c.bf16 %v7714, %v7713
    %v7752 = vpack.c.bf16 %v7716, %v7715
    %v7753 = vpack.c.bf16 %v7718, %v7717
    %v7754 = vpack.c.bf16 %v7720, %v7719
    %v7755 = vpack.c.bf16 %v7722, %v7721
    %v7756 = vpack.c.bf16 %v7724, %v7723
    %v7757 = vpack.c.bf16 %v7726, %v7725
    %v7758 = vpack.c.bf16 %v7728, %v7727
    %v7759 = vpack.c.bf16 %v7730, %v7729
    %v7760 = vpack.c.bf16 %v7732, %v7731
    %v7761 = vpack.c.bf16 %v7734, %v7733
    %v7762 = vpack.c.bf16 %v7736, %v7735
    %v7763 = vpack.c.bf16 %v7738, %v7737
    %v7764 = vpack.c.bf16 %v7740, %v7739
    %v7765 = vld [vmem:[%s3036] sm:$0xf]
    %v7766 = vld [vmem:[%s3036 + $0x4] sm:$0xf]
    %v7767 = vld [vmem:[%s3036 + $0x8] sm:$0xf]
    %v7768 = vld [vmem:[%s3036 + $0xc] sm:$0xf]
    %v7773 = vunpack.c.l.b16 %v7765
    %v7774 = vunpack.c.l.b16 %v7766
    %v7775 = vunpack.c.l.b16 %v7767
    %v7776 = vunpack.c.l.b16 %v7768
    %v7777 = vpack.c.b16 %v7774, %v7773
    %v7778 = vpack.c.b16 %v7776, %v7775
    %v7782 = vsel %vm65, %v7741, 0
    %v7785 = vsel %vm65, %v7742, 0
    %v7788 = vsel %vm65, %v7743, 0
    %v7791 = vsel %vm65, %v7744, 0
    %v7794 = vsel %vm65, %v7745, 0
    %v7797 = vsel %vm65, %v7746, 0
    %v7800 = vsel %vm65, %v7747, 0
    %v7803 = vsel %vm65, %v7748, 0
    %v7806 = vsel %vm65, %v7749, 0
    %v7809 = vsel %vm65, %v7750, 0
    %v7812 = vsel %vm65, %v7751, 0
    %v7815 = vsel %vm65, %v7752, 0
    %v7818 = vsel %vm65, %v7753, 0
    %v7821 = vsel %vm65, %v7754, 0
    %v7824 = vsel %vm65, %v7755, 0
    %v7827 = vsel %vm65, %v7756, 0
    %v7830 = vsel %vm65, %v7757, 0
    %v7833 = vsel %vm65, %v7758, 0
    %v7836 = vsel %vm65, %v7759, 0
    %v7839 = vsel %vm65, %v7760, 0
    %v7842 = vsel %vm65, %v7761, 0
    %v7845 = vsel %vm65, %v7762, 0
    %v7848 = vsel %vm65, %v7763, 0
    %v7851 = vsel %vm65, %v7764, 0
    %7853 = vmatprep.subr.bf16.mxu0 0
    %7854 = vmatpush1.bf16.msra.mxu0 %v7777
    %7855 = vmatprep.subr.bf16.mxu0 0
    %7856 = vmatpush1.bf16.msra.mxu0 %v7778
    %7857 = vmatprep.subr.bf16.mxu0 0
    %7858 = vmatpush1.bf16.msra.mxu0 0
    %7859 = vmatprep.subr.bf16.mxu0 0
    %7860 = vmatpush1.bf16.msra.mxu0 0
    %7861 = vmatprep.subr.bf16.mxu0 0
    %7862 = vmatpush1.bf16.msra.mxu0 0
    %7863 = vmatprep.subr.bf16.mxu0 0
    %7864 = vmatpush1.bf16.msra.mxu0 0
    %7865 = vmatprep.subr.bf16.mxu0 0
    %7866 = vmatpush1.bf16.msra.mxu0 0
    %7867 = vmatprep.subr.bf16.mxu0 0
    %7868 = vmatpush1.bf16.msra.mxu0 0
    %7869 = vmatprep.subr.bf16.mxu0 0
    %7870 = vmatpush1.bf16.msra.mxu0 0
    %7871 = vmatprep.subr.bf16.mxu0 0
    %7872 = vmatpush1.bf16.msra.mxu0 0
    %7873 = vmatprep.subr.bf16.mxu0 0
    %7874 = vmatpush1.bf16.msra.mxu0 0
    %7875 = vmatprep.subr.bf16.mxu0 0
    %7876 = vmatpush1.bf16.msra.mxu0 0
    %7877 = vmatprep.subr.bf16.mxu0 0
    %7878 = vmatpush1.bf16.msra.mxu0 0
    %7879 = vmatprep.subr.bf16.mxu0 0
    %7880 = vmatpush1.bf16.msra.mxu0 0
    %7881 = vmatprep.subr.bf16.mxu0 0
    %7882 = vmatpush1.bf16.msra.mxu0 0
    %7883 = vmatprep.subr.bf16.mxu0 0
    %7884 = vmatpush1.bf16.msra.mxu0 0
    %7885 = vmatprep.mubr.bf16.mxu0 0
    %7886 = vmatmul.mubr.bf16.gmra.mrb[0].mxu0 %v7782
    %v7887 = vpop.f32.mrb[0].mxu0
    %v7888 = vadd.f32 0.0, %v7887
    %v7889 = vpop.f32.mrb[0].mxu0
    %v7890 = vpop.f32.mrb[0].mxu0
    %v7891 = vadd.f32 0.0, %v7890
    %v7892 = vpop.f32.mrb[0].mxu0
    %7893 = vmatprep.mubr.bf16.mxu0 0
    %7894 = vmatmul.mubr.bf16.gmra.mrb[0].mxu0 %v7785
    %v7895 = vpop.f32.mrb[0].mxu0
    %v7896 = vpop.f32.mrb[0].mxu0
    %v7897 = vpop.f32.mrb[0].mxu0
    %v7898 = vadd.f32 0.0, %v7897
    %v7899 = vpop.f32.mrb[0].mxu0
    %7900 = vmatprep.mubr.bf16.mxu0 0
    %7901 = vmatmul.mubr.bf16.gmra.mrb[0].mxu0 %v7788
    %v7902 = vpop.f32.mrb[0].mxu0
    %v7903 = vadd.f32 0.0, %v7902
    %v7904 = vpop.f32.mrb[0].mxu0
    %v7905 = vpop.f32.mrb[0].mxu0
    %v7906 = vpop.f32.mrb[0].mxu0
    %7907 = vmatprep.mubr.bf16.mxu0 0
    %7908 = vmatmul.mubr.bf16.gmra.mrb[0].mxu0 %v7791
    %v7909 = vpop.f32.mrb[0].mxu0
    %v7910 = vadd.f32 0.0, %v7909
    %v7911 = vpop.f32.mrb[0].mxu0
    %v7912 = vpop.f32.mrb[0].mxu0
    %v7913 = vadd.f32 0.0, %v7912
    %v7914 = vpop.f32.mrb[0].mxu0
    %7915 = vmatprep.mubr.bf16.mxu0 0
    %7916 = vmatmul.mubr.bf16.gmra.mrb[0].mxu0 %v7794
    %v7917 = vpop.f32.mrb[0].mxu0
    %v7918 = vpop.f32.mrb[0].mxu0
    %v7919 = vpop.f32.mrb[0].mxu0
    %v7920 = vadd.f32 0.0, %v7919
    %v7921 = vpop.f32.mrb[0].mxu0
    %7922 = vmatprep.mubr.bf16.mxu0 0
    %7923 = vmatmul.mubr.bf16.gmra.mrb[0].mxu0 %v7797
    %v7924 = vpop.f32.mrb[0].mxu0
    %v7925 = vadd.f32 0.0, %v7924
    %v7926 = vpop.f32.mrb[0].mxu0
    %v7927 = vpop.f32.mrb[0].mxu0
    %v7928 = vpop.f32.mrb[0].mxu0
    %7929 = vmatprep.mubr.bf16.mxu0 0
    %7930 = vmatmul.mubr.bf16.gmra.mrb[0].mxu0 %v7800
    %v7931 = vpop.f32.mrb[0].mxu0
    %v7932 = vadd.f32 0.0, %v7931
    %v7933 = vpop.f32.mrb[0].mxu0
    %v7934 = vpop.f32.mrb[0].mxu0
    %v7935 = vadd.f32 0.0, %v7934
    %v7936 = vpop.f32.mrb[0].mxu0
    %7937 = vmatprep.mubr.bf16.mxu0 0
    %7938 = vmatmul.mubr.bf16.gmra.mrb[0].mxu0 %v7803
    %v7939 = vpop.f32.mrb[0].mxu0
    %v7940 = vpop.f32.mrb[0].mxu0
    %v7941 = vpop.f32.mrb[0].mxu0
    %v7942 = vadd.f32 0.0, %v7941
    %v7943 = vpop.f32.mrb[0].mxu0
    %7944 = vmatprep.mubr.bf16.mxu0 0
    %7945 = vmatmul.mubr.bf16.gmra.mrb[0].mxu0 %v7806
    %v7946 = vpop.f32.mrb[0].mxu0
    %v7947 = vadd.f32 0.0, %v7946
    %v7948 = vpop.f32.mrb[0].mxu0
    %v7949 = vpop.f32.mrb[0].mxu0
    %v7950 = vpop.f32.mrb[0].mxu0
    %7951 = vmatprep.mubr.bf16.mxu0 0
    %7952 = vmatmul.mubr.bf16.gmra.mrb[0].mxu0 %v7809
    %v7953 = vpop.f32.mrb[0].mxu0
    %v7954 = vadd.f32 0.0, %v7953
    %v7955 = vpop.f32.mrb[0].mxu0
    %v7956 = vpop.f32.mrb[0].mxu0
    %v7957 = vadd.f32 0.0, %v7956
    %v7958 = vpop.f32.mrb[0].mxu0
    %7959 = vmatprep.mubr.bf16.mxu0 0
    %7960 = vmatmul.mubr.bf16.gmra.mrb[0].mxu0 %v7812
    %v7961 = vpop.f32.mrb[0].mxu0
    %v7962 = vpop.f32.mrb[0].mxu0
    %v7963 = vpop.f32.mrb[0].mxu0
    %v7964 = vadd.f32 0.0, %v7963
    %v7965 = vpop.f32.mrb[0].mxu0
    %7966 = vmatprep.mubr.bf16.mxu0 0
    %7967 = vmatmul.mubr.bf16.gmra.mrb[0].mxu0 %v7815
    %v7968 = vpop.f32.mrb[0].mxu0
    %v7969 = vadd.f32 0.0, %v7968
    %v7970 = vpop.f32.mrb[0].mxu0
    %v7971 = vpop.f32.mrb[0].mxu0
    %v7972 = vpop.f32.mrb[0].mxu0
    %7973 = vmatprep.mubr.bf16.mxu0 0
    %7974 = vmatmul.mubr.bf16.gmra.mrb[0].mxu0 %v7818
    %v7975 = vpop.f32.mrb[0].mxu0
    %v7976 = vadd.f32 0.0, %v7975
    %v7977 = vpop.f32.mrb[0].mxu0
    %v7978 = vpop.f32.mrb[0].mxu0
    %v7979 = vadd.f32 0.0, %v7978
    %v7980 = vpop.f32.mrb[0].mxu0
    %7981 = vmatprep.mubr.bf16.mxu0 0
    %7982 = vmatmul.mubr.bf16.gmra.mrb[0].mxu0 %v7821
    %v7983 = vpop.f32.mrb[0].mxu0
    %v7984 = vpop.f32.mrb[0].mxu0
    %v7985 = vpop.f32.mrb[0].mxu0
    %v7986 = vadd.f32 0.0, %v7985
    %v7987 = vpop.f32.mrb[0].mxu0
    %7988 = vmatprep.mubr.bf16.mxu0 0
    %7989 = vmatmul.mubr.bf16.gmra.mrb[0].mxu0 %v7824
    %v7990 = vpop.f32.mrb[0].mxu0
    %v7991 = vadd.f32 0.0, %v7990
    %v7992 = vpop.f32.mrb[0].mxu0
    %v7993 = vpop.f32.mrb[0].mxu0
    %v7994 = vpop.f32.mrb[0].mxu0
    %7995 = vmatprep.mubr.bf16.mxu0 0
    %7996 = vmatmul.mubr.bf16.gmra.mrb[0].mxu0 %v7827
    %v7997 = vpop.f32.mrb[0].mxu0
    %v7998 = vadd.f32 0.0, %v7997
    %v7999 = vpop.f32.mrb[0].mxu0
    %v8000 = vpop.f32.mrb[0].mxu0
    %v8001 = vadd.f32 0.0, %v8000
    %v8002 = vpop.f32.mrb[0].mxu0
    %8003 = vmatprep.mubr.bf16.mxu0 0
    %8004 = vmatmul.mubr.bf16.gmra.mrb[0].mxu0 %v7830
    %v8005 = vpop.f32.mrb[0].mxu0
    %v8006 = vpop.f32.mrb[0].mxu0
    %v8007 = vpop.f32.mrb[0].mxu0
    %v8008 = vadd.f32 0.0, %v8007
    %v8009 = vpop.f32.mrb[0].mxu0
    %8010 = vmatprep.mubr.bf16.mxu0 0
    %8011 = vmatmul.mubr.bf16.gmra.mrb[0].mxu0 %v7833
    %v8012 = vpop.f32.mrb[0].mxu0
    %v8013 = vadd.f32 0.0, %v8012
    %v8014 = vpop.f32.mrb[0].mxu0
    %v8015 = vpop.f32.mrb[0].mxu0
    %v8016 = vpop.f32.mrb[0].mxu0
    %8017 = vmatprep.mubr.bf16.mxu0 0
    %8018 = vmatmul.mubr.bf16.gmra.mrb[0].mxu0 %v7836
    %v8019 = vpop.f32.mrb[0].mxu0
    %v8020 = vadd.f32 0.0, %v8019
    %v8021 = vpop.f32.mrb[0].mxu0
    %v8022 = vpop.f32.mrb[0].mxu0
    %v8023 = vadd.f32 0.0, %v8022
    %v8024 = vpop.f32.mrb[0].mxu0
    %8025 = vmatprep.mubr.bf16.mxu0 0
    %8026 = vmatmul.mubr.bf16.gmra.mrb[0].mxu0 %v7839
    %v8027 = vpop.f32.mrb[0].mxu0
    %v8028 = vpop.f32.mrb[0].mxu0
    %v8029 = vpop.f32.mrb[0].mxu0
    %v8030 = vadd.f32 0.0, %v8029
    %v8031 = vpop.f32.mrb[0].mxu0
    %8032 = vmatprep.mubr.bf16.mxu0 0
    %8033 = vmatmul.mubr.bf16.gmra.mrb[0].mxu0 %v7842
    %v8034 = vpop.f32.mrb[0].mxu0
    %v8035 = vadd.f32 0.0, %v8034
    %v8036 = vpop.f32.mrb[0].mxu0
    %v8037 = vpop.f32.mrb[0].mxu0
    %v8038 = vpop.f32.mrb[0].mxu0
    %8039 = vmatprep.mubr.bf16.mxu0 0
    %8040 = vmatmul.mubr.bf16.gmra.mrb[0].mxu0 %v7845
    %v8041 = vpop.f32.mrb[0].mxu0
    %v8042 = vadd.f32 0.0, %v8041
    %v8043 = vpop.f32.mrb[0].mxu0
    %v8044 = vpop.f32.mrb[0].mxu0
    %v8045 = vadd.f32 0.0, %v8044
    %v8046 = vpop.f32.mrb[0].mxu0
    %8047 = vmatprep.mubr.bf16.mxu0 0
    %8048 = vmatmul.mubr.bf16.gmra.mrb[0].mxu0 %v7848
    %v8049 = vpop.f32.mrb[0].mxu0
    %v8050 = vpop.f32.mrb[0].mxu0
    %v8051 = vpop.f32.mrb[0].mxu0
    %v8052 = vadd.f32 0.0, %v8051
    %v8053 = vpop.f32.mrb[0].mxu0
    %8054 = vmatprep.mubr.bf16.mxu0 0
    %8055 = vmatmul.mubr.bf16.gmra.mrb[0].mxu0 %v7851
    %v8056 = vpop.f32.mrb[0].mxu0
    %v8057 = vadd.f32 0.0, %v8056
    %v8058 = vpop.f32.mrb[0].mxu0
    %v8059 = vpop.f32.mrb[0].mxu0
    %v8060 = vpop.f32.mrb[0].mxu0
    %8061 = vdwg.mxu0
    %v8062 = vadd.f32 %v7661, %v7888
    %v8063 = vadd.f32 %v7662, %v7891
    %v8064 = vadd.f32 %v7663, %v7898
    %v8065 = vadd.f32 %v7664, %v7903
    %v8066 = vadd.f32 %v7665, %v7910
    %v8067 = vadd.f32 %v7666, %v7913
    %v8068 = vadd.f32 %v7667, %v7920
    %v8069 = vadd.f32 %v7668, %v7925
    %v8070 = vadd.f32 %v7669, %v7932
    %v8071 = vadd.f32 %v7670, %v7935
    %v8072 = vadd.f32 %v7671, %v7942
    %v8073 = vadd.f32 %v7672, %v7947
    %v8074 = vadd.f32 %v7673, %v7954
    %v8075 = vadd.f32 %v7674, %v7957
    %v8076 = vadd.f32 %v7675, %v7964
    %v8077 = vadd.f32 %v7676, %v7969
    %v8078 = vadd.f32 %v7677, %v7976
    %v8079 = vadd.f32 %v7678, %v7979
    %v8080 = vadd.f32 %v7679, %v7986
    %v8081 = vadd.f32 %v7680, %v7991
    %v8082 = vadd.f32 %v7681, %v7998
    %v8083 = vadd.f32 %v7682, %v8001
    %v8084 = vadd.f32 %v7683, %v8008
    %v8085 = vadd.f32 %v7684, %v8013
    %v8086 = vadd.f32 %v7685, %v8020
    %v8087 = vadd.f32 %v7686, %v8023
    %v8088 = vadd.f32 %v7687, %v8030
    %v8089 = vadd.f32 %v7688, %v8035
    %v8090 = vadd.f32 %v7689, %v8042
    %v8091 = vadd.f32 %v7690, %v8045
    %v8092 = vadd.f32 %v7691, %v8052
    %v8093 = vadd.f32 %v7692, %v8057
    %v8094 = vld [vmem:[#allocation2 + $0x38] sm:$0xff]
    %v8095 = vld [vmem:[#allocation2 + $0x40] sm:$0xff]
    %v8096 = vld [vmem:[#allocation2 + $0x48] sm:$0xff]
    %v8097 = vld [vmem:[#allocation2 + $0x50] sm:$0xff]
    %v8098 = vld [vmem:[#allocation2 + $0x58] sm:$0xff]
    %v8099 = vld [vmem:[#allocation2 + $0x60] sm:$0xff]
    %v8100 = vld [vmem:[#allocation2 + $0x68] sm:$0xff]
    %v8101 = vld [vmem:[#allocation2 + $0x70] sm:$0xff]
    %v8102 = vld [vmem:[#allocation2 + $0x78] sm:$0xff]
    %v8103 = vld [vmem:[#allocation2 + $0x80] sm:$0xff]
    %v8104 = vld [vmem:[#allocation2 + $0x88] sm:$0xff]
    %v8105 = vld [vmem:[#allocation2 + $0x90] sm:$0xff]
    %v8106 = vld [vmem:[#allocation2 + $0x98] sm:$0xff]
    %v8107 = vld [vmem:[#allocation2 + $0xa0] sm:$0xff]
    %v8108 = vld [vmem:[#allocation2 + $0xa8] sm:$0xff]
    %v8109 = vld [vmem:[#allocation2 + $0xb0] sm:$0xff]
    %v8110 = vld [vmem:[#allocation2 + $0xb8] sm:$0xff]
    %v8111 = vld [vmem:[#allocation2 + $0xc0] sm:$0xff]
    %v8112 = vld [vmem:[#allocation2 + $0xc8] sm:$0xff]
    %v8113 = vld [vmem:[#allocation2 + $0xd0] sm:$0xff]
    %v8114 = vld [vmem:[#allocation2 + $0xd8] sm:$0xff]
    %v8115 = vld [vmem:[#allocation2 + $0xe0] sm:$0xff]
    %v8116 = vld [vmem:[#allocation2 + $0xe8] sm:$0xff]
    %v8117 = vld [vmem:[#allocation2 + $0xf0] sm:$0xff]
    %v8118 = vld [vmem:[#allocation2 + $0xf8] sm:$0xff]
    %v8119 = vld [vmem:[#allocation2 + $0x100] sm:$0xff]
    %v8120 = vld [vmem:[#allocation2 + $0x108] sm:$0xff]
    %v8121 = vld [vmem:[#allocation2 + $0x110] sm:$0xff]
    %v8122 = vld [vmem:[#allocation2 + $0x118] sm:$0xff]
    %v8123 = vld [vmem:[#allocation2 + $0x120] sm:$0xff]
    %v8124 = vld [vmem:[#allocation2 + $0x128] sm:$0xff]
    %v8125 = vld [vmem:[#allocation2 + $0x130] sm:$0xff]
    %v8126 = vld [vmem:[#allocation2 + $0x138] sm:$0xff]
    %v8127 = vld [vmem:[#allocation2 + $0x140] sm:$0xff]
    %v8128 = vld [vmem:[#allocation2 + $0x148] sm:$0xff]
    %v8129 = vld [vmem:[#allocation2 + $0x150] sm:$0xff]
    %v8130 = vld [vmem:[#allocation2 + $0x158] sm:$0xff]
    %v8131 = vld [vmem:[#allocation2 + $0x160] sm:$0xff]
    %v8132 = vld [vmem:[#allocation2 + $0x168] sm:$0xff]
    %v8133 = vld [vmem:[#allocation2 + $0x170] sm:$0xff]
    %v8134 = vld [vmem:[#allocation2 + $0x178] sm:$0xff]
    %v8135 = vld [vmem:[#allocation2 + $0x180] sm:$0xff]
    %v8136 = vld [vmem:[#allocation2 + $0x188] sm:$0xff]
    %v8137 = vld [vmem:[#allocation2 + $0x190] sm:$0xff]
    %v8138 = vld [vmem:[#allocation2 + $0x198] sm:$0xff]
    %v8139 = vld [vmem:[#allocation2 + $0x1a0] sm:$0xff]
    %v8140 = vld [vmem:[#allocation2 + $0x1a8] sm:$0xff]
    %v8141 = vld [vmem:[#allocation2 + $0x1b0] sm:$0xff]
    %v8142 = vpack.c.bf16 %v8095, %v8094
    %v8143 = vpack.c.bf16 %v8097, %v8096
    %v8144 = vpack.c.bf16 %v8099, %v8098
    %v8145 = vpack.c.bf16 %v8101, %v8100
    %v8146 = vpack.c.bf16 %v8103, %v8102
    %v8147 = vpack.c.bf16 %v8105, %v8104
    %v8148 = vpack.c.bf16 %v8107, %v8106
    %v8149 = vpack.c.bf16 %v8109, %v8108
    %v8150 = vpack.c.bf16 %v8111, %v8110
    %v8151 = vpack.c.bf16 %v8113, %v8112
    %v8152 = vpack.c.bf16 %v8115, %v8114
    %v8153 = vpack.c.bf16 %v8117, %v8116
    %v8154 = vpack.c.bf16 %v8119, %v8118
    %v8155 = vpack.c.bf16 %v8121, %v8120
    %v8156 = vpack.c.bf16 %v8123, %v8122
    %v8157 = vpack.c.bf16 %v8125, %v8124
    %v8158 = vpack.c.bf16 %v8127, %v8126
    %v8159 = vpack.c.bf16 %v8129, %v8128
    %v8160 = vpack.c.bf16 %v8131, %v8130
    %v8161 = vpack.c.bf16 %v8133, %v8132
    %v8162 = vpack.c.bf16 %v8135, %v8134
    %v8163 = vpack.c.bf16 %v8137, %v8136
    %v8164 = vpack.c.bf16 %v8139, %v8138
    %v8165 = vpack.c.bf16 %v8141, %v8140
    %v8166 = vld [vmem:[%s3438] sm:$0xf]
    %v8167 = vld [vmem:[%s3438 + $0x4] sm:$0xf]
    %v8168 = vld [vmem:[%s3438 + $0x8] sm:$0xf]
    %v8169 = vld [vmem:[%s3438 + $0xc] sm:$0xf]
    %v8174 = vunpack.c.l.b16 %v8166
    %v8175 = vunpack.c.l.b16 %v8167
    %v8176 = vunpack.c.l.b16 %v8168
    %v8177 = vunpack.c.l.b16 %v8169
    %v8178 = vpack.c.b16 %v8175, %v8174
    %v8179 = vpack.c.b16 %v8177, %v8176
    %v8183 = vsel %vm65, %v8142, 0
    %v8186 = vsel %vm65, %v8143, 0
    %v8189 = vsel %vm65, %v8144, 0
    %v8192 = vsel %vm65, %v8145, 0
    %v8195 = vsel %vm65, %v8146, 0
    %v8198 = vsel %vm65, %v8147, 0
    %v8201 = vsel %vm65, %v8148, 0
    %v8204 = vsel %vm65, %v8149, 0
    %v8207 = vsel %vm65, %v8150, 0
    %v8210 = vsel %vm65, %v8151, 0
    %v8213 = vsel %vm65, %v8152, 0
    %v8216 = vsel %vm65, %v8153, 0
    %v8219 = vsel %vm65, %v8154, 0
    %v8222 = vsel %vm65, %v8155, 0
    %v8225 = vsel %vm65, %v8156, 0
    %v8228 = vsel %vm65, %v8157, 0
    %v8231 = vsel %vm65, %v8158, 0
    %v8234 = vsel %vm65, %v8159, 0
    %v8237 = vsel %vm65, %v8160, 0
    %v8240 = vsel %vm65, %v8161, 0
    %v8243 = vsel %vm65, %v8162, 0
    %v8246 = vsel %vm65, %v8163, 0
    %v8249 = vsel %vm65, %v8164, 0
    %v8252 = vsel %vm65, %v8165, 0
    %8254 = vmatprep.subr.bf16.mxu0 0
    %8255 = vmatpush1.bf16.msra.mxu0 %v8178
    %8256 = vmatprep.subr.bf16.mxu0 0
    %8257 = vmatpush1.bf16.msra.mxu0 %v8179
    %8258 = vmatprep.subr.bf16.mxu0 0
    %8259 = vmatpush1.bf16.msra.mxu0 0
    %8260 = vmatprep.subr.bf16.mxu0 0
    %8261 = vmatpush1.bf16.msra.mxu0 0
    %8262 = vmatprep.subr.bf16.mxu0 0
    %8263 = vmatpush1.bf16.msra.mxu0 0
    %8264 = vmatprep.subr.bf16.mxu0 0
    %8265 = vmatpush1.bf16.msra.mxu0 0
    %8266 = vmatprep.subr.bf16.mxu0 0
    %8267 = vmatpush1.bf16.msra.mxu0 0
    %8268 = vmatprep.subr.bf16.mxu0 0
    %8269 = vmatpush1.bf16.msra.mxu0 0
    %8270 = vmatprep.subr.bf16.mxu0 0
    %8271 = vmatpush1.bf16.msra.mxu0 0
    %8272 = vmatprep.subr.bf16.mxu0 0
    %8273 = vmatpush1.bf16.msra.mxu0 0
    %8274 = vmatprep.subr.bf16.mxu0 0
    %8275 = vmatpush1.bf16.msra.mxu0 0
    %8276 = vmatprep.subr.bf16.mxu0 0
    %8277 = vmatpush1.bf16.msra.mxu0 0
    %8278 = vmatprep.subr.bf16.mxu0 0
    %8279 = vmatpush1.bf16.msra.mxu0 0
    %8280 = vmatprep.subr.bf16.mxu0 0
    %8281 = vmatpush1.bf16.msra.mxu0 0
    %8282 = vmatprep.subr.bf16.mxu0 0
    %8283 = vmatpush1.bf16.msra.mxu0 0
    %8284 = vmatprep.subr.bf16.mxu0 0
    %8285 = vmatpush1.bf16.msra.mxu0 0
    %8286 = vmatprep.mubr.bf16.mxu0 0
    %8287 = vmatmul.mubr.bf16.gmra.mrb[0].mxu0 %v8183
    %v8288 = vpop.f32.mrb[0].mxu0
    %v8289 = vadd.f32 0.0, %v8288
    %v8290 = vpop.f32.mrb[0].mxu0
    %v8291 = vpop.f32.mrb[0].mxu0
    %v8292 = vadd.f32 0.0, %v8291
    %v8293 = vpop.f32.mrb[0].mxu0
    %8294 = vmatprep.mubr.bf16.mxu0 0
    %8295 = vmatmul.mubr.bf16.gmra.mrb[0].mxu0 %v8186
    %v8296 = vpop.f32.mrb[0].mxu0
    %v8297 = vpop.f32.mrb[0].mxu0
    %v8298 = vpop.f32.mrb[0].mxu0
    %v8299 = vadd.f32 0.0, %v8298
    %v8300 = vpop.f32.mrb[0].mxu0
    %8301 = vmatprep.mubr.bf16.mxu0 0
    %8302 = vmatmul.mubr.bf16.gmra.mrb[0].mxu0 %v8189
    %v8303 = vpop.f32.mrb[0].mxu0
    %v8304 = vadd.f32 0.0, %v8303
    %v8305 = vpop.f32.mrb[0].mxu0
    %v8306 = vpop.f32.mrb[0].mxu0
    %v8307 = vpop.f32.mrb[0].mxu0
    %8308 = vmatprep.mubr.bf16.mxu0 0
    %8309 = vmatmul.mubr.bf16.gmra.mrb[0].mxu0 %v8192
    %v8310 = vpop.f32.mrb[0].mxu0
    %v8311 = vadd.f32 0.0, %v8310
    %v8312 = vpop.f32.mrb[0].mxu0
    %v8313 = vpop.f32.mrb[0].mxu0
    %v8314 = vadd.f32 0.0, %v8313
    %v8315 = vpop.f32.mrb[0].mxu0
    %8316 = vmatprep.mubr.bf16.mxu0 0
    %8317 = vmatmul.mubr.bf16.gmra.mrb[0].mxu0 %v8195
    %v8318 = vpop.f32.mrb[0].mxu0
    %v8319 = vpop.f32.mrb[0].mxu0
    %v8320 = vpop.f32.mrb[0].mxu0
    %v8321 = vadd.f32 0.0, %v8320
    %v8322 = vpop.f32.mrb[0].mxu0
    %8323 = vmatprep.mubr.bf16.mxu0 0
    %8324 = vmatmul.mubr.bf16.gmra.mrb[0].mxu0 %v8198
    %v8325 = vpop.f32.mrb[0].mxu0
    %v8326 = vadd.f32 0.0, %v8325
    %v8327 = vpop.f32.mrb[0].mxu0
    %v8328 = vpop.f32.mrb[0].mxu0
    %v8329 = vpop.f32.mrb[0].mxu0
    %8330 = vmatprep.mubr.bf16.mxu0 0
    %8331 = vmatmul.mubr.bf16.gmra.mrb[0].mxu0 %v8201
    %v8332 = vpop.f32.mrb[0].mxu0
    %v8333 = vadd.f32 0.0, %v8332
    %v8334 = vpop.f32.mrb[0].mxu0
    %v8335 = vpop.f32.mrb[0].mxu0
    %v8336 = vadd.f32 0.0, %v8335
    %v8337 = vpop.f32.mrb[0].mxu0
    %8338 = vmatprep.mubr.bf16.mxu0 0
    %8339 = vmatmul.mubr.bf16.gmra.mrb[0].mxu0 %v8204
    %v8340 = vpop.f32.mrb[0].mxu0
    %v8341 = vpop.f32.mrb[0].mxu0
    %v8342 = vpop.f32.mrb[0].mxu0
    %v8343 = vadd.f32 0.0, %v8342
    %v8344 = vpop.f32.mrb[0].mxu0
    %8345 = vmatprep.mubr.bf16.mxu0 0
    %8346 = vmatmul.mubr.bf16.gmra.mrb[0].mxu0 %v8207
    %v8347 = vpop.f32.mrb[0].mxu0
    %v8348 = vadd.f32 0.0, %v8347
    %v8349 = vpop.f32.mrb[0].mxu0
    %v8350 = vpop.f32.mrb[0].mxu0
    %v8351 = vpop.f32.mrb[0].mxu0
    %8352 = vmatprep.mubr.bf16.mxu0 0
    %8353 = vmatmul.mubr.bf16.gmra.mrb[0].mxu0 %v8210
    %v8354 = vpop.f32.mrb[0].mxu0
    %v8355 = vadd.f32 0.0, %v8354
    %v8356 = vpop.f32.mrb[0].mxu0
    %v8357 = vpop.f32.mrb[0].mxu0
    %v8358 = vadd.f32 0.0, %v8357
    %v8359 = vpop.f32.mrb[0].mxu0
    %8360 = vmatprep.mubr.bf16.mxu0 0
    %8361 = vmatmul.mubr.bf16.gmra.mrb[0].mxu0 %v8213
    %v8362 = vpop.f32.mrb[0].mxu0
    %v8363 = vpop.f32.mrb[0].mxu0
    %v8364 = vpop.f32.mrb[0].mxu0
    %v8365 = vadd.f32 0.0, %v8364
    %v8366 = vpop.f32.mrb[0].mxu0
    %8367 = vmatprep.mubr.bf16.mxu0 0
    %8368 = vmatmul.mubr.bf16.gmra.mrb[0].mxu0 %v8216
    %v8369 = vpop.f32.mrb[0].mxu0
    %v8370 = vadd.f32 0.0, %v8369
    %v8371 = vpop.f32.mrb[0].mxu0
    %v8372 = vpop.f32.mrb[0].mxu0
    %v8373 = vpop.f32.mrb[0].mxu0
    %8374 = vmatprep.mubr.bf16.mxu0 0
    %8375 = vmatmul.mubr.bf16.gmra.mrb[0].mxu0 %v8219
    %v8376 = vpop.f32.mrb[0].mxu0
    %v8377 = vadd.f32 0.0, %v8376
    %v8378 = vpop.f32.mrb[0].mxu0
    %v8379 = vpop.f32.mrb[0].mxu0
    %v8380 = vadd.f32 0.0, %v8379
    %v8381 = vpop.f32.mrb[0].mxu0
    %8382 = vmatprep.mubr.bf16.mxu0 0
    %8383 = vmatmul.mubr.bf16.gmra.mrb[0].mxu0 %v8222
    %v8384 = vpop.f32.mrb[0].mxu0
    %v8385 = vpop.f32.mrb[0].mxu0
    %v8386 = vpop.f32.mrb[0].mxu0
    %v8387 = vadd.f32 0.0, %v8386
    %v8388 = vpop.f32.mrb[0].mxu0
    %8389 = vmatprep.mubr.bf16.mxu0 0
    %8390 = vmatmul.mubr.bf16.gmra.mrb[0].mxu0 %v8225
    %v8391 = vpop.f32.mrb[0].mxu0
    %v8392 = vadd.f32 0.0, %v8391
    %v8393 = vpop.f32.mrb[0].mxu0
    %v8394 = vpop.f32.mrb[0].mxu0
    %v8395 = vpop.f32.mrb[0].mxu0
    %8396 = vmatprep.mubr.bf16.mxu0 0
    %8397 = vmatmul.mubr.bf16.gmra.mrb[0].mxu0 %v8228
    %v8398 = vpop.f32.mrb[0].mxu0
    %v8399 = vadd.f32 0.0, %v8398
    %v8400 = vpop.f32.mrb[0].mxu0
    %v8401 = vpop.f32.mrb[0].mxu0
    %v8402 = vadd.f32 0.0, %v8401
    %v8403 = vpop.f32.mrb[0].mxu0
    %8404 = vmatprep.mubr.bf16.mxu0 0
    %8405 = vmatmul.mubr.bf16.gmra.mrb[0].mxu0 %v8231
    %v8406 = vpop.f32.mrb[0].mxu0
    %v8407 = vpop.f32.mrb[0].mxu0
    %v8408 = vpop.f32.mrb[0].mxu0
    %v8409 = vadd.f32 0.0, %v8408
    %v8410 = vpop.f32.mrb[0].mxu0
    %8411 = vmatprep.mubr.bf16.mxu0 0
    %8412 = vmatmul.mubr.bf16.gmra.mrb[0].mxu0 %v8234
    %v8413 = vpop.f32.mrb[0].mxu0
    %v8414 = vadd.f32 0.0, %v8413
    %v8415 = vpop.f32.mrb[0].mxu0
    %v8416 = vpop.f32.mrb[0].mxu0
    %v8417 = vpop.f32.mrb[0].mxu0
    %8418 = vmatprep.mubr.bf16.mxu0 0
    %8419 = vmatmul.mubr.bf16.gmra.mrb[0].mxu0 %v8237
    %v8420 = vpop.f32.mrb[0].mxu0
    %v8421 = vadd.f32 0.0, %v8420
    %v8422 = vpop.f32.mrb[0].mxu0
    %v8423 = vpop.f32.mrb[0].mxu0
    %v8424 = vadd.f32 0.0, %v8423
    %v8425 = vpop.f32.mrb[0].mxu0
    %8426 = vmatprep.mubr.bf16.mxu0 0
    %8427 = vmatmul.mubr.bf16.gmra.mrb[0].mxu0 %v8240
    %v8428 = vpop.f32.mrb[0].mxu0
    %v8429 = vpop.f32.mrb[0].mxu0
    %v8430 = vpop.f32.mrb[0].mxu0
    %v8431 = vadd.f32 0.0, %v8430
    %v8432 = vpop.f32.mrb[0].mxu0
    %8433 = vmatprep.mubr.bf16.mxu0 0
    %8434 = vmatmul.mubr.bf16.gmra.mrb[0].mxu0 %v8243
    %v8435 = vpop.f32.mrb[0].mxu0
    %v8436 = vadd.f32 0.0, %v8435
    %v8437 = vpop.f32.mrb[0].mxu0
    %v8438 = vpop.f32.mrb[0].mxu0
    %v8439 = vpop.f32.mrb[0].mxu0
    %8440 = vmatprep.mubr.bf16.mxu0 0
    %8441 = vmatmul.mubr.bf16.gmra.mrb[0].mxu0 %v8246
    %v8442 = vpop.f32.mrb[0].mxu0
    %v8443 = vadd.f32 0.0, %v8442
    %v8444 = vpop.f32.mrb[0].mxu0
    %v8445 = vpop.f32.mrb[0].mxu0
    %v8446 = vadd.f32 0.0, %v8445
    %v8447 = vpop.f32.mrb[0].mxu0
    %8448 = vmatprep.mubr.bf16.mxu0 0
    %8449 = vmatmul.mubr.bf16.gmra.mrb[0].mxu0 %v8249
    %v8450 = vpop.f32.mrb[0].mxu0
    %v8451 = vpop.f32.mrb[0].mxu0
    %v8452 = vpop.f32.mrb[0].mxu0
    %v8453 = vadd.f32 0.0, %v8452
    %v8454 = vpop.f32.mrb[0].mxu0
    %8455 = vmatprep.mubr.bf16.mxu0 0
    %8456 = vmatmul.mubr.bf16.gmra.mrb[0].mxu0 %v8252
    %v8457 = vpop.f32.mrb[0].mxu0
    %v8458 = vadd.f32 0.0, %v8457
    %v8459 = vpop.f32.mrb[0].mxu0
    %v8460 = vpop.f32.mrb[0].mxu0
    %v8461 = vpop.f32.mrb[0].mxu0
    %8462 = vdwg.mxu0
    %v8463 = vadd.f32 %v8062, %v8289
    %v8464 = vadd.f32 %v8063, %v8292
    %v8465 = vadd.f32 %v8064, %v8299
    %v8466 = vadd.f32 %v8065, %v8304
    %v8467 = vadd.f32 %v8066, %v8311
    %v8468 = vadd.f32 %v8067, %v8314
    %v8469 = vadd.f32 %v8068, %v8321
    %v8470 = vadd.f32 %v8069, %v8326
    %v8471 = vadd.f32 %v8070, %v8333
    %v8472 = vadd.f32 %v8071, %v8336
    %v8473 = vadd.f32 %v8072, %v8343
    %v8474 = vadd.f32 %v8073, %v8348
    %v8475 = vadd.f32 %v8074, %v8355
    %v8476 = vadd.f32 %v8075, %v8358
    %v8477 = vadd.f32 %v8076, %v8365
    %v8478 = vadd.f32 %v8077, %v8370
    %v8479 = vadd.f32 %v8078, %v8377
    %v8480 = vadd.f32 %v8079, %v8380
    %v8481 = vadd.f32 %v8080, %v8387
    %v8482 = vadd.f32 %v8081, %v8392
    %v8483 = vadd.f32 %v8082, %v8399
    %v8484 = vadd.f32 %v8083, %v8402
    %v8485 = vadd.f32 %v8084, %v8409
    %v8486 = vadd.f32 %v8085, %v8414
    %v8487 = vadd.f32 %v8086, %v8421
    %v8488 = vadd.f32 %v8087, %v8424
    %v8489 = vadd.f32 %v8088, %v8431
    %v8490 = vadd.f32 %v8089, %v8436
    %v8491 = vadd.f32 %v8090, %v8443
    %v8492 = vadd.f32 %v8091, %v8446
    %v8493 = vadd.f32 %v8092, %v8453
    %v8494 = vadd.f32 %v8093, %v8458
    %v8495 = vld [vmem:[#allocation2 + $0x39] sm:$0xff]
    %v8496 = vld [vmem:[#allocation2 + $0x41] sm:$0xff]
    %v8497 = vld [vmem:[#allocation2 + $0x49] sm:$0xff]
    %v8498 = vld [vmem:[#allocation2 + $0x51] sm:$0xff]
    %v8499 = vld [vmem:[#allocation2 + $0x59] sm:$0xff]
    %v8500 = vld [vmem:[#allocation2 + $0x61] sm:$0xff]
    %v8501 = vld [vmem:[#allocation2 + $0x69] sm:$0xff]
    %v8502 = vld [vmem:[#allocation2 + $0x71] sm:$0xff]
    %v8503 = vld [vmem:[#allocation2 + $0x79] sm:$0xff]
    %v8504 = vld [vmem:[#allocation2 + $0x81] sm:$0xff]
    %v8505 = vld [vmem:[#allocation2 + $0x89] sm:$0xff]
    %v8506 = vld [vmem:[#allocation2 + $0x91] sm:$0xff]
    %v8507 = vld [vmem:[#allocation2 + $0x99] sm:$0xff]
    %v8508 = vld [vmem:[#allocation2 + $0xa1] sm:$0xff]
    %v8509 = vld [vmem:[#allocation2 + $0xa9] sm:$0xff]
    %v8510 = vld [vmem:[#allocation2 + $0xb1] sm:$0xff]
    %v8511 = vld [vmem:[#allocation2 + $0xb9] sm:$0xff]
    %v8512 = vld [vmem:[#allocation2 + $0xc1] sm:$0xff]
    %v8513 = vld [vmem:[#allocation2 + $0xc9] sm:$0xff]
    %v8514 = vld [vmem:[#allocation2 + $0xd1] sm:$0xff]
    %v8515 = vld [vmem:[#allocation2 + $0xd9] sm:$0xff]
    %v8516 = vld [vmem:[#allocation2 + $0xe1] sm:$0xff]
    %v8517 = vld [vmem:[#allocation2 + $0xe9] sm:$0xff]
    %v8518 = vld [vmem:[#allocation2 + $0xf1] sm:$0xff]
    %v8519 = vld [vmem:[#allocation2 + $0xf9] sm:$0xff]
    %v8520 = vld [vmem:[#allocation2 + $0x101] sm:$0xff]
    %v8521 = vld [vmem:[#allocation2 + $0x109] sm:$0xff]
    %v8522 = vld [vmem:[#allocation2 + $0x111] sm:$0xff]
    %v8523 = vld [vmem:[#allocation2 + $0x119] sm:$0xff]
    %v8524 = vld [vmem:[#allocation2 + $0x121] sm:$0xff]
    %v8525 = vld [vmem:[#allocation2 + $0x129] sm:$0xff]
    %v8526 = vld [vmem:[#allocation2 + $0x131] sm:$0xff]
    %v8527 = vld [vmem:[#allocation2 + $0x139] sm:$0xff]
    %v8528 = vld [vmem:[#allocation2 + $0x141] sm:$0xff]
    %v8529 = vld [vmem:[#allocation2 + $0x149] sm:$0xff]
    %v8530 = vld [vmem:[#allocation2 + $0x151] sm:$0xff]
    %v8531 = vld [vmem:[#allocation2 + $0x159] sm:$0xff]
    %v8532 = vld [vmem:[#allocation2 + $0x161] sm:$0xff]
    %v8533 = vld [vmem:[#allocation2 + $0x169] sm:$0xff]
    %v8534 = vld [vmem:[#allocation2 + $0x171] sm:$0xff]
    %v8535 = vld [vmem:[#allocation2 + $0x179] sm:$0xff]
    %v8536 = vld [vmem:[#allocation2 + $0x181] sm:$0xff]
    %v8537 = vld [vmem:[#allocation2 + $0x189] sm:$0xff]
    %v8538 = vld [vmem:[#allocation2 + $0x191] sm:$0xff]
    %v8539 = vld [vmem:[#allocation2 + $0x199] sm:$0xff]
    %v8540 = vld [vmem:[#allocation2 + $0x1a1] sm:$0xff]
    %v8541 = vld [vmem:[#allocation2 + $0x1a9] sm:$0xff]
    %v8542 = vld [vmem:[#allocation2 + $0x1b1] sm:$0xff]
    %v8543 = vpack.c.bf16 %v8496, %v8495
    %v8544 = vpack.c.bf16 %v8498, %v8497
    %v8545 = vpack.c.bf16 %v8500, %v8499
    %v8546 = vpack.c.bf16 %v8502, %v8501
    %v8547 = vpack.c.bf16 %v8504, %v8503
    %v8548 = vpack.c.bf16 %v8506, %v8505
    %v8549 = vpack.c.bf16 %v8508, %v8507
    %v8550 = vpack.c.bf16 %v8510, %v8509
    %v8551 = vpack.c.bf16 %v8512, %v8511
    %v8552 = vpack.c.bf16 %v8514, %v8513
    %v8553 = vpack.c.bf16 %v8516, %v8515
    %v8554 = vpack.c.bf16 %v8518, %v8517
    %v8555 = vpack.c.bf16 %v8520, %v8519
    %v8556 = vpack.c.bf16 %v8522, %v8521
    %v8557 = vpack.c.bf16 %v8524, %v8523
    %v8558 = vpack.c.bf16 %v8526, %v8525
    %v8559 = vpack.c.bf16 %v8528, %v8527
    %v8560 = vpack.c.bf16 %v8530, %v8529
    %v8561 = vpack.c.bf16 %v8532, %v8531
    %v8562 = vpack.c.bf16 %v8534, %v8533
    %v8563 = vpack.c.bf16 %v8536, %v8535
    %v8564 = vpack.c.bf16 %v8538, %v8537
    %v8565 = vpack.c.bf16 %v8540, %v8539
    %v8566 = vpack.c.bf16 %v8542, %v8541
    %v8567 = vld [vmem:[%s3840] sm:$0xf]
    %v8568 = vld [vmem:[%s3840 + $0x4] sm:$0xf]
    %v8569 = vld [vmem:[%s3840 + $0x8] sm:$0xf]
    %v8570 = vld [vmem:[%s3840 + $0xc] sm:$0xf]
    %v8575 = vunpack.c.l.b16 %v8567
    %v8576 = vunpack.c.l.b16 %v8568
    %v8577 = vunpack.c.l.b16 %v8569
    %v8578 = vunpack.c.l.b16 %v8570
    %v8579 = vpack.c.b16 %v8576, %v8575
    %v8580 = vpack.c.b16 %v8578, %v8577
    %v8584 = vsel %vm65, %v8543, 0
    %v8587 = vsel %vm65, %v8544, 0
    %v8590 = vsel %vm65, %v8545, 0
    %v8593 = vsel %vm65, %v8546, 0
    %v8596 = vsel %vm65, %v8547, 0
    %v8599 = vsel %vm65, %v8548, 0
    %v8602 = vsel %vm65, %v8549, 0
    %v8605 = vsel %vm65, %v8550, 0
    %v8608 = vsel %vm65, %v8551, 0
    %v8611 = vsel %vm65, %v8552, 0
    %v8614 = vsel %vm65, %v8553, 0
    %v8617 = vsel %vm65, %v8554, 0
    %v8620 = vsel %vm65, %v8555, 0
    %v8623 = vsel %vm65, %v8556, 0
    %v8626 = vsel %vm65, %v8557, 0
    %v8629 = vsel %vm65, %v8558, 0
    %v8632 = vsel %vm65, %v8559, 0
    %v8635 = vsel %vm65, %v8560, 0
    %v8638 = vsel %vm65, %v8561, 0
    %v8641 = vsel %vm65, %v8562, 0
    %v8644 = vsel %vm65, %v8563, 0
    %v8647 = vsel %vm65, %v8564, 0
    %v8650 = vsel %vm65, %v8565, 0
    %v8653 = vsel %vm65, %v8566, 0
    %8655 = vmatprep.subr.bf16.mxu0 0
    %8656 = vmatpush1.bf16.msra.mxu0 %v8579
    %8657 = vmatprep.subr.bf16.mxu0 0
    %8658 = vmatpush1.bf16.msra.mxu0 %v8580
    %8659 = vmatprep.subr.bf16.mxu0 0
    %8660 = vmatpush1.bf16.msra.mxu0 0
    %8661 = vmatprep.subr.bf16.mxu0 0
    %8662 = vmatpush1.bf16.msra.mxu0 0
    %8663 = vmatprep.subr.bf16.mxu0 0
    %8664 = vmatpush1.bf16.msra.mxu0 0
    %8665 = vmatprep.subr.bf16.mxu0 0
    %8666 = vmatpush1.bf16.msra.mxu0 0
    %8667 = vmatprep.subr.bf16.mxu0 0
    %8668 = vmatpush1.bf16.msra.mxu0 0
    %8669 = vmatprep.subr.bf16.mxu0 0
    %8670 = vmatpush1.bf16.msra.mxu0 0
    %8671 = vmatprep.subr.bf16.mxu0 0
    %8672 = vmatpush1.bf16.msra.mxu0 0
    %8673 = vmatprep.subr.bf16.mxu0 0
    %8674 = vmatpush1.bf16.msra.mxu0 0
    %8675 = vmatprep.subr.bf16.mxu0 0
    %8676 = vmatpush1.bf16.msra.mxu0 0
    %8677 = vmatprep.subr.bf16.mxu0 0
    %8678 = vmatpush1.bf16.msra.mxu0 0
    %8679 = vmatprep.subr.bf16.mxu0 0
    %8680 = vmatpush1.bf16.msra.mxu0 0
    %8681 = vmatprep.subr.bf16.mxu0 0
    %8682 = vmatpush1.bf16.msra.mxu0 0
    %8683 = vmatprep.subr.bf16.mxu0 0
    %8684 = vmatpush1.bf16.msra.mxu0 0
    %8685 = vmatprep.subr.bf16.mxu0 0
    %8686 = vmatpush1.bf16.msra.mxu0 0
    %8687 = vmatprep.mubr.bf16.mxu0 0
    %8688 = vmatmul.mubr.bf16.gmra.mrb[0].mxu0 %v8584
    %v8689 = vpop.f32.mrb[0].mxu0
    %v8690 = vadd.f32 0.0, %v8689
    %v8691 = vpop.f32.mrb[0].mxu0
    %v8692 = vpop.f32.mrb[0].mxu0
    %v8693 = vadd.f32 0.0, %v8692
    %v8694 = vpop.f32.mrb[0].mxu0
    %8695 = vmatprep.mubr.bf16.mxu0 0
    %8696 = vmatmul.mubr.bf16.gmra.mrb[0].mxu0 %v8587
    %v8697 = vpop.f32.mrb[0].mxu0
    %v8698 = vpop.f32.mrb[0].mxu0
    %v8699 = vpop.f32.mrb[0].mxu0
    %v8700 = vadd.f32 0.0, %v8699
    %v8701 = vpop.f32.mrb[0].mxu0
    %8702 = vmatprep.mubr.bf16.mxu0 0
    %8703 = vmatmul.mubr.bf16.gmra.mrb[0].mxu0 %v8590
    %v8704 = vpop.f32.mrb[0].mxu0
    %v8705 = vadd.f32 0.0, %v8704
    %v8706 = vpop.f32.mrb[0].mxu0
    %v8707 = vpop.f32.mrb[0].mxu0
    %v8708 = vpop.f32.mrb[0].mxu0
    %8709 = vmatprep.mubr.bf16.mxu0 0
    %8710 = vmatmul.mubr.bf16.gmra.mrb[0].mxu0 %v8593
    %v8711 = vpop.f32.mrb[0].mxu0
    %v8712 = vadd.f32 0.0, %v8711
    %v8713 = vpop.f32.mrb[0].mxu0
    %v8714 = vpop.f32.mrb[0].mxu0
    %v8715 = vadd.f32 0.0, %v8714
    %v8716 = vpop.f32.mrb[0].mxu0
    %8717 = vmatprep.mubr.bf16.mxu0 0
    %8718 = vmatmul.mubr.bf16.gmra.mrb[0].mxu0 %v8596
    %v8719 = vpop.f32.mrb[0].mxu0
    %v8720 = vpop.f32.mrb[0].mxu0
    %v8721 = vpop.f32.mrb[0].mxu0
    %v8722 = vadd.f32 0.0, %v8721
    %v8723 = vpop.f32.mrb[0].mxu0
    %8724 = vmatprep.mubr.bf16.mxu0 0
    %8725 = vmatmul.mubr.bf16.gmra.mrb[0].mxu0 %v8599
    %v8726 = vpop.f32.mrb[0].mxu0
    %v8727 = vadd.f32 0.0, %v8726
    %v8728 = vpop.f32.mrb[0].mxu0
    %v8729 = vpop.f32.mrb[0].mxu0
    %v8730 = vpop.f32.mrb[0].mxu0
    %8731 = vmatprep.mubr.bf16.mxu0 0
    %8732 = vmatmul.mubr.bf16.gmra.mrb[0].mxu0 %v8602
    %v8733 = vpop.f32.mrb[0].mxu0
    %v8734 = vadd.f32 0.0, %v8733
    %v8735 = vpop.f32.mrb[0].mxu0
    %v8736 = vpop.f32.mrb[0].mxu0
    %v8737 = vadd.f32 0.0, %v8736
    %v8738 = vpop.f32.mrb[0].mxu0
    %8739 = vmatprep.mubr.bf16.mxu0 0
    %8740 = vmatmul.mubr.bf16.gmra.mrb[0].mxu0 %v8605
    %v8741 = vpop.f32.mrb[0].mxu0
    %v8742 = vpop.f32.mrb[0].mxu0
    %v8743 = vpop.f32.mrb[0].mxu0
    %v8744 = vadd.f32 0.0, %v8743
    %v8745 = vpop.f32.mrb[0].mxu0
    %8746 = vmatprep.mubr.bf16.mxu0 0
    %8747 = vmatmul.mubr.bf16.gmra.mrb[0].mxu0 %v8608
    %v8748 = vpop.f32.mrb[0].mxu0
    %v8749 = vadd.f32 0.0, %v8748
    %v8750 = vpop.f32.mrb[0].mxu0
    %v8751 = vpop.f32.mrb[0].mxu0
    %v8752 = vpop.f32.mrb[0].mxu0
    %8753 = vmatprep.mubr.bf16.mxu0 0
    %8754 = vmatmul.mubr.bf16.gmra.mrb[0].mxu0 %v8611
    %v8755 = vpop.f32.mrb[0].mxu0
    %v8756 = vadd.f32 0.0, %v8755
    %v8757 = vpop.f32.mrb[0].mxu0
    %v8758 = vpop.f32.mrb[0].mxu0
    %v8759 = vadd.f32 0.0, %v8758
    %v8760 = vpop.f32.mrb[0].mxu0
    %8761 = vmatprep.mubr.bf16.mxu0 0
    %8762 = vmatmul.mubr.bf16.gmra.mrb[0].mxu0 %v8614
    %v8763 = vpop.f32.mrb[0].mxu0
    %v8764 = vpop.f32.mrb[0].mxu0
    %v8765 = vpop.f32.mrb[0].mxu0
    %v8766 = vadd.f32 0.0, %v8765
    %v8767 = vpop.f32.mrb[0].mxu0
    %8768 = vmatprep.mubr.bf16.mxu0 0
    %8769 = vmatmul.mubr.bf16.gmra.mrb[0].mxu0 %v8617
    %v8770 = vpop.f32.mrb[0].mxu0
    %v8771 = vadd.f32 0.0, %v8770
    %v8772 = vpop.f32.mrb[0].mxu0
    %v8773 = vpop.f32.mrb[0].mxu0
    %v8774 = vpop.f32.mrb[0].mxu0
    %8775 = vmatprep.mubr.bf16.mxu0 0
    %8776 = vmatmul.mubr.bf16.gmra.mrb[0].mxu0 %v8620
    %v8777 = vpop.f32.mrb[0].mxu0
    %v8778 = vadd.f32 0.0, %v8777
    %v8779 = vpop.f32.mrb[0].mxu0
    %v8780 = vpop.f32.mrb[0].mxu0
    %v8781 = vadd.f32 0.0, %v8780
    %v8782 = vpop.f32.mrb[0].mxu0
    %8783 = vmatprep.mubr.bf16.mxu0 0
    %8784 = vmatmul.mubr.bf16.gmra.mrb[0].mxu0 %v8623
    %v8785 = vpop.f32.mrb[0].mxu0
    %v8786 = vpop.f32.mrb[0].mxu0
    %v8787 = vpop.f32.mrb[0].mxu0
    %v8788 = vadd.f32 0.0, %v8787
    %v8789 = vpop.f32.mrb[0].mxu0
    %8790 = vmatprep.mubr.bf16.mxu0 0
    %8791 = vmatmul.mubr.bf16.gmra.mrb[0].mxu0 %v8626
    %v8792 = vpop.f32.mrb[0].mxu0
    %v8793 = vadd.f32 0.0, %v8792
    %v8794 = vpop.f32.mrb[0].mxu0
    %v8795 = vpop.f32.mrb[0].mxu0
    %v8796 = vpop.f32.mrb[0].mxu0
    %8797 = vmatprep.mubr.bf16.mxu0 0
    %8798 = vmatmul.mubr.bf16.gmra.mrb[0].mxu0 %v8629
    %v8799 = vpop.f32.mrb[0].mxu0
    %v8800 = vadd.f32 0.0, %v8799
    %v8801 = vpop.f32.mrb[0].mxu0
    %v8802 = vpop.f32.mrb[0].mxu0
    %v8803 = vadd.f32 0.0, %v8802
    %v8804 = vpop.f32.mrb[0].mxu0
    %8805 = vmatprep.mubr.bf16.mxu0 0
    %8806 = vmatmul.mubr.bf16.gmra.mrb[0].mxu0 %v8632
    %v8807 = vpop.f32.mrb[0].mxu0
    %v8808 = vpop.f32.mrb[0].mxu0
    %v8809 = vpop.f32.mrb[0].mxu0
    %v8810 = vadd.f32 0.0, %v8809
    %v8811 = vpop.f32.mrb[0].mxu0
    %8812 = vmatprep.mubr.bf16.mxu0 0
    %8813 = vmatmul.mubr.bf16.gmra.mrb[0].mxu0 %v8635
    %v8814 = vpop.f32.mrb[0].mxu0
    %v8815 = vadd.f32 0.0, %v8814
    %v8816 = vpop.f32.mrb[0].mxu0
    %v8817 = vpop.f32.mrb[0].mxu0
    %v8818 = vpop.f32.mrb[0].mxu0
    %8819 = vmatprep.mubr.bf16.mxu0 0
    %8820 = vmatmul.mubr.bf16.gmra.mrb[0].mxu0 %v8638
    %v8821 = vpop.f32.mrb[0].mxu0
    %v8822 = vadd.f32 0.0, %v8821
    %v8823 = vpop.f32.mrb[0].mxu0
    %v8824 = vpop.f32.mrb[0].mxu0
    %v8825 = vadd.f32 0.0, %v8824
    %v8826 = vpop.f32.mrb[0].mxu0
    %8827 = vmatprep.mubr.bf16.mxu0 0
    %8828 = vmatmul.mubr.bf16.gmra.mrb[0].mxu0 %v8641
    %v8829 = vpop.f32.mrb[0].mxu0
    %v8830 = vpop.f32.mrb[0].mxu0
    %v8831 = vpop.f32.mrb[0].mxu0
    %v8832 = vadd.f32 0.0, %v8831
    %v8833 = vpop.f32.mrb[0].mxu0
    %8834 = vmatprep.mubr.bf16.mxu0 0
    %8835 = vmatmul.mubr.bf16.gmra.mrb[0].mxu0 %v8644
    %v8836 = vpop.f32.mrb[0].mxu0
    %v8837 = vadd.f32 0.0, %v8836
    %v8838 = vpop.f32.mrb[0].mxu0
    %v8839 = vpop.f32.mrb[0].mxu0
    %v8840 = vpop.f32.mrb[0].mxu0
    %8841 = vmatprep.mubr.bf16.mxu0 0
    %8842 = vmatmul.mubr.bf16.gmra.mrb[0].mxu0 %v8647
    %v8843 = vpop.f32.mrb[0].mxu0
    %v8844 = vadd.f32 0.0, %v8843
    %v8845 = vpop.f32.mrb[0].mxu0
    %v8846 = vpop.f32.mrb[0].mxu0
    %v8847 = vadd.f32 0.0, %v8846
    %v8848 = vpop.f32.mrb[0].mxu0
    %8849 = vmatprep.mubr.bf16.mxu0 0
    %8850 = vmatmul.mubr.bf16.gmra.mrb[0].mxu0 %v8650
    %v8851 = vpop.f32.mrb[0].mxu0
    %v8852 = vpop.f32.mrb[0].mxu0
    %v8853 = vpop.f32.mrb[0].mxu0
    %v8854 = vadd.f32 0.0, %v8853
    %v8855 = vpop.f32.mrb[0].mxu0
    %8856 = vmatprep.mubr.bf16.mxu0 0
    %8857 = vmatmul.mubr.bf16.gmra.mrb[0].mxu0 %v8653
    %v8858 = vpop.f32.mrb[0].mxu0
    %v8859 = vadd.f32 0.0, %v8858
    %v8860 = vpop.f32.mrb[0].mxu0
    %v8861 = vpop.f32.mrb[0].mxu0
    %v8862 = vpop.f32.mrb[0].mxu0
    %8863 = vdwg.mxu0
    %v8864 = vadd.f32 %v8463, %v8690
    %v8865 = vadd.f32 %v8464, %v8693
    %v8866 = vadd.f32 %v8465, %v8700
    %v8867 = vadd.f32 %v8466, %v8705
    %v8868 = vadd.f32 %v8467, %v8712
    %v8869 = vadd.f32 %v8468, %v8715
    %v8870 = vadd.f32 %v8469, %v8722
    %v8871 = vadd.f32 %v8470, %v8727
    %v8872 = vadd.f32 %v8471, %v8734
    %v8873 = vadd.f32 %v8472, %v8737
    %v8874 = vadd.f32 %v8473, %v8744
    %v8875 = vadd.f32 %v8474, %v8749
    %v8876 = vadd.f32 %v8475, %v8756
    %v8877 = vadd.f32 %v8476, %v8759
    %v8878 = vadd.f32 %v8477, %v8766
    %v8879 = vadd.f32 %v8478, %v8771
    %v8880 = vadd.f32 %v8479, %v8778
    %v8881 = vadd.f32 %v8480, %v8781
    %v8882 = vadd.f32 %v8481, %v8788
    %v8883 = vadd.f32 %v8482, %v8793
    %v8884 = vadd.f32 %v8483, %v8800
    %v8885 = vadd.f32 %v8484, %v8803
    %v8886 = vadd.f32 %v8485, %v8810
    %v8887 = vadd.f32 %v8486, %v8815
    %v8888 = vadd.f32 %v8487, %v8822
    %v8889 = vadd.f32 %v8488, %v8825
    %v8890 = vadd.f32 %v8489, %v8832
    %v8891 = vadd.f32 %v8490, %v8837
    %v8892 = vadd.f32 %v8491, %v8844
    %v8893 = vadd.f32 %v8492, %v8847
    %v8894 = vadd.f32 %v8493, %v8854
    %v8895 = vadd.f32 %v8494, %v8859
    %v8896 = vld [vmem:[%s5] sm:$0x1]
    %v8898 = vlaneseq
    %v8899 = vshrl.u32 %v8898, 7
    %v8900 = vsub.s32 0, %v8899
    %v8901 = vrot.slane %v8896, %v8900
    %v8903 = vmul.f32 %v8864, %v8901
    %v8904 = vmul.f32 %v8865, %v8901
    %v8905 = vmul.f32 %v8866, %v8901
    %v8906 = vmul.f32 %v8867, %v8901
    %v8907 = vmul.f32 %v8868, %v8901
    %v8908 = vmul.f32 %v8869, %v8901
    %v8909 = vmul.f32 %v8870, %v8901
    %v8910 = vmul.f32 %v8871, %v8901
    %v8911 = vmul.f32 %v8872, %v8901
    %v8912 = vmul.f32 %v8873, %v8901
    %v8913 = vmul.f32 %v8874, %v8901
    %v8914 = vmul.f32 %v8875, %v8901
    %v8915 = vmul.f32 %v8876, %v8901
    %v8916 = vmul.f32 %v8877, %v8901
    %v8917 = vmul.f32 %v8878, %v8901
    %v8918 = vmul.f32 %v8879, %v8901
    %v8919 = vmul.f32 %v8880, %v8901
    %v8920 = vmul.f32 %v8881, %v8901
    %v8921 = vmul.f32 %v8882, %v8901
    %v8922 = vmul.f32 %v8883, %v8901
    %v8923 = vmul.f32 %v8884, %v8901
    %v8924 = vmul.f32 %v8885, %v8901
    %v8925 = vmul.f32 %v8886, %v8901
    %v8926 = vmul.f32 %v8887, %v8901
    %v8927 = vmul.f32 %v8888, %v8901
    %v8928 = vmul.f32 %v8889, %v8901
    %v8929 = vmul.f32 %v8890, %v8901
    %v8930 = vmul.f32 %v8891, %v8901
    %v8931 = vmul.f32 %v8892, %v8901
    %v8932 = vmul.f32 %v8893, %v8901
    %v8933 = vmul.f32 %v8894, %v8901
    %v8934 = vmul.f32 %v8895, %v8901
    %v8935 = vld [vmem:[%s6] sm:$0x1]
    %v8937 = vlaneseq
    %v8938 = vshrl.u32 %v8937, 7
    %v8939 = vsub.s32 0, %v8938
    %v8940 = vrot.slane %v8935, %v8939
    %v8942 = vadd.f32 %v8903, %v8940
    %v8943 = vadd.f32 %v8904, %v8940
    %v8944 = vadd.f32 %v8905, %v8940
    %v8945 = vadd.f32 %v8906, %v8940
    %v8946 = vadd.f32 %v8907, %v8940
    %v8947 = vadd.f32 %v8908, %v8940
    %v8948 = vadd.f32 %v8909, %v8940
    %v8949 = vadd.f32 %v8910, %v8940
    %v8950 = vadd.f32 %v8911, %v8940
    %v8951 = vadd.f32 %v8912, %v8940
    %v8952 = vadd.f32 %v8913, %v8940
    %v8953 = vadd.f32 %v8914, %v8940
    %v8954 = vadd.f32 %v8915, %v8940
    %v8955 = vadd.f32 %v8916, %v8940
    %v8956 = vadd.f32 %v8917, %v8940
    %v8957 = vadd.f32 %v8918, %v8940
    %v8958 = vadd.f32 %v8919, %v8940
    %v8959 = vadd.f32 %v8920, %v8940
    %v8960 = vadd.f32 %v8921, %v8940
    %v8961 = vadd.f32 %v8922, %v8940
    %v8962 = vadd.f32 %v8923, %v8940
    %v8963 = vadd.f32 %v8924, %v8940
    %v8964 = vadd.f32 %v8925, %v8940
    %v8965 = vadd.f32 %v8926, %v8940
    %v8966 = vadd.f32 %v8927, %v8940
    %v8967 = vadd.f32 %v8928, %v8940
    %v8968 = vadd.f32 %v8929, %v8940
    %v8969 = vadd.f32 %v8930, %v8940
    %v8970 = vadd.f32 %v8931, %v8940
    %v8971 = vadd.f32 %v8932, %v8940
    %v8972 = vadd.f32 %v8933, %v8940
    %v8973 = vadd.f32 %v8934, %v8940
    %v8974 = vmax.f32 %v8942, 0.0
    %v8975 = vmax.f32 %v8943, 0.0
    %v8976 = vmax.f32 %v8944, 0.0
    %v8977 = vmax.f32 %v8945, 0.0
    %v8978 = vmax.f32 %v8946, 0.0
    %v8979 = vmax.f32 %v8947, 0.0
    %v8980 = vmax.f32 %v8948, 0.0
    %v8981 = vmax.f32 %v8949, 0.0
    %v8982 = vmax.f32 %v8950, 0.0
    %v8983 = vmax.f32 %v8951, 0.0
    %v8984 = vmax.f32 %v8952, 0.0
    %v8985 = vmax.f32 %v8953, 0.0
    %v8986 = vmax.f32 %v8954, 0.0
    %v8987 = vmax.f32 %v8955, 0.0
    %v8988 = vmax.f32 %v8956, 0.0
    %v8989 = vmax.f32 %v8957, 0.0
    %v8990 = vmax.f32 %v8958, 0.0
    %v8991 = vmax.f32 %v8959, 0.0
    %v8992 = vmax.f32 %v8960, 0.0
    %v8993 = vmax.f32 %v8961, 0.0
    %v8994 = vmax.f32 %v8962, 0.0
    %v8995 = vmax.f32 %v8963, 0.0
    %v8996 = vmax.f32 %v8964, 0.0
    %v8997 = vmax.f32 %v8965, 0.0
    %v8998 = vmax.f32 %v8966, 0.0
    %v8999 = vmax.f32 %v8967, 0.0
    %v9000 = vmax.f32 %v8968, 0.0
    %v9001 = vmax.f32 %v8969, 0.0
    %v9002 = vmax.f32 %v8970, 0.0
    %v9003 = vmax.f32 %v8971, 0.0
    %v9004 = vmax.f32 %v8972, 0.0
    %v9005 = vmax.f32 %v8973, 0.0
    %v9006 = vpack.c.bf16 %v8975, %v8974
    %v9007 = vpack.c.bf16 %v8977, %v8976
    %v9008 = vpack.c.bf16 %v8979, %v8978
    %v9009 = vpack.c.bf16 %v8981, %v8980
    %v9010 = vpack.c.bf16 %v8983, %v8982
    %v9011 = vpack.c.bf16 %v8985, %v8984
    %v9012 = vpack.c.bf16 %v8987, %v8986
    %v9013 = vpack.c.bf16 %v8989, %v8988
    %v9014 = vpack.c.bf16 %v8991, %v8990
    %v9015 = vpack.c.bf16 %v8993, %v8992
    %v9016 = vpack.c.bf16 %v8995, %v8994
    %v9017 = vpack.c.bf16 %v8997, %v8996
    %v9018 = vpack.c.bf16 %v8999, %v8998
    %v9019 = vpack.c.bf16 %v9001, %v9000
    %v9020 = vpack.c.bf16 %v9003, %v9002
    %v9021 = vpack.c.bf16 %v9005, %v9004
    %v9022 = vld [vmem:[%s7] sm:$0xf]
    %v9023 = vld [vmem:[%s7 + $0x4] sm:$0xf]
    %v9024 = vld [vmem:[%s7 + $0x8] sm:$0xf]
    %v9025 = vld [vmem:[%s7 + $0xc] sm:$0xf]
    %v9030 = vunpack.c.l.b16 %v9022
    %v9031 = vunpack.c.l.b16 %v9023
    %v9032 = vunpack.c.l.b16 %v9024
    %v9033 = vunpack.c.l.b16 %v9025
    %v9034 = vpack.c.b16 %v9031, %v9030
    %v9035 = vpack.c.b16 %v9033, %v9032
    %v9039 = vsel %vm65, %v9006, 0
    %v9042 = vsel %vm65, %v9007, 0
    %v9045 = vsel %vm65, %v9008, 0
    %v9048 = vsel %vm65, %v9009, 0
    %v9051 = vsel %vm65, %v9010, 0
    %v9054 = vsel %vm65, %v9011, 0
    %v9057 = vsel %vm65, %v9012, 0
    %v9060 = vsel %vm65, %v9013, 0
    %v9063 = vsel %vm65, %v9014, 0
    %v9066 = vsel %vm65, %v9015, 0
    %v9069 = vsel %vm65, %v9016, 0
    %v9072 = vsel %vm65, %v9017, 0
    %v9075 = vsel %vm65, %v9018, 0
    %v9078 = vsel %vm65, %v9019, 0
    %v9081 = vsel %vm65, %v9020, 0
    %v9084 = vsel %vm65, %v9021, 0
    %9086 = vmatprep.subr.bf16.mxu0 0
    %9087 = vmatpush1.bf16.msra.mxu0 %v9034
    %9088 = vmatprep.subr.bf16.mxu0 0
    %9089 = vmatpush1.bf16.msra.mxu0 %v9035
    %9090 = vmatprep.subr.bf16.mxu0 0
    %9091 = vmatpush1.bf16.msra.mxu0 0
    %9092 = vmatprep.subr.bf16.mxu0 0
    %9093 = vmatpush1.bf16.msra.mxu0 0
    %9094 = vmatprep.subr.bf16.mxu0 0
    %9095 = vmatpush1.bf16.msra.mxu0 0
    %9096 = vmatprep.subr.bf16.mxu0 0
    %9097 = vmatpush1.bf16.msra.mxu0 0
    %9098 = vmatprep.subr.bf16.mxu0 0
    %9099 = vmatpush1.bf16.msra.mxu0 0
    %9100 = vmatprep.subr.bf16.mxu0 0
    %9101 = vmatpush1.bf16.msra.mxu0 0
    %9102 = vmatprep.subr.bf16.mxu0 0
    %9103 = vmatpush1.bf16.msra.mxu0 0
    %9104 = vmatprep.subr.bf16.mxu0 0
    %9105 = vmatpush1.bf16.msra.mxu0 0
    %9106 = vmatprep.subr.bf16.mxu0 0
    %9107 = vmatpush1.bf16.msra.mxu0 0
    %9108 = vmatprep.subr.bf16.mxu0 0
    %9109 = vmatpush1.bf16.msra.mxu0 0
    %9110 = vmatprep.subr.bf16.mxu0 0
    %9111 = vmatpush1.bf16.msra.mxu0 0
    %9112 = vmatprep.subr.bf16.mxu0 0
    %9113 = vmatpush1.bf16.msra.mxu0 0
    %9114 = vmatprep.subr.bf16.mxu0 0
    %9115 = vmatpush1.bf16.msra.mxu0 0
    %9116 = vmatprep.subr.bf16.mxu0 0
    %9117 = vmatpush1.bf16.msra.mxu0 0
    %9118 = vmatprep.mubr.bf16.mxu0 0
    %9119 = vmatmul.mubr.bf16.gmra.mrb[0].mxu0 %v9039
    %v9120 = vpop.f32.mrb[0].mxu0
    %v9121 = vadd.f32 0.0, %v9120
    %v9122 = vpop.f32.mrb[0].mxu0
    %v9123 = vpop.f32.mrb[0].mxu0
    %v9124 = vadd.f32 0.0, %v9123
    %v9125 = vpop.f32.mrb[0].mxu0
    %9126 = vmatprep.mubr.bf16.mxu0 0
    %9127 = vmatmul.mubr.bf16.gmra.mrb[0].mxu0 %v9042
    %v9128 = vpop.f32.mrb[0].mxu0
    %v9129 = vadd.f32 0.0, %v9128
    %v9130 = vpop.f32.mrb[0].mxu0
    %v9131 = vpop.f32.mrb[0].mxu0
    %v9132 = vadd.f32 0.0, %v9131
    %v9133 = vpop.f32.mrb[0].mxu0
    %9134 = vmatprep.mubr.bf16.mxu0 0
    %9135 = vmatmul.mubr.bf16.gmra.mrb[0].mxu0 %v9045
    %v9136 = vpop.f32.mrb[0].mxu0
    %v9137 = vadd.f32 0.0, %v9136
    %v9138 = vpop.f32.mrb[0].mxu0
    %v9139 = vpop.f32.mrb[0].mxu0
    %v9140 = vadd.f32 0.0, %v9139
    %v9141 = vpop.f32.mrb[0].mxu0
    %9142 = vmatprep.mubr.bf16.mxu0 0
    %9143 = vmatmul.mubr.bf16.gmra.mrb[0].mxu0 %v9048
    %v9144 = vpop.f32.mrb[0].mxu0
    %v9145 = vadd.f32 0.0, %v9144
    %v9146 = vpop.f32.mrb[0].mxu0
    %v9147 = vpop.f32.mrb[0].mxu0
    %v9148 = vadd.f32 0.0, %v9147
    %v9149 = vpop.f32.mrb[0].mxu0
    %9150 = vmatprep.mubr.bf16.mxu0 0
    %9151 = vmatmul.mubr.bf16.gmra.mrb[0].mxu0 %v9051
    %v9152 = vpop.f32.mrb[0].mxu0
    %v9153 = vadd.f32 0.0, %v9152
    %v9154 = vpop.f32.mrb[0].mxu0
    %v9155 = vpop.f32.mrb[0].mxu0
    %v9156 = vadd.f32 0.0, %v9155
    %v9157 = vpop.f32.mrb[0].mxu0
    %9158 = vmatprep.mubr.bf16.mxu0 0
    %9159 = vmatmul.mubr.bf16.gmra.mrb[0].mxu0 %v9054
    %v9160 = vpop.f32.mrb[0].mxu0
    %v9161 = vadd.f32 0.0, %v9160
    %v9162 = vpop.f32.mrb[0].mxu0
    %v9163 = vpop.f32.mrb[0].mxu0
    %v9164 = vadd.f32 0.0, %v9163
    %v9165 = vpop.f32.mrb[0].mxu0
    %9166 = vmatprep.mubr.bf16.mxu0 0
    %9167 = vmatmul.mubr.bf16.gmra.mrb[0].mxu0 %v9057
    %v9168 = vpop.f32.mrb[0].mxu0
    %v9169 = vadd.f32 0.0, %v9168
    %v9170 = vpop.f32.mrb[0].mxu0
    %v9171 = vpop.f32.mrb[0].mxu0
    %v9172 = vadd.f32 0.0, %v9171
    %v9173 = vpop.f32.mrb[0].mxu0
    %9174 = vmatprep.mubr.bf16.mxu0 0
    %9175 = vmatmul.mubr.bf16.gmra.mrb[0].mxu0 %v9060
    %v9176 = vpop.f32.mrb[0].mxu0
    %v9177 = vadd.f32 0.0, %v9176
    %v9178 = vpop.f32.mrb[0].mxu0
    %v9179 = vpop.f32.mrb[0].mxu0
    %v9180 = vadd.f32 0.0, %v9179
    %v9181 = vpop.f32.mrb[0].mxu0
    %9182 = vmatprep.mubr.bf16.mxu0 0
    %9183 = vmatmul.mubr.bf16.gmra.mrb[0].mxu0 %v9063
    %v9184 = vpop.f32.mrb[0].mxu0
    %v9185 = vadd.f32 0.0, %v9184
    %v9186 = vpop.f32.mrb[0].mxu0
    %v9187 = vpop.f32.mrb[0].mxu0
    %v9188 = vadd.f32 0.0, %v9187
    %v9189 = vpop.f32.mrb[0].mxu0
    %9190 = vmatprep.mubr.bf16.mxu0 0
    %9191 = vmatmul.mubr.bf16.gmra.mrb[0].mxu0 %v9066
    %v9192 = vpop.f32.mrb[0].mxu0
    %v9193 = vadd.f32 0.0, %v9192
    %v9194 = vpop.f32.mrb[0].mxu0
    %v9195 = vpop.f32.mrb[0].mxu0
    %v9196 = vadd.f32 0.0, %v9195
    %v9197 = vpop.f32.mrb[0].mxu0
    %9198 = vmatprep.mubr.bf16.mxu0 0
    %9199 = vmatmul.mubr.bf16.gmra.mrb[0].mxu0 %v9069
    %v9200 = vpop.f32.mrb[0].mxu0
    %v9201 = vadd.f32 0.0, %v9200
    %v9202 = vpop.f32.mrb[0].mxu0
    %v9203 = vpop.f32.mrb[0].mxu0
    %v9204 = vadd.f32 0.0, %v9203
    %v9205 = vpop.f32.mrb[0].mxu0
    %9206 = vmatprep.mubr.bf16.mxu0 0
    %9207 = vmatmul.mubr.bf16.gmra.mrb[0].mxu0 %v9072
    %v9208 = vpop.f32.mrb[0].mxu0
    %v9209 = vadd.f32 0.0, %v9208
    %v9210 = vpop.f32.mrb[0].mxu0
    %v9211 = vpop.f32.mrb[0].mxu0
    %v9212 = vadd.f32 0.0, %v9211
    %v9213 = vpop.f32.mrb[0].mxu0
    %9214 = vmatprep.mubr.bf16.mxu0 0
    %9215 = vmatmul.mubr.bf16.gmra.mrb[0].mxu0 %v9075
    %v9216 = vpop.f32.mrb[0].mxu0
    %v9217 = vadd.f32 0.0, %v9216
    %v9218 = vpop.f32.mrb[0].mxu0
    %v9219 = vpop.f32.mrb[0].mxu0
    %v9220 = vadd.f32 0.0, %v9219
    %v9221 = vpop.f32.mrb[0].mxu0
    %9222 = vmatprep.mubr.bf16.mxu0 0
    %9223 = vmatmul.mubr.bf16.gmra.mrb[0].mxu0 %v9078
    %v9224 = vpop.f32.mrb[0].mxu0
    %v9225 = vadd.f32 0.0, %v9224
    %v9226 = vpop.f32.mrb[0].mxu0
    %v9227 = vpop.f32.mrb[0].mxu0
    %v9228 = vadd.f32 0.0, %v9227
    %v9229 = vpop.f32.mrb[0].mxu0
    %9230 = vmatprep.mubr.bf16.mxu0 0
    %9231 = vmatmul.mubr.bf16.gmra.mrb[0].mxu0 %v9081
    %v9232 = vpop.f32.mrb[0].mxu0
    %v9233 = vadd.f32 0.0, %v9232
    %v9234 = vpop.f32.mrb[0].mxu0
    %v9235 = vpop.f32.mrb[0].mxu0
    %v9236 = vadd.f32 0.0, %v9235
    %v9237 = vpop.f32.mrb[0].mxu0
    %9238 = vmatprep.mubr.bf16.mxu0 0
    %9239 = vmatmul.mubr.bf16.gmra.mrb[0].mxu0 %v9084
    %v9240 = vpop.f32.mrb[0].mxu0
    %v9241 = vadd.f32 0.0, %v9240
    %v9242 = vpop.f32.mrb[0].mxu0
    %v9243 = vpop.f32.mrb[0].mxu0
    %v9244 = vadd.f32 0.0, %v9243
    %v9245 = vpop.f32.mrb[0].mxu0
    %9246 = vdwg.mxu0
    %v9247 = vld [vmem:[%s8] sm:$0x1]
    %v9249 = vlaneseq
    %v9250 = vshrl.u32 %v9249, 7
    %v9251 = vsub.s32 0, %v9250
    %v9252 = vrot.slane %v9247, %v9251
    %v9254 = vmul.f32 %v9121, %v9252
    %v9255 = vmul.f32 %v9124, %v9252
    %v9256 = vmul.f32 %v9129, %v9252
    %v9257 = vmul.f32 %v9132, %v9252
    %v9258 = vmul.f32 %v9137, %v9252
    %v9259 = vmul.f32 %v9140, %v9252
    %v9260 = vmul.f32 %v9145, %v9252
    %v9261 = vmul.f32 %v9148, %v9252
    %v9262 = vmul.f32 %v9153, %v9252
    %v9263 = vmul.f32 %v9156, %v9252
    %v9264 = vmul.f32 %v9161, %v9252
    %v9265 = vmul.f32 %v9164, %v9252
    %v9266 = vmul.f32 %v9169, %v9252
    %v9267 = vmul.f32 %v9172, %v9252
    %v9268 = vmul.f32 %v9177, %v9252
    %v9269 = vmul.f32 %v9180, %v9252
    %v9270 = vmul.f32 %v9185, %v9252
    %v9271 = vmul.f32 %v9188, %v9252
    %v9272 = vmul.f32 %v9193, %v9252
    %v9273 = vmul.f32 %v9196, %v9252
    %v9274 = vmul.f32 %v9201, %v9252
    %v9275 = vmul.f32 %v9204, %v9252
    %v9276 = vmul.f32 %v9209, %v9252
    %v9277 = vmul.f32 %v9212, %v9252
    %v9278 = vmul.f32 %v9217, %v9252
    %v9279 = vmul.f32 %v9220, %v9252
    %v9280 = vmul.f32 %v9225, %v9252
    %v9281 = vmul.f32 %v9228, %v9252
    %v9282 = vmul.f32 %v9233, %v9252
    %v9283 = vmul.f32 %v9236, %v9252
    %v9284 = vmul.f32 %v9241, %v9252
    %v9285 = vmul.f32 %v9244, %v9252
    %v9286 = vld [vmem:[%s9] sm:$0x1]
    %v9288 = vlaneseq
    %v9289 = vshrl.u32 %v9288, 7
    %v9290 = vsub.s32 0, %v9289
    %v9291 = vrot.slane %v9286, %v9290
    %v9293 = vadd.f32 %v9254, %v9291
    %v9294 = vadd.f32 %v9255, %v9291
    %v9295 = vadd.f32 %v9256, %v9291
    %v9296 = vadd.f32 %v9257, %v9291
    %v9297 = vadd.f32 %v9258, %v9291
    %v9298 = vadd.f32 %v9259, %v9291
    %v9299 = vadd.f32 %v9260, %v9291
    %v9300 = vadd.f32 %v9261, %v9291
    %v9301 = vadd.f32 %v9262, %v9291
    %v9302 = vadd.f32 %v9263, %v9291
    %v9303 = vadd.f32 %v9264, %v9291
    %v9304 = vadd.f32 %v9265, %v9291
    %v9305 = vadd.f32 %v9266, %v9291
    %v9306 = vadd.f32 %v9267, %v9291
    %v9307 = vadd.f32 %v9268, %v9291
    %v9308 = vadd.f32 %v9269, %v9291
    %v9309 = vadd.f32 %v9270, %v9291
    %v9310 = vadd.f32 %v9271, %v9291
    %v9311 = vadd.f32 %v9272, %v9291
    %v9312 = vadd.f32 %v9273, %v9291
    %v9313 = vadd.f32 %v9274, %v9291
    %v9314 = vadd.f32 %v9275, %v9291
    %v9315 = vadd.f32 %v9276, %v9291
    %v9316 = vadd.f32 %v9277, %v9291
    %v9317 = vadd.f32 %v9278, %v9291
    %v9318 = vadd.f32 %v9279, %v9291
    %v9319 = vadd.f32 %v9280, %v9291
    %v9320 = vadd.f32 %v9281, %v9291
    %v9321 = vadd.f32 %v9282, %v9291
    %v9322 = vadd.f32 %v9283, %v9291
    %v9323 = vadd.f32 %v9284, %v9291
    %v9324 = vadd.f32 %v9285, %v9291
    %v9325 = vunpack.c.l.bf16 %v4856
    %v9326 = vunpack.c.l.bf16 %v4857
    %v9327 = vunpack.c.l.bf16 %v4858
    %v9328 = vunpack.c.l.bf16 %v4859
    %v9329 = vunpack.c.l.bf16 %v4860
    %v9330 = vunpack.c.l.bf16 %v4861
    %v9331 = vunpack.c.l.bf16 %v4862
    %v9332 = vunpack.c.l.bf16 %v4863
    %v9333 = vunpack.c.l.bf16 %v4864
    %v9334 = vunpack.c.l.bf16 %v4865
    %v9335 = vunpack.c.l.bf16 %v4866
    %v9336 = vunpack.c.l.bf16 %v4867
    %v9337 = vunpack.c.l.bf16 %v4868
    %v9338 = vunpack.c.l.bf16 %v4869
    %v9339 = vunpack.c.l.bf16 %v4870
    %v9340 = vunpack.c.l.bf16 %v4871
    %v9341 = vunpack.c.l.bf16 %v4872
    %v9342 = vunpack.c.l.bf16 %v4873
    %v9343 = vunpack.c.l.bf16 %v4874
    %v9344 = vunpack.c.l.bf16 %v4875
    %v9345 = vunpack.c.l.bf16 %v4876
    %v9346 = vunpack.c.l.bf16 %v4877
    %v9347 = vunpack.c.l.bf16 %v4878
    %v9348 = vunpack.c.l.bf16 %v4879
    %v9349 = vunpack.c.l.bf16 %v4880
    %v9350 = vunpack.c.l.bf16 %v4881
    %v9351 = vunpack.c.l.bf16 %v4882
    %v9352 = vunpack.c.l.bf16 %v4883
    %v9353 = vunpack.c.l.bf16 %v4884
    %v9354 = vunpack.c.l.bf16 %v4885
    %v9355 = vunpack.c.l.bf16 %v4886
    %v9356 = vunpack.c.l.bf16 %v4887
    %v9357 = vadd.f32 %v9293, %v9325
    %v9358 = vadd.f32 %v9294, %v9326
    %v9359 = vadd.f32 %v9295, %v9327
    %v9360 = vadd.f32 %v9296, %v9328
    %v9361 = vadd.f32 %v9297, %v9329
    %v9362 = vadd.f32 %v9298, %v9330
    %v9363 = vadd.f32 %v9299, %v9331
    %v9364 = vadd.f32 %v9300, %v9332
    %v9365 = vadd.f32 %v9301, %v9333
    %v9366 = vadd.f32 %v9302, %v9334
    %v9367 = vadd.f32 %v9303, %v9335
    %v9368 = vadd.f32 %v9304, %v9336
    %v9369 = vadd.f32 %v9305, %v9337
    %v9370 = vadd.f32 %v9306, %v9338
    %v9371 = vadd.f32 %v9307, %v9339
    %v9372 = vadd.f32 %v9308, %v9340
    %v9373 = vadd.f32 %v9309, %v9341
    %v9374 = vadd.f32 %v9310, %v9342
    %v9375 = vadd.f32 %v9311, %v9343
    %v9376 = vadd.f32 %v9312, %v9344
    %v9377 = vadd.f32 %v9313, %v9345
    %v9378 = vadd.f32 %v9314, %v9346
    %v9379 = vadd.f32 %v9315, %v9347
    %v9380 = vadd.f32 %v9316, %v9348
    %v9381 = vadd.f32 %v9317, %v9349
    %v9382 = vadd.f32 %v9318, %v9350
    %v9383 = vadd.f32 %v9319, %v9351
    %v9384 = vadd.f32 %v9320, %v9352
    %v9385 = vadd.f32 %v9321, %v9353
    %v9386 = vadd.f32 %v9322, %v9354
    %v9387 = vadd.f32 %v9323, %v9355
    %v9388 = vadd.f32 %v9324, %v9356
    %v9389 = vmax.f32 %v9357, 0.0
    %v9390 = vmax.f32 %v9358, 0.0
    %v9391 = vmax.f32 %v9359, 0.0
    %v9392 = vmax.f32 %v9360, 0.0
    %v9393 = vmax.f32 %v9361, 0.0
    %v9394 = vmax.f32 %v9362, 0.0
    %v9395 = vmax.f32 %v9363, 0.0
    %v9396 = vmax.f32 %v9364, 0.0
    %v9397 = vmax.f32 %v9365, 0.0
    %v9398 = vmax.f32 %v9366, 0.0
    %v9399 = vmax.f32 %v9367, 0.0
    %v9400 = vmax.f32 %v9368, 0.0
    %v9401 = vmax.f32 %v9369, 0.0
    %v9402 = vmax.f32 %v9370, 0.0
    %v9403 = vmax.f32 %v9371, 0.0
    %v9404 = vmax.f32 %v9372, 0.0
    %v9405 = vmax.f32 %v9373, 0.0
    %v9406 = vmax.f32 %v9374, 0.0
    %v9407 = vmax.f32 %v9375, 0.0
    %v9408 = vmax.f32 %v9376, 0.0
    %v9409 = vmax.f32 %v9377, 0.0
    %v9410 = vmax.f32 %v9378, 0.0
    %v9411 = vmax.f32 %v9379, 0.0
    %v9412 = vmax.f32 %v9380, 0.0
    %v9413 = vmax.f32 %v9381, 0.0
    %v9414 = vmax.f32 %v9382, 0.0
    %v9415 = vmax.f32 %v9383, 0.0
    %v9416 = vmax.f32 %v9384, 0.0
    %v9417 = vmax.f32 %v9385, 0.0
    %v9418 = vmax.f32 %v9386, 0.0
    %v9419 = vmax.f32 %v9387, 0.0
    %v9420 = vmax.f32 %v9388, 0.0
    %v9421 = vpack.c.bf16 %v9390, %v9389
    %v9422 = vpack.c.bf16 %v9392, %v9391
    %v9423 = vpack.c.bf16 %v9394, %v9393
    %v9424 = vpack.c.bf16 %v9396, %v9395
    %v9425 = vpack.c.bf16 %v9398, %v9397
    %v9426 = vpack.c.bf16 %v9400, %v9399
    %v9427 = vpack.c.bf16 %v9402, %v9401
    %v9428 = vpack.c.bf16 %v9404, %v9403
    %v9429 = vpack.c.bf16 %v9406, %v9405
    %v9430 = vpack.c.bf16 %v9408, %v9407
    %v9431 = vpack.c.bf16 %v9410, %v9409
    %v9432 = vpack.c.bf16 %v9412, %v9411
    %v9433 = vpack.c.bf16 %v9414, %v9413
    %v9434 = vpack.c.bf16 %v9416, %v9415
    %v9435 = vpack.c.bf16 %v9418, %v9417
    %v9436 = vpack.c.bf16 %v9420, %v9419
    %v9453 = vunpack.c.l.b16 %v9421
    %v9454 = vunpack.c.h.b16 %v9421
    %v9455 = vunpack.c.l.b16 %v9422
    %v9456 = vunpack.c.h.b16 %v9422
    %v9457 = vunpack.c.l.b16 %v9423
    %v9458 = vunpack.c.h.b16 %v9423
    %v9459 = vunpack.c.l.b16 %v9424
    %v9460 = vunpack.c.h.b16 %v9424
    %v9461 = vunpack.c.l.b16 %v9425
    %v9462 = vunpack.c.h.b16 %v9425
    %v9463 = vunpack.c.l.b16 %v9426
    %v9464 = vunpack.c.h.b16 %v9426
    %v9465 = vunpack.c.l.b16 %v9427
    %v9466 = vunpack.c.h.b16 %v9427
    %v9467 = vunpack.c.l.b16 %v9428
    %v9468 = vunpack.c.h.b16 %v9428
    %v9469 = vunpack.c.l.b16 %v9429
    %v9470 = vunpack.c.h.b16 %v9429
    %v9471 = vunpack.c.l.b16 %v9430
    %v9472 = vunpack.c.h.b16 %v9430
    %v9473 = vunpack.c.l.b16 %v9431
    %v9474 = vunpack.c.h.b16 %v9431
    %v9475 = vunpack.c.l.b16 %v9432
    %v9476 = vunpack.c.h.b16 %v9432
    %v9477 = vunpack.c.l.b16 %v9433
    %v9478 = vunpack.c.h.b16 %v9433
    %v9479 = vunpack.c.l.b16 %v9434
    %v9480 = vunpack.c.h.b16 %v9434
    %v9481 = vunpack.c.l.b16 %v9435
    %v9482 = vunpack.c.h.b16 %v9435
    %v9483 = vunpack.c.l.b16 %v9436
    %v9484 = vunpack.c.h.b16 %v9436
    %v9485 = vpack.c.b16 %v9453, %v9453
    %v9486 = vpack.c.b16 %v9454, %v9454
    %v9487 = vpack.c.b16 %v9455, %v9455
    %v9488 = vpack.c.b16 %v9456, %v9456
    %v9489 = vpack.c.b16 %v9457, %v9457
    %v9490 = vpack.c.b16 %v9458, %v9458
    %v9491 = vpack.c.b16 %v9459, %v9459
    %v9492 = vpack.c.b16 %v9460, %v9460
    %v9493 = vpack.c.b16 %v9461, %v9461
    %v9494 = vpack.c.b16 %v9462, %v9462
    %v9495 = vpack.c.b16 %v9463, %v9463
    %v9496 = vpack.c.b16 %v9464, %v9464
    %v9497 = vpack.c.b16 %v9465, %v9465
    %v9498 = vpack.c.b16 %v9466, %v9466
    %v9499 = vpack.c.b16 %v9467, %v9467
    %v9500 = vpack.c.b16 %v9468, %v9468
    %v9501 = vpack.c.b16 %v9469, %v9469
    %v9502 = vpack.c.b16 %v9470, %v9470
    %v9503 = vpack.c.b16 %v9471, %v9471
    %v9504 = vpack.c.b16 %v9472, %v9472
    %v9505 = vpack.c.b16 %v9473, %v9473
    %v9506 = vpack.c.b16 %v9474, %v9474
    %v9507 = vpack.c.b16 %v9475, %v9475
    %v9508 = vpack.c.b16 %v9476, %v9476
    %v9509 = vpack.c.b16 %v9477, %v9477
    %v9510 = vpack.c.b16 %v9478, %v9478
    %v9511 = vpack.c.b16 %v9479, %v9479
    %v9512 = vpack.c.b16 %v9480, %v9480
    %v9513 = vpack.c.b16 %v9481, %v9481
    %v9514 = vpack.c.b16 %v9482, %v9482
    %v9515 = vpack.c.b16 %v9483, %v9483
    %v9516 = vpack.c.b16 %v9484, %v9484
    %s9549 = scalar_lea.vmem [#allocation8], 128
    %9550 = vst [vmem:[%s9549] sm:$0xf] %v9485
    %9551 = vst [vmem:[%s9549 + $0x4] sm:$0xf] %v9486
    %9552 = vst [vmem:[%s9549 + $0x8] sm:$0xf] %v9487
    %9553 = vst [vmem:[%s9549 + $0xc] sm:$0xf] %v9488
    %9554 = vst [vmem:[%s9549 + $0x10] sm:$0xf] %v9489
    %9555 = vst [vmem:[%s9549 + $0x14] sm:$0xf] %v9490
    %9556 = vst [vmem:[%s9549 + $0x18] sm:$0xf] %v9491
    %9557 = vst [vmem:[%s9549 + $0x1c] sm:$0xf] %v9492
    %9558 = vst [vmem:[%s9549 + $0x20] sm:$0xf] %v9493
    %9559 = vst [vmem:[%s9549 + $0x24] sm:$0xf] %v9494
    %9560 = vst [vmem:[%s9549 + $0x28] sm:$0xf] %v9495
    %9561 = vst [vmem:[%s9549 + $0x2c] sm:$0xf] %v9496
    %9562 = vst [vmem:[%s9549 + $0x30] sm:$0xf] %v9497
    %9563 = vst [vmem:[%s9549 + $0x34] sm:$0xf] %v9498
    %9564 = vst [vmem:[%s9549 + $0x38] sm:$0xf] %v9499
    %9565 = vst [vmem:[%s9549 + $0x3c] sm:$0xf] %v9500
    %9566 = vst [vmem:[%s9549 + $0x40] sm:$0xf] %v9501
    %9567 = vst [vmem:[%s9549 + $0x44] sm:$0xf] %v9502
    %9568 = vst [vmem:[%s9549 + $0x48] sm:$0xf] %v9503
    %9569 = vst [vmem:[%s9549 + $0x4c] sm:$0xf] %v9504
    %9570 = vst [vmem:[%s9549 + $0x50] sm:$0xf] %v9505
    %9571 = vst [vmem:[%s9549 + $0x54] sm:$0xf] %v9506
    %9572 = vst [vmem:[%s9549 + $0x58] sm:$0xf] %v9507
    %9573 = vst [vmem:[%s9549 + $0x5c] sm:$0xf] %v9508
    %9574 = vst [vmem:[%s9549 + $0x60] sm:$0xf] %v9509
    %9575 = vst [vmem:[%s9549 + $0x64] sm:$0xf] %v9510
    %9576 = vst [vmem:[%s9549 + $0x68] sm:$0xf] %v9511
    %9577 = vst [vmem:[%s9549 + $0x6c] sm:$0xf] %v9512
    %9578 = vst [vmem:[%s9549 + $0x70] sm:$0xf] %v9513
    %9579 = vst [vmem:[%s9549 + $0x74] sm:$0xf] %v9514
    %9580 = vst [vmem:[%s9549 + $0x78] sm:$0xf] %v9515
    %9581 = vst [vmem:[%s9549 + $0x7c] sm:$0xf] %v9516
    // Predicated region
    $region50: #{tpu_custom_call.1} parent=1 // pred_check
      _
    $region51: #{tpu_custom_call.1} parent=1 // pred_check_branch
      %9583 = sbr.rel (0) target = $region53
    $region52: #{tpu_custom_call.1} parent=1 // pred_region
      %s9585 = ssub.s32 4096, 4096
      %9586 = vsyncadd [#allocation5], %s9585
      %s9587 = sshll.u32 [#allocation8], 4
      %s9588 = int_to_ptr.vmem [resolvable:$true] %s9587
      %9593 = dma.vmem_to_hbm [thread:$0]  %s9588, 4096, %s10, [#allocation5], 64, 64, 4
    $region53: #{tpu_custom_call.1} parent=1 // pred_fallthru
      _
    // Predicated region
    $region54: #{tpu_custom_call.1} parent=1 // pred_check
      _
    $region55: #{tpu_custom_call.1} parent=1 // pred_check_branch
      %9595 = sbr.rel (0) target = $region57
    $region56: #{tpu_custom_call.1} parent=1 // pred_region
      %9596 = dma.done [#allocation5], 4096
    $region57: #{tpu_custom_call.1} parent=1 // pred_fallthru
      _
    %9597 = vsyncpa [#allocation4], 1
    %9598 = vsyncpa [#allocation7], 1
    %9599 = vsyncpa [#allocation5], 1

</llo_original>
